<compile_context>
chip_gen: v7x
topology: tpu7x:2x2x1
jax: 0.10.0
libtpu: 0.0.40
codegen_flags: <defaults>
</compile_context>

<pallas_src>
import functools

import jax
import jax.numpy as jnp
import numpy as np
from jax.experimental import pallas as pl
from jax.experimental.pallas import tpu as pltpu

# ----------------------------- model config ---------------------------------
NC = 3      # input channels
NDF = 8     # base feature width (kept small for the example)
IMG = 64    # spatial size required by the 5-conv DCGAN discriminator
BATCH = 2
BN_EPS = 1e-5
SLOPE = 0.2

_VMEM = pl.BlockSpec(memory_space=pltpu.MemorySpace.VMEM)


# --------------------- host-side constant builders ---------------------------
def _patch_src_indices(batch, h_in, w_in):
    """For a 4x4 / stride-2 / pad-1 conv: for every patch column (k, n, oh, ow)
    the flattened source index n*h_in*w_in + h*w_in + w of the input feature
    map, or the sentinel m_in for padded (out-of-range) taps."""
    oh, ow = h_in // 2, w_in // 2
    m_in = batch * h_in * w_in
    K, Nb, OH, OW = np.meshgrid(np.arange(16), np.arange(batch),
                                np.arange(oh), np.arange(ow), indexing="ij")
    h = 2 * OH + K // 4 - 1
    w = 2 * OW + K % 4 - 1
    valid = (h >= 0) & (h < h_in) & (w >= 0) & (w < w_in)
    src = np.where(valid, Nb * (h_in * w_in) + h * w_in + w, m_in)
    col = K * (batch * oh * ow) + Nb * (oh * ow) + OH * ow + OW
    idx = np.empty((16 * batch * oh * ow,), np.int32)
    idx[col.reshape(-1)] = src.reshape(-1)
    return idx


def _gather_matrix(batch, h_in, w_in, dtype):
    """(m_in, 16*m_out) 0/1 matrix: (C, m_in) activation @ G = (C, 16*m_out)
    im2col patch matrix of the next 4x4/s2/p1 conv (zero cols = zero padding)."""
    idx = _patch_src_indices(batch, h_in, w_in)
    m_in = batch * h_in * w_in
    g = np.zeros((m_in + 1, idx.size), np.float32)
    g[idx, np.arange(idx.size)] = 1.0
    return jnp.asarray(g[:m_in], dtype)


def _head_indicator(batch, hw, width):
    """(batch*hw, width) block indicator: column n sums that batch's hw lanes."""
    ind = np.zeros((batch * hw, width), np.float32)
    ind[np.arange(batch * hw), np.arange(batch * hw) // hw] = 1.0
    return jnp.asarray(ind)


def _im2col_T(x_cnhw, kh, kw, stride, pad):
    """(C, N, H, W) -> (C*kh*kw, N*OH*OW) patch matrix (c slowest, kw fastest)."""
    C, N, H, W = x_cnhw.shape
    OH = (H + 2 * pad - kh) // stride + 1
    OW = (W + 2 * pad - kw) // stride + 1
    xp = jnp.pad(x_cnhw, ((0, 0), (0, 0), (pad, pad), (pad, pad)))
    cols = [xp[:, :, i:i + stride * OH:stride, j:j + stride * OW:stride]
            for i in range(kh) for j in range(kw)]
    return jnp.stack(cols, axis=1).reshape(C * kh * kw, N * OH * OW)


# ------------------------------ Pallas kernel --------------------------------
def _conv_bn_lrelu_block(p_wide, wstk, gamma, beta, m):
    """Conv as 16 lane-block matmuls + one-pass BatchNorm + LeakyReLU (f32)."""
    out_c = wstk.shape[1]
    y = jnp.zeros((out_c, m), jnp.float32)
    for k in range(16):
        y = y + jnp.dot(wstk[k], p_wide[:, k * m:(k + 1) * m],
                        preferred_element_type=jnp.float32)
    mean = jnp.mean(y, axis=1, keepdims=True)
    var = jnp.mean(y * y, axis=1, keepdims=True) - mean * mean
    z = (y - mean) * (gamma * jax.lax.rsqrt(var + BN_EPS)) + beta
    return jnp.maximum(z, SLOPE * z)


def _disc_kernel(p1g_ref, w1_ref,
                 w2_ref, g2_ref, b2_ref,
                 gm3_ref, w3_ref, g3_ref, b3_ref,
                 gm4_ref, w4_ref, g4_ref, b4_ref,
                 w5_ref, ind_ref, o_ref, *, batch):
    m2 = batch * 16 * 16
    m3 = batch * 8 * 8
    m4 = batch * 4 * 4

    # Layer 1: Conv(nc->ndf) + LeakyReLU, evaluated directly on layer-2's patch
    # column ordering, so its activation IS layer 2's im2col patch matrix.
    p2 = jnp.dot(w1_ref[...], p1g_ref[...], preferred_element_type=jnp.float32)
    p2 = jnp.maximum(p2, SLOPE * p2).astype(jnp.bfloat16)          # (ndf, 16*m2)

    # Layer 2: Conv + BN + LeakyReLU (all in VMEM).
    a2 = _conv_bn_lrelu_block(p2, w2_ref[...], g2_ref[...], b2_ref[...], m2)

    # Layer 3: in-VMEM im2col via constant 0/1 gather matmul, then Conv+BN+LReLU.
    p3 = jnp.dot(a2.astype(jnp.bfloat16), gm3_ref[...],
                 preferred_element_type=jnp.float32).astype(jnp.bfloat16)
    a3 = _conv_bn_lrelu_block(p3, w3_ref[...], g3_ref[...], b3_ref[...], m3)

    # Layer 4.
    p4 = jnp.dot(a3.astype(jnp.bfloat16), gm4_ref[...],
                 preferred_element_type=jnp.float32).astype(jnp.bfloat16)
    a4 = _conv_bn_lrelu_block(p4, w4_ref[...], g4_ref[...], b4_ref[...], m4)

    # Layer 5 head: 4x4 "valid" conv (one dot per batch element) + Sigmoid, as an
    # elementwise multiply + sublane reduction + one small matmul against a
    # block indicator; written as a single lane-dense (8, 128) tile.
    prod = a4 * w5_ref[...]                                        # (ndf*8, m4)
    colsum = jnp.sum(prod, axis=0, keepdims=True)                  # (1, m4)
    logits = jnp.dot(colsum, ind_ref[...],
                     preferred_element_type=jnp.float32)           # (1, 128)
    sig = 1.0 / (1.0 + jnp.exp(-logits))
    o_ref[...] = jnp.broadcast_to(sig, o_ref.shape)


# ----------------------------- full forward ----------------------------------
def prepare_params(p, batch):
    """One-time layout prep: weights per kernel-tap, BN params as (C,1), and the
    constant patch-gather matrices / indices for this batch size."""
    def wstk(w):                                   # (OC,C,4,4) -> (16, OC, C)
        oc, c = w.shape[0], w.shape[1]
        return jnp.transpose(w, (2, 3, 0, 1)).reshape(16, oc, c).astype(jnp.bfloat16)

    def col(v):
        return v.reshape(-1, 1).astype(jnp.float32)

    c4 = p["w4"].shape[0]
    return {
        "w1": p["w1"].reshape(p["w1"].shape[0], -1).astype(jnp.bfloat16),
        "w2": wstk(p["w2"]), "g2": col(p["g2"]), "b2": col(p["b2"]),
        "w3": wstk(p["w3"]), "g3": col(p["g3"]), "b3": col(p["b3"]),
        "w4": wstk(p["w4"]), "g4": col(p["g4"]), "b4": col(p["b4"]),
        "w5": jnp.tile(p["w5"].reshape(c4, 16), (1, batch)).astype(jnp.float32),
        "idx2": jnp.asarray(_patch_src_indices(batch, IMG // 2, IMG // 2)),
        "gm3": _gather_matrix(batch, IMG // 4, IMG // 4, jnp.bfloat16),
        "gm4": _gather_matrix(batch, IMG // 8, IMG // 8, jnp.bfloat16),
        "ind": _head_indicator(batch, 16, 128),
    }


def discriminator_forward(x, pp):
    n = x.shape[0]
    xc = jnp.transpose(x, (1, 0, 2, 3))                      # (C, N, H, W)
    # Input-path preprocessing (XLA, touches only the network input):
    # layer-1 im2col, then pre-gather its columns into layer-2-patch order so
    # the kernel needs no in-kernel gather for the first layer boundary.
    p1 = _im2col_T(xc, 4, 4, 2, 1)                           # (nc*16, n*32*32)
    p1e = jnp.concatenate([p1, jnp.zeros((p1.shape[0], 1), p1.dtype)], axis=1)
    p1g = jnp.take(p1e, pp["idx2"], axis=1).astype(jnp.bfloat16)

    out = pl.pallas_call(
        functools.partial(_disc_kernel, batch=n),
        out_shape=jax.ShapeDtypeStruct((8, 128), jnp.float32),
        in_specs=[_VMEM] * 15,
        out_specs=_VMEM,
    )(p1g, pp["w1"],
      pp["w2"], pp["g2"], pp["b2"],
      pp["gm3"], pp["w3"], pp["g3"], pp["b3"],
      pp["gm4"], pp["w4"], pp["g4"], pp["b4"],
      pp["w5"], pp["ind"])
    return out[0, :n]                                        # .view(-1,1).squeeze(1)


def init_params(key):
    ks = jax.random.split(key, 5)

    def w(k, shape):
        return (0.02 * jax.random.normal(k, shape)).astype(jnp.float32)

    return {
        "w1": w(ks[0], (NDF, NC, 4, 4)),
        "w2": w(ks[1], (NDF * 2, NDF, 4, 4)),
        "g2": jnp.ones((NDF * 2,), jnp.float32), "b2": jnp.zeros((NDF * 2,), jnp.float32),
        "w3": w(ks[2], (NDF * 4, NDF * 2, 4, 4)),
        "g3": jnp.ones((NDF * 4,), jnp.float32), "b3": jnp.zeros((NDF * 4,), jnp.float32),
        "w4": w(ks[3], (NDF * 8, NDF * 4, 4, 4)),
        "g4": jnp.ones((NDF * 8,), jnp.float32), "b4": jnp.zeros((NDF * 8,), jnp.float32),
        "w5": w(ks[4], (1, NDF * 8, 4, 4)),
    }


if __name__ == "__main__":
    key = jax.random.PRNGKey(0)
    kx, kp = jax.random.split(key)
    x = jax.random.normal(kx, (BATCH, NC, IMG, IMG), dtype=jnp.float32)
    params = init_params(kp)
    pp = prepare_params(params, BATCH)

    fwd = jax.jit(discriminator_forward)
    out = fwd(x, pp)
    jax.block_until_ready(out)

    assert out.shape == (BATCH,), out.shape
    assert bool(jnp.all((out >= 0.0) & (out <= 1.0)))
    print("KERNEL_OK")
</pallas_src>

<mosaic_0001>
module attributes {stable_mosaic.version = 11 : i64} {
  func.func @_disc_kernel(%arg0: memref<48x8192xbf16, #tpu.memory_space<vmem>>, %arg1: memref<8x48xbf16, #tpu.memory_space<vmem>>, %arg2: memref<16x16x8xbf16, #tpu.memory_space<vmem>>, %arg3: memref<16x1xf32, #tpu.memory_space<vmem>>, %arg4: memref<16x1xf32, #tpu.memory_space<vmem>>, %arg5: memref<512x2048xbf16, #tpu.memory_space<vmem>>, %arg6: memref<16x32x16xbf16, #tpu.memory_space<vmem>>, %arg7: memref<32x1xf32, #tpu.memory_space<vmem>>, %arg8: memref<32x1xf32, #tpu.memory_space<vmem>>, %arg9: memref<128x512xbf16, #tpu.memory_space<vmem>>, %arg10: memref<16x64x32xbf16, #tpu.memory_space<vmem>>, %arg11: memref<64x1xf32, #tpu.memory_space<vmem>>, %arg12: memref<64x1xf32, #tpu.memory_space<vmem>>, %arg13: memref<64x32xf32, #tpu.memory_space<vmem>>, %arg14: memref<32x128xf32, #tpu.memory_space<vmem>>, %arg15: memref<8x128xf32, #tpu.memory_space<vmem>>) attributes {dimension_semantics = [], scalar_prefetch = 0 : i64, scratch_operands = 0 : i64, tpu.core_type = #tpu.core_type<tc>} {
    %c0 = arith.constant 0 : index
    %c0_0 = arith.constant 0 : index
    %0 = vector.load %arg1[%c0, %c0_0] : memref<8x48xbf16, #tpu.memory_space<vmem>>, vector<8x48xbf16>
    %c0_1 = arith.constant 0 : index
    %c0_2 = arith.constant 0 : index
    %1 = vector.load %arg0[%c0_1, %c0_2] : memref<48x8192xbf16, #tpu.memory_space<vmem>>, vector<48x8192xbf16>
    %cst = arith.constant dense<0.000000e+00> : vector<8x8192xf32>
    %2 = tpu.matmul %0, %1, %cst {dimension_numbers = #tpu.dot_dimension_numbers<[1], [0], [0], [1], [0, 0, 1, 1], [], []>} : vector<8x48xbf16>, vector<48x8192xbf16>, vector<8x8192xf32> -> vector<8x8192xf32>
    %cst_3 = arith.constant 2.000000e-01 : f32
    %3 = vector.broadcast %cst_3 : f32 to vector<8x8192xf32>
    %4 = arith.mulf %3, %2 : vector<8x8192xf32>
    %5 = arith.maximumf %2, %4 : vector<8x8192xf32>
    %6 = arith.truncf %5 : vector<8x8192xf32> to vector<8x8192xbf16>
    %c0_4 = arith.constant 0 : index
    %c0_5 = arith.constant 0 : index
    %c0_6 = arith.constant 0 : index
    %7 = vector.load %arg2[%c0_4, %c0_5, %c0_6] : memref<16x16x8xbf16, #tpu.memory_space<vmem>>, vector<16x16x8xbf16>
    %c0_7 = arith.constant 0 : index
    %c0_8 = arith.constant 0 : index
    %8 = vector.load %arg3[%c0_7, %c0_8] : memref<16x1xf32, #tpu.memory_space<vmem>>, vector<16x1xf32>
    %c0_9 = arith.constant 0 : index
    %c0_10 = arith.constant 0 : index
    %9 = vector.load %arg4[%c0_9, %c0_10] : memref<16x1xf32, #tpu.memory_space<vmem>>, vector<16x1xf32>
    %cst_11 = arith.constant 0.000000e+00 : f32
    %10 = vector.broadcast %cst_11 : f32 to vector<16x512xf32>
    %11 = vector.extract_strided_slice %7 {offsets = [0, 0, 0], sizes = [1, 16, 8], strides = [1, 1, 1]} : vector<16x16x8xbf16> to vector<1x16x8xbf16>
    %12 = vector.shape_cast %11 : vector<1x16x8xbf16> to vector<16x8xbf16>
    %13 = vector.extract_strided_slice %6 {offsets = [0, 0], sizes = [8, 512], strides = [1, 1]} : vector<8x8192xbf16> to vector<8x512xbf16>
    %cst_12 = arith.constant dense<0.000000e+00> : vector<16x512xf32>
    %14 = tpu.matmul %12, %13, %cst_12 {dimension_numbers = #tpu.dot_dimension_numbers<[1], [0], [0], [1], [0, 0, 1, 1], [], []>} : vector<16x8xbf16>, vector<8x512xbf16>, vector<16x512xf32> -> vector<16x512xf32>
    %15 = arith.addf %10, %14 : vector<16x512xf32>
    %16 = vector.extract_strided_slice %7 {offsets = [1, 0, 0], sizes = [1, 16, 8], strides = [1, 1, 1]} : vector<16x16x8xbf16> to vector<1x16x8xbf16>
    %17 = vector.shape_cast %16 : vector<1x16x8xbf16> to vector<16x8xbf16>
    %18 = vector.extract_strided_slice %6 {offsets = [0, 512], sizes = [8, 512], strides = [1, 1]} : vector<8x8192xbf16> to vector<8x512xbf16>
    %cst_13 = arith.constant dense<0.000000e+00> : vector<16x512xf32>
    %19 = tpu.matmul %17, %18, %cst_13 {dimension_numbers = #tpu.dot_dimension_numbers<[1], [0], [0], [1], [0, 0, 1, 1], [], []>} : vector<16x8xbf16>, vector<8x512xbf16>, vector<16x512xf32> -> vector<16x512xf32>
    %20 = arith.addf %15, %19 : vector<16x512xf32>
    %21 = vector.extract_strided_slice %7 {offsets = [2, 0, 0], sizes = [1, 16, 8], strides = [1, 1, 1]} : vector<16x16x8xbf16> to vector<1x16x8xbf16>
    %22 = vector.shape_cast %21 : vector<1x16x8xbf16> to vector<16x8xbf16>
    %23 = vector.extract_strided_slice %6 {offsets = [0, 1024], sizes = [8, 512], strides = [1, 1]} : vector<8x8192xbf16> to vector<8x512xbf16>
    %cst_14 = arith.constant dense<0.000000e+00> : vector<16x512xf32>
    %24 = tpu.matmul %22, %23, %cst_14 {dimension_numbers = #tpu.dot_dimension_numbers<[1], [0], [0], [1], [0, 0, 1, 1], [], []>} : vector<16x8xbf16>, vector<8x512xbf16>, vector<16x512xf32> -> vector<16x512xf32>
    %25 = arith.addf %20, %24 : vector<16x512xf32>
    %26 = vector.extract_strided_slice %7 {offsets = [3, 0, 0], sizes = [1, 16, 8], strides = [1, 1, 1]} : vector<16x16x8xbf16> to vector<1x16x8xbf16>
    %27 = vector.shape_cast %26 : vector<1x16x8xbf16> to vector<16x8xbf16>
    %28 = vector.extract_strided_slice %6 {offsets = [0, 1536], sizes = [8, 512], strides = [1, 1]} : vector<8x8192xbf16> to vector<8x512xbf16>
    %cst_15 = arith.constant dense<0.000000e+00> : vector<16x512xf32>
    %29 = tpu.matmul %27, %28, %cst_15 {dimension_numbers = #tpu.dot_dimension_numbers<[1], [0], [0], [1], [0, 0, 1, 1], [], []>} : vector<16x8xbf16>, vector<8x512xbf16>, vector<16x512xf32> -> vector<16x512xf32>
    %30 = arith.addf %25, %29 : vector<16x512xf32>
    %31 = vector.extract_strided_slice %7 {offsets = [4, 0, 0], sizes = [1, 16, 8], strides = [1, 1, 1]} : vector<16x16x8xbf16> to vector<1x16x8xbf16>
    %32 = vector.shape_cast %31 : vector<1x16x8xbf16> to vector<16x8xbf16>
    %33 = vector.extract_strided_slice %6 {offsets = [0, 2048], sizes = [8, 512], strides = [1, 1]} : vector<8x8192xbf16> to vector<8x512xbf16>
    %cst_16 = arith.constant dense<0.000000e+00> : vector<16x512xf32>
    %34 = tpu.matmul %32, %33, %cst_16 {dimension_numbers = #tpu.dot_dimension_numbers<[1], [0], [0], [1], [0, 0, 1, 1], [], []>} : vector<16x8xbf16>, vector<8x512xbf16>, vector<16x512xf32> -> vector<16x512xf32>
    %35 = arith.addf %30, %34 : vector<16x512xf32>
    %36 = vector.extract_strided_slice %7 {offsets = [5, 0, 0], sizes = [1, 16, 8], strides = [1, 1, 1]} : vector<16x16x8xbf16> to vector<1x16x8xbf16>
    %37 = vector.shape_cast %36 : vector<1x16x8xbf16> to vector<16x8xbf16>
    %38 = vector.extract_strided_slice %6 {offsets = [0, 2560], sizes = [8, 512], strides = [1, 1]} : vector<8x8192xbf16> to vector<8x512xbf16>
    %cst_17 = arith.constant dense<0.000000e+00> : vector<16x512xf32>
    %39 = tpu.matmul %37, %38, %cst_17 {dimension_numbers = #tpu.dot_dimension_numbers<[1], [0], [0], [1], [0, 0, 1, 1], [], []>} : vector<16x8xbf16>, vector<8x512xbf16>, vector<16x512xf32> -> vector<16x512xf32>
    %40 = arith.addf %35, %39 : vector<16x512xf32>
    %41 = vector.extract_strided_slice %7 {offsets = [6, 0, 0], sizes = [1, 16, 8], strides = [1, 1, 1]} : vector<16x16x8xbf16> to vector<1x16x8xbf16>
    %42 = vector.shape_cast %41 : vector<1x16x8xbf16> to vector<16x8xbf16>
    %43 = vector.extract_strided_slice %6 {offsets = [0, 3072], sizes = [8, 512], strides = [1, 1]} : vector<8x8192xbf16> to vector<8x512xbf16>
    %cst_18 = arith.constant dense<0.000000e+00> : vector<16x512xf32>
    %44 = tpu.matmul %42, %43, %cst_18 {dimension_numbers = #tpu.dot_dimension_numbers<[1], [0], [0], [1], [0, 0, 1, 1], [], []>} : vector<16x8xbf16>, vector<8x512xbf16>, vector<16x512xf32> -> vector<16x512xf32>
    %45 = arith.addf %40, %44 : vector<16x512xf32>
    %46 = vector.extract_strided_slice %7 {offsets = [7, 0, 0], sizes = [1, 16, 8], strides = [1, 1, 1]} : vector<16x16x8xbf16> to vector<1x16x8xbf16>
    %47 = vector.shape_cast %46 : vector<1x16x8xbf16> to vector<16x8xbf16>
    %48 = vector.extract_strided_slice %6 {offsets = [0, 3584], sizes = [8, 512], strides = [1, 1]} : vector<8x8192xbf16> to vector<8x512xbf16>
    %cst_19 = arith.constant dense<0.000000e+00> : vector<16x512xf32>
    %49 = tpu.matmul %47, %48, %cst_19 {dimension_numbers = #tpu.dot_dimension_numbers<[1], [0], [0], [1], [0, 0, 1, 1], [], []>} : vector<16x8xbf16>, vector<8x512xbf16>, vector<16x512xf32> -> vector<16x512xf32>
    %50 = arith.addf %45, %49 : vector<16x512xf32>
    %51 = vector.extract_strided_slice %7 {offsets = [8, 0, 0], sizes = [1, 16, 8], strides = [1, 1, 1]} : vector<16x16x8xbf16> to vector<1x16x8xbf16>
    %52 = vector.shape_cast %51 : vector<1x16x8xbf16> to vector<16x8xbf16>
    %53 = vector.extract_strided_slice %6 {offsets = [0, 4096], sizes = [8, 512], strides = [1, 1]} : vector<8x8192xbf16> to vector<8x512xbf16>
    %cst_20 = arith.constant dense<0.000000e+00> : vector<16x512xf32>
    %54 = tpu.matmul %52, %53, %cst_20 {dimension_numbers = #tpu.dot_dimension_numbers<[1], [0], [0], [1], [0, 0, 1, 1], [], []>} : vector<16x8xbf16>, vector<8x512xbf16>, vector<16x512xf32> -> vector<16x512xf32>
    %55 = arith.addf %50, %54 : vector<16x512xf32>
    %56 = vector.extract_strided_slice %7 {offsets = [9, 0, 0], sizes = [1, 16, 8], strides = [1, 1, 1]} : vector<16x16x8xbf16> to vector<1x16x8xbf16>
    %57 = vector.shape_cast %56 : vector<1x16x8xbf16> to vector<16x8xbf16>
    %58 = vector.extract_strided_slice %6 {offsets = [0, 4608], sizes = [8, 512], strides = [1, 1]} : vector<8x8192xbf16> to vector<8x512xbf16>
    %cst_21 = arith.constant dense<0.000000e+00> : vector<16x512xf32>
    %59 = tpu.matmul %57, %58, %cst_21 {dimension_numbers = #tpu.dot_dimension_numbers<[1], [0], [0], [1], [0, 0, 1, 1], [], []>} : vector<16x8xbf16>, vector<8x512xbf16>, vector<16x512xf32> -> vector<16x512xf32>
    %60 = arith.addf %55, %59 : vector<16x512xf32>
    %61 = vector.extract_strided_slice %7 {offsets = [10, 0, 0], sizes = [1, 16, 8], strides = [1, 1, 1]} : vector<16x16x8xbf16> to vector<1x16x8xbf16>
    %62 = vector.shape_cast %61 : vector<1x16x8xbf16> to vector<16x8xbf16>
    %63 = vector.extract_strided_slice %6 {offsets = [0, 5120], sizes = [8, 512], strides = [1, 1]} : vector<8x8192xbf16> to vector<8x512xbf16>
    %cst_22 = arith.constant dense<0.000000e+00> : vector<16x512xf32>
    %64 = tpu.matmul %62, %63, %cst_22 {dimension_numbers = #tpu.dot_dimension_numbers<[1], [0], [0], [1], [0, 0, 1, 1], [], []>} : vector<16x8xbf16>, vector<8x512xbf16>, vector<16x512xf32> -> vector<16x512xf32>
    %65 = arith.addf %60, %64 : vector<16x512xf32>
    %66 = vector.extract_strided_slice %7 {offsets = [11, 0, 0], sizes = [1, 16, 8], strides = [1, 1, 1]} : vector<16x16x8xbf16> to vector<1x16x8xbf16>
    %67 = vector.shape_cast %66 : vector<1x16x8xbf16> to vector<16x8xbf16>
    %68 = vector.extract_strided_slice %6 {offsets = [0, 5632], sizes = [8, 512], strides = [1, 1]} : vector<8x8192xbf16> to vector<8x512xbf16>
    %cst_23 = arith.constant dense<0.000000e+00> : vector<16x512xf32>
    %69 = tpu.matmul %67, %68, %cst_23 {dimension_numbers = #tpu.dot_dimension_numbers<[1], [0], [0], [1], [0, 0, 1, 1], [], []>} : vector<16x8xbf16>, vector<8x512xbf16>, vector<16x512xf32> -> vector<16x512xf32>
    %70 = arith.addf %65, %69 : vector<16x512xf32>
    %71 = vector.extract_strided_slice %7 {offsets = [12, 0, 0], sizes = [1, 16, 8], strides = [1, 1, 1]} : vector<16x16x8xbf16> to vector<1x16x8xbf16>
    %72 = vector.shape_cast %71 : vector<1x16x8xbf16> to vector<16x8xbf16>
    %73 = vector.extract_strided_slice %6 {offsets = [0, 6144], sizes = [8, 512], strides = [1, 1]} : vector<8x8192xbf16> to vector<8x512xbf16>
    %cst_24 = arith.constant dense<0.000000e+00> : vector<16x512xf32>
    %74 = tpu.matmul %72, %73, %cst_24 {dimension_numbers = #tpu.dot_dimension_numbers<[1], [0], [0], [1], [0, 0, 1, 1], [], []>} : vector<16x8xbf16>, vector<8x512xbf16>, vector<16x512xf32> -> vector<16x512xf32>
    %75 = arith.addf %70, %74 : vector<16x512xf32>
    %76 = vector.extract_strided_slice %7 {offsets = [13, 0, 0], sizes = [1, 16, 8], strides = [1, 1, 1]} : vector<16x16x8xbf16> to vector<1x16x8xbf16>
    %77 = vector.shape_cast %76 : vector<1x16x8xbf16> to vector<16x8xbf16>
    %78 = vector.extract_strided_slice %6 {offsets = [0, 6656], sizes = [8, 512], strides = [1, 1]} : vector<8x8192xbf16> to vector<8x512xbf16>
    %cst_25 = arith.constant dense<0.000000e+00> : vector<16x512xf32>
    %79 = tpu.matmul %77, %78, %cst_25 {dimension_numbers = #tpu.dot_dimension_numbers<[1], [0], [0], [1], [0, 0, 1, 1], [], []>} : vector<16x8xbf16>, vector<8x512xbf16>, vector<16x512xf32> -> vector<16x512xf32>
    %80 = arith.addf %75, %79 : vector<16x512xf32>
    %81 = vector.extract_strided_slice %7 {offsets = [14, 0, 0], sizes = [1, 16, 8], strides = [1, 1, 1]} : vector<16x16x8xbf16> to vector<1x16x8xbf16>
    %82 = vector.shape_cast %81 : vector<1x16x8xbf16> to vector<16x8xbf16>
    %83 = vector.extract_strided_slice %6 {offsets = [0, 7168], sizes = [8, 512], strides = [1, 1]} : vector<8x8192xbf16> to vector<8x512xbf16>
    %cst_26 = arith.constant dense<0.000000e+00> : vector<16x512xf32>
    %84 = tpu.matmul %82, %83, %cst_26 {dimension_numbers = #tpu.dot_dimension_numbers<[1], [0], [0], [1], [0, 0, 1, 1], [], []>} : vector<16x8xbf16>, vector<8x512xbf16>, vector<16x512xf32> -> vector<16x512xf32>
    %85 = arith.addf %80, %84 : vector<16x512xf32>
    %86 = vector.extract_strided_slice %7 {offsets = [15, 0, 0], sizes = [1, 16, 8], strides = [1, 1, 1]} : vector<16x16x8xbf16> to vector<1x16x8xbf16>
    %87 = vector.shape_cast %86 : vector<1x16x8xbf16> to vector<16x8xbf16>
    %88 = vector.extract_strided_slice %6 {offsets = [0, 7680], sizes = [8, 512], strides = [1, 1]} : vector<8x8192xbf16> to vector<8x512xbf16>
    %cst_27 = arith.constant dense<0.000000e+00> : vector<16x512xf32>
    %89 = tpu.matmul %87, %88, %cst_27 {dimension_numbers = #tpu.dot_dimension_numbers<[1], [0], [0], [1], [0, 0, 1, 1], [], []>} : vector<16x8xbf16>, vector<8x512xbf16>, vector<16x512xf32> -> vector<16x512xf32>
    %90 = arith.addf %85, %89 : vector<16x512xf32>
    %cst_28 = arith.constant dense<0.000000e+00> : vector<16xf32>
    %91 = vector.multi_reduction <add>, %90, %cst_28 [1] : vector<16x512xf32> to vector<16xf32>
    %92 = vector.shape_cast %91 : vector<16xf32> to vector<16x1xf32>
    %cst_29 = arith.constant 5.120000e+02 : f32
    %93 = vector.broadcast %cst_29 : f32 to vector<16x1xf32>
    %94 = arith.divf %92, %93 : vector<16x1xf32>
    %95 = arith.mulf %90, %90 : vector<16x512xf32>
    %cst_30 = arith.constant dense<0.000000e+00> : vector<16xf32>
    %96 = vector.multi_reduction <add>, %95, %cst_30 [1] : vector<16x512xf32> to vector<16xf32>
    %97 = vector.shape_cast %96 : vector<16xf32> to vector<16x1xf32>
    %cst_31 = arith.constant 5.120000e+02 : f32
    %98 = vector.broadcast %cst_31 : f32 to vector<16x1xf32>
    %99 = arith.divf %97, %98 : vector<16x1xf32>
    %100 = arith.mulf %94, %94 : vector<16x1xf32>
    %101 = arith.subf %99, %100 : vector<16x1xf32>
    %102 = vector.broadcast %94 : vector<16x1xf32> to vector<16x512xf32>
    %103 = arith.subf %90, %102 : vector<16x512xf32>
    %cst_32 = arith.constant 9.99999974E-6 : f32
    %104 = vector.broadcast %cst_32 : f32 to vector<16x1xf32>
    %105 = arith.addf %101, %104 : vector<16x1xf32>
    %106 = math.rsqrt %105 : vector<16x1xf32>
    %107 = arith.mulf %8, %106 : vector<16x1xf32>
    %108 = vector.broadcast %107 : vector<16x1xf32> to vector<16x512xf32>
    %109 = arith.mulf %103, %108 : vector<16x512xf32>
    %110 = vector.broadcast %9 : vector<16x1xf32> to vector<16x512xf32>
    %111 = arith.addf %109, %110 : vector<16x512xf32>
    %cst_33 = arith.constant 2.000000e-01 : f32
    %112 = vector.broadcast %cst_33 : f32 to vector<16x512xf32>
    %113 = arith.mulf %112, %111 : vector<16x512xf32>
    %114 = arith.maximumf %111, %113 : vector<16x512xf32>
    %115 = arith.truncf %114 : vector<16x512xf32> to vector<16x512xbf16>
    %c0_34 = arith.constant 0 : index
    %c0_35 = arith.constant 0 : index
    %116 = vector.load %arg5[%c0_34, %c0_35] : memref<512x2048xbf16, #tpu.memory_space<vmem>>, vector<512x2048xbf16>
    %cst_36 = arith.constant dense<0.000000e+00> : vector<16x2048xf32>
    %117 = tpu.matmul %115, %116, %cst_36 {dimension_numbers = #tpu.dot_dimension_numbers<[1], [0], [0], [1], [0, 0, 1, 1], [], []>} : vector<16x512xbf16>, vector<512x2048xbf16>, vector<16x2048xf32> -> vector<16x2048xf32>
    %118 = arith.truncf %117 : vector<16x2048xf32> to vector<16x2048xbf16>
    %c0_37 = arith.constant 0 : index
    %c0_38 = arith.constant 0 : index
    %c0_39 = arith.constant 0 : index
    %119 = vector.load %arg6[%c0_37, %c0_38, %c0_39] : memref<16x32x16xbf16, #tpu.memory_space<vmem>>, vector<16x32x16xbf16>
    %c0_40 = arith.constant 0 : index
    %c0_41 = arith.constant 0 : index
    %120 = vector.load %arg7[%c0_40, %c0_41] : memref<32x1xf32, #tpu.memory_space<vmem>>, vector<32x1xf32>
    %c0_42 = arith.constant 0 : index
    %c0_43 = arith.constant 0 : index
    %121 = vector.load %arg8[%c0_42, %c0_43] : memref<32x1xf32, #tpu.memory_space<vmem>>, vector<32x1xf32>
    %cst_44 = arith.constant 0.000000e+00 : f32
    %122 = vector.broadcast %cst_44 : f32 to vector<32x128xf32>
    %123 = vector.extract_strided_slice %119 {offsets = [0, 0, 0], sizes = [1, 32, 16], strides = [1, 1, 1]} : vector<16x32x16xbf16> to vector<1x32x16xbf16>
    %124 = vector.shape_cast %123 : vector<1x32x16xbf16> to vector<32x16xbf16>
    %125 = vector.extract_strided_slice %118 {offsets = [0, 0], sizes = [16, 128], strides = [1, 1]} : vector<16x2048xbf16> to vector<16x128xbf16>
    %cst_45 = arith.constant dense<0.000000e+00> : vector<32x128xf32>
    %126 = tpu.matmul %124, %125, %cst_45 {dimension_numbers = #tpu.dot_dimension_numbers<[1], [0], [0], [1], [0, 0, 1, 1], [], []>} : vector<32x16xbf16>, vector<16x128xbf16>, vector<32x128xf32> -> vector<32x128xf32>
    %127 = arith.addf %122, %126 : vector<32x128xf32>
    %128 = vector.extract_strided_slice %119 {offsets = [1, 0, 0], sizes = [1, 32, 16], strides = [1, 1, 1]} : vector<16x32x16xbf16> to vector<1x32x16xbf16>
    %129 = vector.shape_cast %128 : vector<1x32x16xbf16> to vector<32x16xbf16>
    %130 = vector.extract_strided_slice %118 {offsets = [0, 128], sizes = [16, 128], strides = [1, 1]} : vector<16x2048xbf16> to vector<16x128xbf16>
    %cst_46 = arith.constant dense<0.000000e+00> : vector<32x128xf32>
    %131 = tpu.matmul %129, %130, %cst_46 {dimension_numbers = #tpu.dot_dimension_numbers<[1], [0], [0], [1], [0, 0, 1, 1], [], []>} : vector<32x16xbf16>, vector<16x128xbf16>, vector<32x128xf32> -> vector<32x128xf32>
    %132 = arith.addf %127, %131 : vector<32x128xf32>
    %133 = vector.extract_strided_slice %119 {offsets = [2, 0, 0], sizes = [1, 32, 16], strides = [1, 1, 1]} : vector<16x32x16xbf16> to vector<1x32x16xbf16>
    %134 = vector.shape_cast %133 : vector<1x32x16xbf16> to vector<32x16xbf16>
    %135 = vector.extract_strided_slice %118 {offsets = [0, 256], sizes = [16, 128], strides = [1, 1]} : vector<16x2048xbf16> to vector<16x128xbf16>
    %cst_47 = arith.constant dense<0.000000e+00> : vector<32x128xf32>
    %136 = tpu.matmul %134, %135, %cst_47 {dimension_numbers = #tpu.dot_dimension_numbers<[1], [0], [0], [1], [0, 0, 1, 1], [], []>} : vector<32x16xbf16>, vector<16x128xbf16>, vector<32x128xf32> -> vector<32x128xf32>
    %137 = arith.addf %132, %136 : vector<32x128xf32>
    %138 = vector.extract_strided_slice %119 {offsets = [3, 0, 0], sizes = [1, 32, 16], strides = [1, 1, 1]} : vector<16x32x16xbf16> to vector<1x32x16xbf16>
    %139 = vector.shape_cast %138 : vector<1x32x16xbf16> to vector<32x16xbf16>
    %140 = vector.extract_strided_slice %118 {offsets = [0, 384], sizes = [16, 128], strides = [1, 1]} : vector<16x2048xbf16> to vector<16x128xbf16>
    %cst_48 = arith.constant dense<0.000000e+00> : vector<32x128xf32>
    %141 = tpu.matmul %139, %140, %cst_48 {dimension_numbers = #tpu.dot_dimension_numbers<[1], [0], [0], [1], [0, 0, 1, 1], [], []>} : vector<32x16xbf16>, vector<16x128xbf16>, vector<32x128xf32> -> vector<32x128xf32>
    %142 = arith.addf %137, %141 : vector<32x128xf32>
    %143 = vector.extract_strided_slice %119 {offsets = [4, 0, 0], sizes = [1, 32, 16], strides = [1, 1, 1]} : vector<16x32x16xbf16> to vector<1x32x16xbf16>
    %144 = vector.shape_cast %143 : vector<1x32x16xbf16> to vector<32x16xbf16>
    %145 = vector.extract_strided_slice %118 {offsets = [0, 512], sizes = [16, 128], strides = [1, 1]} : vector<16x2048xbf16> to vector<16x128xbf16>
    %cst_49 = arith.constant dense<0.000000e+00> : vector<32x128xf32>
    %146 = tpu.matmul %144, %145, %cst_49 {dimension_numbers = #tpu.dot_dimension_numbers<[1], [0], [0], [1], [0, 0, 1, 1], [], []>} : vector<32x16xbf16>, vector<16x128xbf16>, vector<32x128xf32> -> vector<32x128xf32>
    %147 = arith.addf %142, %146 : vector<32x128xf32>
    %148 = vector.extract_strided_slice %119 {offsets = [5, 0, 0], sizes = [1, 32, 16], strides = [1, 1, 1]} : vector<16x32x16xbf16> to vector<1x32x16xbf16>
    %149 = vector.shape_cast %148 : vector<1x32x16xbf16> to vector<32x16xbf16>
    %150 = vector.extract_strided_slice %118 {offsets = [0, 640], sizes = [16, 128], strides = [1, 1]} : vector<16x2048xbf16> to vector<16x128xbf16>
    %cst_50 = arith.constant dense<0.000000e+00> : vector<32x128xf32>
    %151 = tpu.matmul %149, %150, %cst_50 {dimension_numbers = #tpu.dot_dimension_numbers<[1], [0], [0], [1], [0, 0, 1, 1], [], []>} : vector<32x16xbf16>, vector<16x128xbf16>, vector<32x128xf32> -> vector<32x128xf32>
    %152 = arith.addf %147, %151 : vector<32x128xf32>
    %153 = vector.extract_strided_slice %119 {offsets = [6, 0, 0], sizes = [1, 32, 16], strides = [1, 1, 1]} : vector<16x32x16xbf16> to vector<1x32x16xbf16>
    %154 = vector.shape_cast %153 : vector<1x32x16xbf16> to vector<32x16xbf16>
    %155 = vector.extract_strided_slice %118 {offsets = [0, 768], sizes = [16, 128], strides = [1, 1]} : vector<16x2048xbf16> to vector<16x128xbf16>
    %cst_51 = arith.constant dense<0.000000e+00> : vector<32x128xf32>
    %156 = tpu.matmul %154, %155, %cst_51 {dimension_numbers = #tpu.dot_dimension_numbers<[1], [0], [0], [1], [0, 0, 1, 1], [], []>} : vector<32x16xbf16>, vector<16x128xbf16>, vector<32x128xf32> -> vector<32x128xf32>
    %157 = arith.addf %152, %156 : vector<32x128xf32>
    %158 = vector.extract_strided_slice %119 {offsets = [7, 0, 0], sizes = [1, 32, 16], strides = [1, 1, 1]} : vector<16x32x16xbf16> to vector<1x32x16xbf16>
    %159 = vector.shape_cast %158 : vector<1x32x16xbf16> to vector<32x16xbf16>
    %160 = vector.extract_strided_slice %118 {offsets = [0, 896], sizes = [16, 128], strides = [1, 1]} : vector<16x2048xbf16> to vector<16x128xbf16>
    %cst_52 = arith.constant dense<0.000000e+00> : vector<32x128xf32>
    %161 = tpu.matmul %159, %160, %cst_52 {dimension_numbers = #tpu.dot_dimension_numbers<[1], [0], [0], [1], [0, 0, 1, 1], [], []>} : vector<32x16xbf16>, vector<16x128xbf16>, vector<32x128xf32> -> vector<32x128xf32>
    %162 = arith.addf %157, %161 : vector<32x128xf32>
    %163 = vector.extract_strided_slice %119 {offsets = [8, 0, 0], sizes = [1, 32, 16], strides = [1, 1, 1]} : vector<16x32x16xbf16> to vector<1x32x16xbf16>
    %164 = vector.shape_cast %163 : vector<1x32x16xbf16> to vector<32x16xbf16>
    %165 = vector.extract_strided_slice %118 {offsets = [0, 1024], sizes = [16, 128], strides = [1, 1]} : vector<16x2048xbf16> to vector<16x128xbf16>
    %cst_53 = arith.constant dense<0.000000e+00> : vector<32x128xf32>
    %166 = tpu.matmul %164, %165, %cst_53 {dimension_numbers = #tpu.dot_dimension_numbers<[1], [0], [0], [1], [0, 0, 1, 1], [], []>} : vector<32x16xbf16>, vector<16x128xbf16>, vector<32x128xf32> -> vector<32x128xf32>
    %167 = arith.addf %162, %166 : vector<32x128xf32>
    %168 = vector.extract_strided_slice %119 {offsets = [9, 0, 0], sizes = [1, 32, 16], strides = [1, 1, 1]} : vector<16x32x16xbf16> to vector<1x32x16xbf16>
    %169 = vector.shape_cast %168 : vector<1x32x16xbf16> to vector<32x16xbf16>
    %170 = vector.extract_strided_slice %118 {offsets = [0, 1152], sizes = [16, 128], strides = [1, 1]} : vector<16x2048xbf16> to vector<16x128xbf16>
    %cst_54 = arith.constant dense<0.000000e+00> : vector<32x128xf32>
    %171 = tpu.matmul %169, %170, %cst_54 {dimension_numbers = #tpu.dot_dimension_numbers<[1], [0], [0], [1], [0, 0, 1, 1], [], []>} : vector<32x16xbf16>, vector<16x128xbf16>, vector<32x128xf32> -> vector<32x128xf32>
    %172 = arith.addf %167, %171 : vector<32x128xf32>
    %173 = vector.extract_strided_slice %119 {offsets = [10, 0, 0], sizes = [1, 32, 16], strides = [1, 1, 1]} : vector<16x32x16xbf16> to vector<1x32x16xbf16>
    %174 = vector.shape_cast %173 : vector<1x32x16xbf16> to vector<32x16xbf16>
    %175 = vector.extract_strided_slice %118 {offsets = [0, 1280], sizes = [16, 128], strides = [1, 1]} : vector<16x2048xbf16> to vector<16x128xbf16>
    %cst_55 = arith.constant dense<0.000000e+00> : vector<32x128xf32>
    %176 = tpu.matmul %174, %175, %cst_55 {dimension_numbers = #tpu.dot_dimension_numbers<[1], [0], [0], [1], [0, 0, 1, 1], [], []>} : vector<32x16xbf16>, vector<16x128xbf16>, vector<32x128xf32> -> vector<32x128xf32>
    %177 = arith.addf %172, %176 : vector<32x128xf32>
    %178 = vector.extract_strided_slice %119 {offsets = [11, 0, 0], sizes = [1, 32, 16], strides = [1, 1, 1]} : vector<16x32x16xbf16> to vector<1x32x16xbf16>
    %179 = vector.shape_cast %178 : vector<1x32x16xbf16> to vector<32x16xbf16>
    %180 = vector.extract_strided_slice %118 {offsets = [0, 1408], sizes = [16, 128], strides = [1, 1]} : vector<16x2048xbf16> to vector<16x128xbf16>
    %cst_56 = arith.constant dense<0.000000e+00> : vector<32x128xf32>
    %181 = tpu.matmul %179, %180, %cst_56 {dimension_numbers = #tpu.dot_dimension_numbers<[1], [0], [0], [1], [0, 0, 1, 1], [], []>} : vector<32x16xbf16>, vector<16x128xbf16>, vector<32x128xf32> -> vector<32x128xf32>
    %182 = arith.addf %177, %181 : vector<32x128xf32>
    %183 = vector.extract_strided_slice %119 {offsets = [12, 0, 0], sizes = [1, 32, 16], strides = [1, 1, 1]} : vector<16x32x16xbf16> to vector<1x32x16xbf16>
    %184 = vector.shape_cast %183 : vector<1x32x16xbf16> to vector<32x16xbf16>
    %185 = vector.extract_strided_slice %118 {offsets = [0, 1536], sizes = [16, 128], strides = [1, 1]} : vector<16x2048xbf16> to vector<16x128xbf16>
    %cst_57 = arith.constant dense<0.000000e+00> : vector<32x128xf32>
    %186 = tpu.matmul %184, %185, %cst_57 {dimension_numbers = #tpu.dot_dimension_numbers<[1], [0], [0], [1], [0, 0, 1, 1], [], []>} : vector<32x16xbf16>, vector<16x128xbf16>, vector<32x128xf32> -> vector<32x128xf32>
    %187 = arith.addf %182, %186 : vector<32x128xf32>
    %188 = vector.extract_strided_slice %119 {offsets = [13, 0, 0], sizes = [1, 32, 16], strides = [1, 1, 1]} : vector<16x32x16xbf16> to vector<1x32x16xbf16>
    %189 = vector.shape_cast %188 : vector<1x32x16xbf16> to vector<32x16xbf16>
    %190 = vector.extract_strided_slice %118 {offsets = [0, 1664], sizes = [16, 128], strides = [1, 1]} : vector<16x2048xbf16> to vector<16x128xbf16>
    %cst_58 = arith.constant dense<0.000000e+00> : vector<32x128xf32>
    %191 = tpu.matmul %189, %190, %cst_58 {dimension_numbers = #tpu.dot_dimension_numbers<[1], [0], [0], [1], [0, 0, 1, 1], [], []>} : vector<32x16xbf16>, vector<16x128xbf16>, vector<32x128xf32> -> vector<32x128xf32>
    %192 = arith.addf %187, %191 : vector<32x128xf32>
    %193 = vector.extract_strided_slice %119 {offsets = [14, 0, 0], sizes = [1, 32, 16], strides = [1, 1, 1]} : vector<16x32x16xbf16> to vector<1x32x16xbf16>
    %194 = vector.shape_cast %193 : vector<1x32x16xbf16> to vector<32x16xbf16>
    %195 = vector.extract_strided_slice %118 {offsets = [0, 1792], sizes = [16, 128], strides = [1, 1]} : vector<16x2048xbf16> to vector<16x128xbf16>
    %cst_59 = arith.constant dense<0.000000e+00> : vector<32x128xf32>
    %196 = tpu.matmul %194, %195, %cst_59 {dimension_numbers = #tpu.dot_dimension_numbers<[1], [0], [0], [1], [0, 0, 1, 1], [], []>} : vector<32x16xbf16>, vector<16x128xbf16>, vector<32x128xf32> -> vector<32x128xf32>
    %197 = arith.addf %192, %196 : vector<32x128xf32>
    %198 = vector.extract_strided_slice %119 {offsets = [15, 0, 0], sizes = [1, 32, 16], strides = [1, 1, 1]} : vector<16x32x16xbf16> to vector<1x32x16xbf16>
    %199 = vector.shape_cast %198 : vector<1x32x16xbf16> to vector<32x16xbf16>
    %200 = vector.extract_strided_slice %118 {offsets = [0, 1920], sizes = [16, 128], strides = [1, 1]} : vector<16x2048xbf16> to vector<16x128xbf16>
    %cst_60 = arith.constant dense<0.000000e+00> : vector<32x128xf32>
    %201 = tpu.matmul %199, %200, %cst_60 {dimension_numbers = #tpu.dot_dimension_numbers<[1], [0], [0], [1], [0, 0, 1, 1], [], []>} : vector<32x16xbf16>, vector<16x128xbf16>, vector<32x128xf32> -> vector<32x128xf32>
    %202 = arith.addf %197, %201 : vector<32x128xf32>
    %cst_61 = arith.constant dense<0.000000e+00> : vector<32xf32>
    %203 = vector.multi_reduction <add>, %202, %cst_61 [1] : vector<32x128xf32> to vector<32xf32>
    %204 = vector.shape_cast %203 : vector<32xf32> to vector<32x1xf32>
    %cst_62 = arith.constant 1.280000e+02 : f32
    %205 = vector.broadcast %cst_62 : f32 to vector<32x1xf32>
    %206 = arith.divf %204, %205 : vector<32x1xf32>
    %207 = arith.mulf %202, %202 : vector<32x128xf32>
    %cst_63 = arith.constant dense<0.000000e+00> : vector<32xf32>
    %208 = vector.multi_reduction <add>, %207, %cst_63 [1] : vector<32x128xf32> to vector<32xf32>
    %209 = vector.shape_cast %208 : vector<32xf32> to vector<32x1xf32>
    %cst_64 = arith.constant 1.280000e+02 : f32
    %210 = vector.broadcast %cst_64 : f32 to vector<32x1xf32>
    %211 = arith.divf %209, %210 : vector<32x1xf32>
    %212 = arith.mulf %206, %206 : vector<32x1xf32>
    %213 = arith.subf %211, %212 : vector<32x1xf32>
    %214 = vector.broadcast %206 : vector<32x1xf32> to vector<32x128xf32>
    %215 = arith.subf %202, %214 : vector<32x128xf32>
    %cst_65 = arith.constant 9.99999974E-6 : f32
    %216 = vector.broadcast %cst_65 : f32 to vector<32x1xf32>
    %217 = arith.addf %213, %216 : vector<32x1xf32>
    %218 = math.rsqrt %217 : vector<32x1xf32>
    %219 = arith.mulf %120, %218 : vector<32x1xf32>
    %220 = vector.broadcast %219 : vector<32x1xf32> to vector<32x128xf32>
    %221 = arith.mulf %215, %220 : vector<32x128xf32>
    %222 = vector.broadcast %121 : vector<32x1xf32> to vector<32x128xf32>
    %223 = arith.addf %221, %222 : vector<32x128xf32>
    %cst_66 = arith.constant 2.000000e-01 : f32
    %224 = vector.broadcast %cst_66 : f32 to vector<32x128xf32>
    %225 = arith.mulf %224, %223 : vector<32x128xf32>
    %226 = arith.maximumf %223, %225 : vector<32x128xf32>
    %227 = arith.truncf %226 : vector<32x128xf32> to vector<32x128xbf16>
    %c0_67 = arith.constant 0 : index
    %c0_68 = arith.constant 0 : index
    %228 = vector.load %arg9[%c0_67, %c0_68] : memref<128x512xbf16, #tpu.memory_space<vmem>>, vector<128x512xbf16>
    %cst_69 = arith.constant dense<0.000000e+00> : vector<32x512xf32>
    %229 = tpu.matmul %227, %228, %cst_69 {dimension_numbers = #tpu.dot_dimension_numbers<[1], [0], [0], [1], [0, 0, 1, 1], [], []>} : vector<32x128xbf16>, vector<128x512xbf16>, vector<32x512xf32> -> vector<32x512xf32>
    %230 = arith.truncf %229 : vector<32x512xf32> to vector<32x512xbf16>
    %c0_70 = arith.constant 0 : index
    %c0_71 = arith.constant 0 : index
    %c0_72 = arith.constant 0 : index
    %231 = vector.load %arg10[%c0_70, %c0_71, %c0_72] : memref<16x64x32xbf16, #tpu.memory_space<vmem>>, vector<16x64x32xbf16>
    %c0_73 = arith.constant 0 : index
    %c0_74 = arith.constant 0 : index
    %232 = vector.load %arg11[%c0_73, %c0_74] : memref<64x1xf32, #tpu.memory_space<vmem>>, vector<64x1xf32>
    %c0_75 = arith.constant 0 : index
    %c0_76 = arith.constant 0 : index
    %233 = vector.load %arg12[%c0_75, %c0_76] : memref<64x1xf32, #tpu.memory_space<vmem>>, vector<64x1xf32>
    %cst_77 = arith.constant 0.000000e+00 : f32
    %234 = vector.broadcast %cst_77 : f32 to vector<64x32xf32>
    %235 = vector.extract_strided_slice %231 {offsets = [0, 0, 0], sizes = [1, 64, 32], strides = [1, 1, 1]} : vector<16x64x32xbf16> to vector<1x64x32xbf16>
    %236 = vector.shape_cast %235 : vector<1x64x32xbf16> to vector<64x32xbf16>
    %237 = vector.extract_strided_slice %230 {offsets = [0, 0], sizes = [32, 32], strides = [1, 1]} : vector<32x512xbf16> to vector<32x32xbf16>
    %cst_78 = arith.constant dense<0.000000e+00> : vector<64x32xf32>
    %238 = tpu.matmul %236, %237, %cst_78 {dimension_numbers = #tpu.dot_dimension_numbers<[1], [0], [0], [1], [0, 0, 1, 1], [], []>} : vector<64x32xbf16>, vector<32x32xbf16>, vector<64x32xf32> -> vector<64x32xf32>
    %239 = arith.addf %234, %238 : vector<64x32xf32>
    %240 = vector.extract_strided_slice %231 {offsets = [1, 0, 0], sizes = [1, 64, 32], strides = [1, 1, 1]} : vector<16x64x32xbf16> to vector<1x64x32xbf16>
    %241 = vector.shape_cast %240 : vector<1x64x32xbf16> to vector<64x32xbf16>
    %242 = vector.extract_strided_slice %230 {offsets = [0, 32], sizes = [32, 32], strides = [1, 1]} : vector<32x512xbf16> to vector<32x32xbf16>
    %cst_79 = arith.constant dense<0.000000e+00> : vector<64x32xf32>
    %243 = tpu.matmul %241, %242, %cst_79 {dimension_numbers = #tpu.dot_dimension_numbers<[1], [0], [0], [1], [0, 0, 1, 1], [], []>} : vector<64x32xbf16>, vector<32x32xbf16>, vector<64x32xf32> -> vector<64x32xf32>
    %244 = arith.addf %239, %243 : vector<64x32xf32>
    %245 = vector.extract_strided_slice %231 {offsets = [2, 0, 0], sizes = [1, 64, 32], strides = [1, 1, 1]} : vector<16x64x32xbf16> to vector<1x64x32xbf16>
    %246 = vector.shape_cast %245 : vector<1x64x32xbf16> to vector<64x32xbf16>
    %247 = vector.extract_strided_slice %230 {offsets = [0, 64], sizes = [32, 32], strides = [1, 1]} : vector<32x512xbf16> to vector<32x32xbf16>
    %cst_80 = arith.constant dense<0.000000e+00> : vector<64x32xf32>
    %248 = tpu.matmul %246, %247, %cst_80 {dimension_numbers = #tpu.dot_dimension_numbers<[1], [0], [0], [1], [0, 0, 1, 1], [], []>} : vector<64x32xbf16>, vector<32x32xbf16>, vector<64x32xf32> -> vector<64x32xf32>
    %249 = arith.addf %244, %248 : vector<64x32xf32>
    %250 = vector.extract_strided_slice %231 {offsets = [3, 0, 0], sizes = [1, 64, 32], strides = [1, 1, 1]} : vector<16x64x32xbf16> to vector<1x64x32xbf16>
    %251 = vector.shape_cast %250 : vector<1x64x32xbf16> to vector<64x32xbf16>
    %252 = vector.extract_strided_slice %230 {offsets = [0, 96], sizes = [32, 32], strides = [1, 1]} : vector<32x512xbf16> to vector<32x32xbf16>
    %cst_81 = arith.constant dense<0.000000e+00> : vector<64x32xf32>
    %253 = tpu.matmul %251, %252, %cst_81 {dimension_numbers = #tpu.dot_dimension_numbers<[1], [0], [0], [1], [0, 0, 1, 1], [], []>} : vector<64x32xbf16>, vector<32x32xbf16>, vector<64x32xf32> -> vector<64x32xf32>
    %254 = arith.addf %249, %253 : vector<64x32xf32>
    %255 = vector.extract_strided_slice %231 {offsets = [4, 0, 0], sizes = [1, 64, 32], strides = [1, 1, 1]} : vector<16x64x32xbf16> to vector<1x64x32xbf16>
    %256 = vector.shape_cast %255 : vector<1x64x32xbf16> to vector<64x32xbf16>
    %257 = vector.extract_strided_slice %230 {offsets = [0, 128], sizes = [32, 32], strides = [1, 1]} : vector<32x512xbf16> to vector<32x32xbf16>
    %cst_82 = arith.constant dense<0.000000e+00> : vector<64x32xf32>
    %258 = tpu.matmul %256, %257, %cst_82 {dimension_numbers = #tpu.dot_dimension_numbers<[1], [0], [0], [1], [0, 0, 1, 1], [], []>} : vector<64x32xbf16>, vector<32x32xbf16>, vector<64x32xf32> -> vector<64x32xf32>
    %259 = arith.addf %254, %258 : vector<64x32xf32>
    %260 = vector.extract_strided_slice %231 {offsets = [5, 0, 0], sizes = [1, 64, 32], strides = [1, 1, 1]} : vector<16x64x32xbf16> to vector<1x64x32xbf16>
    %261 = vector.shape_cast %260 : vector<1x64x32xbf16> to vector<64x32xbf16>
    %262 = vector.extract_strided_slice %230 {offsets = [0, 160], sizes = [32, 32], strides = [1, 1]} : vector<32x512xbf16> to vector<32x32xbf16>
    %cst_83 = arith.constant dense<0.000000e+00> : vector<64x32xf32>
    %263 = tpu.matmul %261, %262, %cst_83 {dimension_numbers = #tpu.dot_dimension_numbers<[1], [0], [0], [1], [0, 0, 1, 1], [], []>} : vector<64x32xbf16>, vector<32x32xbf16>, vector<64x32xf32> -> vector<64x32xf32>
    %264 = arith.addf %259, %263 : vector<64x32xf32>
    %265 = vector.extract_strided_slice %231 {offsets = [6, 0, 0], sizes = [1, 64, 32], strides = [1, 1, 1]} : vector<16x64x32xbf16> to vector<1x64x32xbf16>
    %266 = vector.shape_cast %265 : vector<1x64x32xbf16> to vector<64x32xbf16>
    %267 = vector.extract_strided_slice %230 {offsets = [0, 192], sizes = [32, 32], strides = [1, 1]} : vector<32x512xbf16> to vector<32x32xbf16>
    %cst_84 = arith.constant dense<0.000000e+00> : vector<64x32xf32>
    %268 = tpu.matmul %266, %267, %cst_84 {dimension_numbers = #tpu.dot_dimension_numbers<[1], [0], [0], [1], [0, 0, 1, 1], [], []>} : vector<64x32xbf16>, vector<32x32xbf16>, vector<64x32xf32> -> vector<64x32xf32>
    %269 = arith.addf %264, %268 : vector<64x32xf32>
    %270 = vector.extract_strided_slice %231 {offsets = [7, 0, 0], sizes = [1, 64, 32], strides = [1, 1, 1]} : vector<16x64x32xbf16> to vector<1x64x32xbf16>
    %271 = vector.shape_cast %270 : vector<1x64x32xbf16> to vector<64x32xbf16>
    %272 = vector.extract_strided_slice %230 {offsets = [0, 224], sizes = [32, 32], strides = [1, 1]} : vector<32x512xbf16> to vector<32x32xbf16>
    %cst_85 = arith.constant dense<0.000000e+00> : vector<64x32xf32>
    %273 = tpu.matmul %271, %272, %cst_85 {dimension_numbers = #tpu.dot_dimension_numbers<[1], [0], [0], [1], [0, 0, 1, 1], [], []>} : vector<64x32xbf16>, vector<32x32xbf16>, vector<64x32xf32> -> vector<64x32xf32>
    %274 = arith.addf %269, %273 : vector<64x32xf32>
    %275 = vector.extract_strided_slice %231 {offsets = [8, 0, 0], sizes = [1, 64, 32], strides = [1, 1, 1]} : vector<16x64x32xbf16> to vector<1x64x32xbf16>
    %276 = vector.shape_cast %275 : vector<1x64x32xbf16> to vector<64x32xbf16>
    %277 = vector.extract_strided_slice %230 {offsets = [0, 256], sizes = [32, 32], strides = [1, 1]} : vector<32x512xbf16> to vector<32x32xbf16>
    %cst_86 = arith.constant dense<0.000000e+00> : vector<64x32xf32>
    %278 = tpu.matmul %276, %277, %cst_86 {dimension_numbers = #tpu.dot_dimension_numbers<[1], [0], [0], [1], [0, 0, 1, 1], [], []>} : vector<64x32xbf16>, vector<32x32xbf16>, vector<64x32xf32> -> vector<64x32xf32>
    %279 = arith.addf %274, %278 : vector<64x32xf32>
    %280 = vector.extract_strided_slice %231 {offsets = [9, 0, 0], sizes = [1, 64, 32], strides = [1, 1, 1]} : vector<16x64x32xbf16> to vector<1x64x32xbf16>
    %281 = vector.shape_cast %280 : vector<1x64x32xbf16> to vector<64x32xbf16>
    %282 = vector.extract_strided_slice %230 {offsets = [0, 288], sizes = [32, 32], strides = [1, 1]} : vector<32x512xbf16> to vector<32x32xbf16>
    %cst_87 = arith.constant dense<0.000000e+00> : vector<64x32xf32>
    %283 = tpu.matmul %281, %282, %cst_87 {dimension_numbers = #tpu.dot_dimension_numbers<[1], [0], [0], [1], [0, 0, 1, 1], [], []>} : vector<64x32xbf16>, vector<32x32xbf16>, vector<64x32xf32> -> vector<64x32xf32>
    %284 = arith.addf %279, %283 : vector<64x32xf32>
    %285 = vector.extract_strided_slice %231 {offsets = [10, 0, 0], sizes = [1, 64, 32], strides = [1, 1, 1]} : vector<16x64x32xbf16> to vector<1x64x32xbf16>
    %286 = vector.shape_cast %285 : vector<1x64x32xbf16> to vector<64x32xbf16>
    %287 = vector.extract_strided_slice %230 {offsets = [0, 320], sizes = [32, 32], strides = [1, 1]} : vector<32x512xbf16> to vector<32x32xbf16>
    %cst_88 = arith.constant dense<0.000000e+00> : vector<64x32xf32>
    %288 = tpu.matmul %286, %287, %cst_88 {dimension_numbers = #tpu.dot_dimension_numbers<[1], [0], [0], [1], [0, 0, 1, 1], [], []>} : vector<64x32xbf16>, vector<32x32xbf16>, vector<64x32xf32> -> vector<64x32xf32>
    %289 = arith.addf %284, %288 : vector<64x32xf32>
    %290 = vector.extract_strided_slice %231 {offsets = [11, 0, 0], sizes = [1, 64, 32], strides = [1, 1, 1]} : vector<16x64x32xbf16> to vector<1x64x32xbf16>
    %291 = vector.shape_cast %290 : vector<1x64x32xbf16> to vector<64x32xbf16>
    %292 = vector.extract_strided_slice %230 {offsets = [0, 352], sizes = [32, 32], strides = [1, 1]} : vector<32x512xbf16> to vector<32x32xbf16>
    %cst_89 = arith.constant dense<0.000000e+00> : vector<64x32xf32>
    %293 = tpu.matmul %291, %292, %cst_89 {dimension_numbers = #tpu.dot_dimension_numbers<[1], [0], [0], [1], [0, 0, 1, 1], [], []>} : vector<64x32xbf16>, vector<32x32xbf16>, vector<64x32xf32> -> vector<64x32xf32>
    %294 = arith.addf %289, %293 : vector<64x32xf32>
    %295 = vector.extract_strided_slice %231 {offsets = [12, 0, 0], sizes = [1, 64, 32], strides = [1, 1, 1]} : vector<16x64x32xbf16> to vector<1x64x32xbf16>
    %296 = vector.shape_cast %295 : vector<1x64x32xbf16> to vector<64x32xbf16>
    %297 = vector.extract_strided_slice %230 {offsets = [0, 384], sizes = [32, 32], strides = [1, 1]} : vector<32x512xbf16> to vector<32x32xbf16>
    %cst_90 = arith.constant dense<0.000000e+00> : vector<64x32xf32>
    %298 = tpu.matmul %296, %297, %cst_90 {dimension_numbers = #tpu.dot_dimension_numbers<[1], [0], [0], [1], [0, 0, 1, 1], [], []>} : vector<64x32xbf16>, vector<32x32xbf16>, vector<64x32xf32> -> vector<64x32xf32>
    %299 = arith.addf %294, %298 : vector<64x32xf32>
    %300 = vector.extract_strided_slice %231 {offsets = [13, 0, 0], sizes = [1, 64, 32], strides = [1, 1, 1]} : vector<16x64x32xbf16> to vector<1x64x32xbf16>
    %301 = vector.shape_cast %300 : vector<1x64x32xbf16> to vector<64x32xbf16>
    %302 = vector.extract_strided_slice %230 {offsets = [0, 416], sizes = [32, 32], strides = [1, 1]} : vector<32x512xbf16> to vector<32x32xbf16>
    %cst_91 = arith.constant dense<0.000000e+00> : vector<64x32xf32>
    %303 = tpu.matmul %301, %302, %cst_91 {dimension_numbers = #tpu.dot_dimension_numbers<[1], [0], [0], [1], [0, 0, 1, 1], [], []>} : vector<64x32xbf16>, vector<32x32xbf16>, vector<64x32xf32> -> vector<64x32xf32>
    %304 = arith.addf %299, %303 : vector<64x32xf32>
    %305 = vector.extract_strided_slice %231 {offsets = [14, 0, 0], sizes = [1, 64, 32], strides = [1, 1, 1]} : vector<16x64x32xbf16> to vector<1x64x32xbf16>
    %306 = vector.shape_cast %305 : vector<1x64x32xbf16> to vector<64x32xbf16>
    %307 = vector.extract_strided_slice %230 {offsets = [0, 448], sizes = [32, 32], strides = [1, 1]} : vector<32x512xbf16> to vector<32x32xbf16>
    %cst_92 = arith.constant dense<0.000000e+00> : vector<64x32xf32>
    %308 = tpu.matmul %306, %307, %cst_92 {dimension_numbers = #tpu.dot_dimension_numbers<[1], [0], [0], [1], [0, 0, 1, 1], [], []>} : vector<64x32xbf16>, vector<32x32xbf16>, vector<64x32xf32> -> vector<64x32xf32>
    %309 = arith.addf %304, %308 : vector<64x32xf32>
    %310 = vector.extract_strided_slice %231 {offsets = [15, 0, 0], sizes = [1, 64, 32], strides = [1, 1, 1]} : vector<16x64x32xbf16> to vector<1x64x32xbf16>
    %311 = vector.shape_cast %310 : vector<1x64x32xbf16> to vector<64x32xbf16>
    %312 = vector.extract_strided_slice %230 {offsets = [0, 480], sizes = [32, 32], strides = [1, 1]} : vector<32x512xbf16> to vector<32x32xbf16>
    %cst_93 = arith.constant dense<0.000000e+00> : vector<64x32xf32>
    %313 = tpu.matmul %311, %312, %cst_93 {dimension_numbers = #tpu.dot_dimension_numbers<[1], [0], [0], [1], [0, 0, 1, 1], [], []>} : vector<64x32xbf16>, vector<32x32xbf16>, vector<64x32xf32> -> vector<64x32xf32>
    %314 = arith.addf %309, %313 : vector<64x32xf32>
    %cst_94 = arith.constant dense<0.000000e+00> : vector<64xf32>
    %315 = vector.multi_reduction <add>, %314, %cst_94 [1] : vector<64x32xf32> to vector<64xf32>
    %316 = vector.shape_cast %315 : vector<64xf32> to vector<64x1xf32>
    %cst_95 = arith.constant 3.200000e+01 : f32
    %317 = vector.broadcast %cst_95 : f32 to vector<64x1xf32>
    %318 = arith.divf %316, %317 : vector<64x1xf32>
    %319 = arith.mulf %314, %314 : vector<64x32xf32>
    %cst_96 = arith.constant dense<0.000000e+00> : vector<64xf32>
    %320 = vector.multi_reduction <add>, %319, %cst_96 [1] : vector<64x32xf32> to vector<64xf32>
    %321 = vector.shape_cast %320 : vector<64xf32> to vector<64x1xf32>
    %cst_97 = arith.constant 3.200000e+01 : f32
    %322 = vector.broadcast %cst_97 : f32 to vector<64x1xf32>
    %323 = arith.divf %321, %322 : vector<64x1xf32>
    %324 = arith.mulf %318, %318 : vector<64x1xf32>
    %325 = arith.subf %323, %324 : vector<64x1xf32>
    %326 = vector.broadcast %318 : vector<64x1xf32> to vector<64x32xf32>
    %327 = arith.subf %314, %326 : vector<64x32xf32>
    %cst_98 = arith.constant 9.99999974E-6 : f32
    %328 = vector.broadcast %cst_98 : f32 to vector<64x1xf32>
    %329 = arith.addf %325, %328 : vector<64x1xf32>
    %330 = math.rsqrt %329 : vector<64x1xf32>
    %331 = arith.mulf %232, %330 : vector<64x1xf32>
    %332 = vector.broadcast %331 : vector<64x1xf32> to vector<64x32xf32>
    %333 = arith.mulf %327, %332 : vector<64x32xf32>
    %334 = vector.broadcast %233 : vector<64x1xf32> to vector<64x32xf32>
    %335 = arith.addf %333, %334 : vector<64x32xf32>
    %cst_99 = arith.constant 2.000000e-01 : f32
    %336 = vector.broadcast %cst_99 : f32 to vector<64x32xf32>
    %337 = arith.mulf %336, %335 : vector<64x32xf32>
    %338 = arith.maximumf %335, %337 : vector<64x32xf32>
    %c0_100 = arith.constant 0 : index
    %c0_101 = arith.constant 0 : index
    %339 = vector.load %arg13[%c0_100, %c0_101] : memref<64x32xf32, #tpu.memory_space<vmem>>, vector<64x32xf32>
    %340 = arith.mulf %338, %339 : vector<64x32xf32>
    %cst_102 = arith.constant dense<0.000000e+00> : vector<32xf32>
    %341 = vector.multi_reduction <add>, %340, %cst_102 [0] : vector<64x32xf32> to vector<32xf32>
    %342 = vector.shape_cast %341 : vector<32xf32> to vector<1x32xf32>
    %c0_103 = arith.constant 0 : index
    %c0_104 = arith.constant 0 : index
    %343 = vector.load %arg14[%c0_103, %c0_104] : memref<32x128xf32, #tpu.memory_space<vmem>>, vector<32x128xf32>
    %cst_105 = arith.constant dense<0.000000e+00> : vector<1x128xf32>
    %344 = tpu.matmul %342, %343, %cst_105 {dimension_numbers = #tpu.dot_dimension_numbers<[1], [0], [0], [1], [0, 0, 1, 1], [], []>} : vector<1x32xf32>, vector<32x128xf32>, vector<1x128xf32> -> vector<1x128xf32>
    %cst_106 = arith.constant 0.000000e+00 : f32
    %345 = vector.broadcast %cst_106 : f32 to vector<1x128xf32>
    %346 = arith.subf %345, %344 : vector<1x128xf32>
    %347 = math.exp %346 : vector<1x128xf32>
    %cst_107 = arith.constant 1.000000e+00 : f32
    %348 = vector.broadcast %cst_107 : f32 to vector<1x128xf32>
    %349 = arith.addf %348, %347 : vector<1x128xf32>
    %cst_108 = arith.constant 1.000000e+00 : f32
    %350 = vector.broadcast %cst_108 : f32 to vector<1x128xf32>
    %351 = arith.divf %350, %349 : vector<1x128xf32>
    %352 = vector.shape_cast %351 : vector<1x128xf32> to vector<1x128xf32>
    %353 = vector.broadcast %352 : vector<1x128xf32> to vector<8x128xf32>
    %c0_109 = arith.constant 0 : index
    %c0_110 = arith.constant 0 : index
    %354 = vector.load %arg15[%c0_109, %c0_110] : memref<8x128xf32, #tpu.memory_space<vmem>>, vector<8x128xf32>
    tpu.vector_store %arg15[%c0_109, %c0_110], %353 {strides = array<i32>} : memref<8x128xf32, #tpu.memory_space<vmem>>, vector<8x128xf32>,
    return
  }
}

</mosaic_0001>

<llo_original>
// kernel: discriminator_forward.1
$region0: #{discriminator_forward.1}
  #allocation0 [shape = 'u32[]', space=smem, size = 0x4, offset = 0x4, fixed_abs, tag = 'smem constant byte address 0x4 - core index']
  #allocation1 [shape = 'u32[144,128]{1,0:T(1,128)}', space=vmem, size = 0x12000, scoped, tag = 'internal scratch']
  %s0 = inlined_call_operand.vmem [shape: bf16[48,8192], index: 0, kind: input, shape index: {}]
  %s1 = inlined_call_operand.vmem [shape: bf16[8,48], index: 1, kind: input, shape index: {}]
  %s2 = inlined_call_operand.vmem [shape: bf16[16,16,8], index: 2, kind: input, shape index: {}]
  %s3 = inlined_call_operand.vmem [shape: f32[16,1], index: 3, kind: input, shape index: {}]
  %s4 = inlined_call_operand.vmem [shape: f32[16,1], index: 4, kind: input, shape index: {}]
  %s5 = inlined_call_operand.vmem [shape: bf16[512,2048], index: 5, kind: input, shape index: {}]
  %s6 = inlined_call_operand.vmem [shape: bf16[16,32,16], index: 6, kind: input, shape index: {}]
  %s7 = inlined_call_operand.vmem [shape: f32[32,1], index: 7, kind: input, shape index: {}]
  %s8 = inlined_call_operand.vmem [shape: f32[32,1], index: 8, kind: input, shape index: {}]
  %s9 = inlined_call_operand.vmem [shape: bf16[128,512], index: 9, kind: input, shape index: {}]
  %s10 = inlined_call_operand.vmem [shape: bf16[16,64,32], index: 10, kind: input, shape index: {}]
  %s11 = inlined_call_operand.vmem [shape: f32[64,1], index: 11, kind: input, shape index: {}]
  %s12 = inlined_call_operand.vmem [shape: f32[64,1], index: 12, kind: input, shape index: {}]
  %s13 = inlined_call_operand.vmem [shape: f32[64,32], index: 13, kind: input, shape index: {}]
  %s14 = inlined_call_operand.vmem [shape: f32[32,128], index: 14, kind: input, shape index: {}]
  %s15 = inlined_call_operand.vmem [shape: f32[8,128], index: 15, kind: output, shape index: {}]
  %s16 = sld [smem:[#allocation0]]
  $region70: #{discriminator_forward.1} parent=0
    _
  %s18 = ssub.s32 1, %s16
  %s19 = scalar_select 0, %s18, %s16
  // Predicated region
  $region2: #{discriminator_forward.1} parent=0 // pred_check
    _
  $region3: #{discriminator_forward.1} parent=0 // pred_check_branch
    %21 = sbr.rel (0) target = $region5
  $region4: #{discriminator_forward.1} parent=0 // pred_region
    _
  $region5: #{discriminator_forward.1} parent=0 // pred_fallthru
    _
  // Predicated region
  $region6: #{discriminator_forward.1} parent=0 // pred_check
    _
  $region7: #{discriminator_forward.1} parent=0 // pred_check_branch
    %23 = sbr.rel (0) target = $region9
  $region8: #{discriminator_forward.1} parent=0 // pred_region
    _
  $region9: #{discriminator_forward.1} parent=0 // pred_fallthru
    _
  // Predicated region
  $region10: #{discriminator_forward.1} parent=0 // pred_check
    _
  $region11: #{discriminator_forward.1} parent=0 // pred_check_branch
    %25 = sbr.rel (0) target = $region13
  $region12: #{discriminator_forward.1} parent=0 // pred_region
    _
  $region13: #{discriminator_forward.1} parent=0 // pred_fallthru
    _
  // Predicated region
  $region14: #{discriminator_forward.1} parent=0 // pred_check
    _
  $region15: #{discriminator_forward.1} parent=0 // pred_check_branch
    %27 = sbr.rel (0) target = $region17
  $region16: #{discriminator_forward.1} parent=0 // pred_region
    _
  $region17: #{discriminator_forward.1} parent=0 // pred_fallthru
    _
  // Predicated region
  $region18: #{discriminator_forward.1} parent=0 // pred_check
    _
  $region19: #{discriminator_forward.1} parent=0 // pred_check_branch
    %29 = sbr.rel (0) target = $region21
  $region20: #{discriminator_forward.1} parent=0 // pred_region
    _
  $region21: #{discriminator_forward.1} parent=0 // pred_fallthru
    _
  // Predicated region
  $region22: #{discriminator_forward.1} parent=0 // pred_check
    _
  $region23: #{discriminator_forward.1} parent=0 // pred_check_branch
    %31 = sbr.rel (0) target = $region25
  $region24: #{discriminator_forward.1} parent=0 // pred_region
    _
  $region25: #{discriminator_forward.1} parent=0 // pred_fallthru
    _
  // Predicated region
  $region26: #{discriminator_forward.1} parent=0 // pred_check
    _
  $region27: #{discriminator_forward.1} parent=0 // pred_check_branch
    %33 = sbr.rel (0) target = $region29
  $region28: #{discriminator_forward.1} parent=0 // pred_region
    _
  $region29: #{discriminator_forward.1} parent=0 // pred_fallthru
    _
  // Predicated region
  $region30: #{discriminator_forward.1} parent=0 // pred_check
    _
  $region31: #{discriminator_forward.1} parent=0 // pred_check_branch
    %35 = sbr.rel (0) target = $region33
  $region32: #{discriminator_forward.1} parent=0 // pred_region
    _
  $region33: #{discriminator_forward.1} parent=0 // pred_fallthru
    _
  // Predicated region
  $region34: #{discriminator_forward.1} parent=0 // pred_check
    _
  $region35: #{discriminator_forward.1} parent=0 // pred_check_branch
    %37 = sbr.rel (0) target = $region37
  $region36: #{discriminator_forward.1} parent=0 // pred_region
    _
  $region37: #{discriminator_forward.1} parent=0 // pred_fallthru
    _
  // Predicated region
  $region38: #{discriminator_forward.1} parent=0 // pred_check
    _
  $region39: #{discriminator_forward.1} parent=0 // pred_check_branch
    %39 = sbr.rel (0) target = $region41
  $region40: #{discriminator_forward.1} parent=0 // pred_region
    _
  $region41: #{discriminator_forward.1} parent=0 // pred_fallthru
    _
  // Predicated region
  $region42: #{discriminator_forward.1} parent=0 // pred_check
    _
  $region43: #{discriminator_forward.1} parent=0 // pred_check_branch
    %41 = sbr.rel (0) target = $region45
  $region44: #{discriminator_forward.1} parent=0 // pred_region
    _
  $region45: #{discriminator_forward.1} parent=0 // pred_fallthru
    _
  // Predicated region
  $region46: #{discriminator_forward.1} parent=0 // pred_check
    _
  $region47: #{discriminator_forward.1} parent=0 // pred_check_branch
    %43 = sbr.rel (0) target = $region49
  $region48: #{discriminator_forward.1} parent=0 // pred_region
    _
  $region49: #{discriminator_forward.1} parent=0 // pred_fallthru
    _
  // Predicated region
  $region50: #{discriminator_forward.1} parent=0 // pred_check
    _
  $region51: #{discriminator_forward.1} parent=0 // pred_check_branch
    %45 = sbr.rel (0) target = $region53
  $region52: #{discriminator_forward.1} parent=0 // pred_region
    _
  $region53: #{discriminator_forward.1} parent=0 // pred_fallthru
    _
  // Predicated region
  $region54: #{discriminator_forward.1} parent=0 // pred_check
    _
  $region55: #{discriminator_forward.1} parent=0 // pred_check_branch
    %47 = sbr.rel (0) target = $region57
  $region56: #{discriminator_forward.1} parent=0 // pred_region
    _
  $region57: #{discriminator_forward.1} parent=0 // pred_fallthru
    _
  // Predicated region
  $region58: #{discriminator_forward.1} parent=0 // pred_check
    _
  $region59: #{discriminator_forward.1} parent=0 // pred_check_branch
    %49 = sbr.rel (0) target = $region61
  $region60: #{discriminator_forward.1} parent=0 // pred_region
    _
  $region61: #{discriminator_forward.1} parent=0 // pred_fallthru
    _
  %v51 = vld [vmem:[%s1] sm:$0xf]
  %v52 = vld [vmem:[%s0] sm:$0xff]
  %v53 = vld [vmem:[%s0 + $0x8] sm:$0xff]
  %v54 = vld [vmem:[%s0 + $0x10] sm:$0xff]
  %v55 = vld [vmem:[%s0 + $0x18] sm:$0xff]
  %v56 = vld [vmem:[%s0 + $0x20] sm:$0xff]
  %v57 = vld [vmem:[%s0 + $0x28] sm:$0xff]
  %v58 = vld [vmem:[%s0 + $0x30] sm:$0xff]
  %v59 = vld [vmem:[%s0 + $0x38] sm:$0xff]
  %v60 = vld [vmem:[%s0 + $0x40] sm:$0xff]
  %v61 = vld [vmem:[%s0 + $0x48] sm:$0xff]
  %v62 = vld [vmem:[%s0 + $0x50] sm:$0xff]
  %v63 = vld [vmem:[%s0 + $0x58] sm:$0xff]
  %v64 = vld [vmem:[%s0 + $0x60] sm:$0xff]
  %v65 = vld [vmem:[%s0 + $0x68] sm:$0xff]
  %v66 = vld [vmem:[%s0 + $0x70] sm:$0xff]
  %v67 = vld [vmem:[%s0 + $0x78] sm:$0xff]
  %v68 = vld [vmem:[%s0 + $0x80] sm:$0xff]
  %v69 = vld [vmem:[%s0 + $0x88] sm:$0xff]
  %v70 = vld [vmem:[%s0 + $0x90] sm:$0xff]
  %v71 = vld [vmem:[%s0 + $0x98] sm:$0xff]
  %v72 = vld [vmem:[%s0 + $0xa0] sm:$0xff]
  %v73 = vld [vmem:[%s0 + $0xa8] sm:$0xff]
  %v74 = vld [vmem:[%s0 + $0xb0] sm:$0xff]
  %v75 = vld [vmem:[%s0 + $0xb8] sm:$0xff]
  %v76 = vld [vmem:[%s0 + $0xc0] sm:$0xff]
  %v77 = vld [vmem:[%s0 + $0xc8] sm:$0xff]
  %v78 = vld [vmem:[%s0 + $0xd0] sm:$0xff]
  %v79 = vld [vmem:[%s0 + $0xd8] sm:$0xff]
  %v80 = vld [vmem:[%s0 + $0xe0] sm:$0xff]
  %v81 = vld [vmem:[%s0 + $0xe8] sm:$0xff]
  %v82 = vld [vmem:[%s0 + $0xf0] sm:$0xff]
  %v83 = vld [vmem:[%s0 + $0xf8] sm:$0xff]
  %v84 = vld [vmem:[%s0 + $0x100] sm:$0xff]
  %v85 = vld [vmem:[%s0 + $0x108] sm:$0xff]
  %v86 = vld [vmem:[%s0 + $0x110] sm:$0xff]
  %v87 = vld [vmem:[%s0 + $0x118] sm:$0xff]
  %v88 = vld [vmem:[%s0 + $0x120] sm:$0xff]
  %v89 = vld [vmem:[%s0 + $0x128] sm:$0xff]
  %v90 = vld [vmem:[%s0 + $0x130] sm:$0xff]
  %v91 = vld [vmem:[%s0 + $0x138] sm:$0xff]
  %v92 = vld [vmem:[%s0 + $0x140] sm:$0xff]
  %v93 = vld [vmem:[%s0 + $0x148] sm:$0xff]
  %v94 = vld [vmem:[%s0 + $0x150] sm:$0xff]
  %v95 = vld [vmem:[%s0 + $0x158] sm:$0xff]
  %v96 = vld [vmem:[%s0 + $0x160] sm:$0xff]
  %v97 = vld [vmem:[%s0 + $0x168] sm:$0xff]
  %v98 = vld [vmem:[%s0 + $0x170] sm:$0xff]
  %v99 = vld [vmem:[%s0 + $0x178] sm:$0xff]
  %v100 = vld [vmem:[%s0 + $0x180] sm:$0xff]
  %v101 = vld [vmem:[%s0 + $0x188] sm:$0xff]
  %v102 = vld [vmem:[%s0 + $0x190] sm:$0xff]
  %v103 = vld [vmem:[%s0 + $0x198] sm:$0xff]
  %v104 = vld [vmem:[%s0 + $0x1a0] sm:$0xff]
  %v105 = vld [vmem:[%s0 + $0x1a8] sm:$0xff]
  %v106 = vld [vmem:[%s0 + $0x1b0] sm:$0xff]
  %v107 = vld [vmem:[%s0 + $0x1b8] sm:$0xff]
  %v108 = vld [vmem:[%s0 + $0x1c0] sm:$0xff]
  %v109 = vld [vmem:[%s0 + $0x1c8] sm:$0xff]
  %v110 = vld [vmem:[%s0 + $0x1d0] sm:$0xff]
  %v111 = vld [vmem:[%s0 + $0x1d8] sm:$0xff]
  %v112 = vld [vmem:[%s0 + $0x1e0] sm:$0xff]
  %v113 = vld [vmem:[%s0 + $0x1e8] sm:$0xff]
  %v114 = vld [vmem:[%s0 + $0x1f0] sm:$0xff]
  %v115 = vld [vmem:[%s0 + $0x1f8] sm:$0xff]
  %v116 = vld [vmem:[%s0 + $0x200] sm:$0xff]
  %v117 = vld [vmem:[%s0 + $0x208] sm:$0xff]
  %v118 = vld [vmem:[%s0 + $0x210] sm:$0xff]
  %v119 = vld [vmem:[%s0 + $0x218] sm:$0xff]
  %v120 = vld [vmem:[%s0 + $0x220] sm:$0xff]
  %v121 = vld [vmem:[%s0 + $0x228] sm:$0xff]
  %v122 = vld [vmem:[%s0 + $0x230] sm:$0xff]
  %v123 = vld [vmem:[%s0 + $0x238] sm:$0xff]
  %v124 = vld [vmem:[%s0 + $0x240] sm:$0xff]
  %v125 = vld [vmem:[%s0 + $0x248] sm:$0xff]
  %v126 = vld [vmem:[%s0 + $0x250] sm:$0xff]
  %v127 = vld [vmem:[%s0 + $0x258] sm:$0xff]
  %v128 = vld [vmem:[%s0 + $0x260] sm:$0xff]
  %v129 = vld [vmem:[%s0 + $0x268] sm:$0xff]
  %v130 = vld [vmem:[%s0 + $0x270] sm:$0xff]
  %v131 = vld [vmem:[%s0 + $0x278] sm:$0xff]
  %v132 = vld [vmem:[%s0 + $0x280] sm:$0xff]
  %v133 = vld [vmem:[%s0 + $0x288] sm:$0xff]
  %v134 = vld [vmem:[%s0 + $0x290] sm:$0xff]
  %v135 = vld [vmem:[%s0 + $0x298] sm:$0xff]
  %v136 = vld [vmem:[%s0 + $0x2a0] sm:$0xff]
  %v137 = vld [vmem:[%s0 + $0x2a8] sm:$0xff]
  %v138 = vld [vmem:[%s0 + $0x2b0] sm:$0xff]
  %v139 = vld [vmem:[%s0 + $0x2b8] sm:$0xff]
  %v140 = vld [vmem:[%s0 + $0x2c0] sm:$0xff]
  %v141 = vld [vmem:[%s0 + $0x2c8] sm:$0xff]
  %v142 = vld [vmem:[%s0 + $0x2d0] sm:$0xff]
  %v143 = vld [vmem:[%s0 + $0x2d8] sm:$0xff]
  %v144 = vld [vmem:[%s0 + $0x2e0] sm:$0xff]
  %v145 = vld [vmem:[%s0 + $0x2e8] sm:$0xff]
  %v146 = vld [vmem:[%s0 + $0x2f0] sm:$0xff]
  %v147 = vld [vmem:[%s0 + $0x2f8] sm:$0xff]
  %v148 = vld [vmem:[%s0 + $0x300] sm:$0xff]
  %v149 = vld [vmem:[%s0 + $0x308] sm:$0xff]
  %v150 = vld [vmem:[%s0 + $0x310] sm:$0xff]
  %v151 = vld [vmem:[%s0 + $0x318] sm:$0xff]
  %v152 = vld [vmem:[%s0 + $0x320] sm:$0xff]
  %v153 = vld [vmem:[%s0 + $0x328] sm:$0xff]
  %v154 = vld [vmem:[%s0 + $0x330] sm:$0xff]
  %v155 = vld [vmem:[%s0 + $0x338] sm:$0xff]
  %v156 = vld [vmem:[%s0 + $0x340] sm:$0xff]
  %v157 = vld [vmem:[%s0 + $0x348] sm:$0xff]
  %v158 = vld [vmem:[%s0 + $0x350] sm:$0xff]
  %v159 = vld [vmem:[%s0 + $0x358] sm:$0xff]
  %v160 = vld [vmem:[%s0 + $0x360] sm:$0xff]
  %v161 = vld [vmem:[%s0 + $0x368] sm:$0xff]
  %v162 = vld [vmem:[%s0 + $0x370] sm:$0xff]
  %v163 = vld [vmem:[%s0 + $0x378] sm:$0xff]
  %v164 = vld [vmem:[%s0 + $0x380] sm:$0xff]
  %v165 = vld [vmem:[%s0 + $0x388] sm:$0xff]
  %v166 = vld [vmem:[%s0 + $0x390] sm:$0xff]
  %v167 = vld [vmem:[%s0 + $0x398] sm:$0xff]
  %v168 = vld [vmem:[%s0 + $0x3a0] sm:$0xff]
  %v169 = vld [vmem:[%s0 + $0x3a8] sm:$0xff]
  %v170 = vld [vmem:[%s0 + $0x3b0] sm:$0xff]
  %v171 = vld [vmem:[%s0 + $0x3b8] sm:$0xff]
  %v172 = vld [vmem:[%s0 + $0x3c0] sm:$0xff]
  %v173 = vld [vmem:[%s0 + $0x3c8] sm:$0xff]
  %v174 = vld [vmem:[%s0 + $0x3d0] sm:$0xff]
  %v175 = vld [vmem:[%s0 + $0x3d8] sm:$0xff]
  %v176 = vld [vmem:[%s0 + $0x3e0] sm:$0xff]
  %v177 = vld [vmem:[%s0 + $0x3e8] sm:$0xff]
  %v178 = vld [vmem:[%s0 + $0x3f0] sm:$0xff]
  %v179 = vld [vmem:[%s0 + $0x3f8] sm:$0xff]
  %v180 = vld [vmem:[%s0 + $0x400] sm:$0xff]
  %v181 = vld [vmem:[%s0 + $0x408] sm:$0xff]
  %v182 = vld [vmem:[%s0 + $0x410] sm:$0xff]
  %v183 = vld [vmem:[%s0 + $0x418] sm:$0xff]
  %v184 = vld [vmem:[%s0 + $0x420] sm:$0xff]
  %v185 = vld [vmem:[%s0 + $0x428] sm:$0xff]
  %v186 = vld [vmem:[%s0 + $0x430] sm:$0xff]
  %v187 = vld [vmem:[%s0 + $0x438] sm:$0xff]
  %v188 = vld [vmem:[%s0 + $0x440] sm:$0xff]
  %v189 = vld [vmem:[%s0 + $0x448] sm:$0xff]
  %v190 = vld [vmem:[%s0 + $0x450] sm:$0xff]
  %v191 = vld [vmem:[%s0 + $0x458] sm:$0xff]
  %v192 = vld [vmem:[%s0 + $0x460] sm:$0xff]
  %v193 = vld [vmem:[%s0 + $0x468] sm:$0xff]
  %v194 = vld [vmem:[%s0 + $0x470] sm:$0xff]
  %v195 = vld [vmem:[%s0 + $0x478] sm:$0xff]
  %v196 = vld [vmem:[%s0 + $0x480] sm:$0xff]
  %v197 = vld [vmem:[%s0 + $0x488] sm:$0xff]
  %v198 = vld [vmem:[%s0 + $0x490] sm:$0xff]
  %v199 = vld [vmem:[%s0 + $0x498] sm:$0xff]
  %v200 = vld [vmem:[%s0 + $0x4a0] sm:$0xff]
  %v201 = vld [vmem:[%s0 + $0x4a8] sm:$0xff]
  %v202 = vld [vmem:[%s0 + $0x4b0] sm:$0xff]
  %v203 = vld [vmem:[%s0 + $0x4b8] sm:$0xff]
  %v204 = vld [vmem:[%s0 + $0x4c0] sm:$0xff]
  %v205 = vld [vmem:[%s0 + $0x4c8] sm:$0xff]
  %v206 = vld [vmem:[%s0 + $0x4d0] sm:$0xff]
  %v207 = vld [vmem:[%s0 + $0x4d8] sm:$0xff]
  %v208 = vld [vmem:[%s0 + $0x4e0] sm:$0xff]
  %v209 = vld [vmem:[%s0 + $0x4e8] sm:$0xff]
  %v210 = vld [vmem:[%s0 + $0x4f0] sm:$0xff]
  %v211 = vld [vmem:[%s0 + $0x4f8] sm:$0xff]
  %v212 = vld [vmem:[%s0 + $0x500] sm:$0xff]
  %v213 = vld [vmem:[%s0 + $0x508] sm:$0xff]
  %v214 = vld [vmem:[%s0 + $0x510] sm:$0xff]
  %v215 = vld [vmem:[%s0 + $0x518] sm:$0xff]
  %v216 = vld [vmem:[%s0 + $0x520] sm:$0xff]
  %v217 = vld [vmem:[%s0 + $0x528] sm:$0xff]
  %v218 = vld [vmem:[%s0 + $0x530] sm:$0xff]
  %v219 = vld [vmem:[%s0 + $0x538] sm:$0xff]
  %v220 = vld [vmem:[%s0 + $0x540] sm:$0xff]
  %v221 = vld [vmem:[%s0 + $0x548] sm:$0xff]
  %v222 = vld [vmem:[%s0 + $0x550] sm:$0xff]
  %v223 = vld [vmem:[%s0 + $0x558] sm:$0xff]
  %v224 = vld [vmem:[%s0 + $0x560] sm:$0xff]
  %v225 = vld [vmem:[%s0 + $0x568] sm:$0xff]
  %v226 = vld [vmem:[%s0 + $0x570] sm:$0xff]
  %v227 = vld [vmem:[%s0 + $0x578] sm:$0xff]
  %v228 = vld [vmem:[%s0 + $0x580] sm:$0xff]
  %v229 = vld [vmem:[%s0 + $0x588] sm:$0xff]
  %v230 = vld [vmem:[%s0 + $0x590] sm:$0xff]
  %v231 = vld [vmem:[%s0 + $0x598] sm:$0xff]
  %v232 = vld [vmem:[%s0 + $0x5a0] sm:$0xff]
  %v233 = vld [vmem:[%s0 + $0x5a8] sm:$0xff]
  %v234 = vld [vmem:[%s0 + $0x5b0] sm:$0xff]
  %v235 = vld [vmem:[%s0 + $0x5b8] sm:$0xff]
  %v236 = vld [vmem:[%s0 + $0x5c0] sm:$0xff]
  %v237 = vld [vmem:[%s0 + $0x5c8] sm:$0xff]
  %v238 = vld [vmem:[%s0 + $0x5d0] sm:$0xff]
  %v239 = vld [vmem:[%s0 + $0x5d8] sm:$0xff]
  %v240 = vld [vmem:[%s0 + $0x5e0] sm:$0xff]
  %v241 = vld [vmem:[%s0 + $0x5e8] sm:$0xff]
  %v242 = vld [vmem:[%s0 + $0x5f0] sm:$0xff]
  %v243 = vld [vmem:[%s0 + $0x5f8] sm:$0xff]
  %v436 = vunpack.c.l.b16 %v52
  %v437 = vunpack.c.h.b16 %v52
  %v438 = vunpack.c.l.b16 %v53
  %v439 = vunpack.c.h.b16 %v53
  %v440 = vunpack.c.l.b16 %v54
  %v441 = vunpack.c.h.b16 %v54
  %v442 = vunpack.c.l.b16 %v55
  %v443 = vunpack.c.h.b16 %v55
  %v444 = vunpack.c.l.b16 %v56
  %v445 = vunpack.c.h.b16 %v56
  %v446 = vunpack.c.l.b16 %v57
  %v447 = vunpack.c.h.b16 %v57
  %v448 = vunpack.c.l.b16 %v58
  %v449 = vunpack.c.h.b16 %v58
  %v450 = vunpack.c.l.b16 %v59
  %v451 = vunpack.c.h.b16 %v59
  %v452 = vunpack.c.l.b16 %v60
  %v453 = vunpack.c.h.b16 %v60
  %v454 = vunpack.c.l.b16 %v61
  %v455 = vunpack.c.h.b16 %v61
  %v456 = vunpack.c.l.b16 %v62
  %v457 = vunpack.c.h.b16 %v62
  %v458 = vunpack.c.l.b16 %v63
  %v459 = vunpack.c.h.b16 %v63
  %v460 = vunpack.c.l.b16 %v64
  %v461 = vunpack.c.h.b16 %v64
  %v462 = vunpack.c.l.b16 %v65
  %v463 = vunpack.c.h.b16 %v65
  %v464 = vunpack.c.l.b16 %v66
  %v465 = vunpack.c.h.b16 %v66
  %v466 = vunpack.c.l.b16 %v67
  %v467 = vunpack.c.h.b16 %v67
  %v468 = vunpack.c.l.b16 %v68
  %v469 = vunpack.c.h.b16 %v68
  %v470 = vunpack.c.l.b16 %v69
  %v471 = vunpack.c.h.b16 %v69
  %v472 = vunpack.c.l.b16 %v70
  %v473 = vunpack.c.h.b16 %v70
  %v474 = vunpack.c.l.b16 %v71
  %v475 = vunpack.c.h.b16 %v71
  %v476 = vunpack.c.l.b16 %v72
  %v477 = vunpack.c.h.b16 %v72
  %v478 = vunpack.c.l.b16 %v73
  %v479 = vunpack.c.h.b16 %v73
  %v480 = vunpack.c.l.b16 %v74
  %v481 = vunpack.c.h.b16 %v74
  %v482 = vunpack.c.l.b16 %v75
  %v483 = vunpack.c.h.b16 %v75
  %v484 = vunpack.c.l.b16 %v76
  %v485 = vunpack.c.h.b16 %v76
  %v486 = vunpack.c.l.b16 %v77
  %v487 = vunpack.c.h.b16 %v77
  %v488 = vunpack.c.l.b16 %v78
  %v489 = vunpack.c.h.b16 %v78
  %v490 = vunpack.c.l.b16 %v79
  %v491 = vunpack.c.h.b16 %v79
  %v492 = vunpack.c.l.b16 %v80
  %v493 = vunpack.c.h.b16 %v80
  %v494 = vunpack.c.l.b16 %v81
  %v495 = vunpack.c.h.b16 %v81
  %v496 = vunpack.c.l.b16 %v82
  %v497 = vunpack.c.h.b16 %v82
  %v498 = vunpack.c.l.b16 %v83
  %v499 = vunpack.c.h.b16 %v83
  %v500 = vunpack.c.l.b16 %v84
  %v501 = vunpack.c.h.b16 %v84
  %v502 = vunpack.c.l.b16 %v85
  %v503 = vunpack.c.h.b16 %v85
  %v504 = vunpack.c.l.b16 %v86
  %v505 = vunpack.c.h.b16 %v86
  %v506 = vunpack.c.l.b16 %v87
  %v507 = vunpack.c.h.b16 %v87
  %v508 = vunpack.c.l.b16 %v88
  %v509 = vunpack.c.h.b16 %v88
  %v510 = vunpack.c.l.b16 %v89
  %v511 = vunpack.c.h.b16 %v89
  %v512 = vunpack.c.l.b16 %v90
  %v513 = vunpack.c.h.b16 %v90
  %v514 = vunpack.c.l.b16 %v91
  %v515 = vunpack.c.h.b16 %v91
  %v516 = vunpack.c.l.b16 %v92
  %v517 = vunpack.c.h.b16 %v92
  %v518 = vunpack.c.l.b16 %v93
  %v519 = vunpack.c.h.b16 %v93
  %v520 = vunpack.c.l.b16 %v94
  %v521 = vunpack.c.h.b16 %v94
  %v522 = vunpack.c.l.b16 %v95
  %v523 = vunpack.c.h.b16 %v95
  %v524 = vunpack.c.l.b16 %v96
  %v525 = vunpack.c.h.b16 %v96
  %v526 = vunpack.c.l.b16 %v97
  %v527 = vunpack.c.h.b16 %v97
  %v528 = vunpack.c.l.b16 %v98
  %v529 = vunpack.c.h.b16 %v98
  %v530 = vunpack.c.l.b16 %v99
  %v531 = vunpack.c.h.b16 %v99
  %v532 = vunpack.c.l.b16 %v100
  %v533 = vunpack.c.h.b16 %v100
  %v534 = vunpack.c.l.b16 %v101
  %v535 = vunpack.c.h.b16 %v101
  %v536 = vunpack.c.l.b16 %v102
  %v537 = vunpack.c.h.b16 %v102
  %v538 = vunpack.c.l.b16 %v103
  %v539 = vunpack.c.h.b16 %v103
  %v540 = vunpack.c.l.b16 %v104
  %v541 = vunpack.c.h.b16 %v104
  %v542 = vunpack.c.l.b16 %v105
  %v543 = vunpack.c.h.b16 %v105
  %v544 = vunpack.c.l.b16 %v106
  %v545 = vunpack.c.h.b16 %v106
  %v546 = vunpack.c.l.b16 %v107
  %v547 = vunpack.c.h.b16 %v107
  %v548 = vunpack.c.l.b16 %v108
  %v549 = vunpack.c.h.b16 %v108
  %v550 = vunpack.c.l.b16 %v109
  %v551 = vunpack.c.h.b16 %v109
  %v552 = vunpack.c.l.b16 %v110
  %v553 = vunpack.c.h.b16 %v110
  %v554 = vunpack.c.l.b16 %v111
  %v555 = vunpack.c.h.b16 %v111
  %v556 = vunpack.c.l.b16 %v112
  %v557 = vunpack.c.h.b16 %v112
  %v558 = vunpack.c.l.b16 %v113
  %v559 = vunpack.c.h.b16 %v113
  %v560 = vunpack.c.l.b16 %v114
  %v561 = vunpack.c.h.b16 %v114
  %v562 = vunpack.c.l.b16 %v115
  %v563 = vunpack.c.h.b16 %v115
  %v564 = vunpack.c.l.b16 %v116
  %v565 = vunpack.c.h.b16 %v116
  %v566 = vunpack.c.l.b16 %v117
  %v567 = vunpack.c.h.b16 %v117
  %v568 = vunpack.c.l.b16 %v118
  %v569 = vunpack.c.h.b16 %v118
  %v570 = vunpack.c.l.b16 %v119
  %v571 = vunpack.c.h.b16 %v119
  %v572 = vunpack.c.l.b16 %v120
  %v573 = vunpack.c.h.b16 %v120
  %v574 = vunpack.c.l.b16 %v121
  %v575 = vunpack.c.h.b16 %v121
  %v576 = vunpack.c.l.b16 %v122
  %v577 = vunpack.c.h.b16 %v122
  %v578 = vunpack.c.l.b16 %v123
  %v579 = vunpack.c.h.b16 %v123
  %v580 = vunpack.c.l.b16 %v124
  %v581 = vunpack.c.h.b16 %v124
  %v582 = vunpack.c.l.b16 %v125
  %v583 = vunpack.c.h.b16 %v125
  %v584 = vunpack.c.l.b16 %v126
  %v585 = vunpack.c.h.b16 %v126
  %v586 = vunpack.c.l.b16 %v127
  %v587 = vunpack.c.h.b16 %v127
  %v588 = vunpack.c.l.b16 %v128
  %v589 = vunpack.c.h.b16 %v128
  %v590 = vunpack.c.l.b16 %v129
  %v591 = vunpack.c.h.b16 %v129
  %v592 = vunpack.c.l.b16 %v130
  %v593 = vunpack.c.h.b16 %v130
  %v594 = vunpack.c.l.b16 %v131
  %v595 = vunpack.c.h.b16 %v131
  %v596 = vunpack.c.l.b16 %v132
  %v597 = vunpack.c.h.b16 %v132
  %v598 = vunpack.c.l.b16 %v133
  %v599 = vunpack.c.h.b16 %v133
  %v600 = vunpack.c.l.b16 %v134
  %v601 = vunpack.c.h.b16 %v134
  %v602 = vunpack.c.l.b16 %v135
  %v603 = vunpack.c.h.b16 %v135
  %v604 = vunpack.c.l.b16 %v136
  %v605 = vunpack.c.h.b16 %v136
  %v606 = vunpack.c.l.b16 %v137
  %v607 = vunpack.c.h.b16 %v137
  %v608 = vunpack.c.l.b16 %v138
  %v609 = vunpack.c.h.b16 %v138
  %v610 = vunpack.c.l.b16 %v139
  %v611 = vunpack.c.h.b16 %v139
  %v612 = vunpack.c.l.b16 %v140
  %v613 = vunpack.c.h.b16 %v140
  %v614 = vunpack.c.l.b16 %v141
  %v615 = vunpack.c.h.b16 %v141
  %v616 = vunpack.c.l.b16 %v142
  %v617 = vunpack.c.h.b16 %v142
  %v618 = vunpack.c.l.b16 %v143
  %v619 = vunpack.c.h.b16 %v143
  %v620 = vunpack.c.l.b16 %v144
  %v621 = vunpack.c.h.b16 %v144
  %v622 = vunpack.c.l.b16 %v145
  %v623 = vunpack.c.h.b16 %v145
  %v624 = vunpack.c.l.b16 %v146
  %v625 = vunpack.c.h.b16 %v146
  %v626 = vunpack.c.l.b16 %v147
  %v627 = vunpack.c.h.b16 %v147
  %v628 = vunpack.c.l.b16 %v148
  %v629 = vunpack.c.h.b16 %v148
  %v630 = vunpack.c.l.b16 %v149
  %v631 = vunpack.c.h.b16 %v149
  %v632 = vunpack.c.l.b16 %v150
  %v633 = vunpack.c.h.b16 %v150
  %v634 = vunpack.c.l.b16 %v151
  %v635 = vunpack.c.h.b16 %v151
  %v636 = vunpack.c.l.b16 %v152
  %v637 = vunpack.c.h.b16 %v152
  %v638 = vunpack.c.l.b16 %v153
  %v639 = vunpack.c.h.b16 %v153
  %v640 = vunpack.c.l.b16 %v154
  %v641 = vunpack.c.h.b16 %v154
  %v642 = vunpack.c.l.b16 %v155
  %v643 = vunpack.c.h.b16 %v155
  %v644 = vunpack.c.l.b16 %v156
  %v645 = vunpack.c.h.b16 %v156
  %v646 = vunpack.c.l.b16 %v157
  %v647 = vunpack.c.h.b16 %v157
  %v648 = vunpack.c.l.b16 %v158
  %v649 = vunpack.c.h.b16 %v158
  %v650 = vunpack.c.l.b16 %v159
  %v651 = vunpack.c.h.b16 %v159
  %v652 = vunpack.c.l.b16 %v160
  %v653 = vunpack.c.h.b16 %v160
  %v654 = vunpack.c.l.b16 %v161
  %v655 = vunpack.c.h.b16 %v161
  %v656 = vunpack.c.l.b16 %v162
  %v657 = vunpack.c.h.b16 %v162
  %v658 = vunpack.c.l.b16 %v163
  %v659 = vunpack.c.h.b16 %v163
  %v660 = vunpack.c.l.b16 %v164
  %v661 = vunpack.c.h.b16 %v164
  %v662 = vunpack.c.l.b16 %v165
  %v663 = vunpack.c.h.b16 %v165
  %v664 = vunpack.c.l.b16 %v166
  %v665 = vunpack.c.h.b16 %v166
  %v666 = vunpack.c.l.b16 %v167
  %v667 = vunpack.c.h.b16 %v167
  %v668 = vunpack.c.l.b16 %v168
  %v669 = vunpack.c.h.b16 %v168
  %v670 = vunpack.c.l.b16 %v169
  %v671 = vunpack.c.h.b16 %v169
  %v672 = vunpack.c.l.b16 %v170
  %v673 = vunpack.c.h.b16 %v170
  %v674 = vunpack.c.l.b16 %v171
  %v675 = vunpack.c.h.b16 %v171
  %v676 = vunpack.c.l.b16 %v172
  %v677 = vunpack.c.h.b16 %v172
  %v678 = vunpack.c.l.b16 %v173
  %v679 = vunpack.c.h.b16 %v173
  %v680 = vunpack.c.l.b16 %v174
  %v681 = vunpack.c.h.b16 %v174
  %v682 = vunpack.c.l.b16 %v175
  %v683 = vunpack.c.h.b16 %v175
  %v684 = vunpack.c.l.b16 %v176
  %v685 = vunpack.c.h.b16 %v176
  %v686 = vunpack.c.l.b16 %v177
  %v687 = vunpack.c.h.b16 %v177
  %v688 = vunpack.c.l.b16 %v178
  %v689 = vunpack.c.h.b16 %v178
  %v690 = vunpack.c.l.b16 %v179
  %v691 = vunpack.c.h.b16 %v179
  %v692 = vunpack.c.l.b16 %v180
  %v693 = vunpack.c.h.b16 %v180
  %v694 = vunpack.c.l.b16 %v181
  %v695 = vunpack.c.h.b16 %v181
  %v696 = vunpack.c.l.b16 %v182
  %v697 = vunpack.c.h.b16 %v182
  %v698 = vunpack.c.l.b16 %v183
  %v699 = vunpack.c.h.b16 %v183
  %v700 = vunpack.c.l.b16 %v184
  %v701 = vunpack.c.h.b16 %v184
  %v702 = vunpack.c.l.b16 %v185
  %v703 = vunpack.c.h.b16 %v185
  %v704 = vunpack.c.l.b16 %v186
  %v705 = vunpack.c.h.b16 %v186
  %v706 = vunpack.c.l.b16 %v187
  %v707 = vunpack.c.h.b16 %v187
  %v708 = vunpack.c.l.b16 %v188
  %v709 = vunpack.c.h.b16 %v188
  %v710 = vunpack.c.l.b16 %v189
  %v711 = vunpack.c.h.b16 %v189
  %v712 = vunpack.c.l.b16 %v190
  %v713 = vunpack.c.h.b16 %v190
  %v714 = vunpack.c.l.b16 %v191
  %v715 = vunpack.c.h.b16 %v191
  %v716 = vunpack.c.l.b16 %v192
  %v717 = vunpack.c.h.b16 %v192
  %v718 = vunpack.c.l.b16 %v193
  %v719 = vunpack.c.h.b16 %v193
  %v720 = vunpack.c.l.b16 %v194
  %v721 = vunpack.c.h.b16 %v194
  %v722 = vunpack.c.l.b16 %v195
  %v723 = vunpack.c.h.b16 %v195
  %v724 = vunpack.c.l.b16 %v196
  %v725 = vunpack.c.h.b16 %v196
  %v726 = vunpack.c.l.b16 %v197
  %v727 = vunpack.c.h.b16 %v197
  %v728 = vunpack.c.l.b16 %v198
  %v729 = vunpack.c.h.b16 %v198
  %v730 = vunpack.c.l.b16 %v199
  %v731 = vunpack.c.h.b16 %v199
  %v732 = vunpack.c.l.b16 %v200
  %v733 = vunpack.c.h.b16 %v200
  %v734 = vunpack.c.l.b16 %v201
  %v735 = vunpack.c.h.b16 %v201
  %v736 = vunpack.c.l.b16 %v202
  %v737 = vunpack.c.h.b16 %v202
  %v738 = vunpack.c.l.b16 %v203
  %v739 = vunpack.c.h.b16 %v203
  %v740 = vunpack.c.l.b16 %v204
  %v741 = vunpack.c.h.b16 %v204
  %v742 = vunpack.c.l.b16 %v205
  %v743 = vunpack.c.h.b16 %v205
  %v744 = vunpack.c.l.b16 %v206
  %v745 = vunpack.c.h.b16 %v206
  %v746 = vunpack.c.l.b16 %v207
  %v747 = vunpack.c.h.b16 %v207
  %v748 = vunpack.c.l.b16 %v208
  %v749 = vunpack.c.h.b16 %v208
  %v750 = vunpack.c.l.b16 %v209
  %v751 = vunpack.c.h.b16 %v209
  %v752 = vunpack.c.l.b16 %v210
  %v753 = vunpack.c.h.b16 %v210
  %v754 = vunpack.c.l.b16 %v211
  %v755 = vunpack.c.h.b16 %v211
  %v756 = vunpack.c.l.b16 %v212
  %v757 = vunpack.c.h.b16 %v212
  %v758 = vunpack.c.l.b16 %v213
  %v759 = vunpack.c.h.b16 %v213
  %v760 = vunpack.c.l.b16 %v214
  %v761 = vunpack.c.h.b16 %v214
  %v762 = vunpack.c.l.b16 %v215
  %v763 = vunpack.c.h.b16 %v215
  %v764 = vunpack.c.l.b16 %v216
  %v765 = vunpack.c.h.b16 %v216
  %v766 = vunpack.c.l.b16 %v217
  %v767 = vunpack.c.h.b16 %v217
  %v768 = vunpack.c.l.b16 %v218
  %v769 = vunpack.c.h.b16 %v218
  %v770 = vunpack.c.l.b16 %v219
  %v771 = vunpack.c.h.b16 %v219
  %v772 = vunpack.c.l.b16 %v220
  %v773 = vunpack.c.h.b16 %v220
  %v774 = vunpack.c.l.b16 %v221
  %v775 = vunpack.c.h.b16 %v221
  %v776 = vunpack.c.l.b16 %v222
  %v777 = vunpack.c.h.b16 %v222
  %v778 = vunpack.c.l.b16 %v223
  %v779 = vunpack.c.h.b16 %v223
  %v780 = vunpack.c.l.b16 %v224
  %v781 = vunpack.c.h.b16 %v224
  %v782 = vunpack.c.l.b16 %v225
  %v783 = vunpack.c.h.b16 %v225
  %v784 = vunpack.c.l.b16 %v226
  %v785 = vunpack.c.h.b16 %v226
  %v786 = vunpack.c.l.b16 %v227
  %v787 = vunpack.c.h.b16 %v227
  %v788 = vunpack.c.l.b16 %v228
  %v789 = vunpack.c.h.b16 %v228
  %v790 = vunpack.c.l.b16 %v229
  %v791 = vunpack.c.h.b16 %v229
  %v792 = vunpack.c.l.b16 %v230
  %v793 = vunpack.c.h.b16 %v230
  %v794 = vunpack.c.l.b16 %v231
  %v795 = vunpack.c.h.b16 %v231
  %v796 = vunpack.c.l.b16 %v232
  %v797 = vunpack.c.h.b16 %v232
  %v798 = vunpack.c.l.b16 %v233
  %v799 = vunpack.c.h.b16 %v233
  %v800 = vunpack.c.l.b16 %v234
  %v801 = vunpack.c.h.b16 %v234
  %v802 = vunpack.c.l.b16 %v235
  %v803 = vunpack.c.h.b16 %v235
  %v804 = vunpack.c.l.b16 %v236
  %v805 = vunpack.c.h.b16 %v236
  %v806 = vunpack.c.l.b16 %v237
  %v807 = vunpack.c.h.b16 %v237
  %v808 = vunpack.c.l.b16 %v238
  %v809 = vunpack.c.h.b16 %v238
  %v810 = vunpack.c.l.b16 %v239
  %v811 = vunpack.c.h.b16 %v239
  %v812 = vunpack.c.l.b16 %v240
  %v813 = vunpack.c.h.b16 %v240
  %v814 = vunpack.c.l.b16 %v241
  %v815 = vunpack.c.h.b16 %v241
  %v816 = vunpack.c.l.b16 %v242
  %v817 = vunpack.c.h.b16 %v242
  %v818 = vunpack.c.l.b16 %v243
  %v819 = vunpack.c.h.b16 %v243
  %v820 = vpack.c.b16 %v500, %v436
  %v821 = vpack.c.b16 %v501, %v437
  %v822 = vpack.c.b16 %v502, %v438
  %v823 = vpack.c.b16 %v503, %v439
  %v824 = vpack.c.b16 %v504, %v440
  %v825 = vpack.c.b16 %v505, %v441
  %v826 = vpack.c.b16 %v506, %v442
  %v827 = vpack.c.b16 %v507, %v443
  %v828 = vpack.c.b16 %v508, %v444
  %v829 = vpack.c.b16 %v509, %v445
  %v830 = vpack.c.b16 %v510, %v446
  %v831 = vpack.c.b16 %v511, %v447
  %v832 = vpack.c.b16 %v512, %v448
  %v833 = vpack.c.b16 %v513, %v449
  %v834 = vpack.c.b16 %v514, %v450
  %v835 = vpack.c.b16 %v515, %v451
  %v836 = vpack.c.b16 %v516, %v452
  %v837 = vpack.c.b16 %v517, %v453
  %v838 = vpack.c.b16 %v518, %v454
  %v839 = vpack.c.b16 %v519, %v455
  %v840 = vpack.c.b16 %v520, %v456
  %v841 = vpack.c.b16 %v521, %v457
  %v842 = vpack.c.b16 %v522, %v458
  %v843 = vpack.c.b16 %v523, %v459
  %v844 = vpack.c.b16 %v524, %v460
  %v845 = vpack.c.b16 %v525, %v461
  %v846 = vpack.c.b16 %v526, %v462
  %v847 = vpack.c.b16 %v527, %v463
  %v848 = vpack.c.b16 %v528, %v464
  %v849 = vpack.c.b16 %v529, %v465
  %v850 = vpack.c.b16 %v530, %v466
  %v851 = vpack.c.b16 %v531, %v467
  %v852 = vpack.c.b16 %v532, %v468
  %v853 = vpack.c.b16 %v533, %v469
  %v854 = vpack.c.b16 %v534, %v470
  %v855 = vpack.c.b16 %v535, %v471
  %v856 = vpack.c.b16 %v536, %v472
  %v857 = vpack.c.b16 %v537, %v473
  %v858 = vpack.c.b16 %v538, %v474
  %v859 = vpack.c.b16 %v539, %v475
  %v860 = vpack.c.b16 %v540, %v476
  %v861 = vpack.c.b16 %v541, %v477
  %v862 = vpack.c.b16 %v542, %v478
  %v863 = vpack.c.b16 %v543, %v479
  %v864 = vpack.c.b16 %v544, %v480
  %v865 = vpack.c.b16 %v545, %v481
  %v866 = vpack.c.b16 %v546, %v482
  %v867 = vpack.c.b16 %v547, %v483
  %v868 = vpack.c.b16 %v548, %v484
  %v869 = vpack.c.b16 %v549, %v485
  %v870 = vpack.c.b16 %v550, %v486
  %v871 = vpack.c.b16 %v551, %v487
  %v872 = vpack.c.b16 %v552, %v488
  %v873 = vpack.c.b16 %v553, %v489
  %v874 = vpack.c.b16 %v554, %v490
  %v875 = vpack.c.b16 %v555, %v491
  %v876 = vpack.c.b16 %v556, %v492
  %v877 = vpack.c.b16 %v557, %v493
  %v878 = vpack.c.b16 %v558, %v494
  %v879 = vpack.c.b16 %v559, %v495
  %v880 = vpack.c.b16 %v560, %v496
  %v881 = vpack.c.b16 %v561, %v497
  %v882 = vpack.c.b16 %v562, %v498
  %v883 = vpack.c.b16 %v563, %v499
  %v884 = vpack.c.b16 %v628, %v564
  %v885 = vpack.c.b16 %v629, %v565
  %v886 = vpack.c.b16 %v630, %v566
  %v887 = vpack.c.b16 %v631, %v567
  %v888 = vpack.c.b16 %v632, %v568
  %v889 = vpack.c.b16 %v633, %v569
  %v890 = vpack.c.b16 %v634, %v570
  %v891 = vpack.c.b16 %v635, %v571
  %v892 = vpack.c.b16 %v636, %v572
  %v893 = vpack.c.b16 %v637, %v573
  %v894 = vpack.c.b16 %v638, %v574
  %v895 = vpack.c.b16 %v639, %v575
  %v896 = vpack.c.b16 %v640, %v576
  %v897 = vpack.c.b16 %v641, %v577
  %v898 = vpack.c.b16 %v642, %v578
  %v899 = vpack.c.b16 %v643, %v579
  %v900 = vpack.c.b16 %v644, %v580
  %v901 = vpack.c.b16 %v645, %v581
  %v902 = vpack.c.b16 %v646, %v582
  %v903 = vpack.c.b16 %v647, %v583
  %v904 = vpack.c.b16 %v648, %v584
  %v905 = vpack.c.b16 %v649, %v585
  %v906 = vpack.c.b16 %v650, %v586
  %v907 = vpack.c.b16 %v651, %v587
  %v908 = vpack.c.b16 %v652, %v588
  %v909 = vpack.c.b16 %v653, %v589
  %v910 = vpack.c.b16 %v654, %v590
  %v911 = vpack.c.b16 %v655, %v591
  %v912 = vpack.c.b16 %v656, %v592
  %v913 = vpack.c.b16 %v657, %v593
  %v914 = vpack.c.b16 %v658, %v594
  %v915 = vpack.c.b16 %v659, %v595
  %v916 = vpack.c.b16 %v660, %v596
  %v917 = vpack.c.b16 %v661, %v597
  %v918 = vpack.c.b16 %v662, %v598
  %v919 = vpack.c.b16 %v663, %v599
  %v920 = vpack.c.b16 %v664, %v600
  %v921 = vpack.c.b16 %v665, %v601
  %v922 = vpack.c.b16 %v666, %v602
  %v923 = vpack.c.b16 %v667, %v603
  %v924 = vpack.c.b16 %v668, %v604
  %v925 = vpack.c.b16 %v669, %v605
  %v926 = vpack.c.b16 %v670, %v606
  %v927 = vpack.c.b16 %v671, %v607
  %v928 = vpack.c.b16 %v672, %v608
  %v929 = vpack.c.b16 %v673, %v609
  %v930 = vpack.c.b16 %v674, %v610
  %v931 = vpack.c.b16 %v675, %v611
  %v932 = vpack.c.b16 %v676, %v612
  %v933 = vpack.c.b16 %v677, %v613
  %v934 = vpack.c.b16 %v678, %v614
  %v935 = vpack.c.b16 %v679, %v615
  %v936 = vpack.c.b16 %v680, %v616
  %v937 = vpack.c.b16 %v681, %v617
  %v938 = vpack.c.b16 %v682, %v618
  %v939 = vpack.c.b16 %v683, %v619
  %v940 = vpack.c.b16 %v684, %v620
  %v941 = vpack.c.b16 %v685, %v621
  %v942 = vpack.c.b16 %v686, %v622
  %v943 = vpack.c.b16 %v687, %v623
  %v944 = vpack.c.b16 %v688, %v624
  %v945 = vpack.c.b16 %v689, %v625
  %v946 = vpack.c.b16 %v690, %v626
  %v947 = vpack.c.b16 %v691, %v627
  %v948 = vpack.c.b16 %v756, %v692
  %v949 = vpack.c.b16 %v757, %v693
  %v950 = vpack.c.b16 %v758, %v694
  %v951 = vpack.c.b16 %v759, %v695
  %v952 = vpack.c.b16 %v760, %v696
  %v953 = vpack.c.b16 %v761, %v697
  %v954 = vpack.c.b16 %v762, %v698
  %v955 = vpack.c.b16 %v763, %v699
  %v956 = vpack.c.b16 %v764, %v700
  %v957 = vpack.c.b16 %v765, %v701
  %v958 = vpack.c.b16 %v766, %v702
  %v959 = vpack.c.b16 %v767, %v703
  %v960 = vpack.c.b16 %v768, %v704
  %v961 = vpack.c.b16 %v769, %v705
  %v962 = vpack.c.b16 %v770, %v706
  %v963 = vpack.c.b16 %v771, %v707
  %v964 = vpack.c.b16 %v772, %v708
  %v965 = vpack.c.b16 %v773, %v709
  %v966 = vpack.c.b16 %v774, %v710
  %v967 = vpack.c.b16 %v775, %v711
  %v968 = vpack.c.b16 %v776, %v712
  %v969 = vpack.c.b16 %v777, %v713
  %v970 = vpack.c.b16 %v778, %v714
  %v971 = vpack.c.b16 %v779, %v715
  %v972 = vpack.c.b16 %v780, %v716
  %v973 = vpack.c.b16 %v781, %v717
  %v974 = vpack.c.b16 %v782, %v718
  %v975 = vpack.c.b16 %v783, %v719
  %v976 = vpack.c.b16 %v784, %v720
  %v977 = vpack.c.b16 %v785, %v721
  %v978 = vpack.c.b16 %v786, %v722
  %v979 = vpack.c.b16 %v787, %v723
  %v980 = vpack.c.b16 %v788, %v724
  %v981 = vpack.c.b16 %v789, %v725
  %v982 = vpack.c.b16 %v790, %v726
  %v983 = vpack.c.b16 %v791, %v727
  %v984 = vpack.c.b16 %v792, %v728
  %v985 = vpack.c.b16 %v793, %v729
  %v986 = vpack.c.b16 %v794, %v730
  %v987 = vpack.c.b16 %v795, %v731
  %v988 = vpack.c.b16 %v796, %v732
  %v989 = vpack.c.b16 %v797, %v733
  %v990 = vpack.c.b16 %v798, %v734
  %v991 = vpack.c.b16 %v799, %v735
  %v992 = vpack.c.b16 %v800, %v736
  %v993 = vpack.c.b16 %v801, %v737
  %v994 = vpack.c.b16 %v802, %v738
  %v995 = vpack.c.b16 %v803, %v739
  %v996 = vpack.c.b16 %v804, %v740
  %v997 = vpack.c.b16 %v805, %v741
  %v998 = vpack.c.b16 %v806, %v742
  %v999 = vpack.c.b16 %v807, %v743
  %v1000 = vpack.c.b16 %v808, %v744
  %v1001 = vpack.c.b16 %v809, %v745
  %v1002 = vpack.c.b16 %v810, %v746
  %v1003 = vpack.c.b16 %v811, %v747
  %v1004 = vpack.c.b16 %v812, %v748
  %v1005 = vpack.c.b16 %v813, %v749
  %v1006 = vpack.c.b16 %v814, %v750
  %v1007 = vpack.c.b16 %v815, %v751
  %v1008 = vpack.c.b16 %v816, %v752
  %v1009 = vpack.c.b16 %v817, %v753
  %v1010 = vpack.c.b16 %v818, %v754
  %v1011 = vpack.c.b16 %v819, %v755
  %vm1204 = vcmask 392192
  %v1206 = vsel %vm1204, %v51, 0
  %1208 = vmatprep.subr.bf16.mxu0 %v821
  %1209 = vmatpush1.bf16.msra.mxu0 %v820
  %1210 = vmatprep.subr.bf16.mxu0 %v885
  %1211 = vmatpush1.bf16.msra.mxu0 %v884
  %1212 = vmatprep.subr.bf16.mxu0 %v949
  %1213 = vmatpush1.bf16.msra.mxu0 %v948
  %1214 = vmatprep.subr.bf16.mxu0 0
  %1215 = vmatpush1.bf16.msra.mxu0 0
  %1216 = vmatprep.subr.bf16.mxu0 0
  %1217 = vmatpush1.bf16.msra.mxu0 0
  %1218 = vmatprep.subr.bf16.mxu0 0
  %1219 = vmatpush1.bf16.msra.mxu0 0
  %1220 = vmatprep.subr.bf16.mxu0 0
  %1221 = vmatpush1.bf16.msra.mxu0 0
  %1222 = vmatprep.subr.bf16.mxu0 0
  %1223 = vmatpush1.bf16.msra.mxu0 0
  %1224 = vmatprep.subr.bf16.mxu0 0
  %1225 = vmatpush1.bf16.msra.mxu0 0
  %1226 = vmatprep.subr.bf16.mxu0 0
  %1227 = vmatpush1.bf16.msra.mxu0 0
  %1228 = vmatprep.subr.bf16.mxu0 0
  %1229 = vmatpush1.bf16.msra.mxu0 0
  %1230 = vmatprep.subr.bf16.mxu0 0
  %1231 = vmatpush1.bf16.msra.mxu0 0
  %1232 = vmatprep.subr.bf16.mxu0 0
  %1233 = vmatpush1.bf16.msra.mxu0 0
  %1234 = vmatprep.subr.bf16.mxu0 0
  %1235 = vmatpush1.bf16.msra.mxu0 0
  %1236 = vmatprep.subr.bf16.mxu0 0
  %1237 = vmatpush1.bf16.msra.mxu0 0
  %1238 = vmatprep.subr.bf16.mxu0 0
  %1239 = vmatpush1.bf16.msra.mxu0 0
  %1240 = vmatprep.mubr.bf16.mxu0 0
  %1241 = vmatmul.mubr.bf16.gmra.mrb[0].mxu0 %v1206
  %v1242 = vpop.f32.mrb[0].mxu0
  %v1243 = vadd.f32 0.0, %v1242
  %v1244 = vpop.f32.mrb[0].mxu0
  %v1245 = vadd.f32 0.0, %v1244
  %v1246 = vpop.f32.mrb[0].mxu0
  %v1247 = vpop.f32.mrb[0].mxu0
  %1248 = vdwg.mxu0
  %1249 = vmatprep.subr.bf16.mxu0 %v823
  %1250 = vmatpush1.bf16.msra.mxu0 %v822
  %1251 = vmatprep.subr.bf16.mxu0 %v887
  %1252 = vmatpush1.bf16.msra.mxu0 %v886
  %1253 = vmatprep.subr.bf16.mxu0 %v951
  %1254 = vmatpush1.bf16.msra.mxu0 %v950
  %1255 = vmatprep.subr.bf16.mxu0 0
  %1256 = vmatpush1.bf16.msra.mxu0 0
  %1257 = vmatprep.subr.bf16.mxu0 0
  %1258 = vmatpush1.bf16.msra.mxu0 0
  %1259 = vmatprep.subr.bf16.mxu0 0
  %1260 = vmatpush1.bf16.msra.mxu0 0
  %1261 = vmatprep.subr.bf16.mxu0 0
  %1262 = vmatpush1.bf16.msra.mxu0 0
  %1263 = vmatprep.subr.bf16.mxu0 0
  %1264 = vmatpush1.bf16.msra.mxu0 0
  %1265 = vmatprep.subr.bf16.mxu0 0
  %1266 = vmatpush1.bf16.msra.mxu0 0
  %1267 = vmatprep.subr.bf16.mxu0 0
  %1268 = vmatpush1.bf16.msra.mxu0 0
  %1269 = vmatprep.subr.bf16.mxu0 0
  %1270 = vmatpush1.bf16.msra.mxu0 0
  %1271 = vmatprep.subr.bf16.mxu0 0
  %1272 = vmatpush1.bf16.msra.mxu0 0
  %1273 = vmatprep.subr.bf16.mxu0 0
  %1274 = vmatpush1.bf16.msra.mxu0 0
  %1275 = vmatprep.subr.bf16.mxu0 0
  %1276 = vmatpush1.bf16.msra.mxu0 0
  %1277 = vmatprep.subr.bf16.mxu0 0
  %1278 = vmatpush1.bf16.msra.mxu0 0
  %1279 = vmatprep.subr.bf16.mxu0 0
  %1280 = vmatpush1.bf16.msra.mxu0 0
  %1281 = vmatprep.mubr.bf16.mxu0 0
  %1282 = vmatmul.mubr.bf16.gmra.mrb[0].mxu0 %v1206
  %v1283 = vpop.f32.mrb[0].mxu0
  %v1284 = vadd.f32 0.0, %v1283
  %v1285 = vpop.f32.mrb[0].mxu0
  %v1286 = vadd.f32 0.0, %v1285
  %v1287 = vpop.f32.mrb[0].mxu0
  %v1288 = vpop.f32.mrb[0].mxu0
  %1289 = vdwg.mxu0
  %1290 = vmatprep.subr.bf16.mxu0 %v825
  %1291 = vmatpush1.bf16.msra.mxu0 %v824
  %1292 = vmatprep.subr.bf16.mxu0 %v889
  %1293 = vmatpush1.bf16.msra.mxu0 %v888
  %1294 = vmatprep.subr.bf16.mxu0 %v953
  %1295 = vmatpush1.bf16.msra.mxu0 %v952
  %1296 = vmatprep.subr.bf16.mxu0 0
  %1297 = vmatpush1.bf16.msra.mxu0 0
  %1298 = vmatprep.subr.bf16.mxu0 0
  %1299 = vmatpush1.bf16.msra.mxu0 0
  %1300 = vmatprep.subr.bf16.mxu0 0
  %1301 = vmatpush1.bf16.msra.mxu0 0
  %1302 = vmatprep.subr.bf16.mxu0 0
  %1303 = vmatpush1.bf16.msra.mxu0 0
  %1304 = vmatprep.subr.bf16.mxu0 0
  %1305 = vmatpush1.bf16.msra.mxu0 0
  %1306 = vmatprep.subr.bf16.mxu0 0
  %1307 = vmatpush1.bf16.msra.mxu0 0
  %1308 = vmatprep.subr.bf16.mxu0 0
  %1309 = vmatpush1.bf16.msra.mxu0 0
  %1310 = vmatprep.subr.bf16.mxu0 0
  %1311 = vmatpush1.bf16.msra.mxu0 0
  %1312 = vmatprep.subr.bf16.mxu0 0
  %1313 = vmatpush1.bf16.msra.mxu0 0
  %1314 = vmatprep.subr.bf16.mxu0 0
  %1315 = vmatpush1.bf16.msra.mxu0 0
  %1316 = vmatprep.subr.bf16.mxu0 0
  %1317 = vmatpush1.bf16.msra.mxu0 0
  %1318 = vmatprep.subr.bf16.mxu0 0
  %1319 = vmatpush1.bf16.msra.mxu0 0
  %1320 = vmatprep.subr.bf16.mxu0 0
  %1321 = vmatpush1.bf16.msra.mxu0 0
  %1322 = vmatprep.mubr.bf16.mxu0 0
  %1323 = vmatmul.mubr.bf16.gmra.mrb[0].mxu0 %v1206
  %v1324 = vpop.f32.mrb[0].mxu0
  %v1325 = vadd.f32 0.0, %v1324
  %v1326 = vpop.f32.mrb[0].mxu0
  %v1327 = vadd.f32 0.0, %v1326
  %v1328 = vpop.f32.mrb[0].mxu0
  %v1329 = vpop.f32.mrb[0].mxu0
  %1330 = vdwg.mxu0
  %1331 = vmatprep.subr.bf16.mxu0 %v827
  %1332 = vmatpush1.bf16.msra.mxu0 %v826
  %1333 = vmatprep.subr.bf16.mxu0 %v891
  %1334 = vmatpush1.bf16.msra.mxu0 %v890
  %1335 = vmatprep.subr.bf16.mxu0 %v955
  %1336 = vmatpush1.bf16.msra.mxu0 %v954
  %1337 = vmatprep.subr.bf16.mxu0 0
  %1338 = vmatpush1.bf16.msra.mxu0 0
  %1339 = vmatprep.subr.bf16.mxu0 0
  %1340 = vmatpush1.bf16.msra.mxu0 0
  %1341 = vmatprep.subr.bf16.mxu0 0
  %1342 = vmatpush1.bf16.msra.mxu0 0
  %1343 = vmatprep.subr.bf16.mxu0 0
  %1344 = vmatpush1.bf16.msra.mxu0 0
  %1345 = vmatprep.subr.bf16.mxu0 0
  %1346 = vmatpush1.bf16.msra.mxu0 0
  %1347 = vmatprep.subr.bf16.mxu0 0
  %1348 = vmatpush1.bf16.msra.mxu0 0
  %1349 = vmatprep.subr.bf16.mxu0 0
  %1350 = vmatpush1.bf16.msra.mxu0 0
  %1351 = vmatprep.subr.bf16.mxu0 0
  %1352 = vmatpush1.bf16.msra.mxu0 0
  %1353 = vmatprep.subr.bf16.mxu0 0
  %1354 = vmatpush1.bf16.msra.mxu0 0
  %1355 = vmatprep.subr.bf16.mxu0 0
  %1356 = vmatpush1.bf16.msra.mxu0 0
  %1357 = vmatprep.subr.bf16.mxu0 0
  %1358 = vmatpush1.bf16.msra.mxu0 0
  %1359 = vmatprep.subr.bf16.mxu0 0
  %1360 = vmatpush1.bf16.msra.mxu0 0
  %1361 = vmatprep.subr.bf16.mxu0 0
  %1362 = vmatpush1.bf16.msra.mxu0 0
  %1363 = vmatprep.mubr.bf16.mxu0 0
  %1364 = vmatmul.mubr.bf16.gmra.mrb[0].mxu0 %v1206
  %v1365 = vpop.f32.mrb[0].mxu0
  %v1366 = vadd.f32 0.0, %v1365
  %v1367 = vpop.f32.mrb[0].mxu0
  %v1368 = vadd.f32 0.0, %v1367
  %v1369 = vpop.f32.mrb[0].mxu0
  %v1370 = vpop.f32.mrb[0].mxu0
  %1371 = vdwg.mxu0
  %1372 = vmatprep.subr.bf16.mxu0 %v829
  %1373 = vmatpush1.bf16.msra.mxu0 %v828
  %1374 = vmatprep.subr.bf16.mxu0 %v893
  %1375 = vmatpush1.bf16.msra.mxu0 %v892
  %1376 = vmatprep.subr.bf16.mxu0 %v957
  %1377 = vmatpush1.bf16.msra.mxu0 %v956
  %1378 = vmatprep.subr.bf16.mxu0 0
  %1379 = vmatpush1.bf16.msra.mxu0 0
  %1380 = vmatprep.subr.bf16.mxu0 0
  %1381 = vmatpush1.bf16.msra.mxu0 0
  %1382 = vmatprep.subr.bf16.mxu0 0
  %1383 = vmatpush1.bf16.msra.mxu0 0
  %1384 = vmatprep.subr.bf16.mxu0 0
  %1385 = vmatpush1.bf16.msra.mxu0 0
  %1386 = vmatprep.subr.bf16.mxu0 0
  %1387 = vmatpush1.bf16.msra.mxu0 0
  %1388 = vmatprep.subr.bf16.mxu0 0
  %1389 = vmatpush1.bf16.msra.mxu0 0
  %1390 = vmatprep.subr.bf16.mxu0 0
  %1391 = vmatpush1.bf16.msra.mxu0 0
  %1392 = vmatprep.subr.bf16.mxu0 0
  %1393 = vmatpush1.bf16.msra.mxu0 0
  %1394 = vmatprep.subr.bf16.mxu0 0
  %1395 = vmatpush1.bf16.msra.mxu0 0
  %1396 = vmatprep.subr.bf16.mxu0 0
  %1397 = vmatpush1.bf16.msra.mxu0 0
  %1398 = vmatprep.subr.bf16.mxu0 0
  %1399 = vmatpush1.bf16.msra.mxu0 0
  %1400 = vmatprep.subr.bf16.mxu0 0
  %1401 = vmatpush1.bf16.msra.mxu0 0
  %1402 = vmatprep.subr.bf16.mxu0 0
  %1403 = vmatpush1.bf16.msra.mxu0 0
  %1404 = vmatprep.mubr.bf16.mxu0 0
  %1405 = vmatmul.mubr.bf16.gmra.mrb[0].mxu0 %v1206
  %v1406 = vpop.f32.mrb[0].mxu0
  %v1407 = vadd.f32 0.0, %v1406
  %v1408 = vpop.f32.mrb[0].mxu0
  %v1409 = vadd.f32 0.0, %v1408
  %v1410 = vpop.f32.mrb[0].mxu0
  %v1411 = vpop.f32.mrb[0].mxu0
  %1412 = vdwg.mxu0
  %1413 = vmatprep.subr.bf16.mxu0 %v831
  %1414 = vmatpush1.bf16.msra.mxu0 %v830
  %1415 = vmatprep.subr.bf16.mxu0 %v895
  %1416 = vmatpush1.bf16.msra.mxu0 %v894
  %1417 = vmatprep.subr.bf16.mxu0 %v959
  %1418 = vmatpush1.bf16.msra.mxu0 %v958
  %1419 = vmatprep.subr.bf16.mxu0 0
  %1420 = vmatpush1.bf16.msra.mxu0 0
  %1421 = vmatprep.subr.bf16.mxu0 0
  %1422 = vmatpush1.bf16.msra.mxu0 0
  %1423 = vmatprep.subr.bf16.mxu0 0
  %1424 = vmatpush1.bf16.msra.mxu0 0
  %1425 = vmatprep.subr.bf16.mxu0 0
  %1426 = vmatpush1.bf16.msra.mxu0 0
  %1427 = vmatprep.subr.bf16.mxu0 0
  %1428 = vmatpush1.bf16.msra.mxu0 0
  %1429 = vmatprep.subr.bf16.mxu0 0
  %1430 = vmatpush1.bf16.msra.mxu0 0
  %1431 = vmatprep.subr.bf16.mxu0 0
  %1432 = vmatpush1.bf16.msra.mxu0 0
  %1433 = vmatprep.subr.bf16.mxu0 0
  %1434 = vmatpush1.bf16.msra.mxu0 0
  %1435 = vmatprep.subr.bf16.mxu0 0
  %1436 = vmatpush1.bf16.msra.mxu0 0
  %1437 = vmatprep.subr.bf16.mxu0 0
  %1438 = vmatpush1.bf16.msra.mxu0 0
  %1439 = vmatprep.subr.bf16.mxu0 0
  %1440 = vmatpush1.bf16.msra.mxu0 0
  %1441 = vmatprep.subr.bf16.mxu0 0
  %1442 = vmatpush1.bf16.msra.mxu0 0
  %1443 = vmatprep.subr.bf16.mxu0 0
  %1444 = vmatpush1.bf16.msra.mxu0 0
  %1445 = vmatprep.mubr.bf16.mxu0 0
  %1446 = vmatmul.mubr.bf16.gmra.mrb[0].mxu0 %v1206
  %v1447 = vpop.f32.mrb[0].mxu0
  %v1448 = vadd.f32 0.0, %v1447
  %v1449 = vpop.f32.mrb[0].mxu0
  %v1450 = vadd.f32 0.0, %v1449
  %v1451 = vpop.f32.mrb[0].mxu0
  %v1452 = vpop.f32.mrb[0].mxu0
  %1453 = vdwg.mxu0
  %1454 = vmatprep.subr.bf16.mxu0 %v833
  %1455 = vmatpush1.bf16.msra.mxu0 %v832
  %1456 = vmatprep.subr.bf16.mxu0 %v897
  %1457 = vmatpush1.bf16.msra.mxu0 %v896
  %1458 = vmatprep.subr.bf16.mxu0 %v961
  %1459 = vmatpush1.bf16.msra.mxu0 %v960
  %1460 = vmatprep.subr.bf16.mxu0 0
  %1461 = vmatpush1.bf16.msra.mxu0 0
  %1462 = vmatprep.subr.bf16.mxu0 0
  %1463 = vmatpush1.bf16.msra.mxu0 0
  %1464 = vmatprep.subr.bf16.mxu0 0
  %1465 = vmatpush1.bf16.msra.mxu0 0
  %1466 = vmatprep.subr.bf16.mxu0 0
  %1467 = vmatpush1.bf16.msra.mxu0 0
  %1468 = vmatprep.subr.bf16.mxu0 0
  %1469 = vmatpush1.bf16.msra.mxu0 0
  %1470 = vmatprep.subr.bf16.mxu0 0
  %1471 = vmatpush1.bf16.msra.mxu0 0
  %1472 = vmatprep.subr.bf16.mxu0 0
  %1473 = vmatpush1.bf16.msra.mxu0 0
  %1474 = vmatprep.subr.bf16.mxu0 0
  %1475 = vmatpush1.bf16.msra.mxu0 0
  %1476 = vmatprep.subr.bf16.mxu0 0
  %1477 = vmatpush1.bf16.msra.mxu0 0
  %1478 = vmatprep.subr.bf16.mxu0 0
  %1479 = vmatpush1.bf16.msra.mxu0 0
  %1480 = vmatprep.subr.bf16.mxu0 0
  %1481 = vmatpush1.bf16.msra.mxu0 0
  %1482 = vmatprep.subr.bf16.mxu0 0
  %1483 = vmatpush1.bf16.msra.mxu0 0
  %1484 = vmatprep.subr.bf16.mxu0 0
  %1485 = vmatpush1.bf16.msra.mxu0 0
  %1486 = vmatprep.mubr.bf16.mxu0 0
  %1487 = vmatmul.mubr.bf16.gmra.mrb[0].mxu0 %v1206
  %v1488 = vpop.f32.mrb[0].mxu0
  %v1489 = vadd.f32 0.0, %v1488
  %v1490 = vpop.f32.mrb[0].mxu0
  %v1491 = vadd.f32 0.0, %v1490
  %v1492 = vpop.f32.mrb[0].mxu0
  %v1493 = vpop.f32.mrb[0].mxu0
  %1494 = vdwg.mxu0
  %1495 = vmatprep.subr.bf16.mxu0 %v835
  %1496 = vmatpush1.bf16.msra.mxu0 %v834
  %1497 = vmatprep.subr.bf16.mxu0 %v899
  %1498 = vmatpush1.bf16.msra.mxu0 %v898
  %1499 = vmatprep.subr.bf16.mxu0 %v963
  %1500 = vmatpush1.bf16.msra.mxu0 %v962
  %1501 = vmatprep.subr.bf16.mxu0 0
  %1502 = vmatpush1.bf16.msra.mxu0 0
  %1503 = vmatprep.subr.bf16.mxu0 0
  %1504 = vmatpush1.bf16.msra.mxu0 0
  %1505 = vmatprep.subr.bf16.mxu0 0
  %1506 = vmatpush1.bf16.msra.mxu0 0
  %1507 = vmatprep.subr.bf16.mxu0 0
  %1508 = vmatpush1.bf16.msra.mxu0 0
  %1509 = vmatprep.subr.bf16.mxu0 0
  %1510 = vmatpush1.bf16.msra.mxu0 0
  %1511 = vmatprep.subr.bf16.mxu0 0
  %1512 = vmatpush1.bf16.msra.mxu0 0
  %1513 = vmatprep.subr.bf16.mxu0 0
  %1514 = vmatpush1.bf16.msra.mxu0 0
  %1515 = vmatprep.subr.bf16.mxu0 0
  %1516 = vmatpush1.bf16.msra.mxu0 0
  %1517 = vmatprep.subr.bf16.mxu0 0
  %1518 = vmatpush1.bf16.msra.mxu0 0
  %1519 = vmatprep.subr.bf16.mxu0 0
  %1520 = vmatpush1.bf16.msra.mxu0 0
  %1521 = vmatprep.subr.bf16.mxu0 0
  %1522 = vmatpush1.bf16.msra.mxu0 0
  %1523 = vmatprep.subr.bf16.mxu0 0
  %1524 = vmatpush1.bf16.msra.mxu0 0
  %1525 = vmatprep.subr.bf16.mxu0 0
  %1526 = vmatpush1.bf16.msra.mxu0 0
  %1527 = vmatprep.mubr.bf16.mxu0 0
  %1528 = vmatmul.mubr.bf16.gmra.mrb[0].mxu0 %v1206
  %v1529 = vpop.f32.mrb[0].mxu0
  %v1530 = vadd.f32 0.0, %v1529
  %v1531 = vpop.f32.mrb[0].mxu0
  %v1532 = vadd.f32 0.0, %v1531
  %v1533 = vpop.f32.mrb[0].mxu0
  %v1534 = vpop.f32.mrb[0].mxu0
  %1535 = vdwg.mxu0
  %1536 = vmatprep.subr.bf16.mxu0 %v837
  %1537 = vmatpush1.bf16.msra.mxu0 %v836
  %1538 = vmatprep.subr.bf16.mxu0 %v901
  %1539 = vmatpush1.bf16.msra.mxu0 %v900
  %1540 = vmatprep.subr.bf16.mxu0 %v965
  %1541 = vmatpush1.bf16.msra.mxu0 %v964
  %1542 = vmatprep.subr.bf16.mxu0 0
  %1543 = vmatpush1.bf16.msra.mxu0 0
  %1544 = vmatprep.subr.bf16.mxu0 0
  %1545 = vmatpush1.bf16.msra.mxu0 0
  %1546 = vmatprep.subr.bf16.mxu0 0
  %1547 = vmatpush1.bf16.msra.mxu0 0
  %1548 = vmatprep.subr.bf16.mxu0 0
  %1549 = vmatpush1.bf16.msra.mxu0 0
  %1550 = vmatprep.subr.bf16.mxu0 0
  %1551 = vmatpush1.bf16.msra.mxu0 0
  %1552 = vmatprep.subr.bf16.mxu0 0
  %1553 = vmatpush1.bf16.msra.mxu0 0
  %1554 = vmatprep.subr.bf16.mxu0 0
  %1555 = vmatpush1.bf16.msra.mxu0 0
  %1556 = vmatprep.subr.bf16.mxu0 0
  %1557 = vmatpush1.bf16.msra.mxu0 0
  %1558 = vmatprep.subr.bf16.mxu0 0
  %1559 = vmatpush1.bf16.msra.mxu0 0
  %1560 = vmatprep.subr.bf16.mxu0 0
  %1561 = vmatpush1.bf16.msra.mxu0 0
  %1562 = vmatprep.subr.bf16.mxu0 0
  %1563 = vmatpush1.bf16.msra.mxu0 0
  %1564 = vmatprep.subr.bf16.mxu0 0
  %1565 = vmatpush1.bf16.msra.mxu0 0
  %1566 = vmatprep.subr.bf16.mxu0 0
  %1567 = vmatpush1.bf16.msra.mxu0 0
  %1568 = vmatprep.mubr.bf16.mxu0 0
  %1569 = vmatmul.mubr.bf16.gmra.mrb[0].mxu0 %v1206
  %v1570 = vpop.f32.mrb[0].mxu0
  %v1571 = vadd.f32 0.0, %v1570
  %v1572 = vpop.f32.mrb[0].mxu0
  %v1573 = vadd.f32 0.0, %v1572
  %v1574 = vpop.f32.mrb[0].mxu0
  %v1575 = vpop.f32.mrb[0].mxu0
  %1576 = vdwg.mxu0
  %1577 = vmatprep.subr.bf16.mxu0 %v839
  %1578 = vmatpush1.bf16.msra.mxu0 %v838
  %1579 = vmatprep.subr.bf16.mxu0 %v903
  %1580 = vmatpush1.bf16.msra.mxu0 %v902
  %1581 = vmatprep.subr.bf16.mxu0 %v967
  %1582 = vmatpush1.bf16.msra.mxu0 %v966
  %1583 = vmatprep.subr.bf16.mxu0 0
  %1584 = vmatpush1.bf16.msra.mxu0 0
  %1585 = vmatprep.subr.bf16.mxu0 0
  %1586 = vmatpush1.bf16.msra.mxu0 0
  %1587 = vmatprep.subr.bf16.mxu0 0
  %1588 = vmatpush1.bf16.msra.mxu0 0
  %1589 = vmatprep.subr.bf16.mxu0 0
  %1590 = vmatpush1.bf16.msra.mxu0 0
  %1591 = vmatprep.subr.bf16.mxu0 0
  %1592 = vmatpush1.bf16.msra.mxu0 0
  %1593 = vmatprep.subr.bf16.mxu0 0
  %1594 = vmatpush1.bf16.msra.mxu0 0
  %1595 = vmatprep.subr.bf16.mxu0 0
  %1596 = vmatpush1.bf16.msra.mxu0 0
  %1597 = vmatprep.subr.bf16.mxu0 0
  %1598 = vmatpush1.bf16.msra.mxu0 0
  %1599 = vmatprep.subr.bf16.mxu0 0
  %1600 = vmatpush1.bf16.msra.mxu0 0
  %1601 = vmatprep.subr.bf16.mxu0 0
  %1602 = vmatpush1.bf16.msra.mxu0 0
  %1603 = vmatprep.subr.bf16.mxu0 0
  %1604 = vmatpush1.bf16.msra.mxu0 0
  %1605 = vmatprep.subr.bf16.mxu0 0
  %1606 = vmatpush1.bf16.msra.mxu0 0
  %1607 = vmatprep.subr.bf16.mxu0 0
  %1608 = vmatpush1.bf16.msra.mxu0 0
  %1609 = vmatprep.mubr.bf16.mxu0 0
  %1610 = vmatmul.mubr.bf16.gmra.mrb[0].mxu0 %v1206
  %v1611 = vpop.f32.mrb[0].mxu0
  %v1612 = vadd.f32 0.0, %v1611
  %v1613 = vpop.f32.mrb[0].mxu0
  %v1614 = vadd.f32 0.0, %v1613
  %v1615 = vpop.f32.mrb[0].mxu0
  %v1616 = vpop.f32.mrb[0].mxu0
  %1617 = vdwg.mxu0
  %1618 = vmatprep.subr.bf16.mxu0 %v841
  %1619 = vmatpush1.bf16.msra.mxu0 %v840
  %1620 = vmatprep.subr.bf16.mxu0 %v905
  %1621 = vmatpush1.bf16.msra.mxu0 %v904
  %1622 = vmatprep.subr.bf16.mxu0 %v969
  %1623 = vmatpush1.bf16.msra.mxu0 %v968
  %1624 = vmatprep.subr.bf16.mxu0 0
  %1625 = vmatpush1.bf16.msra.mxu0 0
  %1626 = vmatprep.subr.bf16.mxu0 0
  %1627 = vmatpush1.bf16.msra.mxu0 0
  %1628 = vmatprep.subr.bf16.mxu0 0
  %1629 = vmatpush1.bf16.msra.mxu0 0
  %1630 = vmatprep.subr.bf16.mxu0 0
  %1631 = vmatpush1.bf16.msra.mxu0 0
  %1632 = vmatprep.subr.bf16.mxu0 0
  %1633 = vmatpush1.bf16.msra.mxu0 0
  %1634 = vmatprep.subr.bf16.mxu0 0
  %1635 = vmatpush1.bf16.msra.mxu0 0
  %1636 = vmatprep.subr.bf16.mxu0 0
  %1637 = vmatpush1.bf16.msra.mxu0 0
  %1638 = vmatprep.subr.bf16.mxu0 0
  %1639 = vmatpush1.bf16.msra.mxu0 0
  %1640 = vmatprep.subr.bf16.mxu0 0
  %1641 = vmatpush1.bf16.msra.mxu0 0
  %1642 = vmatprep.subr.bf16.mxu0 0
  %1643 = vmatpush1.bf16.msra.mxu0 0
  %1644 = vmatprep.subr.bf16.mxu0 0
  %1645 = vmatpush1.bf16.msra.mxu0 0
  %1646 = vmatprep.subr.bf16.mxu0 0
  %1647 = vmatpush1.bf16.msra.mxu0 0
  %1648 = vmatprep.subr.bf16.mxu0 0
  %1649 = vmatpush1.bf16.msra.mxu0 0
  %1650 = vmatprep.mubr.bf16.mxu0 0
  %1651 = vmatmul.mubr.bf16.gmra.mrb[0].mxu0 %v1206
  %v1652 = vpop.f32.mrb[0].mxu0
  %v1653 = vadd.f32 0.0, %v1652
  %v1654 = vpop.f32.mrb[0].mxu0
  %v1655 = vadd.f32 0.0, %v1654
  %v1656 = vpop.f32.mrb[0].mxu0
  %v1657 = vpop.f32.mrb[0].mxu0
  %1658 = vdwg.mxu0
  %1659 = vmatprep.subr.bf16.mxu0 %v843
  %1660 = vmatpush1.bf16.msra.mxu0 %v842
  %1661 = vmatprep.subr.bf16.mxu0 %v907
  %1662 = vmatpush1.bf16.msra.mxu0 %v906
  %1663 = vmatprep.subr.bf16.mxu0 %v971
  %1664 = vmatpush1.bf16.msra.mxu0 %v970
  %1665 = vmatprep.subr.bf16.mxu0 0
  %1666 = vmatpush1.bf16.msra.mxu0 0
  %1667 = vmatprep.subr.bf16.mxu0 0
  %1668 = vmatpush1.bf16.msra.mxu0 0
  %1669 = vmatprep.subr.bf16.mxu0 0
  %1670 = vmatpush1.bf16.msra.mxu0 0
  %1671 = vmatprep.subr.bf16.mxu0 0
  %1672 = vmatpush1.bf16.msra.mxu0 0
  %1673 = vmatprep.subr.bf16.mxu0 0
  %1674 = vmatpush1.bf16.msra.mxu0 0
  %1675 = vmatprep.subr.bf16.mxu0 0
  %1676 = vmatpush1.bf16.msra.mxu0 0
  %1677 = vmatprep.subr.bf16.mxu0 0
  %1678 = vmatpush1.bf16.msra.mxu0 0
  %1679 = vmatprep.subr.bf16.mxu0 0
  %1680 = vmatpush1.bf16.msra.mxu0 0
  %1681 = vmatprep.subr.bf16.mxu0 0
  %1682 = vmatpush1.bf16.msra.mxu0 0
  %1683 = vmatprep.subr.bf16.mxu0 0
  %1684 = vmatpush1.bf16.msra.mxu0 0
  %1685 = vmatprep.subr.bf16.mxu0 0
  %1686 = vmatpush1.bf16.msra.mxu0 0
  %1687 = vmatprep.subr.bf16.mxu0 0
  %1688 = vmatpush1.bf16.msra.mxu0 0
  %1689 = vmatprep.subr.bf16.mxu0 0
  %1690 = vmatpush1.bf16.msra.mxu0 0
  %1691 = vmatprep.mubr.bf16.mxu0 0
  %1692 = vmatmul.mubr.bf16.gmra.mrb[0].mxu0 %v1206
  %v1693 = vpop.f32.mrb[0].mxu0
  %v1694 = vadd.f32 0.0, %v1693
  %v1695 = vpop.f32.mrb[0].mxu0
  %v1696 = vadd.f32 0.0, %v1695
  %v1697 = vpop.f32.mrb[0].mxu0
  %v1698 = vpop.f32.mrb[0].mxu0
  %1699 = vdwg.mxu0
  %1700 = vmatprep.subr.bf16.mxu0 %v845
  %1701 = vmatpush1.bf16.msra.mxu0 %v844
  %1702 = vmatprep.subr.bf16.mxu0 %v909
  %1703 = vmatpush1.bf16.msra.mxu0 %v908
  %1704 = vmatprep.subr.bf16.mxu0 %v973
  %1705 = vmatpush1.bf16.msra.mxu0 %v972
  %1706 = vmatprep.subr.bf16.mxu0 0
  %1707 = vmatpush1.bf16.msra.mxu0 0
  %1708 = vmatprep.subr.bf16.mxu0 0
  %1709 = vmatpush1.bf16.msra.mxu0 0
  %1710 = vmatprep.subr.bf16.mxu0 0
  %1711 = vmatpush1.bf16.msra.mxu0 0
  %1712 = vmatprep.subr.bf16.mxu0 0
  %1713 = vmatpush1.bf16.msra.mxu0 0
  %1714 = vmatprep.subr.bf16.mxu0 0
  %1715 = vmatpush1.bf16.msra.mxu0 0
  %1716 = vmatprep.subr.bf16.mxu0 0
  %1717 = vmatpush1.bf16.msra.mxu0 0
  %1718 = vmatprep.subr.bf16.mxu0 0
  %1719 = vmatpush1.bf16.msra.mxu0 0
  %1720 = vmatprep.subr.bf16.mxu0 0
  %1721 = vmatpush1.bf16.msra.mxu0 0
  %1722 = vmatprep.subr.bf16.mxu0 0
  %1723 = vmatpush1.bf16.msra.mxu0 0
  %1724 = vmatprep.subr.bf16.mxu0 0
  %1725 = vmatpush1.bf16.msra.mxu0 0
  %1726 = vmatprep.subr.bf16.mxu0 0
  %1727 = vmatpush1.bf16.msra.mxu0 0
  %1728 = vmatprep.subr.bf16.mxu0 0
  %1729 = vmatpush1.bf16.msra.mxu0 0
  %1730 = vmatprep.subr.bf16.mxu0 0
  %1731 = vmatpush1.bf16.msra.mxu0 0
  %1732 = vmatprep.mubr.bf16.mxu0 0
  %1733 = vmatmul.mubr.bf16.gmra.mrb[0].mxu0 %v1206
  %v1734 = vpop.f32.mrb[0].mxu0
  %v1735 = vadd.f32 0.0, %v1734
  %v1736 = vpop.f32.mrb[0].mxu0
  %v1737 = vadd.f32 0.0, %v1736
  %v1738 = vpop.f32.mrb[0].mxu0
  %v1739 = vpop.f32.mrb[0].mxu0
  %1740 = vdwg.mxu0
  %1741 = vmatprep.subr.bf16.mxu0 %v847
  %1742 = vmatpush1.bf16.msra.mxu0 %v846
  %1743 = vmatprep.subr.bf16.mxu0 %v911
  %1744 = vmatpush1.bf16.msra.mxu0 %v910
  %1745 = vmatprep.subr.bf16.mxu0 %v975
  %1746 = vmatpush1.bf16.msra.mxu0 %v974
  %1747 = vmatprep.subr.bf16.mxu0 0
  %1748 = vmatpush1.bf16.msra.mxu0 0
  %1749 = vmatprep.subr.bf16.mxu0 0
  %1750 = vmatpush1.bf16.msra.mxu0 0
  %1751 = vmatprep.subr.bf16.mxu0 0
  %1752 = vmatpush1.bf16.msra.mxu0 0
  %1753 = vmatprep.subr.bf16.mxu0 0
  %1754 = vmatpush1.bf16.msra.mxu0 0
  %1755 = vmatprep.subr.bf16.mxu0 0
  %1756 = vmatpush1.bf16.msra.mxu0 0
  %1757 = vmatprep.subr.bf16.mxu0 0
  %1758 = vmatpush1.bf16.msra.mxu0 0
  %1759 = vmatprep.subr.bf16.mxu0 0
  %1760 = vmatpush1.bf16.msra.mxu0 0
  %1761 = vmatprep.subr.bf16.mxu0 0
  %1762 = vmatpush1.bf16.msra.mxu0 0
  %1763 = vmatprep.subr.bf16.mxu0 0
  %1764 = vmatpush1.bf16.msra.mxu0 0
  %1765 = vmatprep.subr.bf16.mxu0 0
  %1766 = vmatpush1.bf16.msra.mxu0 0
  %1767 = vmatprep.subr.bf16.mxu0 0
  %1768 = vmatpush1.bf16.msra.mxu0 0
  %1769 = vmatprep.subr.bf16.mxu0 0
  %1770 = vmatpush1.bf16.msra.mxu0 0
  %1771 = vmatprep.subr.bf16.mxu0 0
  %1772 = vmatpush1.bf16.msra.mxu0 0
  %1773 = vmatprep.mubr.bf16.mxu0 0
  %1774 = vmatmul.mubr.bf16.gmra.mrb[0].mxu0 %v1206
  %v1775 = vpop.f32.mrb[0].mxu0
  %v1776 = vadd.f32 0.0, %v1775
  %v1777 = vpop.f32.mrb[0].mxu0
  %v1778 = vadd.f32 0.0, %v1777
  %v1779 = vpop.f32.mrb[0].mxu0
  %v1780 = vpop.f32.mrb[0].mxu0
  %1781 = vdwg.mxu0
  %1782 = vmatprep.subr.bf16.mxu0 %v849
  %1783 = vmatpush1.bf16.msra.mxu0 %v848
  %1784 = vmatprep.subr.bf16.mxu0 %v913
  %1785 = vmatpush1.bf16.msra.mxu0 %v912
  %1786 = vmatprep.subr.bf16.mxu0 %v977
  %1787 = vmatpush1.bf16.msra.mxu0 %v976
  %1788 = vmatprep.subr.bf16.mxu0 0
  %1789 = vmatpush1.bf16.msra.mxu0 0
  %1790 = vmatprep.subr.bf16.mxu0 0
  %1791 = vmatpush1.bf16.msra.mxu0 0
  %1792 = vmatprep.subr.bf16.mxu0 0
  %1793 = vmatpush1.bf16.msra.mxu0 0
  %1794 = vmatprep.subr.bf16.mxu0 0
  %1795 = vmatpush1.bf16.msra.mxu0 0
  %1796 = vmatprep.subr.bf16.mxu0 0
  %1797 = vmatpush1.bf16.msra.mxu0 0
  %1798 = vmatprep.subr.bf16.mxu0 0
  %1799 = vmatpush1.bf16.msra.mxu0 0
  %1800 = vmatprep.subr.bf16.mxu0 0
  %1801 = vmatpush1.bf16.msra.mxu0 0
  %1802 = vmatprep.subr.bf16.mxu0 0
  %1803 = vmatpush1.bf16.msra.mxu0 0
  %1804 = vmatprep.subr.bf16.mxu0 0
  %1805 = vmatpush1.bf16.msra.mxu0 0
  %1806 = vmatprep.subr.bf16.mxu0 0
  %1807 = vmatpush1.bf16.msra.mxu0 0
  %1808 = vmatprep.subr.bf16.mxu0 0
  %1809 = vmatpush1.bf16.msra.mxu0 0
  %1810 = vmatprep.subr.bf16.mxu0 0
  %1811 = vmatpush1.bf16.msra.mxu0 0
  %1812 = vmatprep.subr.bf16.mxu0 0
  %1813 = vmatpush1.bf16.msra.mxu0 0
  %1814 = vmatprep.mubr.bf16.mxu0 0
  %1815 = vmatmul.mubr.bf16.gmra.mrb[0].mxu0 %v1206
  %v1816 = vpop.f32.mrb[0].mxu0
  %v1817 = vadd.f32 0.0, %v1816
  %v1818 = vpop.f32.mrb[0].mxu0
  %v1819 = vadd.f32 0.0, %v1818
  %v1820 = vpop.f32.mrb[0].mxu0
  %v1821 = vpop.f32.mrb[0].mxu0
  %1822 = vdwg.mxu0
  %1823 = vmatprep.subr.bf16.mxu0 %v851
  %1824 = vmatpush1.bf16.msra.mxu0 %v850
  %1825 = vmatprep.subr.bf16.mxu0 %v915
  %1826 = vmatpush1.bf16.msra.mxu0 %v914
  %1827 = vmatprep.subr.bf16.mxu0 %v979
  %1828 = vmatpush1.bf16.msra.mxu0 %v978
  %1829 = vmatprep.subr.bf16.mxu0 0
  %1830 = vmatpush1.bf16.msra.mxu0 0
  %1831 = vmatprep.subr.bf16.mxu0 0
  %1832 = vmatpush1.bf16.msra.mxu0 0
  %1833 = vmatprep.subr.bf16.mxu0 0
  %1834 = vmatpush1.bf16.msra.mxu0 0
  %1835 = vmatprep.subr.bf16.mxu0 0
  %1836 = vmatpush1.bf16.msra.mxu0 0
  %1837 = vmatprep.subr.bf16.mxu0 0
  %1838 = vmatpush1.bf16.msra.mxu0 0
  %1839 = vmatprep.subr.bf16.mxu0 0
  %1840 = vmatpush1.bf16.msra.mxu0 0
  %1841 = vmatprep.subr.bf16.mxu0 0
  %1842 = vmatpush1.bf16.msra.mxu0 0
  %1843 = vmatprep.subr.bf16.mxu0 0
  %1844 = vmatpush1.bf16.msra.mxu0 0
  %1845 = vmatprep.subr.bf16.mxu0 0
  %1846 = vmatpush1.bf16.msra.mxu0 0
  %1847 = vmatprep.subr.bf16.mxu0 0
  %1848 = vmatpush1.bf16.msra.mxu0 0
  %1849 = vmatprep.subr.bf16.mxu0 0
  %1850 = vmatpush1.bf16.msra.mxu0 0
  %1851 = vmatprep.subr.bf16.mxu0 0
  %1852 = vmatpush1.bf16.msra.mxu0 0
  %1853 = vmatprep.subr.bf16.mxu0 0
  %1854 = vmatpush1.bf16.msra.mxu0 0
  %1855 = vmatprep.mubr.bf16.mxu0 0
  %1856 = vmatmul.mubr.bf16.gmra.mrb[0].mxu0 %v1206
  %v1857 = vpop.f32.mrb[0].mxu0
  %v1858 = vadd.f32 0.0, %v1857
  %v1859 = vpop.f32.mrb[0].mxu0
  %v1860 = vadd.f32 0.0, %v1859
  %v1861 = vpop.f32.mrb[0].mxu0
  %v1862 = vpop.f32.mrb[0].mxu0
  %1863 = vdwg.mxu0
  %1864 = vmatprep.subr.bf16.mxu0 %v853
  %1865 = vmatpush1.bf16.msra.mxu0 %v852
  %1866 = vmatprep.subr.bf16.mxu0 %v917
  %1867 = vmatpush1.bf16.msra.mxu0 %v916
  %1868 = vmatprep.subr.bf16.mxu0 %v981
  %1869 = vmatpush1.bf16.msra.mxu0 %v980
  %1870 = vmatprep.subr.bf16.mxu0 0
  %1871 = vmatpush1.bf16.msra.mxu0 0
  %1872 = vmatprep.subr.bf16.mxu0 0
  %1873 = vmatpush1.bf16.msra.mxu0 0
  %1874 = vmatprep.subr.bf16.mxu0 0
  %1875 = vmatpush1.bf16.msra.mxu0 0
  %1876 = vmatprep.subr.bf16.mxu0 0
  %1877 = vmatpush1.bf16.msra.mxu0 0
  %1878 = vmatprep.subr.bf16.mxu0 0
  %1879 = vmatpush1.bf16.msra.mxu0 0
  %1880 = vmatprep.subr.bf16.mxu0 0
  %1881 = vmatpush1.bf16.msra.mxu0 0
  %1882 = vmatprep.subr.bf16.mxu0 0
  %1883 = vmatpush1.bf16.msra.mxu0 0
  %1884 = vmatprep.subr.bf16.mxu0 0
  %1885 = vmatpush1.bf16.msra.mxu0 0
  %1886 = vmatprep.subr.bf16.mxu0 0
  %1887 = vmatpush1.bf16.msra.mxu0 0
  %1888 = vmatprep.subr.bf16.mxu0 0
  %1889 = vmatpush1.bf16.msra.mxu0 0
  %1890 = vmatprep.subr.bf16.mxu0 0
  %1891 = vmatpush1.bf16.msra.mxu0 0
  %1892 = vmatprep.subr.bf16.mxu0 0
  %1893 = vmatpush1.bf16.msra.mxu0 0
  %1894 = vmatprep.subr.bf16.mxu0 0
  %1895 = vmatpush1.bf16.msra.mxu0 0
  %1896 = vmatprep.mubr.bf16.mxu0 0
  %1897 = vmatmul.mubr.bf16.gmra.mrb[0].mxu0 %v1206
  %v1898 = vpop.f32.mrb[0].mxu0
  %v1899 = vadd.f32 0.0, %v1898
  %v1900 = vpop.f32.mrb[0].mxu0
  %v1901 = vadd.f32 0.0, %v1900
  %v1902 = vpop.f32.mrb[0].mxu0
  %v1903 = vpop.f32.mrb[0].mxu0
  %1904 = vdwg.mxu0
  %1905 = vmatprep.subr.bf16.mxu0 %v855
  %1906 = vmatpush1.bf16.msra.mxu0 %v854
  %1907 = vmatprep.subr.bf16.mxu0 %v919
  %1908 = vmatpush1.bf16.msra.mxu0 %v918
  %1909 = vmatprep.subr.bf16.mxu0 %v983
  %1910 = vmatpush1.bf16.msra.mxu0 %v982
  %1911 = vmatprep.subr.bf16.mxu0 0
  %1912 = vmatpush1.bf16.msra.mxu0 0
  %1913 = vmatprep.subr.bf16.mxu0 0
  %1914 = vmatpush1.bf16.msra.mxu0 0
  %1915 = vmatprep.subr.bf16.mxu0 0
  %1916 = vmatpush1.bf16.msra.mxu0 0
  %1917 = vmatprep.subr.bf16.mxu0 0
  %1918 = vmatpush1.bf16.msra.mxu0 0
  %1919 = vmatprep.subr.bf16.mxu0 0
  %1920 = vmatpush1.bf16.msra.mxu0 0
  %1921 = vmatprep.subr.bf16.mxu0 0
  %1922 = vmatpush1.bf16.msra.mxu0 0
  %1923 = vmatprep.subr.bf16.mxu0 0
  %1924 = vmatpush1.bf16.msra.mxu0 0
  %1925 = vmatprep.subr.bf16.mxu0 0
  %1926 = vmatpush1.bf16.msra.mxu0 0
  %1927 = vmatprep.subr.bf16.mxu0 0
  %1928 = vmatpush1.bf16.msra.mxu0 0
  %1929 = vmatprep.subr.bf16.mxu0 0
  %1930 = vmatpush1.bf16.msra.mxu0 0
  %1931 = vmatprep.subr.bf16.mxu0 0
  %1932 = vmatpush1.bf16.msra.mxu0 0
  %1933 = vmatprep.subr.bf16.mxu0 0
  %1934 = vmatpush1.bf16.msra.mxu0 0
  %1935 = vmatprep.subr.bf16.mxu0 0
  %1936 = vmatpush1.bf16.msra.mxu0 0
  %1937 = vmatprep.mubr.bf16.mxu0 0
  %1938 = vmatmul.mubr.bf16.gmra.mrb[0].mxu0 %v1206
  %v1939 = vpop.f32.mrb[0].mxu0
  %v1940 = vadd.f32 0.0, %v1939
  %v1941 = vpop.f32.mrb[0].mxu0
  %v1942 = vadd.f32 0.0, %v1941
  %v1943 = vpop.f32.mrb[0].mxu0
  %v1944 = vpop.f32.mrb[0].mxu0
  %1945 = vdwg.mxu0
  %1946 = vmatprep.subr.bf16.mxu0 %v857
  %1947 = vmatpush1.bf16.msra.mxu0 %v856
  %1948 = vmatprep.subr.bf16.mxu0 %v921
  %1949 = vmatpush1.bf16.msra.mxu0 %v920
  %1950 = vmatprep.subr.bf16.mxu0 %v985
  %1951 = vmatpush1.bf16.msra.mxu0 %v984
  %1952 = vmatprep.subr.bf16.mxu0 0
  %1953 = vmatpush1.bf16.msra.mxu0 0
  %1954 = vmatprep.subr.bf16.mxu0 0
  %1955 = vmatpush1.bf16.msra.mxu0 0
  %1956 = vmatprep.subr.bf16.mxu0 0
  %1957 = vmatpush1.bf16.msra.mxu0 0
  %1958 = vmatprep.subr.bf16.mxu0 0
  %1959 = vmatpush1.bf16.msra.mxu0 0
  %1960 = vmatprep.subr.bf16.mxu0 0
  %1961 = vmatpush1.bf16.msra.mxu0 0
  %1962 = vmatprep.subr.bf16.mxu0 0
  %1963 = vmatpush1.bf16.msra.mxu0 0
  %1964 = vmatprep.subr.bf16.mxu0 0
  %1965 = vmatpush1.bf16.msra.mxu0 0
  %1966 = vmatprep.subr.bf16.mxu0 0
  %1967 = vmatpush1.bf16.msra.mxu0 0
  %1968 = vmatprep.subr.bf16.mxu0 0
  %1969 = vmatpush1.bf16.msra.mxu0 0
  %1970 = vmatprep.subr.bf16.mxu0 0
  %1971 = vmatpush1.bf16.msra.mxu0 0
  %1972 = vmatprep.subr.bf16.mxu0 0
  %1973 = vmatpush1.bf16.msra.mxu0 0
  %1974 = vmatprep.subr.bf16.mxu0 0
  %1975 = vmatpush1.bf16.msra.mxu0 0
  %1976 = vmatprep.subr.bf16.mxu0 0
  %1977 = vmatpush1.bf16.msra.mxu0 0
  %1978 = vmatprep.mubr.bf16.mxu0 0
  %1979 = vmatmul.mubr.bf16.gmra.mrb[0].mxu0 %v1206
  %v1980 = vpop.f32.mrb[0].mxu0
  %v1981 = vadd.f32 0.0, %v1980
  %v1982 = vpop.f32.mrb[0].mxu0
  %v1983 = vadd.f32 0.0, %v1982
  %v1984 = vpop.f32.mrb[0].mxu0
  %v1985 = vpop.f32.mrb[0].mxu0
  %1986 = vdwg.mxu0
  %1987 = vmatprep.subr.bf16.mxu0 %v859
  %1988 = vmatpush1.bf16.msra.mxu0 %v858
  %1989 = vmatprep.subr.bf16.mxu0 %v923
  %1990 = vmatpush1.bf16.msra.mxu0 %v922
  %1991 = vmatprep.subr.bf16.mxu0 %v987
  %1992 = vmatpush1.bf16.msra.mxu0 %v986
  %1993 = vmatprep.subr.bf16.mxu0 0
  %1994 = vmatpush1.bf16.msra.mxu0 0
  %1995 = vmatprep.subr.bf16.mxu0 0
  %1996 = vmatpush1.bf16.msra.mxu0 0
  %1997 = vmatprep.subr.bf16.mxu0 0
  %1998 = vmatpush1.bf16.msra.mxu0 0
  %1999 = vmatprep.subr.bf16.mxu0 0
  %2000 = vmatpush1.bf16.msra.mxu0 0
  %2001 = vmatprep.subr.bf16.mxu0 0
  %2002 = vmatpush1.bf16.msra.mxu0 0
  %2003 = vmatprep.subr.bf16.mxu0 0
  %2004 = vmatpush1.bf16.msra.mxu0 0
  %2005 = vmatprep.subr.bf16.mxu0 0
  %2006 = vmatpush1.bf16.msra.mxu0 0
  %2007 = vmatprep.subr.bf16.mxu0 0
  %2008 = vmatpush1.bf16.msra.mxu0 0
  %2009 = vmatprep.subr.bf16.mxu0 0
  %2010 = vmatpush1.bf16.msra.mxu0 0
  %2011 = vmatprep.subr.bf16.mxu0 0
  %2012 = vmatpush1.bf16.msra.mxu0 0
  %2013 = vmatprep.subr.bf16.mxu0 0
  %2014 = vmatpush1.bf16.msra.mxu0 0
  %2015 = vmatprep.subr.bf16.mxu0 0
  %2016 = vmatpush1.bf16.msra.mxu0 0
  %2017 = vmatprep.subr.bf16.mxu0 0
  %2018 = vmatpush1.bf16.msra.mxu0 0
  %2019 = vmatprep.mubr.bf16.mxu0 0
  %2020 = vmatmul.mubr.bf16.gmra.mrb[0].mxu0 %v1206
  %v2021 = vpop.f32.mrb[0].mxu0
  %v2022 = vadd.f32 0.0, %v2021
  %v2023 = vpop.f32.mrb[0].mxu0
  %v2024 = vadd.f32 0.0, %v2023
  %v2025 = vpop.f32.mrb[0].mxu0
  %v2026 = vpop.f32.mrb[0].mxu0
  %2027 = vdwg.mxu0
  %2028 = vmatprep.subr.bf16.mxu0 %v861
  %2029 = vmatpush1.bf16.msra.mxu0 %v860
  %2030 = vmatprep.subr.bf16.mxu0 %v925
  %2031 = vmatpush1.bf16.msra.mxu0 %v924
  %2032 = vmatprep.subr.bf16.mxu0 %v989
  %2033 = vmatpush1.bf16.msra.mxu0 %v988
  %2034 = vmatprep.subr.bf16.mxu0 0
  %2035 = vmatpush1.bf16.msra.mxu0 0
  %2036 = vmatprep.subr.bf16.mxu0 0
  %2037 = vmatpush1.bf16.msra.mxu0 0
  %2038 = vmatprep.subr.bf16.mxu0 0
  %2039 = vmatpush1.bf16.msra.mxu0 0
  %2040 = vmatprep.subr.bf16.mxu0 0
  %2041 = vmatpush1.bf16.msra.mxu0 0
  %2042 = vmatprep.subr.bf16.mxu0 0
  %2043 = vmatpush1.bf16.msra.mxu0 0
  %2044 = vmatprep.subr.bf16.mxu0 0
  %2045 = vmatpush1.bf16.msra.mxu0 0
  %2046 = vmatprep.subr.bf16.mxu0 0
  %2047 = vmatpush1.bf16.msra.mxu0 0
  %2048 = vmatprep.subr.bf16.mxu0 0
  %2049 = vmatpush1.bf16.msra.mxu0 0
  %2050 = vmatprep.subr.bf16.mxu0 0
  %2051 = vmatpush1.bf16.msra.mxu0 0
  %2052 = vmatprep.subr.bf16.mxu0 0
  %2053 = vmatpush1.bf16.msra.mxu0 0
  %2054 = vmatprep.subr.bf16.mxu0 0
  %2055 = vmatpush1.bf16.msra.mxu0 0
  %2056 = vmatprep.subr.bf16.mxu0 0
  %2057 = vmatpush1.bf16.msra.mxu0 0
  %2058 = vmatprep.subr.bf16.mxu0 0
  %2059 = vmatpush1.bf16.msra.mxu0 0
  %2060 = vmatprep.mubr.bf16.mxu0 0
  %2061 = vmatmul.mubr.bf16.gmra.mrb[0].mxu0 %v1206
  %v2062 = vpop.f32.mrb[0].mxu0
  %v2063 = vadd.f32 0.0, %v2062
  %v2064 = vpop.f32.mrb[0].mxu0
  %v2065 = vadd.f32 0.0, %v2064
  %v2066 = vpop.f32.mrb[0].mxu0
  %v2067 = vpop.f32.mrb[0].mxu0
  %2068 = vdwg.mxu0
  %2069 = vmatprep.subr.bf16.mxu0 %v863
  %2070 = vmatpush1.bf16.msra.mxu0 %v862
  %2071 = vmatprep.subr.bf16.mxu0 %v927
  %2072 = vmatpush1.bf16.msra.mxu0 %v926
  %2073 = vmatprep.subr.bf16.mxu0 %v991
  %2074 = vmatpush1.bf16.msra.mxu0 %v990
  %2075 = vmatprep.subr.bf16.mxu0 0
  %2076 = vmatpush1.bf16.msra.mxu0 0
  %2077 = vmatprep.subr.bf16.mxu0 0
  %2078 = vmatpush1.bf16.msra.mxu0 0
  %2079 = vmatprep.subr.bf16.mxu0 0
  %2080 = vmatpush1.bf16.msra.mxu0 0
  %2081 = vmatprep.subr.bf16.mxu0 0
  %2082 = vmatpush1.bf16.msra.mxu0 0
  %2083 = vmatprep.subr.bf16.mxu0 0
  %2084 = vmatpush1.bf16.msra.mxu0 0
  %2085 = vmatprep.subr.bf16.mxu0 0
  %2086 = vmatpush1.bf16.msra.mxu0 0
  %2087 = vmatprep.subr.bf16.mxu0 0
  %2088 = vmatpush1.bf16.msra.mxu0 0
  %2089 = vmatprep.subr.bf16.mxu0 0
  %2090 = vmatpush1.bf16.msra.mxu0 0
  %2091 = vmatprep.subr.bf16.mxu0 0
  %2092 = vmatpush1.bf16.msra.mxu0 0
  %2093 = vmatprep.subr.bf16.mxu0 0
  %2094 = vmatpush1.bf16.msra.mxu0 0
  %2095 = vmatprep.subr.bf16.mxu0 0
  %2096 = vmatpush1.bf16.msra.mxu0 0
  %2097 = vmatprep.subr.bf16.mxu0 0
  %2098 = vmatpush1.bf16.msra.mxu0 0
  %2099 = vmatprep.subr.bf16.mxu0 0
  %2100 = vmatpush1.bf16.msra.mxu0 0
  %2101 = vmatprep.mubr.bf16.mxu0 0
  %2102 = vmatmul.mubr.bf16.gmra.mrb[0].mxu0 %v1206
  %v2103 = vpop.f32.mrb[0].mxu0
  %v2104 = vadd.f32 0.0, %v2103
  %v2105 = vpop.f32.mrb[0].mxu0
  %v2106 = vadd.f32 0.0, %v2105
  %v2107 = vpop.f32.mrb[0].mxu0
  %v2108 = vpop.f32.mrb[0].mxu0
  %2109 = vdwg.mxu0
  %2110 = vmatprep.subr.bf16.mxu0 %v865
  %2111 = vmatpush1.bf16.msra.mxu0 %v864
  %2112 = vmatprep.subr.bf16.mxu0 %v929
  %2113 = vmatpush1.bf16.msra.mxu0 %v928
  %2114 = vmatprep.subr.bf16.mxu0 %v993
  %2115 = vmatpush1.bf16.msra.mxu0 %v992
  %2116 = vmatprep.subr.bf16.mxu0 0
  %2117 = vmatpush1.bf16.msra.mxu0 0
  %2118 = vmatprep.subr.bf16.mxu0 0
  %2119 = vmatpush1.bf16.msra.mxu0 0
  %2120 = vmatprep.subr.bf16.mxu0 0
  %2121 = vmatpush1.bf16.msra.mxu0 0
  %2122 = vmatprep.subr.bf16.mxu0 0
  %2123 = vmatpush1.bf16.msra.mxu0 0
  %2124 = vmatprep.subr.bf16.mxu0 0
  %2125 = vmatpush1.bf16.msra.mxu0 0
  %2126 = vmatprep.subr.bf16.mxu0 0
  %2127 = vmatpush1.bf16.msra.mxu0 0
  %2128 = vmatprep.subr.bf16.mxu0 0
  %2129 = vmatpush1.bf16.msra.mxu0 0
  %2130 = vmatprep.subr.bf16.mxu0 0
  %2131 = vmatpush1.bf16.msra.mxu0 0
  %2132 = vmatprep.subr.bf16.mxu0 0
  %2133 = vmatpush1.bf16.msra.mxu0 0
  %2134 = vmatprep.subr.bf16.mxu0 0
  %2135 = vmatpush1.bf16.msra.mxu0 0
  %2136 = vmatprep.subr.bf16.mxu0 0
  %2137 = vmatpush1.bf16.msra.mxu0 0
  %2138 = vmatprep.subr.bf16.mxu0 0
  %2139 = vmatpush1.bf16.msra.mxu0 0
  %2140 = vmatprep.subr.bf16.mxu0 0
  %2141 = vmatpush1.bf16.msra.mxu0 0
  %2142 = vmatprep.mubr.bf16.mxu0 0
  %2143 = vmatmul.mubr.bf16.gmra.mrb[0].mxu0 %v1206
  %v2144 = vpop.f32.mrb[0].mxu0
  %v2145 = vadd.f32 0.0, %v2144
  %v2146 = vpop.f32.mrb[0].mxu0
  %v2147 = vadd.f32 0.0, %v2146
  %v2148 = vpop.f32.mrb[0].mxu0
  %v2149 = vpop.f32.mrb[0].mxu0
  %2150 = vdwg.mxu0
  %2151 = vmatprep.subr.bf16.mxu0 %v867
  %2152 = vmatpush1.bf16.msra.mxu0 %v866
  %2153 = vmatprep.subr.bf16.mxu0 %v931
  %2154 = vmatpush1.bf16.msra.mxu0 %v930
  %2155 = vmatprep.subr.bf16.mxu0 %v995
  %2156 = vmatpush1.bf16.msra.mxu0 %v994
  %2157 = vmatprep.subr.bf16.mxu0 0
  %2158 = vmatpush1.bf16.msra.mxu0 0
  %2159 = vmatprep.subr.bf16.mxu0 0
  %2160 = vmatpush1.bf16.msra.mxu0 0
  %2161 = vmatprep.subr.bf16.mxu0 0
  %2162 = vmatpush1.bf16.msra.mxu0 0
  %2163 = vmatprep.subr.bf16.mxu0 0
  %2164 = vmatpush1.bf16.msra.mxu0 0
  %2165 = vmatprep.subr.bf16.mxu0 0
  %2166 = vmatpush1.bf16.msra.mxu0 0
  %2167 = vmatprep.subr.bf16.mxu0 0
  %2168 = vmatpush1.bf16.msra.mxu0 0
  %2169 = vmatprep.subr.bf16.mxu0 0
  %2170 = vmatpush1.bf16.msra.mxu0 0
  %2171 = vmatprep.subr.bf16.mxu0 0
  %2172 = vmatpush1.bf16.msra.mxu0 0
  %2173 = vmatprep.subr.bf16.mxu0 0
  %2174 = vmatpush1.bf16.msra.mxu0 0
  %2175 = vmatprep.subr.bf16.mxu0 0
  %2176 = vmatpush1.bf16.msra.mxu0 0
  %2177 = vmatprep.subr.bf16.mxu0 0
  %2178 = vmatpush1.bf16.msra.mxu0 0
  %2179 = vmatprep.subr.bf16.mxu0 0
  %2180 = vmatpush1.bf16.msra.mxu0 0
  %2181 = vmatprep.subr.bf16.mxu0 0
  %2182 = vmatpush1.bf16.msra.mxu0 0
  %2183 = vmatprep.mubr.bf16.mxu0 0
  %2184 = vmatmul.mubr.bf16.gmra.mrb[0].mxu0 %v1206
  %v2185 = vpop.f32.mrb[0].mxu0
  %v2186 = vadd.f32 0.0, %v2185
  %v2187 = vpop.f32.mrb[0].mxu0
  %v2188 = vadd.f32 0.0, %v2187
  %v2189 = vpop.f32.mrb[0].mxu0
  %v2190 = vpop.f32.mrb[0].mxu0
  %2191 = vdwg.mxu0
  %2192 = vmatprep.subr.bf16.mxu0 %v869
  %2193 = vmatpush1.bf16.msra.mxu0 %v868
  %2194 = vmatprep.subr.bf16.mxu0 %v933
  %2195 = vmatpush1.bf16.msra.mxu0 %v932
  %2196 = vmatprep.subr.bf16.mxu0 %v997
  %2197 = vmatpush1.bf16.msra.mxu0 %v996
  %2198 = vmatprep.subr.bf16.mxu0 0
  %2199 = vmatpush1.bf16.msra.mxu0 0
  %2200 = vmatprep.subr.bf16.mxu0 0
  %2201 = vmatpush1.bf16.msra.mxu0 0
  %2202 = vmatprep.subr.bf16.mxu0 0
  %2203 = vmatpush1.bf16.msra.mxu0 0
  %2204 = vmatprep.subr.bf16.mxu0 0
  %2205 = vmatpush1.bf16.msra.mxu0 0
  %2206 = vmatprep.subr.bf16.mxu0 0
  %2207 = vmatpush1.bf16.msra.mxu0 0
  %2208 = vmatprep.subr.bf16.mxu0 0
  %2209 = vmatpush1.bf16.msra.mxu0 0
  %2210 = vmatprep.subr.bf16.mxu0 0
  %2211 = vmatpush1.bf16.msra.mxu0 0
  %2212 = vmatprep.subr.bf16.mxu0 0
  %2213 = vmatpush1.bf16.msra.mxu0 0
  %2214 = vmatprep.subr.bf16.mxu0 0
  %2215 = vmatpush1.bf16.msra.mxu0 0
  %2216 = vmatprep.subr.bf16.mxu0 0
  %2217 = vmatpush1.bf16.msra.mxu0 0
  %2218 = vmatprep.subr.bf16.mxu0 0
  %2219 = vmatpush1.bf16.msra.mxu0 0
  %2220 = vmatprep.subr.bf16.mxu0 0
  %2221 = vmatpush1.bf16.msra.mxu0 0
  %2222 = vmatprep.subr.bf16.mxu0 0
  %2223 = vmatpush1.bf16.msra.mxu0 0
  %2224 = vmatprep.mubr.bf16.mxu0 0
  %2225 = vmatmul.mubr.bf16.gmra.mrb[0].mxu0 %v1206
  %v2226 = vpop.f32.mrb[0].mxu0
  %v2227 = vadd.f32 0.0, %v2226
  %v2228 = vpop.f32.mrb[0].mxu0
  %v2229 = vadd.f32 0.0, %v2228
  %v2230 = vpop.f32.mrb[0].mxu0
  %v2231 = vpop.f32.mrb[0].mxu0
  %2232 = vdwg.mxu0
  %2233 = vmatprep.subr.bf16.mxu0 %v871
  %2234 = vmatpush1.bf16.msra.mxu0 %v870
  %2235 = vmatprep.subr.bf16.mxu0 %v935
  %2236 = vmatpush1.bf16.msra.mxu0 %v934
  %2237 = vmatprep.subr.bf16.mxu0 %v999
  %2238 = vmatpush1.bf16.msra.mxu0 %v998
  %2239 = vmatprep.subr.bf16.mxu0 0
  %2240 = vmatpush1.bf16.msra.mxu0 0
  %2241 = vmatprep.subr.bf16.mxu0 0
  %2242 = vmatpush1.bf16.msra.mxu0 0
  %2243 = vmatprep.subr.bf16.mxu0 0
  %2244 = vmatpush1.bf16.msra.mxu0 0
  %2245 = vmatprep.subr.bf16.mxu0 0
  %2246 = vmatpush1.bf16.msra.mxu0 0
  %2247 = vmatprep.subr.bf16.mxu0 0
  %2248 = vmatpush1.bf16.msra.mxu0 0
  %2249 = vmatprep.subr.bf16.mxu0 0
  %2250 = vmatpush1.bf16.msra.mxu0 0
  %2251 = vmatprep.subr.bf16.mxu0 0
  %2252 = vmatpush1.bf16.msra.mxu0 0
  %2253 = vmatprep.subr.bf16.mxu0 0
  %2254 = vmatpush1.bf16.msra.mxu0 0
  %2255 = vmatprep.subr.bf16.mxu0 0
  %2256 = vmatpush1.bf16.msra.mxu0 0
  %2257 = vmatprep.subr.bf16.mxu0 0
  %2258 = vmatpush1.bf16.msra.mxu0 0
  %2259 = vmatprep.subr.bf16.mxu0 0
  %2260 = vmatpush1.bf16.msra.mxu0 0
  %2261 = vmatprep.subr.bf16.mxu0 0
  %2262 = vmatpush1.bf16.msra.mxu0 0
  %2263 = vmatprep.subr.bf16.mxu0 0
  %2264 = vmatpush1.bf16.msra.mxu0 0
  %2265 = vmatprep.mubr.bf16.mxu0 0
  %2266 = vmatmul.mubr.bf16.gmra.mrb[0].mxu0 %v1206
  %v2267 = vpop.f32.mrb[0].mxu0
  %v2268 = vadd.f32 0.0, %v2267
  %v2269 = vpop.f32.mrb[0].mxu0
  %v2270 = vadd.f32 0.0, %v2269
  %v2271 = vpop.f32.mrb[0].mxu0
  %v2272 = vpop.f32.mrb[0].mxu0
  %2273 = vdwg.mxu0
  %2274 = vmatprep.subr.bf16.mxu0 %v873
  %2275 = vmatpush1.bf16.msra.mxu0 %v872
  %2276 = vmatprep.subr.bf16.mxu0 %v937
  %2277 = vmatpush1.bf16.msra.mxu0 %v936
  %2278 = vmatprep.subr.bf16.mxu0 %v1001
  %2279 = vmatpush1.bf16.msra.mxu0 %v1000
  %2280 = vmatprep.subr.bf16.mxu0 0
  %2281 = vmatpush1.bf16.msra.mxu0 0
  %2282 = vmatprep.subr.bf16.mxu0 0
  %2283 = vmatpush1.bf16.msra.mxu0 0
  %2284 = vmatprep.subr.bf16.mxu0 0
  %2285 = vmatpush1.bf16.msra.mxu0 0
  %2286 = vmatprep.subr.bf16.mxu0 0
  %2287 = vmatpush1.bf16.msra.mxu0 0
  %2288 = vmatprep.subr.bf16.mxu0 0
  %2289 = vmatpush1.bf16.msra.mxu0 0
  %2290 = vmatprep.subr.bf16.mxu0 0
  %2291 = vmatpush1.bf16.msra.mxu0 0
  %2292 = vmatprep.subr.bf16.mxu0 0
  %2293 = vmatpush1.bf16.msra.mxu0 0
  %2294 = vmatprep.subr.bf16.mxu0 0
  %2295 = vmatpush1.bf16.msra.mxu0 0
  %2296 = vmatprep.subr.bf16.mxu0 0
  %2297 = vmatpush1.bf16.msra.mxu0 0
  %2298 = vmatprep.subr.bf16.mxu0 0
  %2299 = vmatpush1.bf16.msra.mxu0 0
  %2300 = vmatprep.subr.bf16.mxu0 0
  %2301 = vmatpush1.bf16.msra.mxu0 0
  %2302 = vmatprep.subr.bf16.mxu0 0
  %2303 = vmatpush1.bf16.msra.mxu0 0
  %2304 = vmatprep.subr.bf16.mxu0 0
  %2305 = vmatpush1.bf16.msra.mxu0 0
  %2306 = vmatprep.mubr.bf16.mxu0 0
  %2307 = vmatmul.mubr.bf16.gmra.mrb[0].mxu0 %v1206
  %v2308 = vpop.f32.mrb[0].mxu0
  %v2309 = vadd.f32 0.0, %v2308
  %v2310 = vpop.f32.mrb[0].mxu0
  %v2311 = vadd.f32 0.0, %v2310
  %v2312 = vpop.f32.mrb[0].mxu0
  %v2313 = vpop.f32.mrb[0].mxu0
  %2314 = vdwg.mxu0
  %2315 = vmatprep.subr.bf16.mxu0 %v875
  %2316 = vmatpush1.bf16.msra.mxu0 %v874
  %2317 = vmatprep.subr.bf16.mxu0 %v939
  %2318 = vmatpush1.bf16.msra.mxu0 %v938
  %2319 = vmatprep.subr.bf16.mxu0 %v1003
  %2320 = vmatpush1.bf16.msra.mxu0 %v1002
  %2321 = vmatprep.subr.bf16.mxu0 0
  %2322 = vmatpush1.bf16.msra.mxu0 0
  %2323 = vmatprep.subr.bf16.mxu0 0
  %2324 = vmatpush1.bf16.msra.mxu0 0
  %2325 = vmatprep.subr.bf16.mxu0 0
  %2326 = vmatpush1.bf16.msra.mxu0 0
  %2327 = vmatprep.subr.bf16.mxu0 0
  %2328 = vmatpush1.bf16.msra.mxu0 0
  %2329 = vmatprep.subr.bf16.mxu0 0
  %2330 = vmatpush1.bf16.msra.mxu0 0
  %2331 = vmatprep.subr.bf16.mxu0 0
  %2332 = vmatpush1.bf16.msra.mxu0 0
  %2333 = vmatprep.subr.bf16.mxu0 0
  %2334 = vmatpush1.bf16.msra.mxu0 0
  %2335 = vmatprep.subr.bf16.mxu0 0
  %2336 = vmatpush1.bf16.msra.mxu0 0
  %2337 = vmatprep.subr.bf16.mxu0 0
  %2338 = vmatpush1.bf16.msra.mxu0 0
  %2339 = vmatprep.subr.bf16.mxu0 0
  %2340 = vmatpush1.bf16.msra.mxu0 0
  %2341 = vmatprep.subr.bf16.mxu0 0
  %2342 = vmatpush1.bf16.msra.mxu0 0
  %2343 = vmatprep.subr.bf16.mxu0 0
  %2344 = vmatpush1.bf16.msra.mxu0 0
  %2345 = vmatprep.subr.bf16.mxu0 0
  %2346 = vmatpush1.bf16.msra.mxu0 0
  %2347 = vmatprep.mubr.bf16.mxu0 0
  %2348 = vmatmul.mubr.bf16.gmra.mrb[0].mxu0 %v1206
  %v2349 = vpop.f32.mrb[0].mxu0
  %v2350 = vadd.f32 0.0, %v2349
  %v2351 = vpop.f32.mrb[0].mxu0
  %v2352 = vadd.f32 0.0, %v2351
  %v2353 = vpop.f32.mrb[0].mxu0
  %v2354 = vpop.f32.mrb[0].mxu0
  %2355 = vdwg.mxu0
  %2356 = vmatprep.subr.bf16.mxu0 %v877
  %2357 = vmatpush1.bf16.msra.mxu0 %v876
  %2358 = vmatprep.subr.bf16.mxu0 %v941
  %2359 = vmatpush1.bf16.msra.mxu0 %v940
  %2360 = vmatprep.subr.bf16.mxu0 %v1005
  %2361 = vmatpush1.bf16.msra.mxu0 %v1004
  %2362 = vmatprep.subr.bf16.mxu0 0
  %2363 = vmatpush1.bf16.msra.mxu0 0
  %2364 = vmatprep.subr.bf16.mxu0 0
  %2365 = vmatpush1.bf16.msra.mxu0 0
  %2366 = vmatprep.subr.bf16.mxu0 0
  %2367 = vmatpush1.bf16.msra.mxu0 0
  %2368 = vmatprep.subr.bf16.mxu0 0
  %2369 = vmatpush1.bf16.msra.mxu0 0
  %2370 = vmatprep.subr.bf16.mxu0 0
  %2371 = vmatpush1.bf16.msra.mxu0 0
  %2372 = vmatprep.subr.bf16.mxu0 0
  %2373 = vmatpush1.bf16.msra.mxu0 0
  %2374 = vmatprep.subr.bf16.mxu0 0
  %2375 = vmatpush1.bf16.msra.mxu0 0
  %2376 = vmatprep.subr.bf16.mxu0 0
  %2377 = vmatpush1.bf16.msra.mxu0 0
  %2378 = vmatprep.subr.bf16.mxu0 0
  %2379 = vmatpush1.bf16.msra.mxu0 0
  %2380 = vmatprep.subr.bf16.mxu0 0
  %2381 = vmatpush1.bf16.msra.mxu0 0
  %2382 = vmatprep.subr.bf16.mxu0 0
  %2383 = vmatpush1.bf16.msra.mxu0 0
  %2384 = vmatprep.subr.bf16.mxu0 0
  %2385 = vmatpush1.bf16.msra.mxu0 0
  %2386 = vmatprep.subr.bf16.mxu0 0
  %2387 = vmatpush1.bf16.msra.mxu0 0
  %2388 = vmatprep.mubr.bf16.mxu0 0
  %2389 = vmatmul.mubr.bf16.gmra.mrb[0].mxu0 %v1206
  %v2390 = vpop.f32.mrb[0].mxu0
  %v2391 = vadd.f32 0.0, %v2390
  %v2392 = vpop.f32.mrb[0].mxu0
  %v2393 = vadd.f32 0.0, %v2392
  %v2394 = vpop.f32.mrb[0].mxu0
  %v2395 = vpop.f32.mrb[0].mxu0
  %2396 = vdwg.mxu0
  %2397 = vmatprep.subr.bf16.mxu0 %v879
  %2398 = vmatpush1.bf16.msra.mxu0 %v878
  %2399 = vmatprep.subr.bf16.mxu0 %v943
  %2400 = vmatpush1.bf16.msra.mxu0 %v942
  %2401 = vmatprep.subr.bf16.mxu0 %v1007
  %2402 = vmatpush1.bf16.msra.mxu0 %v1006
  %2403 = vmatprep.subr.bf16.mxu0 0
  %2404 = vmatpush1.bf16.msra.mxu0 0
  %2405 = vmatprep.subr.bf16.mxu0 0
  %2406 = vmatpush1.bf16.msra.mxu0 0
  %2407 = vmatprep.subr.bf16.mxu0 0
  %2408 = vmatpush1.bf16.msra.mxu0 0
  %2409 = vmatprep.subr.bf16.mxu0 0
  %2410 = vmatpush1.bf16.msra.mxu0 0
  %2411 = vmatprep.subr.bf16.mxu0 0
  %2412 = vmatpush1.bf16.msra.mxu0 0
  %2413 = vmatprep.subr.bf16.mxu0 0
  %2414 = vmatpush1.bf16.msra.mxu0 0
  %2415 = vmatprep.subr.bf16.mxu0 0
  %2416 = vmatpush1.bf16.msra.mxu0 0
  %2417 = vmatprep.subr.bf16.mxu0 0
  %2418 = vmatpush1.bf16.msra.mxu0 0
  %2419 = vmatprep.subr.bf16.mxu0 0
  %2420 = vmatpush1.bf16.msra.mxu0 0
  %2421 = vmatprep.subr.bf16.mxu0 0
  %2422 = vmatpush1.bf16.msra.mxu0 0
  %2423 = vmatprep.subr.bf16.mxu0 0
  %2424 = vmatpush1.bf16.msra.mxu0 0
  %2425 = vmatprep.subr.bf16.mxu0 0
  %2426 = vmatpush1.bf16.msra.mxu0 0
  %2427 = vmatprep.subr.bf16.mxu0 0
  %2428 = vmatpush1.bf16.msra.mxu0 0
  %2429 = vmatprep.mubr.bf16.mxu0 0
  %2430 = vmatmul.mubr.bf16.gmra.mrb[0].mxu0 %v1206
  %v2431 = vpop.f32.mrb[0].mxu0
  %v2432 = vadd.f32 0.0, %v2431
  %v2433 = vpop.f32.mrb[0].mxu0
  %v2434 = vadd.f32 0.0, %v2433
  %v2435 = vpop.f32.mrb[0].mxu0
  %v2436 = vpop.f32.mrb[0].mxu0
  %2437 = vdwg.mxu0
  %2438 = vmatprep.subr.bf16.mxu0 %v881
  %2439 = vmatpush1.bf16.msra.mxu0 %v880
  %2440 = vmatprep.subr.bf16.mxu0 %v945
  %2441 = vmatpush1.bf16.msra.mxu0 %v944
  %2442 = vmatprep.subr.bf16.mxu0 %v1009
  %2443 = vmatpush1.bf16.msra.mxu0 %v1008
  %2444 = vmatprep.subr.bf16.mxu0 0
  %2445 = vmatpush1.bf16.msra.mxu0 0
  %2446 = vmatprep.subr.bf16.mxu0 0
  %2447 = vmatpush1.bf16.msra.mxu0 0
  %2448 = vmatprep.subr.bf16.mxu0 0
  %2449 = vmatpush1.bf16.msra.mxu0 0
  %2450 = vmatprep.subr.bf16.mxu0 0
  %2451 = vmatpush1.bf16.msra.mxu0 0
  %2452 = vmatprep.subr.bf16.mxu0 0
  %2453 = vmatpush1.bf16.msra.mxu0 0
  %2454 = vmatprep.subr.bf16.mxu0 0
  %2455 = vmatpush1.bf16.msra.mxu0 0
  %2456 = vmatprep.subr.bf16.mxu0 0
  %2457 = vmatpush1.bf16.msra.mxu0 0
  %2458 = vmatprep.subr.bf16.mxu0 0
  %2459 = vmatpush1.bf16.msra.mxu0 0
  %2460 = vmatprep.subr.bf16.mxu0 0
  %2461 = vmatpush1.bf16.msra.mxu0 0
  %2462 = vmatprep.subr.bf16.mxu0 0
  %2463 = vmatpush1.bf16.msra.mxu0 0
  %2464 = vmatprep.subr.bf16.mxu0 0
  %2465 = vmatpush1.bf16.msra.mxu0 0
  %2466 = vmatprep.subr.bf16.mxu0 0
  %2467 = vmatpush1.bf16.msra.mxu0 0
  %2468 = vmatprep.subr.bf16.mxu0 0
  %2469 = vmatpush1.bf16.msra.mxu0 0
  %2470 = vmatprep.mubr.bf16.mxu0 0
  %2471 = vmatmul.mubr.bf16.gmra.mrb[0].mxu0 %v1206
  %v2472 = vpop.f32.mrb[0].mxu0
  %v2473 = vadd.f32 0.0, %v2472
  %v2474 = vpop.f32.mrb[0].mxu0
  %v2475 = vadd.f32 0.0, %v2474
  %v2476 = vpop.f32.mrb[0].mxu0
  %v2477 = vpop.f32.mrb[0].mxu0
  %2478 = vdwg.mxu0
  %2479 = vmatprep.subr.bf16.mxu0 %v883
  %2480 = vmatpush1.bf16.msra.mxu0 %v882
  %2481 = vmatprep.subr.bf16.mxu0 %v947
  %2482 = vmatpush1.bf16.msra.mxu0 %v946
  %2483 = vmatprep.subr.bf16.mxu0 %v1011
  %2484 = vmatpush1.bf16.msra.mxu0 %v1010
  %2485 = vmatprep.subr.bf16.mxu0 0
  %2486 = vmatpush1.bf16.msra.mxu0 0
  %2487 = vmatprep.subr.bf16.mxu0 0
  %2488 = vmatpush1.bf16.msra.mxu0 0
  %2489 = vmatprep.subr.bf16.mxu0 0
  %2490 = vmatpush1.bf16.msra.mxu0 0
  %2491 = vmatprep.subr.bf16.mxu0 0
  %2492 = vmatpush1.bf16.msra.mxu0 0
  %2493 = vmatprep.subr.bf16.mxu0 0
  %2494 = vmatpush1.bf16.msra.mxu0 0
  %2495 = vmatprep.subr.bf16.mxu0 0
  %2496 = vmatpush1.bf16.msra.mxu0 0
  %2497 = vmatprep.subr.bf16.mxu0 0
  %2498 = vmatpush1.bf16.msra.mxu0 0
  %2499 = vmatprep.subr.bf16.mxu0 0
  %2500 = vmatpush1.bf16.msra.mxu0 0
  %2501 = vmatprep.subr.bf16.mxu0 0
  %2502 = vmatpush1.bf16.msra.mxu0 0
  %2503 = vmatprep.subr.bf16.mxu0 0
  %2504 = vmatpush1.bf16.msra.mxu0 0
  %2505 = vmatprep.subr.bf16.mxu0 0
  %2506 = vmatpush1.bf16.msra.mxu0 0
  %2507 = vmatprep.subr.bf16.mxu0 0
  %2508 = vmatpush1.bf16.msra.mxu0 0
  %2509 = vmatprep.subr.bf16.mxu0 0
  %2510 = vmatpush1.bf16.msra.mxu0 0
  %2511 = vmatprep.mubr.bf16.mxu0 0
  %2512 = vmatmul.mubr.bf16.gmra.mrb[0].mxu0 %v1206
  %v2513 = vpop.f32.mrb[0].mxu0
  %v2514 = vadd.f32 0.0, %v2513
  %v2515 = vpop.f32.mrb[0].mxu0
  %v2516 = vadd.f32 0.0, %v2515
  %v2517 = vpop.f32.mrb[0].mxu0
  %v2518 = vpop.f32.mrb[0].mxu0
  %2519 = vdwg.mxu0
  %v2520 = vmul.f32 %v1243, 0.2
  %v2521 = vmul.f32 %v1245, 0.2
  %v2522 = vmul.f32 %v1284, 0.2
  %v2523 = vmul.f32 %v1286, 0.2
  %v2524 = vmul.f32 %v1325, 0.2
  %v2525 = vmul.f32 %v1327, 0.2
  %v2526 = vmul.f32 %v1366, 0.2
  %v2527 = vmul.f32 %v1368, 0.2
  %v2528 = vmul.f32 %v1407, 0.2
  %v2529 = vmul.f32 %v1409, 0.2
  %v2530 = vmul.f32 %v1448, 0.2
  %v2531 = vmul.f32 %v1450, 0.2
  %v2532 = vmul.f32 %v1489, 0.2
  %v2533 = vmul.f32 %v1491, 0.2
  %v2534 = vmul.f32 %v1530, 0.2
  %v2535 = vmul.f32 %v1532, 0.2
  %v2536 = vmul.f32 %v1571, 0.2
  %v2537 = vmul.f32 %v1573, 0.2
  %v2538 = vmul.f32 %v1612, 0.2
  %v2539 = vmul.f32 %v1614, 0.2
  %v2540 = vmul.f32 %v1653, 0.2
  %v2541 = vmul.f32 %v1655, 0.2
  %v2542 = vmul.f32 %v1694, 0.2
  %v2543 = vmul.f32 %v1696, 0.2
  %v2544 = vmul.f32 %v1735, 0.2
  %v2545 = vmul.f32 %v1737, 0.2
  %v2546 = vmul.f32 %v1776, 0.2
  %v2547 = vmul.f32 %v1778, 0.2
  %v2548 = vmul.f32 %v1817, 0.2
  %v2549 = vmul.f32 %v1819, 0.2
  %v2550 = vmul.f32 %v1858, 0.2
  %v2551 = vmul.f32 %v1860, 0.2
  %v2552 = vmul.f32 %v1899, 0.2
  %v2553 = vmul.f32 %v1901, 0.2
  %v2554 = vmul.f32 %v1940, 0.2
  %v2555 = vmul.f32 %v1942, 0.2
  %v2556 = vmul.f32 %v1981, 0.2
  %v2557 = vmul.f32 %v1983, 0.2
  %v2558 = vmul.f32 %v2022, 0.2
  %v2559 = vmul.f32 %v2024, 0.2
  %v2560 = vmul.f32 %v2063, 0.2
  %v2561 = vmul.f32 %v2065, 0.2
  %v2562 = vmul.f32 %v2104, 0.2
  %v2563 = vmul.f32 %v2106, 0.2
  %v2564 = vmul.f32 %v2145, 0.2
  %v2565 = vmul.f32 %v2147, 0.2
  %v2566 = vmul.f32 %v2186, 0.2
  %v2567 = vmul.f32 %v2188, 0.2
  %v2568 = vmul.f32 %v2227, 0.2
  %v2569 = vmul.f32 %v2229, 0.2
  %v2570 = vmul.f32 %v2268, 0.2
  %v2571 = vmul.f32 %v2270, 0.2
  %v2572 = vmul.f32 %v2309, 0.2
  %v2573 = vmul.f32 %v2311, 0.2
  %v2574 = vmul.f32 %v2350, 0.2
  %v2575 = vmul.f32 %v2352, 0.2
  %v2576 = vmul.f32 %v2391, 0.2
  %v2577 = vmul.f32 %v2393, 0.2
  %v2578 = vmul.f32 %v2432, 0.2
  %v2579 = vmul.f32 %v2434, 0.2
  %v2580 = vmul.f32 %v2473, 0.2
  %v2581 = vmul.f32 %v2475, 0.2
  %v2582 = vmul.f32 %v2514, 0.2
  %v2583 = vmul.f32 %v2516, 0.2
  %v2584 = vmax.f32 %v1243, %v2520
  %v2585 = vmax.f32 %v1245, %v2521
  %v2586 = vmax.f32 %v1284, %v2522
  %v2587 = vmax.f32 %v1286, %v2523
  %v2588 = vmax.f32 %v1325, %v2524
  %v2589 = vmax.f32 %v1327, %v2525
  %v2590 = vmax.f32 %v1366, %v2526
  %v2591 = vmax.f32 %v1368, %v2527
  %v2592 = vmax.f32 %v1407, %v2528
  %v2593 = vmax.f32 %v1409, %v2529
  %v2594 = vmax.f32 %v1448, %v2530
  %v2595 = vmax.f32 %v1450, %v2531
  %v2596 = vmax.f32 %v1489, %v2532
  %v2597 = vmax.f32 %v1491, %v2533
  %v2598 = vmax.f32 %v1530, %v2534
  %v2599 = vmax.f32 %v1532, %v2535
  %v2600 = vmax.f32 %v1571, %v2536
  %v2601 = vmax.f32 %v1573, %v2537
  %v2602 = vmax.f32 %v1612, %v2538
  %v2603 = vmax.f32 %v1614, %v2539
  %v2604 = vmax.f32 %v1653, %v2540
  %v2605 = vmax.f32 %v1655, %v2541
  %v2606 = vmax.f32 %v1694, %v2542
  %v2607 = vmax.f32 %v1696, %v2543
  %v2608 = vmax.f32 %v1735, %v2544
  %v2609 = vmax.f32 %v1737, %v2545
  %v2610 = vmax.f32 %v1776, %v2546
  %v2611 = vmax.f32 %v1778, %v2547
  %v2612 = vmax.f32 %v1817, %v2548
  %v2613 = vmax.f32 %v1819, %v2549
  %v2614 = vmax.f32 %v1858, %v2550
  %v2615 = vmax.f32 %v1860, %v2551
  %v2616 = vmax.f32 %v1899, %v2552
  %v2617 = vmax.f32 %v1901, %v2553
  %v2618 = vmax.f32 %v1940, %v2554
  %v2619 = vmax.f32 %v1942, %v2555
  %v2620 = vmax.f32 %v1981, %v2556
  %v2621 = vmax.f32 %v1983, %v2557
  %v2622 = vmax.f32 %v2022, %v2558
  %v2623 = vmax.f32 %v2024, %v2559
  %v2624 = vmax.f32 %v2063, %v2560
  %v2625 = vmax.f32 %v2065, %v2561
  %v2626 = vmax.f32 %v2104, %v2562
  %v2627 = vmax.f32 %v2106, %v2563
  %v2628 = vmax.f32 %v2145, %v2564
  %v2629 = vmax.f32 %v2147, %v2565
  %v2630 = vmax.f32 %v2186, %v2566
  %v2631 = vmax.f32 %v2188, %v2567
  %v2632 = vmax.f32 %v2227, %v2568
  %v2633 = vmax.f32 %v2229, %v2569
  %v2634 = vmax.f32 %v2268, %v2570
  %v2635 = vmax.f32 %v2270, %v2571
  %v2636 = vmax.f32 %v2309, %v2572
  %v2637 = vmax.f32 %v2311, %v2573
  %v2638 = vmax.f32 %v2350, %v2574
  %v2639 = vmax.f32 %v2352, %v2575
  %v2640 = vmax.f32 %v2391, %v2576
  %v2641 = vmax.f32 %v2393, %v2577
  %v2642 = vmax.f32 %v2432, %v2578
  %v2643 = vmax.f32 %v2434, %v2579
  %v2644 = vmax.f32 %v2473, %v2580
  %v2645 = vmax.f32 %v2475, %v2581
  %v2646 = vmax.f32 %v2514, %v2582
  %v2647 = vmax.f32 %v2516, %v2583
  %v2648 = vpack.c.bf16 %v2584, %v2584
  %v2649 = vpack.c.bf16 %v2585, %v2585
  %v2650 = vpack.c.bf16 %v2586, %v2586
  %v2651 = vpack.c.bf16 %v2587, %v2587
  %v2652 = vpack.c.bf16 %v2588, %v2588
  %v2653 = vpack.c.bf16 %v2589, %v2589
  %v2654 = vpack.c.bf16 %v2590, %v2590
  %v2655 = vpack.c.bf16 %v2591, %v2591
  %v2656 = vpack.c.bf16 %v2592, %v2592
  %v2657 = vpack.c.bf16 %v2593, %v2593
  %v2658 = vpack.c.bf16 %v2594, %v2594
  %v2659 = vpack.c.bf16 %v2595, %v2595
  %v2660 = vpack.c.bf16 %v2596, %v2596
  %v2661 = vpack.c.bf16 %v2597, %v2597
  %v2662 = vpack.c.bf16 %v2598, %v2598
  %v2663 = vpack.c.bf16 %v2599, %v2599
  %v2664 = vpack.c.bf16 %v2600, %v2600
  %v2665 = vpack.c.bf16 %v2601, %v2601
  %v2666 = vpack.c.bf16 %v2602, %v2602
  %v2667 = vpack.c.bf16 %v2603, %v2603
  %v2668 = vpack.c.bf16 %v2604, %v2604
  %v2669 = vpack.c.bf16 %v2605, %v2605
  %v2670 = vpack.c.bf16 %v2606, %v2606
  %v2671 = vpack.c.bf16 %v2607, %v2607
  %v2672 = vpack.c.bf16 %v2608, %v2608
  %v2673 = vpack.c.bf16 %v2609, %v2609
  %v2674 = vpack.c.bf16 %v2610, %v2610
  %v2675 = vpack.c.bf16 %v2611, %v2611
  %v2676 = vpack.c.bf16 %v2612, %v2612
  %v2677 = vpack.c.bf16 %v2613, %v2613
  %v2678 = vpack.c.bf16 %v2614, %v2614
  %v2679 = vpack.c.bf16 %v2615, %v2615
  %v2680 = vpack.c.bf16 %v2616, %v2616
  %v2681 = vpack.c.bf16 %v2617, %v2617
  %v2682 = vpack.c.bf16 %v2618, %v2618
  %v2683 = vpack.c.bf16 %v2619, %v2619
  %v2684 = vpack.c.bf16 %v2620, %v2620
  %v2685 = vpack.c.bf16 %v2621, %v2621
  %v2686 = vpack.c.bf16 %v2622, %v2622
  %v2687 = vpack.c.bf16 %v2623, %v2623
  %v2688 = vpack.c.bf16 %v2624, %v2624
  %v2689 = vpack.c.bf16 %v2625, %v2625
  %v2690 = vpack.c.bf16 %v2626, %v2626
  %v2691 = vpack.c.bf16 %v2627, %v2627
  %v2692 = vpack.c.bf16 %v2628, %v2628
  %v2693 = vpack.c.bf16 %v2629, %v2629
  %v2694 = vpack.c.bf16 %v2630, %v2630
  %v2695 = vpack.c.bf16 %v2631, %v2631
  %v2696 = vpack.c.bf16 %v2632, %v2632
  %v2697 = vpack.c.bf16 %v2633, %v2633
  %v2698 = vpack.c.bf16 %v2634, %v2634
  %v2699 = vpack.c.bf16 %v2635, %v2635
  %v2700 = vpack.c.bf16 %v2636, %v2636
  %v2701 = vpack.c.bf16 %v2637, %v2637
  %v2702 = vpack.c.bf16 %v2638, %v2638
  %v2703 = vpack.c.bf16 %v2639, %v2639
  %v2704 = vpack.c.bf16 %v2640, %v2640
  %v2705 = vpack.c.bf16 %v2641, %v2641
  %v2706 = vpack.c.bf16 %v2642, %v2642
  %v2707 = vpack.c.bf16 %v2643, %v2643
  %v2708 = vpack.c.bf16 %v2644, %v2644
  %v2709 = vpack.c.bf16 %v2645, %v2645
  %v2710 = vpack.c.bf16 %v2646, %v2646
  %v2711 = vpack.c.bf16 %v2647, %v2647
  %v2712 = vld [vmem:[%s2] sm:$0xf]
  %v2713 = vld [vmem:[%s2 + $0x4] sm:$0xf]
  %v2714 = vld [vmem:[%s2 + $0x8] sm:$0xf]
  %v2715 = vld [vmem:[%s2 + $0xc] sm:$0xf]
  %v2716 = vld [vmem:[%s2 + $0x10] sm:$0xf]
  %v2717 = vld [vmem:[%s2 + $0x14] sm:$0xf]
  %v2718 = vld [vmem:[%s2 + $0x18] sm:$0xf]
  %v2719 = vld [vmem:[%s2 + $0x1c] sm:$0xf]
  %v2720 = vld [vmem:[%s2 + $0x20] sm:$0xf]
  %v2721 = vld [vmem:[%s2 + $0x24] sm:$0xf]
  %v2722 = vld [vmem:[%s2 + $0x28] sm:$0xf]
  %v2723 = vld [vmem:[%s2 + $0x2c] sm:$0xf]
  %v2724 = vld [vmem:[%s2 + $0x30] sm:$0xf]
  %v2725 = vld [vmem:[%s2 + $0x34] sm:$0xf]
  %v2726 = vld [vmem:[%s2 + $0x38] sm:$0xf]
  %v2727 = vld [vmem:[%s2 + $0x3c] sm:$0xf]
  %v2728 = vld [vmem:[%s2 + $0x40] sm:$0xf]
  %v2729 = vld [vmem:[%s2 + $0x44] sm:$0xf]
  %v2730 = vld [vmem:[%s2 + $0x48] sm:$0xf]
  %v2731 = vld [vmem:[%s2 + $0x4c] sm:$0xf]
  %v2732 = vld [vmem:[%s2 + $0x50] sm:$0xf]
  %v2733 = vld [vmem:[%s2 + $0x54] sm:$0xf]
  %v2734 = vld [vmem:[%s2 + $0x58] sm:$0xf]
  %v2735 = vld [vmem:[%s2 + $0x5c] sm:$0xf]
  %v2736 = vld [vmem:[%s2 + $0x60] sm:$0xf]
  %v2737 = vld [vmem:[%s2 + $0x64] sm:$0xf]
  %v2738 = vld [vmem:[%s2 + $0x68] sm:$0xf]
  %v2739 = vld [vmem:[%s2 + $0x6c] sm:$0xf]
  %v2740 = vld [vmem:[%s2 + $0x70] sm:$0xf]
  %v2741 = vld [vmem:[%s2 + $0x74] sm:$0xf]
  %v2742 = vld [vmem:[%s2 + $0x78] sm:$0xf]
  %v2743 = vld [vmem:[%s2 + $0x7c] sm:$0xf]
  %v2744 = vld [vmem:[%s3] sm:$0xff]
  %v2745 = vld [vmem:[%s3 + $0x8] sm:$0xff]
  %v2746 = vld [vmem:[%s4] sm:$0xff]
  %v2747 = vld [vmem:[%s4 + $0x8] sm:$0xff]
  %v2750 = vunpack.c.l.b16 %v2714
  %v2751 = vunpack.c.l.b16 %v2715
  %v2752 = vpack.c.b16 %v2751, %v2750
  %vm2753 = vcmask 64512
  %v2755 = vsel %vm2753, %v2752, 0
  %vm2757 = vcmask 1043456
  %v2759 = vsel %vm2757, %v2652, 0
  %v2762 = vsel %vm2757, %v2653, 0
  %v2765 = vsel %vm2757, %v2654, 0
  %v2768 = vsel %vm2757, %v2655, 0
  %2770 = vmatprep.subr.bf16.mxu0 %v2762
  %2771 = vmatpush1.bf16.msra.mxu0 %v2759
  %2772 = vmatprep.subr.bf16.mxu0 0
  %2773 = vmatpush1.bf16.msra.mxu0 0
  %2774 = vmatprep.subr.bf16.mxu0 0
  %2775 = vmatpush1.bf16.msra.mxu0 0
  %2776 = vmatprep.subr.bf16.mxu0 0
  %2777 = vmatpush1.bf16.msra.mxu0 0
  %2778 = vmatprep.subr.bf16.mxu0 0
  %2779 = vmatpush1.bf16.msra.mxu0 0
  %2780 = vmatprep.subr.bf16.mxu0 0
  %2781 = vmatpush1.bf16.msra.mxu0 0
  %2782 = vmatprep.subr.bf16.mxu0 0
  %2783 = vmatpush1.bf16.msra.mxu0 0
  %2784 = vmatprep.subr.bf16.mxu0 0
  %2785 = vmatpush1.bf16.msra.mxu0 0
  %2786 = vmatprep.subr.bf16.mxu0 0
  %2787 = vmatpush1.bf16.msra.mxu0 0
  %2788 = vmatprep.subr.bf16.mxu0 0
  %2789 = vmatpush1.bf16.msra.mxu0 0
  %2790 = vmatprep.subr.bf16.mxu0 0
  %2791 = vmatpush1.bf16.msra.mxu0 0
  %2792 = vmatprep.subr.bf16.mxu0 0
  %2793 = vmatpush1.bf16.msra.mxu0 0
  %2794 = vmatprep.subr.bf16.mxu0 0
  %2795 = vmatpush1.bf16.msra.mxu0 0
  %2796 = vmatprep.subr.bf16.mxu0 0
  %2797 = vmatpush1.bf16.msra.mxu0 0
  %2798 = vmatprep.subr.bf16.mxu0 0
  %2799 = vmatpush1.bf16.msra.mxu0 0
  %2800 = vmatprep.subr.bf16.mxu0 0
  %2801 = vmatpush1.bf16.msra.mxu0 0
  %2802 = vmatprep.mubr.bf16.mxu0 0
  %2803 = vmatmul.mubr.bf16.gmra.mrb[0].mxu0 %v2755
  %v2804 = vpop.f32.mrb[0].mxu0
  %v2805 = vadd.f32 0.0, %v2804
  %v2806 = vpop.f32.mrb[0].mxu0
  %v2807 = vadd.f32 0.0, %v2806
  %v2808 = vpop.f32.mrb[0].mxu0
  %v2809 = vadd.f32 0.0, %v2808
  %v2810 = vpop.f32.mrb[0].mxu0
  %v2811 = vadd.f32 0.0, %v2810
  %2812 = vdwg.mxu0
  %2813 = vmatprep.subr.bf16.mxu0 %v2768
  %2814 = vmatpush1.bf16.msra.mxu0 %v2765
  %2815 = vmatprep.subr.bf16.mxu0 0
  %2816 = vmatpush1.bf16.msra.mxu0 0
  %2817 = vmatprep.subr.bf16.mxu0 0
  %2818 = vmatpush1.bf16.msra.mxu0 0
  %2819 = vmatprep.subr.bf16.mxu0 0
  %2820 = vmatpush1.bf16.msra.mxu0 0
  %2821 = vmatprep.subr.bf16.mxu0 0
  %2822 = vmatpush1.bf16.msra.mxu0 0
  %2823 = vmatprep.subr.bf16.mxu0 0
  %2824 = vmatpush1.bf16.msra.mxu0 0
  %2825 = vmatprep.subr.bf16.mxu0 0
  %2826 = vmatpush1.bf16.msra.mxu0 0
  %2827 = vmatprep.subr.bf16.mxu0 0
  %2828 = vmatpush1.bf16.msra.mxu0 0
  %2829 = vmatprep.subr.bf16.mxu0 0
  %2830 = vmatpush1.bf16.msra.mxu0 0
  %2831 = vmatprep.subr.bf16.mxu0 0
  %2832 = vmatpush1.bf16.msra.mxu0 0
  %2833 = vmatprep.subr.bf16.mxu0 0
  %2834 = vmatpush1.bf16.msra.mxu0 0
  %2835 = vmatprep.subr.bf16.mxu0 0
  %2836 = vmatpush1.bf16.msra.mxu0 0
  %2837 = vmatprep.subr.bf16.mxu0 0
  %2838 = vmatpush1.bf16.msra.mxu0 0
  %2839 = vmatprep.subr.bf16.mxu0 0
  %2840 = vmatpush1.bf16.msra.mxu0 0
  %2841 = vmatprep.subr.bf16.mxu0 0
  %2842 = vmatpush1.bf16.msra.mxu0 0
  %2843 = vmatprep.subr.bf16.mxu0 0
  %2844 = vmatpush1.bf16.msra.mxu0 0
  %2845 = vmatprep.mubr.bf16.mxu0 0
  %2846 = vmatmul.mubr.bf16.gmra.mrb[0].mxu0 %v2755
  %v2847 = vpop.f32.mrb[0].mxu0
  %v2848 = vadd.f32 0.0, %v2847
  %v2849 = vpop.f32.mrb[0].mxu0
  %v2850 = vadd.f32 0.0, %v2849
  %v2851 = vpop.f32.mrb[0].mxu0
  %v2852 = vadd.f32 0.0, %v2851
  %v2853 = vpop.f32.mrb[0].mxu0
  %v2854 = vadd.f32 0.0, %v2853
  %2855 = vdwg.mxu0
  %v2858 = vunpack.c.l.b16 %v2712
  %v2859 = vunpack.c.l.b16 %v2713
  %v2860 = vpack.c.b16 %v2859, %v2858
  %v2862 = vsel %vm2753, %v2860, 0
  %v2865 = vsel %vm2757, %v2648, 0
  %v2868 = vsel %vm2757, %v2649, 0
  %v2871 = vsel %vm2757, %v2650, 0
  %v2874 = vsel %vm2757, %v2651, 0
  %2876 = vmatprep.subr.bf16.mxu0 %v2868
  %2877 = vmatpush1.bf16.msra.mxu0 %v2865
  %2878 = vmatprep.subr.bf16.mxu0 0
  %2879 = vmatpush1.bf16.msra.mxu0 0
  %2880 = vmatprep.subr.bf16.mxu0 0
  %2881 = vmatpush1.bf16.msra.mxu0 0
  %2882 = vmatprep.subr.bf16.mxu0 0
  %2883 = vmatpush1.bf16.msra.mxu0 0
  %2884 = vmatprep.subr.bf16.mxu0 0
  %2885 = vmatpush1.bf16.msra.mxu0 0
  %2886 = vmatprep.subr.bf16.mxu0 0
  %2887 = vmatpush1.bf16.msra.mxu0 0
  %2888 = vmatprep.subr.bf16.mxu0 0
  %2889 = vmatpush1.bf16.msra.mxu0 0
  %2890 = vmatprep.subr.bf16.mxu0 0
  %2891 = vmatpush1.bf16.msra.mxu0 0
  %2892 = vmatprep.subr.bf16.mxu0 0
  %2893 = vmatpush1.bf16.msra.mxu0 0
  %2894 = vmatprep.subr.bf16.mxu0 0
  %2895 = vmatpush1.bf16.msra.mxu0 0
  %2896 = vmatprep.subr.bf16.mxu0 0
  %2897 = vmatpush1.bf16.msra.mxu0 0
  %2898 = vmatprep.subr.bf16.mxu0 0
  %2899 = vmatpush1.bf16.msra.mxu0 0
  %2900 = vmatprep.subr.bf16.mxu0 0
  %2901 = vmatpush1.bf16.msra.mxu0 0
  %2902 = vmatprep.subr.bf16.mxu0 0
  %2903 = vmatpush1.bf16.msra.mxu0 0
  %2904 = vmatprep.subr.bf16.mxu0 0
  %2905 = vmatpush1.bf16.msra.mxu0 0
  %2906 = vmatprep.subr.bf16.mxu0 0
  %2907 = vmatpush1.bf16.msra.mxu0 0
  %2908 = vmatprep.mubr.bf16.mxu0 0
  %2909 = vmatmul.mubr.bf16.gmra.mrb[0].mxu0 %v2862
  %v2910 = vpop.f32.mrb[0].mxu0
  %v2911 = vadd.f32 %v2805, %v2910
  %v2912 = vpop.f32.mrb[0].mxu0
  %v2913 = vadd.f32 %v2807, %v2912
  %v2914 = vpop.f32.mrb[0].mxu0
  %v2915 = vadd.f32 %v2809, %v2914
  %v2916 = vpop.f32.mrb[0].mxu0
  %v2917 = vadd.f32 %v2811, %v2916
  %2918 = vdwg.mxu0
  %2919 = vmatprep.subr.bf16.mxu0 %v2874
  %2920 = vmatpush1.bf16.msra.mxu0 %v2871
  %2921 = vmatprep.subr.bf16.mxu0 0
  %2922 = vmatpush1.bf16.msra.mxu0 0
  %2923 = vmatprep.subr.bf16.mxu0 0
  %2924 = vmatpush1.bf16.msra.mxu0 0
  %2925 = vmatprep.subr.bf16.mxu0 0
  %2926 = vmatpush1.bf16.msra.mxu0 0
  %2927 = vmatprep.subr.bf16.mxu0 0
  %2928 = vmatpush1.bf16.msra.mxu0 0
  %2929 = vmatprep.subr.bf16.mxu0 0
  %2930 = vmatpush1.bf16.msra.mxu0 0
  %2931 = vmatprep.subr.bf16.mxu0 0
  %2932 = vmatpush1.bf16.msra.mxu0 0
  %2933 = vmatprep.subr.bf16.mxu0 0
  %2934 = vmatpush1.bf16.msra.mxu0 0
  %2935 = vmatprep.subr.bf16.mxu0 0
  %2936 = vmatpush1.bf16.msra.mxu0 0
  %2937 = vmatprep.subr.bf16.mxu0 0
  %2938 = vmatpush1.bf16.msra.mxu0 0
  %2939 = vmatprep.subr.bf16.mxu0 0
  %2940 = vmatpush1.bf16.msra.mxu0 0
  %2941 = vmatprep.subr.bf16.mxu0 0
  %2942 = vmatpush1.bf16.msra.mxu0 0
  %2943 = vmatprep.subr.bf16.mxu0 0
  %2944 = vmatpush1.bf16.msra.mxu0 0
  %2945 = vmatprep.subr.bf16.mxu0 0
  %2946 = vmatpush1.bf16.msra.mxu0 0
  %2947 = vmatprep.subr.bf16.mxu0 0
  %2948 = vmatpush1.bf16.msra.mxu0 0
  %2949 = vmatprep.subr.bf16.mxu0 0
  %2950 = vmatpush1.bf16.msra.mxu0 0
  %2951 = vmatprep.mubr.bf16.mxu0 0
  %2952 = vmatmul.mubr.bf16.gmra.mrb[0].mxu0 %v2862
  %v2953 = vpop.f32.mrb[0].mxu0
  %v2954 = vadd.f32 %v2848, %v2953
  %v2955 = vpop.f32.mrb[0].mxu0
  %v2956 = vadd.f32 %v2850, %v2955
  %v2957 = vpop.f32.mrb[0].mxu0
  %v2958 = vadd.f32 %v2852, %v2957
  %v2959 = vpop.f32.mrb[0].mxu0
  %v2960 = vadd.f32 %v2854, %v2959
  %2961 = vdwg.mxu0
  %v2964 = vunpack.c.l.b16 %v2716
  %v2965 = vunpack.c.l.b16 %v2717
  %v2966 = vpack.c.b16 %v2965, %v2964
  %v2968 = vsel %vm2753, %v2966, 0
  %v2971 = vsel %vm2757, %v2656, 0
  %v2974 = vsel %vm2757, %v2657, 0
  %v2977 = vsel %vm2757, %v2658, 0
  %v2980 = vsel %vm2757, %v2659, 0
  %2982 = vmatprep.subr.bf16.mxu0 %v2974
  %2983 = vmatpush1.bf16.msra.mxu0 %v2971
  %2984 = vmatprep.subr.bf16.mxu0 0
  %2985 = vmatpush1.bf16.msra.mxu0 0
  %2986 = vmatprep.subr.bf16.mxu0 0
  %2987 = vmatpush1.bf16.msra.mxu0 0
  %2988 = vmatprep.subr.bf16.mxu0 0
  %2989 = vmatpush1.bf16.msra.mxu0 0
  %2990 = vmatprep.subr.bf16.mxu0 0
  %2991 = vmatpush1.bf16.msra.mxu0 0
  %2992 = vmatprep.subr.bf16.mxu0 0
  %2993 = vmatpush1.bf16.msra.mxu0 0
  %2994 = vmatprep.subr.bf16.mxu0 0
  %2995 = vmatpush1.bf16.msra.mxu0 0
  %2996 = vmatprep.subr.bf16.mxu0 0
  %2997 = vmatpush1.bf16.msra.mxu0 0
  %2998 = vmatprep.subr.bf16.mxu0 0
  %2999 = vmatpush1.bf16.msra.mxu0 0
  %3000 = vmatprep.subr.bf16.mxu0 0
  %3001 = vmatpush1.bf16.msra.mxu0 0
  %3002 = vmatprep.subr.bf16.mxu0 0
  %3003 = vmatpush1.bf16.msra.mxu0 0
  %3004 = vmatprep.subr.bf16.mxu0 0
  %3005 = vmatpush1.bf16.msra.mxu0 0
  %3006 = vmatprep.subr.bf16.mxu0 0
  %3007 = vmatpush1.bf16.msra.mxu0 0
  %3008 = vmatprep.subr.bf16.mxu0 0
  %3009 = vmatpush1.bf16.msra.mxu0 0
  %3010 = vmatprep.subr.bf16.mxu0 0
  %3011 = vmatpush1.bf16.msra.mxu0 0
  %3012 = vmatprep.subr.bf16.mxu0 0
  %3013 = vmatpush1.bf16.msra.mxu0 0
  %3014 = vmatprep.mubr.bf16.mxu0 0
  %3015 = vmatmul.mubr.bf16.gmra.mrb[0].mxu0 %v2968
  %v3016 = vpop.f32.mrb[0].mxu0
  %v3017 = vadd.f32 0.0, %v3016
  %v3018 = vpop.f32.mrb[0].mxu0
  %v3019 = vadd.f32 0.0, %v3018
  %v3020 = vpop.f32.mrb[0].mxu0
  %v3021 = vadd.f32 0.0, %v3020
  %v3022 = vpop.f32.mrb[0].mxu0
  %v3023 = vadd.f32 0.0, %v3022
  %3024 = vdwg.mxu0
  %3025 = vmatprep.subr.bf16.mxu0 %v2980
  %3026 = vmatpush1.bf16.msra.mxu0 %v2977
  %3027 = vmatprep.subr.bf16.mxu0 0
  %3028 = vmatpush1.bf16.msra.mxu0 0
  %3029 = vmatprep.subr.bf16.mxu0 0
  %3030 = vmatpush1.bf16.msra.mxu0 0
  %3031 = vmatprep.subr.bf16.mxu0 0
  %3032 = vmatpush1.bf16.msra.mxu0 0
  %3033 = vmatprep.subr.bf16.mxu0 0
  %3034 = vmatpush1.bf16.msra.mxu0 0
  %3035 = vmatprep.subr.bf16.mxu0 0
  %3036 = vmatpush1.bf16.msra.mxu0 0
  %3037 = vmatprep.subr.bf16.mxu0 0
  %3038 = vmatpush1.bf16.msra.mxu0 0
  %3039 = vmatprep.subr.bf16.mxu0 0
  %3040 = vmatpush1.bf16.msra.mxu0 0
  %3041 = vmatprep.subr.bf16.mxu0 0
  %3042 = vmatpush1.bf16.msra.mxu0 0
  %3043 = vmatprep.subr.bf16.mxu0 0
  %3044 = vmatpush1.bf16.msra.mxu0 0
  %3045 = vmatprep.subr.bf16.mxu0 0
  %3046 = vmatpush1.bf16.msra.mxu0 0
  %3047 = vmatprep.subr.bf16.mxu0 0
  %3048 = vmatpush1.bf16.msra.mxu0 0
  %3049 = vmatprep.subr.bf16.mxu0 0
  %3050 = vmatpush1.bf16.msra.mxu0 0
  %3051 = vmatprep.subr.bf16.mxu0 0
  %3052 = vmatpush1.bf16.msra.mxu0 0
  %3053 = vmatprep.subr.bf16.mxu0 0
  %3054 = vmatpush1.bf16.msra.mxu0 0
  %3055 = vmatprep.subr.bf16.mxu0 0
  %3056 = vmatpush1.bf16.msra.mxu0 0
  %3057 = vmatprep.mubr.bf16.mxu0 0
  %3058 = vmatmul.mubr.bf16.gmra.mrb[0].mxu0 %v2968
  %v3059 = vpop.f32.mrb[0].mxu0
  %v3060 = vadd.f32 0.0, %v3059
  %v3061 = vpop.f32.mrb[0].mxu0
  %v3062 = vadd.f32 0.0, %v3061
  %v3063 = vpop.f32.mrb[0].mxu0
  %v3064 = vadd.f32 0.0, %v3063
  %v3065 = vpop.f32.mrb[0].mxu0
  %v3066 = vadd.f32 0.0, %v3065
  %3067 = vdwg.mxu0
  %v3068 = vadd.f32 %v2911, %v3017
  %v3069 = vadd.f32 %v2913, %v3019
  %v3070 = vadd.f32 %v2954, %v3060
  %v3071 = vadd.f32 %v2956, %v3062
  %v3072 = vadd.f32 %v2915, %v3021
  %v3073 = vadd.f32 %v2917, %v3023
  %v3074 = vadd.f32 %v2958, %v3064
  %v3075 = vadd.f32 %v2960, %v3066
  %v3078 = vunpack.c.l.b16 %v2718
  %v3079 = vunpack.c.l.b16 %v2719
  %v3080 = vpack.c.b16 %v3079, %v3078
  %v3082 = vsel %vm2753, %v3080, 0
  %v3085 = vsel %vm2757, %v2660, 0
  %v3088 = vsel %vm2757, %v2661, 0
  %v3091 = vsel %vm2757, %v2662, 0
  %v3094 = vsel %vm2757, %v2663, 0
  %3096 = vmatprep.subr.bf16.mxu0 %v3088
  %3097 = vmatpush1.bf16.msra.mxu0 %v3085
  %3098 = vmatprep.subr.bf16.mxu0 0
  %3099 = vmatpush1.bf16.msra.mxu0 0
  %3100 = vmatprep.subr.bf16.mxu0 0
  %3101 = vmatpush1.bf16.msra.mxu0 0
  %3102 = vmatprep.subr.bf16.mxu0 0
  %3103 = vmatpush1.bf16.msra.mxu0 0
  %3104 = vmatprep.subr.bf16.mxu0 0
  %3105 = vmatpush1.bf16.msra.mxu0 0
  %3106 = vmatprep.subr.bf16.mxu0 0
  %3107 = vmatpush1.bf16.msra.mxu0 0
  %3108 = vmatprep.subr.bf16.mxu0 0
  %3109 = vmatpush1.bf16.msra.mxu0 0
  %3110 = vmatprep.subr.bf16.mxu0 0
  %3111 = vmatpush1.bf16.msra.mxu0 0
  %3112 = vmatprep.subr.bf16.mxu0 0
  %3113 = vmatpush1.bf16.msra.mxu0 0
  %3114 = vmatprep.subr.bf16.mxu0 0
  %3115 = vmatpush1.bf16.msra.mxu0 0
  %3116 = vmatprep.subr.bf16.mxu0 0
  %3117 = vmatpush1.bf16.msra.mxu0 0
  %3118 = vmatprep.subr.bf16.mxu0 0
  %3119 = vmatpush1.bf16.msra.mxu0 0
  %3120 = vmatprep.subr.bf16.mxu0 0
  %3121 = vmatpush1.bf16.msra.mxu0 0
  %3122 = vmatprep.subr.bf16.mxu0 0
  %3123 = vmatpush1.bf16.msra.mxu0 0
  %3124 = vmatprep.subr.bf16.mxu0 0
  %3125 = vmatpush1.bf16.msra.mxu0 0
  %3126 = vmatprep.subr.bf16.mxu0 0
  %3127 = vmatpush1.bf16.msra.mxu0 0
  %3128 = vmatprep.mubr.bf16.mxu0 0
  %3129 = vmatmul.mubr.bf16.gmra.mrb[0].mxu0 %v3082
  %v3130 = vpop.f32.mrb[0].mxu0
  %v3131 = vadd.f32 0.0, %v3130
  %v3132 = vpop.f32.mrb[0].mxu0
  %v3133 = vadd.f32 0.0, %v3132
  %v3134 = vpop.f32.mrb[0].mxu0
  %v3135 = vadd.f32 0.0, %v3134
  %v3136 = vpop.f32.mrb[0].mxu0
  %v3137 = vadd.f32 0.0, %v3136
  %3138 = vdwg.mxu0
  %3139 = vmatprep.subr.bf16.mxu0 %v3094
  %3140 = vmatpush1.bf16.msra.mxu0 %v3091
  %3141 = vmatprep.subr.bf16.mxu0 0
  %3142 = vmatpush1.bf16.msra.mxu0 0
  %3143 = vmatprep.subr.bf16.mxu0 0
  %3144 = vmatpush1.bf16.msra.mxu0 0
  %3145 = vmatprep.subr.bf16.mxu0 0
  %3146 = vmatpush1.bf16.msra.mxu0 0
  %3147 = vmatprep.subr.bf16.mxu0 0
  %3148 = vmatpush1.bf16.msra.mxu0 0
  %3149 = vmatprep.subr.bf16.mxu0 0
  %3150 = vmatpush1.bf16.msra.mxu0 0
  %3151 = vmatprep.subr.bf16.mxu0 0
  %3152 = vmatpush1.bf16.msra.mxu0 0
  %3153 = vmatprep.subr.bf16.mxu0 0
  %3154 = vmatpush1.bf16.msra.mxu0 0
  %3155 = vmatprep.subr.bf16.mxu0 0
  %3156 = vmatpush1.bf16.msra.mxu0 0
  %3157 = vmatprep.subr.bf16.mxu0 0
  %3158 = vmatpush1.bf16.msra.mxu0 0
  %3159 = vmatprep.subr.bf16.mxu0 0
  %3160 = vmatpush1.bf16.msra.mxu0 0
  %3161 = vmatprep.subr.bf16.mxu0 0
  %3162 = vmatpush1.bf16.msra.mxu0 0
  %3163 = vmatprep.subr.bf16.mxu0 0
  %3164 = vmatpush1.bf16.msra.mxu0 0
  %3165 = vmatprep.subr.bf16.mxu0 0
  %3166 = vmatpush1.bf16.msra.mxu0 0
  %3167 = vmatprep.subr.bf16.mxu0 0
  %3168 = vmatpush1.bf16.msra.mxu0 0
  %3169 = vmatprep.subr.bf16.mxu0 0
  %3170 = vmatpush1.bf16.msra.mxu0 0
  %3171 = vmatprep.mubr.bf16.mxu0 0
  %3172 = vmatmul.mubr.bf16.gmra.mrb[0].mxu0 %v3082
  %v3173 = vpop.f32.mrb[0].mxu0
  %v3174 = vadd.f32 0.0, %v3173
  %v3175 = vpop.f32.mrb[0].mxu0
  %v3176 = vadd.f32 0.0, %v3175
  %v3177 = vpop.f32.mrb[0].mxu0
  %v3178 = vadd.f32 0.0, %v3177
  %v3179 = vpop.f32.mrb[0].mxu0
  %v3180 = vadd.f32 0.0, %v3179
  %3181 = vdwg.mxu0
  %v3182 = vadd.f32 %v3068, %v3131
  %v3183 = vadd.f32 %v3069, %v3133
  %v3184 = vadd.f32 %v3070, %v3174
  %v3185 = vadd.f32 %v3071, %v3176
  %v3186 = vadd.f32 %v3072, %v3135
  %v3187 = vadd.f32 %v3073, %v3137
  %v3188 = vadd.f32 %v3074, %v3178
  %v3189 = vadd.f32 %v3075, %v3180
  %v3192 = vunpack.c.l.b16 %v2720
  %v3193 = vunpack.c.l.b16 %v2721
  %v3194 = vpack.c.b16 %v3193, %v3192
  %v3196 = vsel %vm2753, %v3194, 0
  %v3199 = vsel %vm2757, %v2664, 0
  %v3202 = vsel %vm2757, %v2665, 0
  %v3205 = vsel %vm2757, %v2666, 0
  %v3208 = vsel %vm2757, %v2667, 0
  %3210 = vmatprep.subr.bf16.mxu0 %v3202
  %3211 = vmatpush1.bf16.msra.mxu0 %v3199
  %3212 = vmatprep.subr.bf16.mxu0 0
  %3213 = vmatpush1.bf16.msra.mxu0 0
  %3214 = vmatprep.subr.bf16.mxu0 0
  %3215 = vmatpush1.bf16.msra.mxu0 0
  %3216 = vmatprep.subr.bf16.mxu0 0
  %3217 = vmatpush1.bf16.msra.mxu0 0
  %3218 = vmatprep.subr.bf16.mxu0 0
  %3219 = vmatpush1.bf16.msra.mxu0 0
  %3220 = vmatprep.subr.bf16.mxu0 0
  %3221 = vmatpush1.bf16.msra.mxu0 0
  %3222 = vmatprep.subr.bf16.mxu0 0
  %3223 = vmatpush1.bf16.msra.mxu0 0
  %3224 = vmatprep.subr.bf16.mxu0 0
  %3225 = vmatpush1.bf16.msra.mxu0 0
  %3226 = vmatprep.subr.bf16.mxu0 0
  %3227 = vmatpush1.bf16.msra.mxu0 0
  %3228 = vmatprep.subr.bf16.mxu0 0
  %3229 = vmatpush1.bf16.msra.mxu0 0
  %3230 = vmatprep.subr.bf16.mxu0 0
  %3231 = vmatpush1.bf16.msra.mxu0 0
  %3232 = vmatprep.subr.bf16.mxu0 0
  %3233 = vmatpush1.bf16.msra.mxu0 0
  %3234 = vmatprep.subr.bf16.mxu0 0
  %3235 = vmatpush1.bf16.msra.mxu0 0
  %3236 = vmatprep.subr.bf16.mxu0 0
  %3237 = vmatpush1.bf16.msra.mxu0 0
  %3238 = vmatprep.subr.bf16.mxu0 0
  %3239 = vmatpush1.bf16.msra.mxu0 0
  %3240 = vmatprep.subr.bf16.mxu0 0
  %3241 = vmatpush1.bf16.msra.mxu0 0
  %3242 = vmatprep.mubr.bf16.mxu0 0
  %3243 = vmatmul.mubr.bf16.gmra.mrb[0].mxu0 %v3196
  %v3244 = vpop.f32.mrb[0].mxu0
  %v3245 = vadd.f32 0.0, %v3244
  %v3246 = vpop.f32.mrb[0].mxu0
  %v3247 = vadd.f32 0.0, %v3246
  %v3248 = vpop.f32.mrb[0].mxu0
  %v3249 = vadd.f32 0.0, %v3248
  %v3250 = vpop.f32.mrb[0].mxu0
  %v3251 = vadd.f32 0.0, %v3250
  %3252 = vdwg.mxu0
  %3253 = vmatprep.subr.bf16.mxu0 %v3208
  %3254 = vmatpush1.bf16.msra.mxu0 %v3205
  %3255 = vmatprep.subr.bf16.mxu0 0
  %3256 = vmatpush1.bf16.msra.mxu0 0
  %3257 = vmatprep.subr.bf16.mxu0 0
  %3258 = vmatpush1.bf16.msra.mxu0 0
  %3259 = vmatprep.subr.bf16.mxu0 0
  %3260 = vmatpush1.bf16.msra.mxu0 0
  %3261 = vmatprep.subr.bf16.mxu0 0
  %3262 = vmatpush1.bf16.msra.mxu0 0
  %3263 = vmatprep.subr.bf16.mxu0 0
  %3264 = vmatpush1.bf16.msra.mxu0 0
  %3265 = vmatprep.subr.bf16.mxu0 0
  %3266 = vmatpush1.bf16.msra.mxu0 0
  %3267 = vmatprep.subr.bf16.mxu0 0
  %3268 = vmatpush1.bf16.msra.mxu0 0
  %3269 = vmatprep.subr.bf16.mxu0 0
  %3270 = vmatpush1.bf16.msra.mxu0 0
  %3271 = vmatprep.subr.bf16.mxu0 0
  %3272 = vmatpush1.bf16.msra.mxu0 0
  %3273 = vmatprep.subr.bf16.mxu0 0
  %3274 = vmatpush1.bf16.msra.mxu0 0
  %3275 = vmatprep.subr.bf16.mxu0 0
  %3276 = vmatpush1.bf16.msra.mxu0 0
  %3277 = vmatprep.subr.bf16.mxu0 0
  %3278 = vmatpush1.bf16.msra.mxu0 0
  %3279 = vmatprep.subr.bf16.mxu0 0
  %3280 = vmatpush1.bf16.msra.mxu0 0
  %3281 = vmatprep.subr.bf16.mxu0 0
  %3282 = vmatpush1.bf16.msra.mxu0 0
  %3283 = vmatprep.subr.bf16.mxu0 0
  %3284 = vmatpush1.bf16.msra.mxu0 0
  %3285 = vmatprep.mubr.bf16.mxu0 0
  %3286 = vmatmul.mubr.bf16.gmra.mrb[0].mxu0 %v3196
  %v3287 = vpop.f32.mrb[0].mxu0
  %v3288 = vadd.f32 0.0, %v3287
  %v3289 = vpop.f32.mrb[0].mxu0
  %v3290 = vadd.f32 0.0, %v3289
  %v3291 = vpop.f32.mrb[0].mxu0
  %v3292 = vadd.f32 0.0, %v3291
  %v3293 = vpop.f32.mrb[0].mxu0
  %v3294 = vadd.f32 0.0, %v3293
  %3295 = vdwg.mxu0
  %v3296 = vadd.f32 %v3182, %v3245
  %v3297 = vadd.f32 %v3183, %v3247
  %v3298 = vadd.f32 %v3184, %v3288
  %v3299 = vadd.f32 %v3185, %v3290
  %v3300 = vadd.f32 %v3186, %v3249
  %v3301 = vadd.f32 %v3187, %v3251
  %v3302 = vadd.f32 %v3188, %v3292
  %v3303 = vadd.f32 %v3189, %v3294
  %v3306 = vunpack.c.l.b16 %v2722
  %v3307 = vunpack.c.l.b16 %v2723
  %v3308 = vpack.c.b16 %v3307, %v3306
  %v3310 = vsel %vm2753, %v3308, 0
  %v3313 = vsel %vm2757, %v2668, 0
  %v3316 = vsel %vm2757, %v2669, 0
  %v3319 = vsel %vm2757, %v2670, 0
  %v3322 = vsel %vm2757, %v2671, 0
  %3324 = vmatprep.subr.bf16.mxu0 %v3316
  %3325 = vmatpush1.bf16.msra.mxu0 %v3313
  %3326 = vmatprep.subr.bf16.mxu0 0
  %3327 = vmatpush1.bf16.msra.mxu0 0
  %3328 = vmatprep.subr.bf16.mxu0 0
  %3329 = vmatpush1.bf16.msra.mxu0 0
  %3330 = vmatprep.subr.bf16.mxu0 0
  %3331 = vmatpush1.bf16.msra.mxu0 0
  %3332 = vmatprep.subr.bf16.mxu0 0
  %3333 = vmatpush1.bf16.msra.mxu0 0
  %3334 = vmatprep.subr.bf16.mxu0 0
  %3335 = vmatpush1.bf16.msra.mxu0 0
  %3336 = vmatprep.subr.bf16.mxu0 0
  %3337 = vmatpush1.bf16.msra.mxu0 0
  %3338 = vmatprep.subr.bf16.mxu0 0
  %3339 = vmatpush1.bf16.msra.mxu0 0
  %3340 = vmatprep.subr.bf16.mxu0 0
  %3341 = vmatpush1.bf16.msra.mxu0 0
  %3342 = vmatprep.subr.bf16.mxu0 0
  %3343 = vmatpush1.bf16.msra.mxu0 0
  %3344 = vmatprep.subr.bf16.mxu0 0
  %3345 = vmatpush1.bf16.msra.mxu0 0
  %3346 = vmatprep.subr.bf16.mxu0 0
  %3347 = vmatpush1.bf16.msra.mxu0 0
  %3348 = vmatprep.subr.bf16.mxu0 0
  %3349 = vmatpush1.bf16.msra.mxu0 0
  %3350 = vmatprep.subr.bf16.mxu0 0
  %3351 = vmatpush1.bf16.msra.mxu0 0
  %3352 = vmatprep.subr.bf16.mxu0 0
  %3353 = vmatpush1.bf16.msra.mxu0 0
  %3354 = vmatprep.subr.bf16.mxu0 0
  %3355 = vmatpush1.bf16.msra.mxu0 0
  %3356 = vmatprep.mubr.bf16.mxu0 0
  %3357 = vmatmul.mubr.bf16.gmra.mrb[0].mxu0 %v3310
  %v3358 = vpop.f32.mrb[0].mxu0
  %v3359 = vadd.f32 0.0, %v3358
  %v3360 = vpop.f32.mrb[0].mxu0
  %v3361 = vadd.f32 0.0, %v3360
  %v3362 = vpop.f32.mrb[0].mxu0
  %v3363 = vadd.f32 0.0, %v3362
  %v3364 = vpop.f32.mrb[0].mxu0
  %v3365 = vadd.f32 0.0, %v3364
  %3366 = vdwg.mxu0
  %3367 = vmatprep.subr.bf16.mxu0 %v3322
  %3368 = vmatpush1.bf16.msra.mxu0 %v3319
  %3369 = vmatprep.subr.bf16.mxu0 0
  %3370 = vmatpush1.bf16.msra.mxu0 0
  %3371 = vmatprep.subr.bf16.mxu0 0
  %3372 = vmatpush1.bf16.msra.mxu0 0
  %3373 = vmatprep.subr.bf16.mxu0 0
  %3374 = vmatpush1.bf16.msra.mxu0 0
  %3375 = vmatprep.subr.bf16.mxu0 0
  %3376 = vmatpush1.bf16.msra.mxu0 0
  %3377 = vmatprep.subr.bf16.mxu0 0
  %3378 = vmatpush1.bf16.msra.mxu0 0
  %3379 = vmatprep.subr.bf16.mxu0 0
  %3380 = vmatpush1.bf16.msra.mxu0 0
  %3381 = vmatprep.subr.bf16.mxu0 0
  %3382 = vmatpush1.bf16.msra.mxu0 0
  %3383 = vmatprep.subr.bf16.mxu0 0
  %3384 = vmatpush1.bf16.msra.mxu0 0
  %3385 = vmatprep.subr.bf16.mxu0 0
  %3386 = vmatpush1.bf16.msra.mxu0 0
  %3387 = vmatprep.subr.bf16.mxu0 0
  %3388 = vmatpush1.bf16.msra.mxu0 0
  %3389 = vmatprep.subr.bf16.mxu0 0
  %3390 = vmatpush1.bf16.msra.mxu0 0
  %3391 = vmatprep.subr.bf16.mxu0 0
  %3392 = vmatpush1.bf16.msra.mxu0 0
  %3393 = vmatprep.subr.bf16.mxu0 0
  %3394 = vmatpush1.bf16.msra.mxu0 0
  %3395 = vmatprep.subr.bf16.mxu0 0
  %3396 = vmatpush1.bf16.msra.mxu0 0
  %3397 = vmatprep.subr.bf16.mxu0 0
  %3398 = vmatpush1.bf16.msra.mxu0 0
  %3399 = vmatprep.mubr.bf16.mxu0 0
  %3400 = vmatmul.mubr.bf16.gmra.mrb[0].mxu0 %v3310
  %v3401 = vpop.f32.mrb[0].mxu0
  %v3402 = vadd.f32 0.0, %v3401
  %v3403 = vpop.f32.mrb[0].mxu0
  %v3404 = vadd.f32 0.0, %v3403
  %v3405 = vpop.f32.mrb[0].mxu0
  %v3406 = vadd.f32 0.0, %v3405
  %v3407 = vpop.f32.mrb[0].mxu0
  %v3408 = vadd.f32 0.0, %v3407
  %3409 = vdwg.mxu0
  %v3410 = vadd.f32 %v3296, %v3359
  %v3411 = vadd.f32 %v3297, %v3361
  %v3412 = vadd.f32 %v3298, %v3402
  %v3413 = vadd.f32 %v3299, %v3404
  %v3414 = vadd.f32 %v3300, %v3363
  %v3415 = vadd.f32 %v3301, %v3365
  %v3416 = vadd.f32 %v3302, %v3406
  %v3417 = vadd.f32 %v3303, %v3408
  %v3420 = vunpack.c.l.b16 %v2724
  %v3421 = vunpack.c.l.b16 %v2725
  %v3422 = vpack.c.b16 %v3421, %v3420
  %v3424 = vsel %vm2753, %v3422, 0
  %v3427 = vsel %vm2757, %v2672, 0
  %v3430 = vsel %vm2757, %v2673, 0
  %v3433 = vsel %vm2757, %v2674, 0
  %v3436 = vsel %vm2757, %v2675, 0
  %3438 = vmatprep.subr.bf16.mxu0 %v3430
  %3439 = vmatpush1.bf16.msra.mxu0 %v3427
  %3440 = vmatprep.subr.bf16.mxu0 0
  %3441 = vmatpush1.bf16.msra.mxu0 0
  %3442 = vmatprep.subr.bf16.mxu0 0
  %3443 = vmatpush1.bf16.msra.mxu0 0
  %3444 = vmatprep.subr.bf16.mxu0 0
  %3445 = vmatpush1.bf16.msra.mxu0 0
  %3446 = vmatprep.subr.bf16.mxu0 0
  %3447 = vmatpush1.bf16.msra.mxu0 0
  %3448 = vmatprep.subr.bf16.mxu0 0
  %3449 = vmatpush1.bf16.msra.mxu0 0
  %3450 = vmatprep.subr.bf16.mxu0 0
  %3451 = vmatpush1.bf16.msra.mxu0 0
  %3452 = vmatprep.subr.bf16.mxu0 0
  %3453 = vmatpush1.bf16.msra.mxu0 0
  %3454 = vmatprep.subr.bf16.mxu0 0
  %3455 = vmatpush1.bf16.msra.mxu0 0
  %3456 = vmatprep.subr.bf16.mxu0 0
  %3457 = vmatpush1.bf16.msra.mxu0 0
  %3458 = vmatprep.subr.bf16.mxu0 0
  %3459 = vmatpush1.bf16.msra.mxu0 0
  %3460 = vmatprep.subr.bf16.mxu0 0
  %3461 = vmatpush1.bf16.msra.mxu0 0
  %3462 = vmatprep.subr.bf16.mxu0 0
  %3463 = vmatpush1.bf16.msra.mxu0 0
  %3464 = vmatprep.subr.bf16.mxu0 0
  %3465 = vmatpush1.bf16.msra.mxu0 0
  %3466 = vmatprep.subr.bf16.mxu0 0
  %3467 = vmatpush1.bf16.msra.mxu0 0
  %3468 = vmatprep.subr.bf16.mxu0 0
  %3469 = vmatpush1.bf16.msra.mxu0 0
  %3470 = vmatprep.mubr.bf16.mxu0 0
  %3471 = vmatmul.mubr.bf16.gmra.mrb[0].mxu0 %v3424
  %v3472 = vpop.f32.mrb[0].mxu0
  %v3473 = vadd.f32 0.0, %v3472
  %v3474 = vpop.f32.mrb[0].mxu0
  %v3475 = vadd.f32 0.0, %v3474
  %v3476 = vpop.f32.mrb[0].mxu0
  %v3477 = vadd.f32 0.0, %v3476
  %v3478 = vpop.f32.mrb[0].mxu0
  %v3479 = vadd.f32 0.0, %v3478
  %3480 = vdwg.mxu0
  %3481 = vmatprep.subr.bf16.mxu0 %v3436
  %3482 = vmatpush1.bf16.msra.mxu0 %v3433
  %3483 = vmatprep.subr.bf16.mxu0 0
  %3484 = vmatpush1.bf16.msra.mxu0 0
  %3485 = vmatprep.subr.bf16.mxu0 0
  %3486 = vmatpush1.bf16.msra.mxu0 0
  %3487 = vmatprep.subr.bf16.mxu0 0
  %3488 = vmatpush1.bf16.msra.mxu0 0
  %3489 = vmatprep.subr.bf16.mxu0 0
  %3490 = vmatpush1.bf16.msra.mxu0 0
  %3491 = vmatprep.subr.bf16.mxu0 0
  %3492 = vmatpush1.bf16.msra.mxu0 0
  %3493 = vmatprep.subr.bf16.mxu0 0
  %3494 = vmatpush1.bf16.msra.mxu0 0
  %3495 = vmatprep.subr.bf16.mxu0 0
  %3496 = vmatpush1.bf16.msra.mxu0 0
  %3497 = vmatprep.subr.bf16.mxu0 0
  %3498 = vmatpush1.bf16.msra.mxu0 0
  %3499 = vmatprep.subr.bf16.mxu0 0
  %3500 = vmatpush1.bf16.msra.mxu0 0
  %3501 = vmatprep.subr.bf16.mxu0 0
  %3502 = vmatpush1.bf16.msra.mxu0 0
  %3503 = vmatprep.subr.bf16.mxu0 0
  %3504 = vmatpush1.bf16.msra.mxu0 0
  %3505 = vmatprep.subr.bf16.mxu0 0
  %3506 = vmatpush1.bf16.msra.mxu0 0
  %3507 = vmatprep.subr.bf16.mxu0 0
  %3508 = vmatpush1.bf16.msra.mxu0 0
  %3509 = vmatprep.subr.bf16.mxu0 0
  %3510 = vmatpush1.bf16.msra.mxu0 0
  %3511 = vmatprep.subr.bf16.mxu0 0
  %3512 = vmatpush1.bf16.msra.mxu0 0
  %3513 = vmatprep.mubr.bf16.mxu0 0
  %3514 = vmatmul.mubr.bf16.gmra.mrb[0].mxu0 %v3424
  %v3515 = vpop.f32.mrb[0].mxu0
  %v3516 = vadd.f32 0.0, %v3515
  %v3517 = vpop.f32.mrb[0].mxu0
  %v3518 = vadd.f32 0.0, %v3517
  %v3519 = vpop.f32.mrb[0].mxu0
  %v3520 = vadd.f32 0.0, %v3519
  %v3521 = vpop.f32.mrb[0].mxu0
  %v3522 = vadd.f32 0.0, %v3521
  %3523 = vdwg.mxu0
  %v3524 = vadd.f32 %v3410, %v3473
  %v3525 = vadd.f32 %v3411, %v3475
  %v3526 = vadd.f32 %v3412, %v3516
  %v3527 = vadd.f32 %v3413, %v3518
  %v3528 = vadd.f32 %v3414, %v3477
  %v3529 = vadd.f32 %v3415, %v3479
  %v3530 = vadd.f32 %v3416, %v3520
  %v3531 = vadd.f32 %v3417, %v3522
  %v3534 = vunpack.c.l.b16 %v2726
  %v3535 = vunpack.c.l.b16 %v2727
  %v3536 = vpack.c.b16 %v3535, %v3534
  %v3538 = vsel %vm2753, %v3536, 0
  %v3541 = vsel %vm2757, %v2676, 0
  %v3544 = vsel %vm2757, %v2677, 0
  %v3547 = vsel %vm2757, %v2678, 0
  %v3550 = vsel %vm2757, %v2679, 0
  %3552 = vmatprep.subr.bf16.mxu0 %v3544
  %3553 = vmatpush1.bf16.msra.mxu0 %v3541
  %3554 = vmatprep.subr.bf16.mxu0 0
  %3555 = vmatpush1.bf16.msra.mxu0 0
  %3556 = vmatprep.subr.bf16.mxu0 0
  %3557 = vmatpush1.bf16.msra.mxu0 0
  %3558 = vmatprep.subr.bf16.mxu0 0
  %3559 = vmatpush1.bf16.msra.mxu0 0
  %3560 = vmatprep.subr.bf16.mxu0 0
  %3561 = vmatpush1.bf16.msra.mxu0 0
  %3562 = vmatprep.subr.bf16.mxu0 0
  %3563 = vmatpush1.bf16.msra.mxu0 0
  %3564 = vmatprep.subr.bf16.mxu0 0
  %3565 = vmatpush1.bf16.msra.mxu0 0
  %3566 = vmatprep.subr.bf16.mxu0 0
  %3567 = vmatpush1.bf16.msra.mxu0 0
  %3568 = vmatprep.subr.bf16.mxu0 0
  %3569 = vmatpush1.bf16.msra.mxu0 0
  %3570 = vmatprep.subr.bf16.mxu0 0
  %3571 = vmatpush1.bf16.msra.mxu0 0
  %3572 = vmatprep.subr.bf16.mxu0 0
  %3573 = vmatpush1.bf16.msra.mxu0 0
  %3574 = vmatprep.subr.bf16.mxu0 0
  %3575 = vmatpush1.bf16.msra.mxu0 0
  %3576 = vmatprep.subr.bf16.mxu0 0
  %3577 = vmatpush1.bf16.msra.mxu0 0
  %3578 = vmatprep.subr.bf16.mxu0 0
  %3579 = vmatpush1.bf16.msra.mxu0 0
  %3580 = vmatprep.subr.bf16.mxu0 0
  %3581 = vmatpush1.bf16.msra.mxu0 0
  %3582 = vmatprep.subr.bf16.mxu0 0
  %3583 = vmatpush1.bf16.msra.mxu0 0
  %3584 = vmatprep.mubr.bf16.mxu0 0
  %3585 = vmatmul.mubr.bf16.gmra.mrb[0].mxu0 %v3538
  %v3586 = vpop.f32.mrb[0].mxu0
  %v3587 = vadd.f32 0.0, %v3586
  %v3588 = vpop.f32.mrb[0].mxu0
  %v3589 = vadd.f32 0.0, %v3588
  %v3590 = vpop.f32.mrb[0].mxu0
  %v3591 = vadd.f32 0.0, %v3590
  %v3592 = vpop.f32.mrb[0].mxu0
  %v3593 = vadd.f32 0.0, %v3592
  %3594 = vdwg.mxu0
  %3595 = vmatprep.subr.bf16.mxu0 %v3550
  %3596 = vmatpush1.bf16.msra.mxu0 %v3547
  %3597 = vmatprep.subr.bf16.mxu0 0
  %3598 = vmatpush1.bf16.msra.mxu0 0
  %3599 = vmatprep.subr.bf16.mxu0 0
  %3600 = vmatpush1.bf16.msra.mxu0 0
  %3601 = vmatprep.subr.bf16.mxu0 0
  %3602 = vmatpush1.bf16.msra.mxu0 0
  %3603 = vmatprep.subr.bf16.mxu0 0
  %3604 = vmatpush1.bf16.msra.mxu0 0
  %3605 = vmatprep.subr.bf16.mxu0 0
  %3606 = vmatpush1.bf16.msra.mxu0 0
  %3607 = vmatprep.subr.bf16.mxu0 0
  %3608 = vmatpush1.bf16.msra.mxu0 0
  %3609 = vmatprep.subr.bf16.mxu0 0
  %3610 = vmatpush1.bf16.msra.mxu0 0
  %3611 = vmatprep.subr.bf16.mxu0 0
  %3612 = vmatpush1.bf16.msra.mxu0 0
  %3613 = vmatprep.subr.bf16.mxu0 0
  %3614 = vmatpush1.bf16.msra.mxu0 0
  %3615 = vmatprep.subr.bf16.mxu0 0
  %3616 = vmatpush1.bf16.msra.mxu0 0
  %3617 = vmatprep.subr.bf16.mxu0 0
  %3618 = vmatpush1.bf16.msra.mxu0 0
  %3619 = vmatprep.subr.bf16.mxu0 0
  %3620 = vmatpush1.bf16.msra.mxu0 0
  %3621 = vmatprep.subr.bf16.mxu0 0
  %3622 = vmatpush1.bf16.msra.mxu0 0
  %3623 = vmatprep.subr.bf16.mxu0 0
  %3624 = vmatpush1.bf16.msra.mxu0 0
  %3625 = vmatprep.subr.bf16.mxu0 0
  %3626 = vmatpush1.bf16.msra.mxu0 0
  %3627 = vmatprep.mubr.bf16.mxu0 0
  %3628 = vmatmul.mubr.bf16.gmra.mrb[0].mxu0 %v3538
  %v3629 = vpop.f32.mrb[0].mxu0
  %v3630 = vadd.f32 0.0, %v3629
  %v3631 = vpop.f32.mrb[0].mxu0
  %v3632 = vadd.f32 0.0, %v3631
  %v3633 = vpop.f32.mrb[0].mxu0
  %v3634 = vadd.f32 0.0, %v3633
  %v3635 = vpop.f32.mrb[0].mxu0
  %v3636 = vadd.f32 0.0, %v3635
  %3637 = vdwg.mxu0
  %v3638 = vadd.f32 %v3524, %v3587
  %v3639 = vadd.f32 %v3525, %v3589
  %v3640 = vadd.f32 %v3526, %v3630
  %v3641 = vadd.f32 %v3527, %v3632
  %v3642 = vadd.f32 %v3528, %v3591
  %v3643 = vadd.f32 %v3529, %v3593
  %v3644 = vadd.f32 %v3530, %v3634
  %v3645 = vadd.f32 %v3531, %v3636
  %v3648 = vunpack.c.l.b16 %v2728
  %v3649 = vunpack.c.l.b16 %v2729
  %v3650 = vpack.c.b16 %v3649, %v3648
  %v3652 = vsel %vm2753, %v3650, 0
  %v3655 = vsel %vm2757, %v2680, 0
  %v3658 = vsel %vm2757, %v2681, 0
  %v3661 = vsel %vm2757, %v2682, 0
  %v3664 = vsel %vm2757, %v2683, 0
  %3666 = vmatprep.subr.bf16.mxu0 %v3658
  %3667 = vmatpush1.bf16.msra.mxu0 %v3655
  %3668 = vmatprep.subr.bf16.mxu0 0
  %3669 = vmatpush1.bf16.msra.mxu0 0
  %3670 = vmatprep.subr.bf16.mxu0 0
  %3671 = vmatpush1.bf16.msra.mxu0 0
  %3672 = vmatprep.subr.bf16.mxu0 0
  %3673 = vmatpush1.bf16.msra.mxu0 0
  %3674 = vmatprep.subr.bf16.mxu0 0
  %3675 = vmatpush1.bf16.msra.mxu0 0
  %3676 = vmatprep.subr.bf16.mxu0 0
  %3677 = vmatpush1.bf16.msra.mxu0 0
  %3678 = vmatprep.subr.bf16.mxu0 0
  %3679 = vmatpush1.bf16.msra.mxu0 0
  %3680 = vmatprep.subr.bf16.mxu0 0
  %3681 = vmatpush1.bf16.msra.mxu0 0
  %3682 = vmatprep.subr.bf16.mxu0 0
  %3683 = vmatpush1.bf16.msra.mxu0 0
  %3684 = vmatprep.subr.bf16.mxu0 0
  %3685 = vmatpush1.bf16.msra.mxu0 0
  %3686 = vmatprep.subr.bf16.mxu0 0
  %3687 = vmatpush1.bf16.msra.mxu0 0
  %3688 = vmatprep.subr.bf16.mxu0 0
  %3689 = vmatpush1.bf16.msra.mxu0 0
  %3690 = vmatprep.subr.bf16.mxu0 0
  %3691 = vmatpush1.bf16.msra.mxu0 0
  %3692 = vmatprep.subr.bf16.mxu0 0
  %3693 = vmatpush1.bf16.msra.mxu0 0
  %3694 = vmatprep.subr.bf16.mxu0 0
  %3695 = vmatpush1.bf16.msra.mxu0 0
  %3696 = vmatprep.subr.bf16.mxu0 0
  %3697 = vmatpush1.bf16.msra.mxu0 0
  %3698 = vmatprep.mubr.bf16.mxu0 0
  %3699 = vmatmul.mubr.bf16.gmra.mrb[0].mxu0 %v3652
  %v3700 = vpop.f32.mrb[0].mxu0
  %v3701 = vadd.f32 0.0, %v3700
  %v3702 = vpop.f32.mrb[0].mxu0
  %v3703 = vadd.f32 0.0, %v3702
  %v3704 = vpop.f32.mrb[0].mxu0
  %v3705 = vadd.f32 0.0, %v3704
  %v3706 = vpop.f32.mrb[0].mxu0
  %v3707 = vadd.f32 0.0, %v3706
  %3708 = vdwg.mxu0
  %3709 = vmatprep.subr.bf16.mxu0 %v3664
  %3710 = vmatpush1.bf16.msra.mxu0 %v3661
  %3711 = vmatprep.subr.bf16.mxu0 0
  %3712 = vmatpush1.bf16.msra.mxu0 0
  %3713 = vmatprep.subr.bf16.mxu0 0
  %3714 = vmatpush1.bf16.msra.mxu0 0
  %3715 = vmatprep.subr.bf16.mxu0 0
  %3716 = vmatpush1.bf16.msra.mxu0 0
  %3717 = vmatprep.subr.bf16.mxu0 0
  %3718 = vmatpush1.bf16.msra.mxu0 0
  %3719 = vmatprep.subr.bf16.mxu0 0
  %3720 = vmatpush1.bf16.msra.mxu0 0
  %3721 = vmatprep.subr.bf16.mxu0 0
  %3722 = vmatpush1.bf16.msra.mxu0 0
  %3723 = vmatprep.subr.bf16.mxu0 0
  %3724 = vmatpush1.bf16.msra.mxu0 0
  %3725 = vmatprep.subr.bf16.mxu0 0
  %3726 = vmatpush1.bf16.msra.mxu0 0
  %3727 = vmatprep.subr.bf16.mxu0 0
  %3728 = vmatpush1.bf16.msra.mxu0 0
  %3729 = vmatprep.subr.bf16.mxu0 0
  %3730 = vmatpush1.bf16.msra.mxu0 0
  %3731 = vmatprep.subr.bf16.mxu0 0
  %3732 = vmatpush1.bf16.msra.mxu0 0
  %3733 = vmatprep.subr.bf16.mxu0 0
  %3734 = vmatpush1.bf16.msra.mxu0 0
  %3735 = vmatprep.subr.bf16.mxu0 0
  %3736 = vmatpush1.bf16.msra.mxu0 0
  %3737 = vmatprep.subr.bf16.mxu0 0
  %3738 = vmatpush1.bf16.msra.mxu0 0
  %3739 = vmatprep.subr.bf16.mxu0 0
  %3740 = vmatpush1.bf16.msra.mxu0 0
  %3741 = vmatprep.mubr.bf16.mxu0 0
  %3742 = vmatmul.mubr.bf16.gmra.mrb[0].mxu0 %v3652
  %v3743 = vpop.f32.mrb[0].mxu0
  %v3744 = vadd.f32 0.0, %v3743
  %v3745 = vpop.f32.mrb[0].mxu0
  %v3746 = vadd.f32 0.0, %v3745
  %v3747 = vpop.f32.mrb[0].mxu0
  %v3748 = vadd.f32 0.0, %v3747
  %v3749 = vpop.f32.mrb[0].mxu0
  %v3750 = vadd.f32 0.0, %v3749
  %3751 = vdwg.mxu0
  %v3752 = vadd.f32 %v3638, %v3701
  %v3753 = vadd.f32 %v3639, %v3703
  %v3754 = vadd.f32 %v3640, %v3744
  %v3755 = vadd.f32 %v3641, %v3746
  %v3756 = vadd.f32 %v3642, %v3705
  %v3757 = vadd.f32 %v3643, %v3707
  %v3758 = vadd.f32 %v3644, %v3748
  %v3759 = vadd.f32 %v3645, %v3750
  %v3762 = vunpack.c.l.b16 %v2730
  %v3763 = vunpack.c.l.b16 %v2731
  %v3764 = vpack.c.b16 %v3763, %v3762
  %v3766 = vsel %vm2753, %v3764, 0
  %v3769 = vsel %vm2757, %v2684, 0
  %v3772 = vsel %vm2757, %v2685, 0
  %v3775 = vsel %vm2757, %v2686, 0
  %v3778 = vsel %vm2757, %v2687, 0
  %3780 = vmatprep.subr.bf16.mxu0 %v3772
  %3781 = vmatpush1.bf16.msra.mxu0 %v3769
  %3782 = vmatprep.subr.bf16.mxu0 0
  %3783 = vmatpush1.bf16.msra.mxu0 0
  %3784 = vmatprep.subr.bf16.mxu0 0
  %3785 = vmatpush1.bf16.msra.mxu0 0
  %3786 = vmatprep.subr.bf16.mxu0 0
  %3787 = vmatpush1.bf16.msra.mxu0 0
  %3788 = vmatprep.subr.bf16.mxu0 0
  %3789 = vmatpush1.bf16.msra.mxu0 0
  %3790 = vmatprep.subr.bf16.mxu0 0
  %3791 = vmatpush1.bf16.msra.mxu0 0
  %3792 = vmatprep.subr.bf16.mxu0 0
  %3793 = vmatpush1.bf16.msra.mxu0 0
  %3794 = vmatprep.subr.bf16.mxu0 0
  %3795 = vmatpush1.bf16.msra.mxu0 0
  %3796 = vmatprep.subr.bf16.mxu0 0
  %3797 = vmatpush1.bf16.msra.mxu0 0
  %3798 = vmatprep.subr.bf16.mxu0 0
  %3799 = vmatpush1.bf16.msra.mxu0 0
  %3800 = vmatprep.subr.bf16.mxu0 0
  %3801 = vmatpush1.bf16.msra.mxu0 0
  %3802 = vmatprep.subr.bf16.mxu0 0
  %3803 = vmatpush1.bf16.msra.mxu0 0
  %3804 = vmatprep.subr.bf16.mxu0 0
  %3805 = vmatpush1.bf16.msra.mxu0 0
  %3806 = vmatprep.subr.bf16.mxu0 0
  %3807 = vmatpush1.bf16.msra.mxu0 0
  %3808 = vmatprep.subr.bf16.mxu0 0
  %3809 = vmatpush1.bf16.msra.mxu0 0
  %3810 = vmatprep.subr.bf16.mxu0 0
  %3811 = vmatpush1.bf16.msra.mxu0 0
  %3812 = vmatprep.mubr.bf16.mxu0 0
  %3813 = vmatmul.mubr.bf16.gmra.mrb[0].mxu0 %v3766
  %v3814 = vpop.f32.mrb[0].mxu0
  %v3815 = vadd.f32 0.0, %v3814
  %v3816 = vpop.f32.mrb[0].mxu0
  %v3817 = vadd.f32 0.0, %v3816
  %v3818 = vpop.f32.mrb[0].mxu0
  %v3819 = vadd.f32 0.0, %v3818
  %v3820 = vpop.f32.mrb[0].mxu0
  %v3821 = vadd.f32 0.0, %v3820
  %3822 = vdwg.mxu0
  %3823 = vmatprep.subr.bf16.mxu0 %v3778
  %3824 = vmatpush1.bf16.msra.mxu0 %v3775
  %3825 = vmatprep.subr.bf16.mxu0 0
  %3826 = vmatpush1.bf16.msra.mxu0 0
  %3827 = vmatprep.subr.bf16.mxu0 0
  %3828 = vmatpush1.bf16.msra.mxu0 0
  %3829 = vmatprep.subr.bf16.mxu0 0
  %3830 = vmatpush1.bf16.msra.mxu0 0
  %3831 = vmatprep.subr.bf16.mxu0 0
  %3832 = vmatpush1.bf16.msra.mxu0 0
  %3833 = vmatprep.subr.bf16.mxu0 0
  %3834 = vmatpush1.bf16.msra.mxu0 0
  %3835 = vmatprep.subr.bf16.mxu0 0
  %3836 = vmatpush1.bf16.msra.mxu0 0
  %3837 = vmatprep.subr.bf16.mxu0 0
  %3838 = vmatpush1.bf16.msra.mxu0 0
  %3839 = vmatprep.subr.bf16.mxu0 0
  %3840 = vmatpush1.bf16.msra.mxu0 0
  %3841 = vmatprep.subr.bf16.mxu0 0
  %3842 = vmatpush1.bf16.msra.mxu0 0
  %3843 = vmatprep.subr.bf16.mxu0 0
  %3844 = vmatpush1.bf16.msra.mxu0 0
  %3845 = vmatprep.subr.bf16.mxu0 0
  %3846 = vmatpush1.bf16.msra.mxu0 0
  %3847 = vmatprep.subr.bf16.mxu0 0
  %3848 = vmatpush1.bf16.msra.mxu0 0
  %3849 = vmatprep.subr.bf16.mxu0 0
  %3850 = vmatpush1.bf16.msra.mxu0 0
  %3851 = vmatprep.subr.bf16.mxu0 0
  %3852 = vmatpush1.bf16.msra.mxu0 0
  %3853 = vmatprep.subr.bf16.mxu0 0
  %3854 = vmatpush1.bf16.msra.mxu0 0
  %3855 = vmatprep.mubr.bf16.mxu0 0
  %3856 = vmatmul.mubr.bf16.gmra.mrb[0].mxu0 %v3766
  %v3857 = vpop.f32.mrb[0].mxu0
  %v3858 = vadd.f32 0.0, %v3857
  %v3859 = vpop.f32.mrb[0].mxu0
  %v3860 = vadd.f32 0.0, %v3859
  %v3861 = vpop.f32.mrb[0].mxu0
  %v3862 = vadd.f32 0.0, %v3861
  %v3863 = vpop.f32.mrb[0].mxu0
  %v3864 = vadd.f32 0.0, %v3863
  %3865 = vdwg.mxu0
  %v3866 = vadd.f32 %v3752, %v3815
  %v3867 = vadd.f32 %v3753, %v3817
  %v3868 = vadd.f32 %v3754, %v3858
  %v3869 = vadd.f32 %v3755, %v3860
  %v3870 = vadd.f32 %v3756, %v3819
  %v3871 = vadd.f32 %v3757, %v3821
  %v3872 = vadd.f32 %v3758, %v3862
  %v3873 = vadd.f32 %v3759, %v3864
  %v3876 = vunpack.c.l.b16 %v2732
  %v3877 = vunpack.c.l.b16 %v2733
  %v3878 = vpack.c.b16 %v3877, %v3876
  %v3880 = vsel %vm2753, %v3878, 0
  %v3883 = vsel %vm2757, %v2688, 0
  %v3886 = vsel %vm2757, %v2689, 0
  %v3889 = vsel %vm2757, %v2690, 0
  %v3892 = vsel %vm2757, %v2691, 0
  %3894 = vmatprep.subr.bf16.mxu0 %v3886
  %3895 = vmatpush1.bf16.msra.mxu0 %v3883
  %3896 = vmatprep.subr.bf16.mxu0 0
  %3897 = vmatpush1.bf16.msra.mxu0 0
  %3898 = vmatprep.subr.bf16.mxu0 0
  %3899 = vmatpush1.bf16.msra.mxu0 0
  %3900 = vmatprep.subr.bf16.mxu0 0
  %3901 = vmatpush1.bf16.msra.mxu0 0
  %3902 = vmatprep.subr.bf16.mxu0 0
  %3903 = vmatpush1.bf16.msra.mxu0 0
  %3904 = vmatprep.subr.bf16.mxu0 0
  %3905 = vmatpush1.bf16.msra.mxu0 0
  %3906 = vmatprep.subr.bf16.mxu0 0
  %3907 = vmatpush1.bf16.msra.mxu0 0
  %3908 = vmatprep.subr.bf16.mxu0 0
  %3909 = vmatpush1.bf16.msra.mxu0 0
  %3910 = vmatprep.subr.bf16.mxu0 0
  %3911 = vmatpush1.bf16.msra.mxu0 0
  %3912 = vmatprep.subr.bf16.mxu0 0
  %3913 = vmatpush1.bf16.msra.mxu0 0
  %3914 = vmatprep.subr.bf16.mxu0 0
  %3915 = vmatpush1.bf16.msra.mxu0 0
  %3916 = vmatprep.subr.bf16.mxu0 0
  %3917 = vmatpush1.bf16.msra.mxu0 0
  %3918 = vmatprep.subr.bf16.mxu0 0
  %3919 = vmatpush1.bf16.msra.mxu0 0
  %3920 = vmatprep.subr.bf16.mxu0 0
  %3921 = vmatpush1.bf16.msra.mxu0 0
  %3922 = vmatprep.subr.bf16.mxu0 0
  %3923 = vmatpush1.bf16.msra.mxu0 0
  %3924 = vmatprep.subr.bf16.mxu0 0
  %3925 = vmatpush1.bf16.msra.mxu0 0
  %3926 = vmatprep.mubr.bf16.mxu0 0
  %3927 = vmatmul.mubr.bf16.gmra.mrb[0].mxu0 %v3880
  %v3928 = vpop.f32.mrb[0].mxu0
  %v3929 = vadd.f32 0.0, %v3928
  %v3930 = vpop.f32.mrb[0].mxu0
  %v3931 = vadd.f32 0.0, %v3930
  %v3932 = vpop.f32.mrb[0].mxu0
  %v3933 = vadd.f32 0.0, %v3932
  %v3934 = vpop.f32.mrb[0].mxu0
  %v3935 = vadd.f32 0.0, %v3934
  %3936 = vdwg.mxu0
  %3937 = vmatprep.subr.bf16.mxu0 %v3892
  %3938 = vmatpush1.bf16.msra.mxu0 %v3889
  %3939 = vmatprep.subr.bf16.mxu0 0
  %3940 = vmatpush1.bf16.msra.mxu0 0
  %3941 = vmatprep.subr.bf16.mxu0 0
  %3942 = vmatpush1.bf16.msra.mxu0 0
  %3943 = vmatprep.subr.bf16.mxu0 0
  %3944 = vmatpush1.bf16.msra.mxu0 0
  %3945 = vmatprep.subr.bf16.mxu0 0
  %3946 = vmatpush1.bf16.msra.mxu0 0
  %3947 = vmatprep.subr.bf16.mxu0 0
  %3948 = vmatpush1.bf16.msra.mxu0 0
  %3949 = vmatprep.subr.bf16.mxu0 0
  %3950 = vmatpush1.bf16.msra.mxu0 0
  %3951 = vmatprep.subr.bf16.mxu0 0
  %3952 = vmatpush1.bf16.msra.mxu0 0
  %3953 = vmatprep.subr.bf16.mxu0 0
  %3954 = vmatpush1.bf16.msra.mxu0 0
  %3955 = vmatprep.subr.bf16.mxu0 0
  %3956 = vmatpush1.bf16.msra.mxu0 0
  %3957 = vmatprep.subr.bf16.mxu0 0
  %3958 = vmatpush1.bf16.msra.mxu0 0
  %3959 = vmatprep.subr.bf16.mxu0 0
  %3960 = vmatpush1.bf16.msra.mxu0 0
  %3961 = vmatprep.subr.bf16.mxu0 0
  %3962 = vmatpush1.bf16.msra.mxu0 0
  %3963 = vmatprep.subr.bf16.mxu0 0
  %3964 = vmatpush1.bf16.msra.mxu0 0
  %3965 = vmatprep.subr.bf16.mxu0 0
  %3966 = vmatpush1.bf16.msra.mxu0 0
  %3967 = vmatprep.subr.bf16.mxu0 0
  %3968 = vmatpush1.bf16.msra.mxu0 0
  %3969 = vmatprep.mubr.bf16.mxu0 0
  %3970 = vmatmul.mubr.bf16.gmra.mrb[0].mxu0 %v3880
  %v3971 = vpop.f32.mrb[0].mxu0
  %v3972 = vadd.f32 0.0, %v3971
  %v3973 = vpop.f32.mrb[0].mxu0
  %v3974 = vadd.f32 0.0, %v3973
  %v3975 = vpop.f32.mrb[0].mxu0
  %v3976 = vadd.f32 0.0, %v3975
  %v3977 = vpop.f32.mrb[0].mxu0
  %v3978 = vadd.f32 0.0, %v3977
  %3979 = vdwg.mxu0
  %v3980 = vadd.f32 %v3866, %v3929
  %v3981 = vadd.f32 %v3867, %v3931
  %v3982 = vadd.f32 %v3868, %v3972
  %v3983 = vadd.f32 %v3869, %v3974
  %v3984 = vadd.f32 %v3870, %v3933
  %v3985 = vadd.f32 %v3871, %v3935
  %v3986 = vadd.f32 %v3872, %v3976
  %v3987 = vadd.f32 %v3873, %v3978
  %v3990 = vunpack.c.l.b16 %v2734
  %v3991 = vunpack.c.l.b16 %v2735
  %v3992 = vpack.c.b16 %v3991, %v3990
  %v3994 = vsel %vm2753, %v3992, 0
  %v3997 = vsel %vm2757, %v2692, 0
  %v4000 = vsel %vm2757, %v2693, 0
  %v4003 = vsel %vm2757, %v2694, 0
  %v4006 = vsel %vm2757, %v2695, 0
  %4008 = vmatprep.subr.bf16.mxu0 %v4000
  %4009 = vmatpush1.bf16.msra.mxu0 %v3997
  %4010 = vmatprep.subr.bf16.mxu0 0
  %4011 = vmatpush1.bf16.msra.mxu0 0
  %4012 = vmatprep.subr.bf16.mxu0 0
  %4013 = vmatpush1.bf16.msra.mxu0 0
  %4014 = vmatprep.subr.bf16.mxu0 0
  %4015 = vmatpush1.bf16.msra.mxu0 0
  %4016 = vmatprep.subr.bf16.mxu0 0
  %4017 = vmatpush1.bf16.msra.mxu0 0
  %4018 = vmatprep.subr.bf16.mxu0 0
  %4019 = vmatpush1.bf16.msra.mxu0 0
  %4020 = vmatprep.subr.bf16.mxu0 0
  %4021 = vmatpush1.bf16.msra.mxu0 0
  %4022 = vmatprep.subr.bf16.mxu0 0
  %4023 = vmatpush1.bf16.msra.mxu0 0
  %4024 = vmatprep.subr.bf16.mxu0 0
  %4025 = vmatpush1.bf16.msra.mxu0 0
  %4026 = vmatprep.subr.bf16.mxu0 0
  %4027 = vmatpush1.bf16.msra.mxu0 0
  %4028 = vmatprep.subr.bf16.mxu0 0
  %4029 = vmatpush1.bf16.msra.mxu0 0
  %4030 = vmatprep.subr.bf16.mxu0 0
  %4031 = vmatpush1.bf16.msra.mxu0 0
  %4032 = vmatprep.subr.bf16.mxu0 0
  %4033 = vmatpush1.bf16.msra.mxu0 0
  %4034 = vmatprep.subr.bf16.mxu0 0
  %4035 = vmatpush1.bf16.msra.mxu0 0
  %4036 = vmatprep.subr.bf16.mxu0 0
  %4037 = vmatpush1.bf16.msra.mxu0 0
  %4038 = vmatprep.subr.bf16.mxu0 0
  %4039 = vmatpush1.bf16.msra.mxu0 0
  %4040 = vmatprep.mubr.bf16.mxu0 0
  %4041 = vmatmul.mubr.bf16.gmra.mrb[0].mxu0 %v3994
  %v4042 = vpop.f32.mrb[0].mxu0
  %v4043 = vadd.f32 0.0, %v4042
  %v4044 = vpop.f32.mrb[0].mxu0
  %v4045 = vadd.f32 0.0, %v4044
  %v4046 = vpop.f32.mrb[0].mxu0
  %v4047 = vadd.f32 0.0, %v4046
  %v4048 = vpop.f32.mrb[0].mxu0
  %v4049 = vadd.f32 0.0, %v4048
  %4050 = vdwg.mxu0
  %4051 = vmatprep.subr.bf16.mxu0 %v4006
  %4052 = vmatpush1.bf16.msra.mxu0 %v4003
  %4053 = vmatprep.subr.bf16.mxu0 0
  %4054 = vmatpush1.bf16.msra.mxu0 0
  %4055 = vmatprep.subr.bf16.mxu0 0
  %4056 = vmatpush1.bf16.msra.mxu0 0
  %4057 = vmatprep.subr.bf16.mxu0 0
  %4058 = vmatpush1.bf16.msra.mxu0 0
  %4059 = vmatprep.subr.bf16.mxu0 0
  %4060 = vmatpush1.bf16.msra.mxu0 0
  %4061 = vmatprep.subr.bf16.mxu0 0
  %4062 = vmatpush1.bf16.msra.mxu0 0
  %4063 = vmatprep.subr.bf16.mxu0 0
  %4064 = vmatpush1.bf16.msra.mxu0 0
  %4065 = vmatprep.subr.bf16.mxu0 0
  %4066 = vmatpush1.bf16.msra.mxu0 0
  %4067 = vmatprep.subr.bf16.mxu0 0
  %4068 = vmatpush1.bf16.msra.mxu0 0
  %4069 = vmatprep.subr.bf16.mxu0 0
  %4070 = vmatpush1.bf16.msra.mxu0 0
  %4071 = vmatprep.subr.bf16.mxu0 0
  %4072 = vmatpush1.bf16.msra.mxu0 0
  %4073 = vmatprep.subr.bf16.mxu0 0
  %4074 = vmatpush1.bf16.msra.mxu0 0
  %4075 = vmatprep.subr.bf16.mxu0 0
  %4076 = vmatpush1.bf16.msra.mxu0 0
  %4077 = vmatprep.subr.bf16.mxu0 0
  %4078 = vmatpush1.bf16.msra.mxu0 0
  %4079 = vmatprep.subr.bf16.mxu0 0
  %4080 = vmatpush1.bf16.msra.mxu0 0
  %4081 = vmatprep.subr.bf16.mxu0 0
  %4082 = vmatpush1.bf16.msra.mxu0 0
  %4083 = vmatprep.mubr.bf16.mxu0 0
  %4084 = vmatmul.mubr.bf16.gmra.mrb[0].mxu0 %v3994
  %v4085 = vpop.f32.mrb[0].mxu0
  %v4086 = vadd.f32 0.0, %v4085
  %v4087 = vpop.f32.mrb[0].mxu0
  %v4088 = vadd.f32 0.0, %v4087
  %v4089 = vpop.f32.mrb[0].mxu0
  %v4090 = vadd.f32 0.0, %v4089
  %v4091 = vpop.f32.mrb[0].mxu0
  %v4092 = vadd.f32 0.0, %v4091
  %4093 = vdwg.mxu0
  %v4094 = vadd.f32 %v3980, %v4043
  %v4095 = vadd.f32 %v3981, %v4045
  %v4096 = vadd.f32 %v3982, %v4086
  %v4097 = vadd.f32 %v3983, %v4088
  %v4098 = vadd.f32 %v3984, %v4047
  %v4099 = vadd.f32 %v3985, %v4049
  %v4100 = vadd.f32 %v3986, %v4090
  %v4101 = vadd.f32 %v3987, %v4092
  %v4104 = vunpack.c.l.b16 %v2736
  %v4105 = vunpack.c.l.b16 %v2737
  %v4106 = vpack.c.b16 %v4105, %v4104
  %v4108 = vsel %vm2753, %v4106, 0
  %v4111 = vsel %vm2757, %v2696, 0
  %v4114 = vsel %vm2757, %v2697, 0
  %v4117 = vsel %vm2757, %v2698, 0
  %v4120 = vsel %vm2757, %v2699, 0
  %4122 = vmatprep.subr.bf16.mxu0 %v4114
  %4123 = vmatpush1.bf16.msra.mxu0 %v4111
  %4124 = vmatprep.subr.bf16.mxu0 0
  %4125 = vmatpush1.bf16.msra.mxu0 0
  %4126 = vmatprep.subr.bf16.mxu0 0
  %4127 = vmatpush1.bf16.msra.mxu0 0
  %4128 = vmatprep.subr.bf16.mxu0 0
  %4129 = vmatpush1.bf16.msra.mxu0 0
  %4130 = vmatprep.subr.bf16.mxu0 0
  %4131 = vmatpush1.bf16.msra.mxu0 0
  %4132 = vmatprep.subr.bf16.mxu0 0
  %4133 = vmatpush1.bf16.msra.mxu0 0
  %4134 = vmatprep.subr.bf16.mxu0 0
  %4135 = vmatpush1.bf16.msra.mxu0 0
  %4136 = vmatprep.subr.bf16.mxu0 0
  %4137 = vmatpush1.bf16.msra.mxu0 0
  %4138 = vmatprep.subr.bf16.mxu0 0
  %4139 = vmatpush1.bf16.msra.mxu0 0
  %4140 = vmatprep.subr.bf16.mxu0 0
  %4141 = vmatpush1.bf16.msra.mxu0 0
  %4142 = vmatprep.subr.bf16.mxu0 0
  %4143 = vmatpush1.bf16.msra.mxu0 0
  %4144 = vmatprep.subr.bf16.mxu0 0
  %4145 = vmatpush1.bf16.msra.mxu0 0
  %4146 = vmatprep.subr.bf16.mxu0 0
  %4147 = vmatpush1.bf16.msra.mxu0 0
  %4148 = vmatprep.subr.bf16.mxu0 0
  %4149 = vmatpush1.bf16.msra.mxu0 0
  %4150 = vmatprep.subr.bf16.mxu0 0
  %4151 = vmatpush1.bf16.msra.mxu0 0
  %4152 = vmatprep.subr.bf16.mxu0 0
  %4153 = vmatpush1.bf16.msra.mxu0 0
  %4154 = vmatprep.mubr.bf16.mxu0 0
  %4155 = vmatmul.mubr.bf16.gmra.mrb[0].mxu0 %v4108
  %v4156 = vpop.f32.mrb[0].mxu0
  %v4157 = vadd.f32 0.0, %v4156
  %v4158 = vpop.f32.mrb[0].mxu0
  %v4159 = vadd.f32 0.0, %v4158
  %v4160 = vpop.f32.mrb[0].mxu0
  %v4161 = vadd.f32 0.0, %v4160
  %v4162 = vpop.f32.mrb[0].mxu0
  %v4163 = vadd.f32 0.0, %v4162
  %4164 = vdwg.mxu0
  %4165 = vmatprep.subr.bf16.mxu0 %v4120
  %4166 = vmatpush1.bf16.msra.mxu0 %v4117
  %4167 = vmatprep.subr.bf16.mxu0 0
  %4168 = vmatpush1.bf16.msra.mxu0 0
  %4169 = vmatprep.subr.bf16.mxu0 0
  %4170 = vmatpush1.bf16.msra.mxu0 0
  %4171 = vmatprep.subr.bf16.mxu0 0
  %4172 = vmatpush1.bf16.msra.mxu0 0
  %4173 = vmatprep.subr.bf16.mxu0 0
  %4174 = vmatpush1.bf16.msra.mxu0 0
  %4175 = vmatprep.subr.bf16.mxu0 0
  %4176 = vmatpush1.bf16.msra.mxu0 0
  %4177 = vmatprep.subr.bf16.mxu0 0
  %4178 = vmatpush1.bf16.msra.mxu0 0
  %4179 = vmatprep.subr.bf16.mxu0 0
  %4180 = vmatpush1.bf16.msra.mxu0 0
  %4181 = vmatprep.subr.bf16.mxu0 0
  %4182 = vmatpush1.bf16.msra.mxu0 0
  %4183 = vmatprep.subr.bf16.mxu0 0
  %4184 = vmatpush1.bf16.msra.mxu0 0
  %4185 = vmatprep.subr.bf16.mxu0 0
  %4186 = vmatpush1.bf16.msra.mxu0 0
  %4187 = vmatprep.subr.bf16.mxu0 0
  %4188 = vmatpush1.bf16.msra.mxu0 0
  %4189 = vmatprep.subr.bf16.mxu0 0
  %4190 = vmatpush1.bf16.msra.mxu0 0
  %4191 = vmatprep.subr.bf16.mxu0 0
  %4192 = vmatpush1.bf16.msra.mxu0 0
  %4193 = vmatprep.subr.bf16.mxu0 0
  %4194 = vmatpush1.bf16.msra.mxu0 0
  %4195 = vmatprep.subr.bf16.mxu0 0
  %4196 = vmatpush1.bf16.msra.mxu0 0
  %4197 = vmatprep.mubr.bf16.mxu0 0
  %4198 = vmatmul.mubr.bf16.gmra.mrb[0].mxu0 %v4108
  %v4199 = vpop.f32.mrb[0].mxu0
  %v4200 = vadd.f32 0.0, %v4199
  %v4201 = vpop.f32.mrb[0].mxu0
  %v4202 = vadd.f32 0.0, %v4201
  %v4203 = vpop.f32.mrb[0].mxu0
  %v4204 = vadd.f32 0.0, %v4203
  %v4205 = vpop.f32.mrb[0].mxu0
  %v4206 = vadd.f32 0.0, %v4205
  %4207 = vdwg.mxu0
  %v4208 = vadd.f32 %v4094, %v4157
  %v4209 = vadd.f32 %v4095, %v4159
  %v4210 = vadd.f32 %v4096, %v4200
  %v4211 = vadd.f32 %v4097, %v4202
  %v4212 = vadd.f32 %v4098, %v4161
  %v4213 = vadd.f32 %v4099, %v4163
  %v4214 = vadd.f32 %v4100, %v4204
  %v4215 = vadd.f32 %v4101, %v4206
  %v4218 = vunpack.c.l.b16 %v2738
  %v4219 = vunpack.c.l.b16 %v2739
  %v4220 = vpack.c.b16 %v4219, %v4218
  %v4222 = vsel %vm2753, %v4220, 0
  %v4225 = vsel %vm2757, %v2700, 0
  %v4228 = vsel %vm2757, %v2701, 0
  %v4231 = vsel %vm2757, %v2702, 0
  %v4234 = vsel %vm2757, %v2703, 0
  %4236 = vmatprep.subr.bf16.mxu0 %v4228
  %4237 = vmatpush1.bf16.msra.mxu0 %v4225
  %4238 = vmatprep.subr.bf16.mxu0 0
  %4239 = vmatpush1.bf16.msra.mxu0 0
  %4240 = vmatprep.subr.bf16.mxu0 0
  %4241 = vmatpush1.bf16.msra.mxu0 0
  %4242 = vmatprep.subr.bf16.mxu0 0
  %4243 = vmatpush1.bf16.msra.mxu0 0
  %4244 = vmatprep.subr.bf16.mxu0 0
  %4245 = vmatpush1.bf16.msra.mxu0 0
  %4246 = vmatprep.subr.bf16.mxu0 0
  %4247 = vmatpush1.bf16.msra.mxu0 0
  %4248 = vmatprep.subr.bf16.mxu0 0
  %4249 = vmatpush1.bf16.msra.mxu0 0
  %4250 = vmatprep.subr.bf16.mxu0 0
  %4251 = vmatpush1.bf16.msra.mxu0 0
  %4252 = vmatprep.subr.bf16.mxu0 0
  %4253 = vmatpush1.bf16.msra.mxu0 0
  %4254 = vmatprep.subr.bf16.mxu0 0
  %4255 = vmatpush1.bf16.msra.mxu0 0
  %4256 = vmatprep.subr.bf16.mxu0 0
  %4257 = vmatpush1.bf16.msra.mxu0 0
  %4258 = vmatprep.subr.bf16.mxu0 0
  %4259 = vmatpush1.bf16.msra.mxu0 0
  %4260 = vmatprep.subr.bf16.mxu0 0
  %4261 = vmatpush1.bf16.msra.mxu0 0
  %4262 = vmatprep.subr.bf16.mxu0 0
  %4263 = vmatpush1.bf16.msra.mxu0 0
  %4264 = vmatprep.subr.bf16.mxu0 0
  %4265 = vmatpush1.bf16.msra.mxu0 0
  %4266 = vmatprep.subr.bf16.mxu0 0
  %4267 = vmatpush1.bf16.msra.mxu0 0
  %4268 = vmatprep.mubr.bf16.mxu0 0
  %4269 = vmatmul.mubr.bf16.gmra.mrb[0].mxu0 %v4222
  %v4270 = vpop.f32.mrb[0].mxu0
  %v4271 = vadd.f32 0.0, %v4270
  %v4272 = vpop.f32.mrb[0].mxu0
  %v4273 = vadd.f32 0.0, %v4272
  %v4274 = vpop.f32.mrb[0].mxu0
  %v4275 = vadd.f32 0.0, %v4274
  %v4276 = vpop.f32.mrb[0].mxu0
  %v4277 = vadd.f32 0.0, %v4276
  %4278 = vdwg.mxu0
  %4279 = vmatprep.subr.bf16.mxu0 %v4234
  %4280 = vmatpush1.bf16.msra.mxu0 %v4231
  %4281 = vmatprep.subr.bf16.mxu0 0
  %4282 = vmatpush1.bf16.msra.mxu0 0
  %4283 = vmatprep.subr.bf16.mxu0 0
  %4284 = vmatpush1.bf16.msra.mxu0 0
  %4285 = vmatprep.subr.bf16.mxu0 0
  %4286 = vmatpush1.bf16.msra.mxu0 0
  %4287 = vmatprep.subr.bf16.mxu0 0
  %4288 = vmatpush1.bf16.msra.mxu0 0
  %4289 = vmatprep.subr.bf16.mxu0 0
  %4290 = vmatpush1.bf16.msra.mxu0 0
  %4291 = vmatprep.subr.bf16.mxu0 0
  %4292 = vmatpush1.bf16.msra.mxu0 0
  %4293 = vmatprep.subr.bf16.mxu0 0
  %4294 = vmatpush1.bf16.msra.mxu0 0
  %4295 = vmatprep.subr.bf16.mxu0 0
  %4296 = vmatpush1.bf16.msra.mxu0 0
  %4297 = vmatprep.subr.bf16.mxu0 0
  %4298 = vmatpush1.bf16.msra.mxu0 0
  %4299 = vmatprep.subr.bf16.mxu0 0
  %4300 = vmatpush1.bf16.msra.mxu0 0
  %4301 = vmatprep.subr.bf16.mxu0 0
  %4302 = vmatpush1.bf16.msra.mxu0 0
  %4303 = vmatprep.subr.bf16.mxu0 0
  %4304 = vmatpush1.bf16.msra.mxu0 0
  %4305 = vmatprep.subr.bf16.mxu0 0
  %4306 = vmatpush1.bf16.msra.mxu0 0
  %4307 = vmatprep.subr.bf16.mxu0 0
  %4308 = vmatpush1.bf16.msra.mxu0 0
  %4309 = vmatprep.subr.bf16.mxu0 0
  %4310 = vmatpush1.bf16.msra.mxu0 0
  %4311 = vmatprep.mubr.bf16.mxu0 0
  %4312 = vmatmul.mubr.bf16.gmra.mrb[0].mxu0 %v4222
  %v4313 = vpop.f32.mrb[0].mxu0
  %v4314 = vadd.f32 0.0, %v4313
  %v4315 = vpop.f32.mrb[0].mxu0
  %v4316 = vadd.f32 0.0, %v4315
  %v4317 = vpop.f32.mrb[0].mxu0
  %v4318 = vadd.f32 0.0, %v4317
  %v4319 = vpop.f32.mrb[0].mxu0
  %v4320 = vadd.f32 0.0, %v4319
  %4321 = vdwg.mxu0
  %v4322 = vadd.f32 %v4208, %v4271
  %v4323 = vadd.f32 %v4209, %v4273
  %v4324 = vadd.f32 %v4210, %v4314
  %v4325 = vadd.f32 %v4211, %v4316
  %v4326 = vadd.f32 %v4212, %v4275
  %v4327 = vadd.f32 %v4213, %v4277
  %v4328 = vadd.f32 %v4214, %v4318
  %v4329 = vadd.f32 %v4215, %v4320
  %v4332 = vunpack.c.l.b16 %v2740
  %v4333 = vunpack.c.l.b16 %v2741
  %v4334 = vpack.c.b16 %v4333, %v4332
  %v4336 = vsel %vm2753, %v4334, 0
  %v4339 = vsel %vm2757, %v2704, 0
  %v4342 = vsel %vm2757, %v2705, 0
  %v4345 = vsel %vm2757, %v2706, 0
  %v4348 = vsel %vm2757, %v2707, 0
  %4350 = vmatprep.subr.bf16.mxu0 %v4342
  %4351 = vmatpush1.bf16.msra.mxu0 %v4339
  %4352 = vmatprep.subr.bf16.mxu0 0
  %4353 = vmatpush1.bf16.msra.mxu0 0
  %4354 = vmatprep.subr.bf16.mxu0 0
  %4355 = vmatpush1.bf16.msra.mxu0 0
  %4356 = vmatprep.subr.bf16.mxu0 0
  %4357 = vmatpush1.bf16.msra.mxu0 0
  %4358 = vmatprep.subr.bf16.mxu0 0
  %4359 = vmatpush1.bf16.msra.mxu0 0
  %4360 = vmatprep.subr.bf16.mxu0 0
  %4361 = vmatpush1.bf16.msra.mxu0 0
  %4362 = vmatprep.subr.bf16.mxu0 0
  %4363 = vmatpush1.bf16.msra.mxu0 0
  %4364 = vmatprep.subr.bf16.mxu0 0
  %4365 = vmatpush1.bf16.msra.mxu0 0
  %4366 = vmatprep.subr.bf16.mxu0 0
  %4367 = vmatpush1.bf16.msra.mxu0 0
  %4368 = vmatprep.subr.bf16.mxu0 0
  %4369 = vmatpush1.bf16.msra.mxu0 0
  %4370 = vmatprep.subr.bf16.mxu0 0
  %4371 = vmatpush1.bf16.msra.mxu0 0
  %4372 = vmatprep.subr.bf16.mxu0 0
  %4373 = vmatpush1.bf16.msra.mxu0 0
  %4374 = vmatprep.subr.bf16.mxu0 0
  %4375 = vmatpush1.bf16.msra.mxu0 0
  %4376 = vmatprep.subr.bf16.mxu0 0
  %4377 = vmatpush1.bf16.msra.mxu0 0
  %4378 = vmatprep.subr.bf16.mxu0 0
  %4379 = vmatpush1.bf16.msra.mxu0 0
  %4380 = vmatprep.subr.bf16.mxu0 0
  %4381 = vmatpush1.bf16.msra.mxu0 0
  %4382 = vmatprep.mubr.bf16.mxu0 0
  %4383 = vmatmul.mubr.bf16.gmra.mrb[0].mxu0 %v4336
  %v4384 = vpop.f32.mrb[0].mxu0
  %v4385 = vadd.f32 0.0, %v4384
  %v4386 = vpop.f32.mrb[0].mxu0
  %v4387 = vadd.f32 0.0, %v4386
  %v4388 = vpop.f32.mrb[0].mxu0
  %v4389 = vadd.f32 0.0, %v4388
  %v4390 = vpop.f32.mrb[0].mxu0
  %v4391 = vadd.f32 0.0, %v4390
  %4392 = vdwg.mxu0
  %4393 = vmatprep.subr.bf16.mxu0 %v4348
  %4394 = vmatpush1.bf16.msra.mxu0 %v4345
  %4395 = vmatprep.subr.bf16.mxu0 0
  %4396 = vmatpush1.bf16.msra.mxu0 0
  %4397 = vmatprep.subr.bf16.mxu0 0
  %4398 = vmatpush1.bf16.msra.mxu0 0
  %4399 = vmatprep.subr.bf16.mxu0 0
  %4400 = vmatpush1.bf16.msra.mxu0 0
  %4401 = vmatprep.subr.bf16.mxu0 0
  %4402 = vmatpush1.bf16.msra.mxu0 0
  %4403 = vmatprep.subr.bf16.mxu0 0
  %4404 = vmatpush1.bf16.msra.mxu0 0
  %4405 = vmatprep.subr.bf16.mxu0 0
  %4406 = vmatpush1.bf16.msra.mxu0 0
  %4407 = vmatprep.subr.bf16.mxu0 0
  %4408 = vmatpush1.bf16.msra.mxu0 0
  %4409 = vmatprep.subr.bf16.mxu0 0
  %4410 = vmatpush1.bf16.msra.mxu0 0
  %4411 = vmatprep.subr.bf16.mxu0 0
  %4412 = vmatpush1.bf16.msra.mxu0 0
  %4413 = vmatprep.subr.bf16.mxu0 0
  %4414 = vmatpush1.bf16.msra.mxu0 0
  %4415 = vmatprep.subr.bf16.mxu0 0
  %4416 = vmatpush1.bf16.msra.mxu0 0
  %4417 = vmatprep.subr.bf16.mxu0 0
  %4418 = vmatpush1.bf16.msra.mxu0 0
  %4419 = vmatprep.subr.bf16.mxu0 0
  %4420 = vmatpush1.bf16.msra.mxu0 0
  %4421 = vmatprep.subr.bf16.mxu0 0
  %4422 = vmatpush1.bf16.msra.mxu0 0
  %4423 = vmatprep.subr.bf16.mxu0 0
  %4424 = vmatpush1.bf16.msra.mxu0 0
  %4425 = vmatprep.mubr.bf16.mxu0 0
  %4426 = vmatmul.mubr.bf16.gmra.mrb[0].mxu0 %v4336
  %v4427 = vpop.f32.mrb[0].mxu0
  %v4428 = vadd.f32 0.0, %v4427
  %v4429 = vpop.f32.mrb[0].mxu0
  %v4430 = vadd.f32 0.0, %v4429
  %v4431 = vpop.f32.mrb[0].mxu0
  %v4432 = vadd.f32 0.0, %v4431
  %v4433 = vpop.f32.mrb[0].mxu0
  %v4434 = vadd.f32 0.0, %v4433
  %4435 = vdwg.mxu0
  %v4436 = vadd.f32 %v4322, %v4385
  %v4437 = vadd.f32 %v4323, %v4387
  %v4438 = vadd.f32 %v4324, %v4428
  %v4439 = vadd.f32 %v4325, %v4430
  %v4440 = vadd.f32 %v4326, %v4389
  %v4441 = vadd.f32 %v4327, %v4391
  %v4442 = vadd.f32 %v4328, %v4432
  %v4443 = vadd.f32 %v4329, %v4434
  %v4446 = vunpack.c.l.b16 %v2742
  %v4447 = vunpack.c.l.b16 %v2743
  %v4448 = vpack.c.b16 %v4447, %v4446
  %v4450 = vsel %vm2753, %v4448, 0
  %v4453 = vsel %vm2757, %v2708, 0
  %v4456 = vsel %vm2757, %v2709, 0
  %v4459 = vsel %vm2757, %v2710, 0
  %v4462 = vsel %vm2757, %v2711, 0
  %4464 = vmatprep.subr.bf16.mxu0 %v4456
  %4465 = vmatpush1.bf16.msra.mxu0 %v4453
  %4466 = vmatprep.subr.bf16.mxu0 0
  %4467 = vmatpush1.bf16.msra.mxu0 0
  %4468 = vmatprep.subr.bf16.mxu0 0
  %4469 = vmatpush1.bf16.msra.mxu0 0
  %4470 = vmatprep.subr.bf16.mxu0 0
  %4471 = vmatpush1.bf16.msra.mxu0 0
  %4472 = vmatprep.subr.bf16.mxu0 0
  %4473 = vmatpush1.bf16.msra.mxu0 0
  %4474 = vmatprep.subr.bf16.mxu0 0
  %4475 = vmatpush1.bf16.msra.mxu0 0
  %4476 = vmatprep.subr.bf16.mxu0 0
  %4477 = vmatpush1.bf16.msra.mxu0 0
  %4478 = vmatprep.subr.bf16.mxu0 0
  %4479 = vmatpush1.bf16.msra.mxu0 0
  %4480 = vmatprep.subr.bf16.mxu0 0
  %4481 = vmatpush1.bf16.msra.mxu0 0
  %4482 = vmatprep.subr.bf16.mxu0 0
  %4483 = vmatpush1.bf16.msra.mxu0 0
  %4484 = vmatprep.subr.bf16.mxu0 0
  %4485 = vmatpush1.bf16.msra.mxu0 0
  %4486 = vmatprep.subr.bf16.mxu0 0
  %4487 = vmatpush1.bf16.msra.mxu0 0
  %4488 = vmatprep.subr.bf16.mxu0 0
  %4489 = vmatpush1.bf16.msra.mxu0 0
  %4490 = vmatprep.subr.bf16.mxu0 0
  %4491 = vmatpush1.bf16.msra.mxu0 0
  %4492 = vmatprep.subr.bf16.mxu0 0
  %4493 = vmatpush1.bf16.msra.mxu0 0
  %4494 = vmatprep.subr.bf16.mxu0 0
  %4495 = vmatpush1.bf16.msra.mxu0 0
  %4496 = vmatprep.mubr.bf16.mxu0 0
  %4497 = vmatmul.mubr.bf16.gmra.mrb[0].mxu0 %v4450
  %v4498 = vpop.f32.mrb[0].mxu0
  %v4499 = vadd.f32 0.0, %v4498
  %v4500 = vpop.f32.mrb[0].mxu0
  %v4501 = vadd.f32 0.0, %v4500
  %v4502 = vpop.f32.mrb[0].mxu0
  %v4503 = vadd.f32 0.0, %v4502
  %v4504 = vpop.f32.mrb[0].mxu0
  %v4505 = vadd.f32 0.0, %v4504
  %4506 = vdwg.mxu0
  %4507 = vmatprep.subr.bf16.mxu0 %v4462
  %4508 = vmatpush1.bf16.msra.mxu0 %v4459
  %4509 = vmatprep.subr.bf16.mxu0 0
  %4510 = vmatpush1.bf16.msra.mxu0 0
  %4511 = vmatprep.subr.bf16.mxu0 0
  %4512 = vmatpush1.bf16.msra.mxu0 0
  %4513 = vmatprep.subr.bf16.mxu0 0
  %4514 = vmatpush1.bf16.msra.mxu0 0
  %4515 = vmatprep.subr.bf16.mxu0 0
  %4516 = vmatpush1.bf16.msra.mxu0 0
  %4517 = vmatprep.subr.bf16.mxu0 0
  %4518 = vmatpush1.bf16.msra.mxu0 0
  %4519 = vmatprep.subr.bf16.mxu0 0
  %4520 = vmatpush1.bf16.msra.mxu0 0
  %4521 = vmatprep.subr.bf16.mxu0 0
  %4522 = vmatpush1.bf16.msra.mxu0 0
  %4523 = vmatprep.subr.bf16.mxu0 0
  %4524 = vmatpush1.bf16.msra.mxu0 0
  %4525 = vmatprep.subr.bf16.mxu0 0
  %4526 = vmatpush1.bf16.msra.mxu0 0
  %4527 = vmatprep.subr.bf16.mxu0 0
  %4528 = vmatpush1.bf16.msra.mxu0 0
  %4529 = vmatprep.subr.bf16.mxu0 0
  %4530 = vmatpush1.bf16.msra.mxu0 0
  %4531 = vmatprep.subr.bf16.mxu0 0
  %4532 = vmatpush1.bf16.msra.mxu0 0
  %4533 = vmatprep.subr.bf16.mxu0 0
  %4534 = vmatpush1.bf16.msra.mxu0 0
  %4535 = vmatprep.subr.bf16.mxu0 0
  %4536 = vmatpush1.bf16.msra.mxu0 0
  %4537 = vmatprep.subr.bf16.mxu0 0
  %4538 = vmatpush1.bf16.msra.mxu0 0
  %4539 = vmatprep.mubr.bf16.mxu0 0
  %4540 = vmatmul.mubr.bf16.gmra.mrb[0].mxu0 %v4450
  %v4541 = vpop.f32.mrb[0].mxu0
  %v4542 = vadd.f32 0.0, %v4541
  %v4543 = vpop.f32.mrb[0].mxu0
  %v4544 = vadd.f32 0.0, %v4543
  %v4545 = vpop.f32.mrb[0].mxu0
  %v4546 = vadd.f32 0.0, %v4545
  %v4547 = vpop.f32.mrb[0].mxu0
  %v4548 = vadd.f32 0.0, %v4547
  %4549 = vdwg.mxu0
  %v4550 = vadd.f32 %v4436, %v4499
  %v4551 = vadd.f32 %v4437, %v4501
  %v4552 = vadd.f32 %v4438, %v4542
  %v4553 = vadd.f32 %v4439, %v4544
  %v4554 = vadd.f32 %v4440, %v4503
  %v4555 = vadd.f32 %v4441, %v4505
  %v4556 = vadd.f32 %v4442, %v4546
  %v4557 = vadd.f32 %v4443, %v4548
  %v4558 = vadd.f32 %v4550, %v4551
  %v4559 = vadd.f32 %v4558, %v4552
  %v4560 = vadd.f32 %v4559, %v4553
  %4561 = vadd.xlane.f32.xlu0 %v4560
  %v4562 = vpop.xlane.xlu0 %4561
  %v4563 = vadd.f32 %v4554, %v4555
  %v4564 = vadd.f32 %v4563, %v4556
  %v4565 = vadd.f32 %v4564, %v4557
  %4566 = vadd.xlane.f32.xlu0 %v4565
  %v4567 = vpop.xlane.xlu0 %4566
  %v4568 = vrcp.pop 512.0
  %v4569 = vmul.f32 %v4562, %v4568
  %v4570 = vmul.f32 %v4567, %v4568
  %v4571 = vmul.f32 %v4550, %v4550
  %v4572 = vmul.f32 %v4551, %v4551
  %v4573 = vmul.f32 %v4552, %v4552
  %v4574 = vmul.f32 %v4553, %v4553
  %v4575 = vmul.f32 %v4554, %v4554
  %v4576 = vmul.f32 %v4555, %v4555
  %v4577 = vmul.f32 %v4556, %v4556
  %v4578 = vmul.f32 %v4557, %v4557
  %v4579 = vadd.f32 %v4571, %v4572
  %v4580 = vadd.f32 %v4579, %v4573
  %v4581 = vadd.f32 %v4580, %v4574
  %4582 = vadd.xlane.f32.xlu0 %v4581
  %v4583 = vpop.xlane.xlu0 %4582
  %v4584 = vadd.f32 %v4575, %v4576
  %v4585 = vadd.f32 %v4584, %v4577
  %v4586 = vadd.f32 %v4585, %v4578
  %4587 = vadd.xlane.f32.xlu0 %v4586
  %v4588 = vpop.xlane.xlu0 %4587
  %v4589 = vmul.f32 %v4583, %v4568
  %v4590 = vmul.f32 %v4588, %v4568
  %v4591 = vmul.f32 %v4569, %v4569
  %v4592 = vmul.f32 %v4570, %v4570
  %v4593 = vsub.f32 %v4589, %v4591
  %v4594 = vsub.f32 %v4590, %v4592
  %v4595 = vsub.f32 %v4550, %v4569
  %v4596 = vsub.f32 %v4551, %v4569
  %v4597 = vsub.f32 %v4552, %v4569
  %v4598 = vsub.f32 %v4553, %v4569
  %v4599 = vsub.f32 %v4554, %v4570
  %v4600 = vsub.f32 %v4555, %v4570
  %v4601 = vsub.f32 %v4556, %v4570
  %v4602 = vsub.f32 %v4557, %v4570
  %v4603 = vadd.f32 %v4593, 1e-05
  %v4604 = vadd.f32 %v4594, 1e-05
  %v4605 = vrsqrt.pop %v4603
  %v4606 = vrsqrt.pop %v4604
  %v4607 = vmul.f32 %v2744, %v4605
  %v4608 = vmul.f32 %v2745, %v4606
  %4610 = vset.pattern.permute.xlu0 0
  %4611 = vperm.xlu0 %4610, %v4607
  %v4612 = vpop.permute.xlu0 %4611
  %4615 = vset.pattern.permute.xlu0 0
  %4616 = vperm.xlu0 %4615, %v4608
  %v4617 = vpop.permute.xlu0 %4616
  %v4619 = vmul.f32 %v4595, %v4612
  %v4620 = vmul.f32 %v4596, %v4612
  %v4621 = vmul.f32 %v4597, %v4612
  %v4622 = vmul.f32 %v4598, %v4612
  %v4623 = vmul.f32 %v4599, %v4617
  %v4624 = vmul.f32 %v4600, %v4617
  %v4625 = vmul.f32 %v4601, %v4617
  %v4626 = vmul.f32 %v4602, %v4617
  %4628 = vset.pattern.permute.xlu0 0
  %4629 = vperm.xlu0 %4628, %v2746
  %v4630 = vpop.permute.xlu0 %4629
  %4633 = vset.pattern.permute.xlu0 0
  %4634 = vperm.xlu0 %4633, %v2747
  %v4635 = vpop.permute.xlu0 %4634
  %v4637 = vadd.f32 %v4619, %v4630
  %v4638 = vadd.f32 %v4620, %v4630
  %v4639 = vadd.f32 %v4621, %v4630
  %v4640 = vadd.f32 %v4622, %v4630
  %v4641 = vadd.f32 %v4623, %v4635
  %v4642 = vadd.f32 %v4624, %v4635
  %v4643 = vadd.f32 %v4625, %v4635
  %v4644 = vadd.f32 %v4626, %v4635
  %v4645 = vmul.f32 %v4637, 0.2
  %v4646 = vmul.f32 %v4638, 0.2
  %v4647 = vmul.f32 %v4639, 0.2
  %v4648 = vmul.f32 %v4640, 0.2
  %v4649 = vmul.f32 %v4641, 0.2
  %v4650 = vmul.f32 %v4642, 0.2
  %v4651 = vmul.f32 %v4643, 0.2
  %v4652 = vmul.f32 %v4644, 0.2
  %v4653 = vmax.f32 %v4637, %v4645
  %v4654 = vmax.f32 %v4638, %v4646
  %v4655 = vmax.f32 %v4639, %v4647
  %v4656 = vmax.f32 %v4640, %v4648
  %v4657 = vmax.f32 %v4641, %v4649
  %v4658 = vmax.f32 %v4642, %v4650
  %v4659 = vmax.f32 %v4643, %v4651
  %v4660 = vmax.f32 %v4644, %v4652
  %v4661 = vpack.c.bf16 %v4657, %v4653
  %v4662 = vpack.c.bf16 %v4658, %v4654
  %v4663 = vpack.c.bf16 %v4659, %v4655
  %v4664 = vpack.c.bf16 %v4660, %v4656
  %v4665 = vld [vmem:[%s5] sm:$0xff]
  %v4666 = vld [vmem:[%s5 + $0x8] sm:$0xff]
  %v4667 = vld [vmem:[%s5 + $0x10] sm:$0xff]
  %v4668 = vld [vmem:[%s5 + $0x18] sm:$0xff]
  %v4669 = vld [vmem:[%s5 + $0x20] sm:$0xff]
  %v4670 = vld [vmem:[%s5 + $0x28] sm:$0xff]
  %v4671 = vld [vmem:[%s5 + $0x30] sm:$0xff]
  %v4672 = vld [vmem:[%s5 + $0x38] sm:$0xff]
  %v4673 = vld [vmem:[%s5 + $0x40] sm:$0xff]
  %v4674 = vld [vmem:[%s5 + $0x48] sm:$0xff]
  %v4675 = vld [vmem:[%s5 + $0x50] sm:$0xff]
  %v4676 = vld [vmem:[%s5 + $0x58] sm:$0xff]
  %v4677 = vld [vmem:[%s5 + $0x60] sm:$0xff]
  %v4678 = vld [vmem:[%s5 + $0x68] sm:$0xff]
  %v4679 = vld [vmem:[%s5 + $0x70] sm:$0xff]
  %v4680 = vld [vmem:[%s5 + $0x78] sm:$0xff]
  %v4681 = vld [vmem:[%s5 + $0x80] sm:$0xff]
  %v4682 = vld [vmem:[%s5 + $0x88] sm:$0xff]
  %v4683 = vld [vmem:[%s5 + $0x90] sm:$0xff]
  %v4684 = vld [vmem:[%s5 + $0x98] sm:$0xff]
  %v4685 = vld [vmem:[%s5 + $0xa0] sm:$0xff]
  %v4686 = vld [vmem:[%s5 + $0xa8] sm:$0xff]
  %v4687 = vld [vmem:[%s5 + $0xb0] sm:$0xff]
  %v4688 = vld [vmem:[%s5 + $0xb8] sm:$0xff]
  %v4689 = vld [vmem:[%s5 + $0xc0] sm:$0xff]
  %v4690 = vld [vmem:[%s5 + $0xc8] sm:$0xff]
  %v4691 = vld [vmem:[%s5 + $0xd0] sm:$0xff]
  %v4692 = vld [vmem:[%s5 + $0xd8] sm:$0xff]
  %v4693 = vld [vmem:[%s5 + $0xe0] sm:$0xff]
  %v4694 = vld [vmem:[%s5 + $0xe8] sm:$0xff]
  %v4695 = vld [vmem:[%s5 + $0xf0] sm:$0xff]
  %v4696 = vld [vmem:[%s5 + $0xf8] sm:$0xff]
  %v4697 = vld [vmem:[%s5 + $0x100] sm:$0xff]
  %v4698 = vld [vmem:[%s5 + $0x108] sm:$0xff]
  %v4699 = vld [vmem:[%s5 + $0x110] sm:$0xff]
  %v4700 = vld [vmem:[%s5 + $0x118] sm:$0xff]
  %v4701 = vld [vmem:[%s5 + $0x120] sm:$0xff]
  %v4702 = vld [vmem:[%s5 + $0x128] sm:$0xff]
  %v4703 = vld [vmem:[%s5 + $0x130] sm:$0xff]
  %v4704 = vld [vmem:[%s5 + $0x138] sm:$0xff]
  %v4705 = vld [vmem:[%s5 + $0x140] sm:$0xff]
  %v4706 = vld [vmem:[%s5 + $0x148] sm:$0xff]
  %v4707 = vld [vmem:[%s5 + $0x150] sm:$0xff]
  %v4708 = vld [vmem:[%s5 + $0x158] sm:$0xff]
  %v4709 = vld [vmem:[%s5 + $0x160] sm:$0xff]
  %v4710 = vld [vmem:[%s5 + $0x168] sm:$0xff]
  %v4711 = vld [vmem:[%s5 + $0x170] sm:$0xff]
  %v4712 = vld [vmem:[%s5 + $0x178] sm:$0xff]
  %v4713 = vld [vmem:[%s5 + $0x180] sm:$0xff]
  %v4714 = vld [vmem:[%s5 + $0x188] sm:$0xff]
  %v4715 = vld [vmem:[%s5 + $0x190] sm:$0xff]
  %v4716 = vld [vmem:[%s5 + $0x198] sm:$0xff]
  %v4717 = vld [vmem:[%s5 + $0x1a0] sm:$0xff]
  %v4718 = vld [vmem:[%s5 + $0x1a8] sm:$0xff]
  %v4719 = vld [vmem:[%s5 + $0x1b0] sm:$0xff]
  %v4720 = vld [vmem:[%s5 + $0x1b8] sm:$0xff]
  %v4721 = vld [vmem:[%s5 + $0x1c0] sm:$0xff]
  %v4722 = vld [vmem:[%s5 + $0x1c8] sm:$0xff]
  %v4723 = vld [vmem:[%s5 + $0x1d0] sm:$0xff]
  %v4724 = vld [vmem:[%s5 + $0x1d8] sm:$0xff]
  %v4725 = vld [vmem:[%s5 + $0x1e0] sm:$0xff]
  %v4726 = vld [vmem:[%s5 + $0x1e8] sm:$0xff]
  %v4727 = vld [vmem:[%s5 + $0x1f0] sm:$0xff]
  %v4728 = vld [vmem:[%s5 + $0x1f8] sm:$0xff]
  %v4729 = vld [vmem:[%s5 + $0x200] sm:$0xff]
  %v4730 = vld [vmem:[%s5 + $0x208] sm:$0xff]
  %v4731 = vld [vmem:[%s5 + $0x210] sm:$0xff]
  %v4732 = vld [vmem:[%s5 + $0x218] sm:$0xff]
  %v4733 = vld [vmem:[%s5 + $0x220] sm:$0xff]
  %v4734 = vld [vmem:[%s5 + $0x228] sm:$0xff]
  %v4735 = vld [vmem:[%s5 + $0x230] sm:$0xff]
  %v4736 = vld [vmem:[%s5 + $0x238] sm:$0xff]
  %v4737 = vld [vmem:[%s5 + $0x240] sm:$0xff]
  %v4738 = vld [vmem:[%s5 + $0x248] sm:$0xff]
  %v4739 = vld [vmem:[%s5 + $0x250] sm:$0xff]
  %v4740 = vld [vmem:[%s5 + $0x258] sm:$0xff]
  %v4741 = vld [vmem:[%s5 + $0x260] sm:$0xff]
  %v4742 = vld [vmem:[%s5 + $0x268] sm:$0xff]
  %v4743 = vld [vmem:[%s5 + $0x270] sm:$0xff]
  %v4744 = vld [vmem:[%s5 + $0x278] sm:$0xff]
  %v4745 = vld [vmem:[%s5 + $0x280] sm:$0xff]
  %v4746 = vld [vmem:[%s5 + $0x288] sm:$0xff]
  %v4747 = vld [vmem:[%s5 + $0x290] sm:$0xff]
  %v4748 = vld [vmem:[%s5 + $0x298] sm:$0xff]
  %v4749 = vld [vmem:[%s5 + $0x2a0] sm:$0xff]
  %v4750 = vld [vmem:[%s5 + $0x2a8] sm:$0xff]
  %v4751 = vld [vmem:[%s5 + $0x2b0] sm:$0xff]
  %v4752 = vld [vmem:[%s5 + $0x2b8] sm:$0xff]
  %v4753 = vld [vmem:[%s5 + $0x2c0] sm:$0xff]
  %v4754 = vld [vmem:[%s5 + $0x2c8] sm:$0xff]
  %v4755 = vld [vmem:[%s5 + $0x2d0] sm:$0xff]
  %v4756 = vld [vmem:[%s5 + $0x2d8] sm:$0xff]
  %v4757 = vld [vmem:[%s5 + $0x2e0] sm:$0xff]
  %v4758 = vld [vmem:[%s5 + $0x2e8] sm:$0xff]
  %v4759 = vld [vmem:[%s5 + $0x2f0] sm:$0xff]
  %v4760 = vld [vmem:[%s5 + $0x2f8] sm:$0xff]
  %v4761 = vld [vmem:[%s5 + $0x300] sm:$0xff]
  %v4762 = vld [vmem:[%s5 + $0x308] sm:$0xff]
  %v4763 = vld [vmem:[%s5 + $0x310] sm:$0xff]
  %v4764 = vld [vmem:[%s5 + $0x318] sm:$0xff]
  %v4765 = vld [vmem:[%s5 + $0x320] sm:$0xff]
  %v4766 = vld [vmem:[%s5 + $0x328] sm:$0xff]
  %v4767 = vld [vmem:[%s5 + $0x330] sm:$0xff]
  %v4768 = vld [vmem:[%s5 + $0x338] sm:$0xff]
  %v4769 = vld [vmem:[%s5 + $0x340] sm:$0xff]
  %v4770 = vld [vmem:[%s5 + $0x348] sm:$0xff]
  %v4771 = vld [vmem:[%s5 + $0x350] sm:$0xff]
  %v4772 = vld [vmem:[%s5 + $0x358] sm:$0xff]
  %v4773 = vld [vmem:[%s5 + $0x360] sm:$0xff]
  %v4774 = vld [vmem:[%s5 + $0x368] sm:$0xff]
  %v4775 = vld [vmem:[%s5 + $0x370] sm:$0xff]
  %v4776 = vld [vmem:[%s5 + $0x378] sm:$0xff]
  %v4777 = vld [vmem:[%s5 + $0x380] sm:$0xff]
  %v4778 = vld [vmem:[%s5 + $0x388] sm:$0xff]
  %v4779 = vld [vmem:[%s5 + $0x390] sm:$0xff]
  %v4780 = vld [vmem:[%s5 + $0x398] sm:$0xff]
  %v4781 = vld [vmem:[%s5 + $0x3a0] sm:$0xff]
  %v4782 = vld [vmem:[%s5 + $0x3a8] sm:$0xff]
  %v4783 = vld [vmem:[%s5 + $0x3b0] sm:$0xff]
  %v4784 = vld [vmem:[%s5 + $0x3b8] sm:$0xff]
  %v4785 = vld [vmem:[%s5 + $0x3c0] sm:$0xff]
  %v4786 = vld [vmem:[%s5 + $0x3c8] sm:$0xff]
  %v4787 = vld [vmem:[%s5 + $0x3d0] sm:$0xff]
  %v4788 = vld [vmem:[%s5 + $0x3d8] sm:$0xff]
  %v4789 = vld [vmem:[%s5 + $0x3e0] sm:$0xff]
  %v4790 = vld [vmem:[%s5 + $0x3e8] sm:$0xff]
  %v4791 = vld [vmem:[%s5 + $0x3f0] sm:$0xff]
  %v4792 = vld [vmem:[%s5 + $0x3f8] sm:$0xff]
  %v4793 = vld [vmem:[%s5 + $0x400] sm:$0xff]
  %v4794 = vld [vmem:[%s5 + $0x408] sm:$0xff]
  %v4795 = vld [vmem:[%s5 + $0x410] sm:$0xff]
  %v4796 = vld [vmem:[%s5 + $0x418] sm:$0xff]
  %v4797 = vld [vmem:[%s5 + $0x420] sm:$0xff]
  %v4798 = vld [vmem:[%s5 + $0x428] sm:$0xff]
  %v4799 = vld [vmem:[%s5 + $0x430] sm:$0xff]
  %v4800 = vld [vmem:[%s5 + $0x438] sm:$0xff]
  %v4801 = vld [vmem:[%s5 + $0x440] sm:$0xff]
  %v4802 = vld [vmem:[%s5 + $0x448] sm:$0xff]
  %v4803 = vld [vmem:[%s5 + $0x450] sm:$0xff]
  %v4804 = vld [vmem:[%s5 + $0x458] sm:$0xff]
  %v4805 = vld [vmem:[%s5 + $0x460] sm:$0xff]
  %v4806 = vld [vmem:[%s5 + $0x468] sm:$0xff]
  %v4807 = vld [vmem:[%s5 + $0x470] sm:$0xff]
  %v4808 = vld [vmem:[%s5 + $0x478] sm:$0xff]
  %v4809 = vld [vmem:[%s5 + $0x480] sm:$0xff]
  %v4810 = vld [vmem:[%s5 + $0x488] sm:$0xff]
  %v4811 = vld [vmem:[%s5 + $0x490] sm:$0xff]
  %v4812 = vld [vmem:[%s5 + $0x498] sm:$0xff]
  %v4813 = vld [vmem:[%s5 + $0x4a0] sm:$0xff]
  %v4814 = vld [vmem:[%s5 + $0x4a8] sm:$0xff]
  %v4815 = vld [vmem:[%s5 + $0x4b0] sm:$0xff]
  %v4816 = vld [vmem:[%s5 + $0x4b8] sm:$0xff]
  %v4817 = vld [vmem:[%s5 + $0x4c0] sm:$0xff]
  %v4818 = vld [vmem:[%s5 + $0x4c8] sm:$0xff]
  %v4819 = vld [vmem:[%s5 + $0x4d0] sm:$0xff]
  %v4820 = vld [vmem:[%s5 + $0x4d8] sm:$0xff]
  %v4821 = vld [vmem:[%s5 + $0x4e0] sm:$0xff]
  %v4822 = vld [vmem:[%s5 + $0x4e8] sm:$0xff]
  %v4823 = vld [vmem:[%s5 + $0x4f0] sm:$0xff]
  %v4824 = vld [vmem:[%s5 + $0x4f8] sm:$0xff]
  %v4825 = vld [vmem:[%s5 + $0x500] sm:$0xff]
  %v4826 = vld [vmem:[%s5 + $0x508] sm:$0xff]
  %v4827 = vld [vmem:[%s5 + $0x510] sm:$0xff]
  %v4828 = vld [vmem:[%s5 + $0x518] sm:$0xff]
  %v4829 = vld [vmem:[%s5 + $0x520] sm:$0xff]
  %v4830 = vld [vmem:[%s5 + $0x528] sm:$0xff]
  %v4831 = vld [vmem:[%s5 + $0x530] sm:$0xff]
  %v4832 = vld [vmem:[%s5 + $0x538] sm:$0xff]
  %v4833 = vld [vmem:[%s5 + $0x540] sm:$0xff]
  %v4834 = vld [vmem:[%s5 + $0x548] sm:$0xff]
  %v4835 = vld [vmem:[%s5 + $0x550] sm:$0xff]
  %v4836 = vld [vmem:[%s5 + $0x558] sm:$0xff]
  %v4837 = vld [vmem:[%s5 + $0x560] sm:$0xff]
  %v4838 = vld [vmem:[%s5 + $0x568] sm:$0xff]
  %v4839 = vld [vmem:[%s5 + $0x570] sm:$0xff]
  %v4840 = vld [vmem:[%s5 + $0x578] sm:$0xff]
  %v4841 = vld [vmem:[%s5 + $0x580] sm:$0xff]
  %v4842 = vld [vmem:[%s5 + $0x588] sm:$0xff]
  %v4843 = vld [vmem:[%s5 + $0x590] sm:$0xff]
  %v4844 = vld [vmem:[%s5 + $0x598] sm:$0xff]
  %v4845 = vld [vmem:[%s5 + $0x5a0] sm:$0xff]
  %v4846 = vld [vmem:[%s5 + $0x5a8] sm:$0xff]
  %v4847 = vld [vmem:[%s5 + $0x5b0] sm:$0xff]
  %v4848 = vld [vmem:[%s5 + $0x5b8] sm:$0xff]
  %v4849 = vld [vmem:[%s5 + $0x5c0] sm:$0xff]
  %v4850 = vld [vmem:[%s5 + $0x5c8] sm:$0xff]
  %v4851 = vld [vmem:[%s5 + $0x5d0] sm:$0xff]
  %v4852 = vld [vmem:[%s5 + $0x5d8] sm:$0xff]
  %v4853 = vld [vmem:[%s5 + $0x5e0] sm:$0xff]
  %v4854 = vld [vmem:[%s5 + $0x5e8] sm:$0xff]
  %v4855 = vld [vmem:[%s5 + $0x5f0] sm:$0xff]
  %v4856 = vld [vmem:[%s5 + $0x5f8] sm:$0xff]
  %v4857 = vld [vmem:[%s5 + $0x600] sm:$0xff]
  %v4858 = vld [vmem:[%s5 + $0x608] sm:$0xff]
  %v4859 = vld [vmem:[%s5 + $0x610] sm:$0xff]
  %v4860 = vld [vmem:[%s5 + $0x618] sm:$0xff]
  %v4861 = vld [vmem:[%s5 + $0x620] sm:$0xff]
  %v4862 = vld [vmem:[%s5 + $0x628] sm:$0xff]
  %v4863 = vld [vmem:[%s5 + $0x630] sm:$0xff]
  %v4864 = vld [vmem:[%s5 + $0x638] sm:$0xff]
  %v4865 = vld [vmem:[%s5 + $0x640] sm:$0xff]
  %v4866 = vld [vmem:[%s5 + $0x648] sm:$0xff]
  %v4867 = vld [vmem:[%s5 + $0x650] sm:$0xff]
  %v4868 = vld [vmem:[%s5 + $0x658] sm:$0xff]
  %v4869 = vld [vmem:[%s5 + $0x660] sm:$0xff]
  %v4870 = vld [vmem:[%s5 + $0x668] sm:$0xff]
  %v4871 = vld [vmem:[%s5 + $0x670] sm:$0xff]
  %v4872 = vld [vmem:[%s5 + $0x678] sm:$0xff]
  %v4873 = vld [vmem:[%s5 + $0x680] sm:$0xff]
  %v4874 = vld [vmem:[%s5 + $0x688] sm:$0xff]
  %v4875 = vld [vmem:[%s5 + $0x690] sm:$0xff]
  %v4876 = vld [vmem:[%s5 + $0x698] sm:$0xff]
  %v4877 = vld [vmem:[%s5 + $0x6a0] sm:$0xff]
  %v4878 = vld [vmem:[%s5 + $0x6a8] sm:$0xff]
  %v4879 = vld [vmem:[%s5 + $0x6b0] sm:$0xff]
  %v4880 = vld [vmem:[%s5 + $0x6b8] sm:$0xff]
  %v4881 = vld [vmem:[%s5 + $0x6c0] sm:$0xff]
  %v4882 = vld [vmem:[%s5 + $0x6c8] sm:$0xff]
  %v4883 = vld [vmem:[%s5 + $0x6d0] sm:$0xff]
  %v4884 = vld [vmem:[%s5 + $0x6d8] sm:$0xff]
  %v4885 = vld [vmem:[%s5 + $0x6e0] sm:$0xff]
  %v4886 = vld [vmem:[%s5 + $0x6e8] sm:$0xff]
  %v4887 = vld [vmem:[%s5 + $0x6f0] sm:$0xff]
  %v4888 = vld [vmem:[%s5 + $0x6f8] sm:$0xff]
  %v4889 = vld [vmem:[%s5 + $0x700] sm:$0xff]
  %v4890 = vld [vmem:[%s5 + $0x708] sm:$0xff]
  %v4891 = vld [vmem:[%s5 + $0x710] sm:$0xff]
  %v4892 = vld [vmem:[%s5 + $0x718] sm:$0xff]
  %v4893 = vld [vmem:[%s5 + $0x720] sm:$0xff]
  %v4894 = vld [vmem:[%s5 + $0x728] sm:$0xff]
  %v4895 = vld [vmem:[%s5 + $0x730] sm:$0xff]
  %v4896 = vld [vmem:[%s5 + $0x738] sm:$0xff]
  %v4897 = vld [vmem:[%s5 + $0x740] sm:$0xff]
  %v4898 = vld [vmem:[%s5 + $0x748] sm:$0xff]
  %v4899 = vld [vmem:[%s5 + $0x750] sm:$0xff]
  %v4900 = vld [vmem:[%s5 + $0x758] sm:$0xff]
  %v4901 = vld [vmem:[%s5 + $0x760] sm:$0xff]
  %v4902 = vld [vmem:[%s5 + $0x768] sm:$0xff]
  %v4903 = vld [vmem:[%s5 + $0x770] sm:$0xff]
  %v4904 = vld [vmem:[%s5 + $0x778] sm:$0xff]
  %v4905 = vld [vmem:[%s5 + $0x780] sm:$0xff]
  %v4906 = vld [vmem:[%s5 + $0x788] sm:$0xff]
  %v4907 = vld [vmem:[%s5 + $0x790] sm:$0xff]
  %v4908 = vld [vmem:[%s5 + $0x798] sm:$0xff]
  %v4909 = vld [vmem:[%s5 + $0x7a0] sm:$0xff]
  %v4910 = vld [vmem:[%s5 + $0x7a8] sm:$0xff]
  %v4911 = vld [vmem:[%s5 + $0x7b0] sm:$0xff]
  %v4912 = vld [vmem:[%s5 + $0x7b8] sm:$0xff]
  %v4913 = vld [vmem:[%s5 + $0x7c0] sm:$0xff]
  %v4914 = vld [vmem:[%s5 + $0x7c8] sm:$0xff]
  %v4915 = vld [vmem:[%s5 + $0x7d0] sm:$0xff]
  %v4916 = vld [vmem:[%s5 + $0x7d8] sm:$0xff]
  %v4917 = vld [vmem:[%s5 + $0x7e0] sm:$0xff]
  %v4918 = vld [vmem:[%s5 + $0x7e8] sm:$0xff]
  %v4919 = vld [vmem:[%s5 + $0x7f0] sm:$0xff]
  %v4920 = vld [vmem:[%s5 + $0x7f8] sm:$0xff]
  %v4921 = vld [vmem:[%s5 + $0x800] sm:$0xff]
  %v4922 = vld [vmem:[%s5 + $0x808] sm:$0xff]
  %v4923 = vld [vmem:[%s5 + $0x810] sm:$0xff]
  %v4924 = vld [vmem:[%s5 + $0x818] sm:$0xff]
  %v4925 = vld [vmem:[%s5 + $0x820] sm:$0xff]
  %v4926 = vld [vmem:[%s5 + $0x828] sm:$0xff]
  %v4927 = vld [vmem:[%s5 + $0x830] sm:$0xff]
  %v4928 = vld [vmem:[%s5 + $0x838] sm:$0xff]
  %v4929 = vld [vmem:[%s5 + $0x840] sm:$0xff]
  %v4930 = vld [vmem:[%s5 + $0x848] sm:$0xff]
  %v4931 = vld [vmem:[%s5 + $0x850] sm:$0xff]
  %v4932 = vld [vmem:[%s5 + $0x858] sm:$0xff]
  %v4933 = vld [vmem:[%s5 + $0x860] sm:$0xff]
  %v4934 = vld [vmem:[%s5 + $0x868] sm:$0xff]
  %v4935 = vld [vmem:[%s5 + $0x870] sm:$0xff]
  %v4936 = vld [vmem:[%s5 + $0x878] sm:$0xff]
  %v4937 = vld [vmem:[%s5 + $0x880] sm:$0xff]
  %v4938 = vld [vmem:[%s5 + $0x888] sm:$0xff]
  %v4939 = vld [vmem:[%s5 + $0x890] sm:$0xff]
  %v4940 = vld [vmem:[%s5 + $0x898] sm:$0xff]
  %v4941 = vld [vmem:[%s5 + $0x8a0] sm:$0xff]
  %v4942 = vld [vmem:[%s5 + $0x8a8] sm:$0xff]
  %v4943 = vld [vmem:[%s5 + $0x8b0] sm:$0xff]
  %v4944 = vld [vmem:[%s5 + $0x8b8] sm:$0xff]
  %v4945 = vld [vmem:[%s5 + $0x8c0] sm:$0xff]
  %v4946 = vld [vmem:[%s5 + $0x8c8] sm:$0xff]
  %v4947 = vld [vmem:[%s5 + $0x8d0] sm:$0xff]
  %v4948 = vld [vmem:[%s5 + $0x8d8] sm:$0xff]
  %v4949 = vld [vmem:[%s5 + $0x8e0] sm:$0xff]
  %v4950 = vld [vmem:[%s5 + $0x8e8] sm:$0xff]
  %v4951 = vld [vmem:[%s5 + $0x8f0] sm:$0xff]
  %v4952 = vld [vmem:[%s5 + $0x8f8] sm:$0xff]
  %v4953 = vld [vmem:[%s5 + $0x900] sm:$0xff]
  %v4954 = vld [vmem:[%s5 + $0x908] sm:$0xff]
  %v4955 = vld [vmem:[%s5 + $0x910] sm:$0xff]
  %v4956 = vld [vmem:[%s5 + $0x918] sm:$0xff]
  %v4957 = vld [vmem:[%s5 + $0x920] sm:$0xff]
  %v4958 = vld [vmem:[%s5 + $0x928] sm:$0xff]
  %v4959 = vld [vmem:[%s5 + $0x930] sm:$0xff]
  %v4960 = vld [vmem:[%s5 + $0x938] sm:$0xff]
  %v4961 = vld [vmem:[%s5 + $0x940] sm:$0xff]
  %v4962 = vld [vmem:[%s5 + $0x948] sm:$0xff]
  %v4963 = vld [vmem:[%s5 + $0x950] sm:$0xff]
  %v4964 = vld [vmem:[%s5 + $0x958] sm:$0xff]
  %v4965 = vld [vmem:[%s5 + $0x960] sm:$0xff]
  %v4966 = vld [vmem:[%s5 + $0x968] sm:$0xff]
  %v4967 = vld [vmem:[%s5 + $0x970] sm:$0xff]
  %v4968 = vld [vmem:[%s5 + $0x978] sm:$0xff]
  %v4969 = vld [vmem:[%s5 + $0x980] sm:$0xff]
  %v4970 = vld [vmem:[%s5 + $0x988] sm:$0xff]
  %v4971 = vld [vmem:[%s5 + $0x990] sm:$0xff]
  %v4972 = vld [vmem:[%s5 + $0x998] sm:$0xff]
  %v4973 = vld [vmem:[%s5 + $0x9a0] sm:$0xff]
  %v4974 = vld [vmem:[%s5 + $0x9a8] sm:$0xff]
  %v4975 = vld [vmem:[%s5 + $0x9b0] sm:$0xff]
  %v4976 = vld [vmem:[%s5 + $0x9b8] sm:$0xff]
  %v4977 = vld [vmem:[%s5 + $0x9c0] sm:$0xff]
  %v4978 = vld [vmem:[%s5 + $0x9c8] sm:$0xff]
  %v4979 = vld [vmem:[%s5 + $0x9d0] sm:$0xff]
  %v4980 = vld [vmem:[%s5 + $0x9d8] sm:$0xff]
  %v4981 = vld [vmem:[%s5 + $0x9e0] sm:$0xff]
  %v4982 = vld [vmem:[%s5 + $0x9e8] sm:$0xff]
  %v4983 = vld [vmem:[%s5 + $0x9f0] sm:$0xff]
  %v4984 = vld [vmem:[%s5 + $0x9f8] sm:$0xff]
  %v4985 = vld [vmem:[%s5 + $0xa00] sm:$0xff]
  %v4986 = vld [vmem:[%s5 + $0xa08] sm:$0xff]
  %v4987 = vld [vmem:[%s5 + $0xa10] sm:$0xff]
  %v4988 = vld [vmem:[%s5 + $0xa18] sm:$0xff]
  %v4989 = vld [vmem:[%s5 + $0xa20] sm:$0xff]
  %v4990 = vld [vmem:[%s5 + $0xa28] sm:$0xff]
  %v4991 = vld [vmem:[%s5 + $0xa30] sm:$0xff]
  %v4992 = vld [vmem:[%s5 + $0xa38] sm:$0xff]
  %v4993 = vld [vmem:[%s5 + $0xa40] sm:$0xff]
  %v4994 = vld [vmem:[%s5 + $0xa48] sm:$0xff]
  %v4995 = vld [vmem:[%s5 + $0xa50] sm:$0xff]
  %v4996 = vld [vmem:[%s5 + $0xa58] sm:$0xff]
  %v4997 = vld [vmem:[%s5 + $0xa60] sm:$0xff]
  %v4998 = vld [vmem:[%s5 + $0xa68] sm:$0xff]
  %v4999 = vld [vmem:[%s5 + $0xa70] sm:$0xff]
  %v5000 = vld [vmem:[%s5 + $0xa78] sm:$0xff]
  %v5001 = vld [vmem:[%s5 + $0xa80] sm:$0xff]
  %v5002 = vld [vmem:[%s5 + $0xa88] sm:$0xff]
  %v5003 = vld [vmem:[%s5 + $0xa90] sm:$0xff]
  %v5004 = vld [vmem:[%s5 + $0xa98] sm:$0xff]
  %v5005 = vld [vmem:[%s5 + $0xaa0] sm:$0xff]
  %v5006 = vld [vmem:[%s5 + $0xaa8] sm:$0xff]
  %v5007 = vld [vmem:[%s5 + $0xab0] sm:$0xff]
  %v5008 = vld [vmem:[%s5 + $0xab8] sm:$0xff]
  %v5009 = vld [vmem:[%s5 + $0xac0] sm:$0xff]
  %v5010 = vld [vmem:[%s5 + $0xac8] sm:$0xff]
  %v5011 = vld [vmem:[%s5 + $0xad0] sm:$0xff]
  %v5012 = vld [vmem:[%s5 + $0xad8] sm:$0xff]
  %v5013 = vld [vmem:[%s5 + $0xae0] sm:$0xff]
  %v5014 = vld [vmem:[%s5 + $0xae8] sm:$0xff]
  %v5015 = vld [vmem:[%s5 + $0xaf0] sm:$0xff]
  %v5016 = vld [vmem:[%s5 + $0xaf8] sm:$0xff]
  %v5017 = vld [vmem:[%s5 + $0xb00] sm:$0xff]
  %v5018 = vld [vmem:[%s5 + $0xb08] sm:$0xff]
  %v5019 = vld [vmem:[%s5 + $0xb10] sm:$0xff]
  %v5020 = vld [vmem:[%s5 + $0xb18] sm:$0xff]
  %v5021 = vld [vmem:[%s5 + $0xb20] sm:$0xff]
  %v5022 = vld [vmem:[%s5 + $0xb28] sm:$0xff]
  %v5023 = vld [vmem:[%s5 + $0xb30] sm:$0xff]
  %v5024 = vld [vmem:[%s5 + $0xb38] sm:$0xff]
  %v5025 = vld [vmem:[%s5 + $0xb40] sm:$0xff]
  %v5026 = vld [vmem:[%s5 + $0xb48] sm:$0xff]
  %v5027 = vld [vmem:[%s5 + $0xb50] sm:$0xff]
  %v5028 = vld [vmem:[%s5 + $0xb58] sm:$0xff]
  %v5029 = vld [vmem:[%s5 + $0xb60] sm:$0xff]
  %v5030 = vld [vmem:[%s5 + $0xb68] sm:$0xff]
  %v5031 = vld [vmem:[%s5 + $0xb70] sm:$0xff]
  %v5032 = vld [vmem:[%s5 + $0xb78] sm:$0xff]
  %v5033 = vld [vmem:[%s5 + $0xb80] sm:$0xff]
  %v5034 = vld [vmem:[%s5 + $0xb88] sm:$0xff]
  %v5035 = vld [vmem:[%s5 + $0xb90] sm:$0xff]
  %v5036 = vld [vmem:[%s5 + $0xb98] sm:$0xff]
  %v5037 = vld [vmem:[%s5 + $0xba0] sm:$0xff]
  %v5038 = vld [vmem:[%s5 + $0xba8] sm:$0xff]
  %v5039 = vld [vmem:[%s5 + $0xbb0] sm:$0xff]
  %v5040 = vld [vmem:[%s5 + $0xbb8] sm:$0xff]
  %v5041 = vld [vmem:[%s5 + $0xbc0] sm:$0xff]
  %v5042 = vld [vmem:[%s5 + $0xbc8] sm:$0xff]
  %v5043 = vld [vmem:[%s5 + $0xbd0] sm:$0xff]
  %v5044 = vld [vmem:[%s5 + $0xbd8] sm:$0xff]
  %v5045 = vld [vmem:[%s5 + $0xbe0] sm:$0xff]
  %v5046 = vld [vmem:[%s5 + $0xbe8] sm:$0xff]
  %v5047 = vld [vmem:[%s5 + $0xbf0] sm:$0xff]
  %v5048 = vld [vmem:[%s5 + $0xbf8] sm:$0xff]
  %v5049 = vld [vmem:[%s5 + $0xc00] sm:$0xff]
  %v5050 = vld [vmem:[%s5 + $0xc08] sm:$0xff]
  %v5051 = vld [vmem:[%s5 + $0xc10] sm:$0xff]
  %v5052 = vld [vmem:[%s5 + $0xc18] sm:$0xff]
  %v5053 = vld [vmem:[%s5 + $0xc20] sm:$0xff]
  %v5054 = vld [vmem:[%s5 + $0xc28] sm:$0xff]
  %v5055 = vld [vmem:[%s5 + $0xc30] sm:$0xff]
  %v5056 = vld [vmem:[%s5 + $0xc38] sm:$0xff]
  %v5057 = vld [vmem:[%s5 + $0xc40] sm:$0xff]
  %v5058 = vld [vmem:[%s5 + $0xc48] sm:$0xff]
  %v5059 = vld [vmem:[%s5 + $0xc50] sm:$0xff]
  %v5060 = vld [vmem:[%s5 + $0xc58] sm:$0xff]
  %v5061 = vld [vmem:[%s5 + $0xc60] sm:$0xff]
  %v5062 = vld [vmem:[%s5 + $0xc68] sm:$0xff]
  %v5063 = vld [vmem:[%s5 + $0xc70] sm:$0xff]
  %v5064 = vld [vmem:[%s5 + $0xc78] sm:$0xff]
  %v5065 = vld [vmem:[%s5 + $0xc80] sm:$0xff]
  %v5066 = vld [vmem:[%s5 + $0xc88] sm:$0xff]
  %v5067 = vld [vmem:[%s5 + $0xc90] sm:$0xff]
  %v5068 = vld [vmem:[%s5 + $0xc98] sm:$0xff]
  %v5069 = vld [vmem:[%s5 + $0xca0] sm:$0xff]
  %v5070 = vld [vmem:[%s5 + $0xca8] sm:$0xff]
  %v5071 = vld [vmem:[%s5 + $0xcb0] sm:$0xff]
  %v5072 = vld [vmem:[%s5 + $0xcb8] sm:$0xff]
  %v5073 = vld [vmem:[%s5 + $0xcc0] sm:$0xff]
  %v5074 = vld [vmem:[%s5 + $0xcc8] sm:$0xff]
  %v5075 = vld [vmem:[%s5 + $0xcd0] sm:$0xff]
  %v5076 = vld [vmem:[%s5 + $0xcd8] sm:$0xff]
  %v5077 = vld [vmem:[%s5 + $0xce0] sm:$0xff]
  %v5078 = vld [vmem:[%s5 + $0xce8] sm:$0xff]
  %v5079 = vld [vmem:[%s5 + $0xcf0] sm:$0xff]
  %v5080 = vld [vmem:[%s5 + $0xcf8] sm:$0xff]
  %v5081 = vld [vmem:[%s5 + $0xd00] sm:$0xff]
  %v5082 = vld [vmem:[%s5 + $0xd08] sm:$0xff]
  %v5083 = vld [vmem:[%s5 + $0xd10] sm:$0xff]
  %v5084 = vld [vmem:[%s5 + $0xd18] sm:$0xff]
  %v5085 = vld [vmem:[%s5 + $0xd20] sm:$0xff]
  %v5086 = vld [vmem:[%s5 + $0xd28] sm:$0xff]
  %v5087 = vld [vmem:[%s5 + $0xd30] sm:$0xff]
  %v5088 = vld [vmem:[%s5 + $0xd38] sm:$0xff]
  %v5089 = vld [vmem:[%s5 + $0xd40] sm:$0xff]
  %v5090 = vld [vmem:[%s5 + $0xd48] sm:$0xff]
  %v5091 = vld [vmem:[%s5 + $0xd50] sm:$0xff]
  %v5092 = vld [vmem:[%s5 + $0xd58] sm:$0xff]
  %v5093 = vld [vmem:[%s5 + $0xd60] sm:$0xff]
  %v5094 = vld [vmem:[%s5 + $0xd68] sm:$0xff]
  %v5095 = vld [vmem:[%s5 + $0xd70] sm:$0xff]
  %v5096 = vld [vmem:[%s5 + $0xd78] sm:$0xff]
  %v5097 = vld [vmem:[%s5 + $0xd80] sm:$0xff]
  %v5098 = vld [vmem:[%s5 + $0xd88] sm:$0xff]
  %v5099 = vld [vmem:[%s5 + $0xd90] sm:$0xff]
  %v5100 = vld [vmem:[%s5 + $0xd98] sm:$0xff]
  %v5101 = vld [vmem:[%s5 + $0xda0] sm:$0xff]
  %v5102 = vld [vmem:[%s5 + $0xda8] sm:$0xff]
  %v5103 = vld [vmem:[%s5 + $0xdb0] sm:$0xff]
  %v5104 = vld [vmem:[%s5 + $0xdb8] sm:$0xff]
  %v5105 = vld [vmem:[%s5 + $0xdc0] sm:$0xff]
  %v5106 = vld [vmem:[%s5 + $0xdc8] sm:$0xff]
  %v5107 = vld [vmem:[%s5 + $0xdd0] sm:$0xff]
  %v5108 = vld [vmem:[%s5 + $0xdd8] sm:$0xff]
  %v5109 = vld [vmem:[%s5 + $0xde0] sm:$0xff]
  %v5110 = vld [vmem:[%s5 + $0xde8] sm:$0xff]
  %v5111 = vld [vmem:[%s5 + $0xdf0] sm:$0xff]
  %v5112 = vld [vmem:[%s5 + $0xdf8] sm:$0xff]
  %v5113 = vld [vmem:[%s5 + $0xe00] sm:$0xff]
  %v5114 = vld [vmem:[%s5 + $0xe08] sm:$0xff]
  %v5115 = vld [vmem:[%s5 + $0xe10] sm:$0xff]
  %v5116 = vld [vmem:[%s5 + $0xe18] sm:$0xff]
  %v5117 = vld [vmem:[%s5 + $0xe20] sm:$0xff]
  %v5118 = vld [vmem:[%s5 + $0xe28] sm:$0xff]
  %v5119 = vld [vmem:[%s5 + $0xe30] sm:$0xff]
  %v5120 = vld [vmem:[%s5 + $0xe38] sm:$0xff]
  %v5121 = vld [vmem:[%s5 + $0xe40] sm:$0xff]
  %v5122 = vld [vmem:[%s5 + $0xe48] sm:$0xff]
  %v5123 = vld [vmem:[%s5 + $0xe50] sm:$0xff]
  %v5124 = vld [vmem:[%s5 + $0xe58] sm:$0xff]
  %v5125 = vld [vmem:[%s5 + $0xe60] sm:$0xff]
  %v5126 = vld [vmem:[%s5 + $0xe68] sm:$0xff]
  %v5127 = vld [vmem:[%s5 + $0xe70] sm:$0xff]
  %v5128 = vld [vmem:[%s5 + $0xe78] sm:$0xff]
  %v5129 = vld [vmem:[%s5 + $0xe80] sm:$0xff]
  %v5130 = vld [vmem:[%s5 + $0xe88] sm:$0xff]
  %v5131 = vld [vmem:[%s5 + $0xe90] sm:$0xff]
  %v5132 = vld [vmem:[%s5 + $0xe98] sm:$0xff]
  %v5133 = vld [vmem:[%s5 + $0xea0] sm:$0xff]
  %v5134 = vld [vmem:[%s5 + $0xea8] sm:$0xff]
  %v5135 = vld [vmem:[%s5 + $0xeb0] sm:$0xff]
  %v5136 = vld [vmem:[%s5 + $0xeb8] sm:$0xff]
  %v5137 = vld [vmem:[%s5 + $0xec0] sm:$0xff]
  %v5138 = vld [vmem:[%s5 + $0xec8] sm:$0xff]
  %v5139 = vld [vmem:[%s5 + $0xed0] sm:$0xff]
  %v5140 = vld [vmem:[%s5 + $0xed8] sm:$0xff]
  %v5141 = vld [vmem:[%s5 + $0xee0] sm:$0xff]
  %v5142 = vld [vmem:[%s5 + $0xee8] sm:$0xff]
  %v5143 = vld [vmem:[%s5 + $0xef0] sm:$0xff]
  %v5144 = vld [vmem:[%s5 + $0xef8] sm:$0xff]
  %v5145 = vld [vmem:[%s5 + $0xf00] sm:$0xff]
  %v5146 = vld [vmem:[%s5 + $0xf08] sm:$0xff]
  %v5147 = vld [vmem:[%s5 + $0xf10] sm:$0xff]
  %v5148 = vld [vmem:[%s5 + $0xf18] sm:$0xff]
  %v5149 = vld [vmem:[%s5 + $0xf20] sm:$0xff]
  %v5150 = vld [vmem:[%s5 + $0xf28] sm:$0xff]
  %v5151 = vld [vmem:[%s5 + $0xf30] sm:$0xff]
  %v5152 = vld [vmem:[%s5 + $0xf38] sm:$0xff]
  %v5153 = vld [vmem:[%s5 + $0xf40] sm:$0xff]
  %v5154 = vld [vmem:[%s5 + $0xf48] sm:$0xff]
  %v5155 = vld [vmem:[%s5 + $0xf50] sm:$0xff]
  %v5156 = vld [vmem:[%s5 + $0xf58] sm:$0xff]
  %v5157 = vld [vmem:[%s5 + $0xf60] sm:$0xff]
  %v5158 = vld [vmem:[%s5 + $0xf68] sm:$0xff]
  %v5159 = vld [vmem:[%s5 + $0xf70] sm:$0xff]
  %v5160 = vld [vmem:[%s5 + $0xf78] sm:$0xff]
  %v5161 = vld [vmem:[%s5 + $0xf80] sm:$0xff]
  %v5162 = vld [vmem:[%s5 + $0xf88] sm:$0xff]
  %v5163 = vld [vmem:[%s5 + $0xf90] sm:$0xff]
  %v5164 = vld [vmem:[%s5 + $0xf98] sm:$0xff]
  %v5165 = vld [vmem:[%s5 + $0xfa0] sm:$0xff]
  %v5166 = vld [vmem:[%s5 + $0xfa8] sm:$0xff]
  %v5167 = vld [vmem:[%s5 + $0xfb0] sm:$0xff]
  %v5168 = vld [vmem:[%s5 + $0xfb8] sm:$0xff]
  %v5169 = vld [vmem:[%s5 + $0xfc0] sm:$0xff]
  %v5170 = vld [vmem:[%s5 + $0xfc8] sm:$0xff]
  %v5171 = vld [vmem:[%s5 + $0xfd0] sm:$0xff]
  %v5172 = vld [vmem:[%s5 + $0xfd8] sm:$0xff]
  %v5173 = vld [vmem:[%s5 + $0xfe0] sm:$0xff]
  %v5174 = vld [vmem:[%s5 + $0xfe8] sm:$0xff]
  %v5175 = vld [vmem:[%s5 + $0xff0] sm:$0xff]
  %v5176 = vld [vmem:[%s5 + $0xff8] sm:$0xff]
  %v5689 = vunpack.c.l.b16 %v4665
  %v5690 = vunpack.c.h.b16 %v4665
  %v5691 = vunpack.c.l.b16 %v4666
  %v5692 = vunpack.c.h.b16 %v4666
  %v5693 = vunpack.c.l.b16 %v4667
  %v5694 = vunpack.c.h.b16 %v4667
  %v5695 = vunpack.c.l.b16 %v4668
  %v5696 = vunpack.c.h.b16 %v4668
  %v5697 = vunpack.c.l.b16 %v4669
  %v5698 = vunpack.c.h.b16 %v4669
  %v5699 = vunpack.c.l.b16 %v4670
  %v5700 = vunpack.c.h.b16 %v4670
  %v5701 = vunpack.c.l.b16 %v4671
  %v5702 = vunpack.c.h.b16 %v4671
  %v5703 = vunpack.c.l.b16 %v4672
  %v5704 = vunpack.c.h.b16 %v4672
  %v5705 = vunpack.c.l.b16 %v4673
  %v5706 = vunpack.c.h.b16 %v4673
  %v5707 = vunpack.c.l.b16 %v4674
  %v5708 = vunpack.c.h.b16 %v4674
  %v5709 = vunpack.c.l.b16 %v4675
  %v5710 = vunpack.c.h.b16 %v4675
  %v5711 = vunpack.c.l.b16 %v4676
  %v5712 = vunpack.c.h.b16 %v4676
  %v5713 = vunpack.c.l.b16 %v4677
  %v5714 = vunpack.c.h.b16 %v4677
  %v5715 = vunpack.c.l.b16 %v4678
  %v5716 = vunpack.c.h.b16 %v4678
  %v5717 = vunpack.c.l.b16 %v4679
  %v5718 = vunpack.c.h.b16 %v4679
  %v5719 = vunpack.c.l.b16 %v4680
  %v5720 = vunpack.c.h.b16 %v4680
  %v5721 = vunpack.c.l.b16 %v4681
  %v5722 = vunpack.c.h.b16 %v4681
  %v5723 = vunpack.c.l.b16 %v4682
  %v5724 = vunpack.c.h.b16 %v4682
  %v5725 = vunpack.c.l.b16 %v4683
  %v5726 = vunpack.c.h.b16 %v4683
  %v5727 = vunpack.c.l.b16 %v4684
  %v5728 = vunpack.c.h.b16 %v4684
  %v5729 = vunpack.c.l.b16 %v4685
  %v5730 = vunpack.c.h.b16 %v4685
  %v5731 = vunpack.c.l.b16 %v4686
  %v5732 = vunpack.c.h.b16 %v4686
  %v5733 = vunpack.c.l.b16 %v4687
  %v5734 = vunpack.c.h.b16 %v4687
  %v5735 = vunpack.c.l.b16 %v4688
  %v5736 = vunpack.c.h.b16 %v4688
  %v5737 = vunpack.c.l.b16 %v4689
  %v5738 = vunpack.c.h.b16 %v4689
  %v5739 = vunpack.c.l.b16 %v4690
  %v5740 = vunpack.c.h.b16 %v4690
  %v5741 = vunpack.c.l.b16 %v4691
  %v5742 = vunpack.c.h.b16 %v4691
  %v5743 = vunpack.c.l.b16 %v4692
  %v5744 = vunpack.c.h.b16 %v4692
  %v5745 = vunpack.c.l.b16 %v4693
  %v5746 = vunpack.c.h.b16 %v4693
  %v5747 = vunpack.c.l.b16 %v4694
  %v5748 = vunpack.c.h.b16 %v4694
  %v5749 = vunpack.c.l.b16 %v4695
  %v5750 = vunpack.c.h.b16 %v4695
  %v5751 = vunpack.c.l.b16 %v4696
  %v5752 = vunpack.c.h.b16 %v4696
  %v5753 = vunpack.c.l.b16 %v4697
  %v5754 = vunpack.c.h.b16 %v4697
  %v5755 = vunpack.c.l.b16 %v4698
  %v5756 = vunpack.c.h.b16 %v4698
  %v5757 = vunpack.c.l.b16 %v4699
  %v5758 = vunpack.c.h.b16 %v4699
  %v5759 = vunpack.c.l.b16 %v4700
  %v5760 = vunpack.c.h.b16 %v4700
  %v5761 = vunpack.c.l.b16 %v4701
  %v5762 = vunpack.c.h.b16 %v4701
  %v5763 = vunpack.c.l.b16 %v4702
  %v5764 = vunpack.c.h.b16 %v4702
  %v5765 = vunpack.c.l.b16 %v4703
  %v5766 = vunpack.c.h.b16 %v4703
  %v5767 = vunpack.c.l.b16 %v4704
  %v5768 = vunpack.c.h.b16 %v4704
  %v5769 = vunpack.c.l.b16 %v4705
  %v5770 = vunpack.c.h.b16 %v4705
  %v5771 = vunpack.c.l.b16 %v4706
  %v5772 = vunpack.c.h.b16 %v4706
  %v5773 = vunpack.c.l.b16 %v4707
  %v5774 = vunpack.c.h.b16 %v4707
  %v5775 = vunpack.c.l.b16 %v4708
  %v5776 = vunpack.c.h.b16 %v4708
  %v5777 = vunpack.c.l.b16 %v4709
  %v5778 = vunpack.c.h.b16 %v4709
  %v5779 = vunpack.c.l.b16 %v4710
  %v5780 = vunpack.c.h.b16 %v4710
  %v5781 = vunpack.c.l.b16 %v4711
  %v5782 = vunpack.c.h.b16 %v4711
  %v5783 = vunpack.c.l.b16 %v4712
  %v5784 = vunpack.c.h.b16 %v4712
  %v5785 = vunpack.c.l.b16 %v4713
  %v5786 = vunpack.c.h.b16 %v4713
  %v5787 = vunpack.c.l.b16 %v4714
  %v5788 = vunpack.c.h.b16 %v4714
  %v5789 = vunpack.c.l.b16 %v4715
  %v5790 = vunpack.c.h.b16 %v4715
  %v5791 = vunpack.c.l.b16 %v4716
  %v5792 = vunpack.c.h.b16 %v4716
  %v5793 = vunpack.c.l.b16 %v4717
  %v5794 = vunpack.c.h.b16 %v4717
  %v5795 = vunpack.c.l.b16 %v4718
  %v5796 = vunpack.c.h.b16 %v4718
  %v5797 = vunpack.c.l.b16 %v4719
  %v5798 = vunpack.c.h.b16 %v4719
  %v5799 = vunpack.c.l.b16 %v4720
  %v5800 = vunpack.c.h.b16 %v4720
  %v5801 = vunpack.c.l.b16 %v4721
  %v5802 = vunpack.c.h.b16 %v4721
  %v5803 = vunpack.c.l.b16 %v4722
  %v5804 = vunpack.c.h.b16 %v4722
  %v5805 = vunpack.c.l.b16 %v4723
  %v5806 = vunpack.c.h.b16 %v4723
  %v5807 = vunpack.c.l.b16 %v4724
  %v5808 = vunpack.c.h.b16 %v4724
  %v5809 = vunpack.c.l.b16 %v4725
  %v5810 = vunpack.c.h.b16 %v4725
  %v5811 = vunpack.c.l.b16 %v4726
  %v5812 = vunpack.c.h.b16 %v4726
  %v5813 = vunpack.c.l.b16 %v4727
  %v5814 = vunpack.c.h.b16 %v4727
  %v5815 = vunpack.c.l.b16 %v4728
  %v5816 = vunpack.c.h.b16 %v4728
  %v5817 = vunpack.c.l.b16 %v4729
  %v5818 = vunpack.c.h.b16 %v4729
  %v5819 = vunpack.c.l.b16 %v4730
  %v5820 = vunpack.c.h.b16 %v4730
  %v5821 = vunpack.c.l.b16 %v4731
  %v5822 = vunpack.c.h.b16 %v4731
  %v5823 = vunpack.c.l.b16 %v4732
  %v5824 = vunpack.c.h.b16 %v4732
  %v5825 = vunpack.c.l.b16 %v4733
  %v5826 = vunpack.c.h.b16 %v4733
  %v5827 = vunpack.c.l.b16 %v4734
  %v5828 = vunpack.c.h.b16 %v4734
  %v5829 = vunpack.c.l.b16 %v4735
  %v5830 = vunpack.c.h.b16 %v4735
  %v5831 = vunpack.c.l.b16 %v4736
  %v5832 = vunpack.c.h.b16 %v4736
  %v5833 = vunpack.c.l.b16 %v4737
  %v5834 = vunpack.c.h.b16 %v4737
  %v5835 = vunpack.c.l.b16 %v4738
  %v5836 = vunpack.c.h.b16 %v4738
  %v5837 = vunpack.c.l.b16 %v4739
  %v5838 = vunpack.c.h.b16 %v4739
  %v5839 = vunpack.c.l.b16 %v4740
  %v5840 = vunpack.c.h.b16 %v4740
  %v5841 = vunpack.c.l.b16 %v4741
  %v5842 = vunpack.c.h.b16 %v4741
  %v5843 = vunpack.c.l.b16 %v4742
  %v5844 = vunpack.c.h.b16 %v4742
  %v5845 = vunpack.c.l.b16 %v4743
  %v5846 = vunpack.c.h.b16 %v4743
  %v5847 = vunpack.c.l.b16 %v4744
  %v5848 = vunpack.c.h.b16 %v4744
  %v5849 = vunpack.c.l.b16 %v4745
  %v5850 = vunpack.c.h.b16 %v4745
  %v5851 = vunpack.c.l.b16 %v4746
  %v5852 = vunpack.c.h.b16 %v4746
  %v5853 = vunpack.c.l.b16 %v4747
  %v5854 = vunpack.c.h.b16 %v4747
  %v5855 = vunpack.c.l.b16 %v4748
  %v5856 = vunpack.c.h.b16 %v4748
  %v5857 = vunpack.c.l.b16 %v4749
  %v5858 = vunpack.c.h.b16 %v4749
  %v5859 = vunpack.c.l.b16 %v4750
  %v5860 = vunpack.c.h.b16 %v4750
  %v5861 = vunpack.c.l.b16 %v4751
  %v5862 = vunpack.c.h.b16 %v4751
  %v5863 = vunpack.c.l.b16 %v4752
  %v5864 = vunpack.c.h.b16 %v4752
  %v5865 = vunpack.c.l.b16 %v4753
  %v5866 = vunpack.c.h.b16 %v4753
  %v5867 = vunpack.c.l.b16 %v4754
  %v5868 = vunpack.c.h.b16 %v4754
  %v5869 = vunpack.c.l.b16 %v4755
  %v5870 = vunpack.c.h.b16 %v4755
  %v5871 = vunpack.c.l.b16 %v4756
  %v5872 = vunpack.c.h.b16 %v4756
  %v5873 = vunpack.c.l.b16 %v4757
  %v5874 = vunpack.c.h.b16 %v4757
  %v5875 = vunpack.c.l.b16 %v4758
  %v5876 = vunpack.c.h.b16 %v4758
  %v5877 = vunpack.c.l.b16 %v4759
  %v5878 = vunpack.c.h.b16 %v4759
  %v5879 = vunpack.c.l.b16 %v4760
  %v5880 = vunpack.c.h.b16 %v4760
  %v5881 = vunpack.c.l.b16 %v4761
  %v5882 = vunpack.c.h.b16 %v4761
  %v5883 = vunpack.c.l.b16 %v4762
  %v5884 = vunpack.c.h.b16 %v4762
  %v5885 = vunpack.c.l.b16 %v4763
  %v5886 = vunpack.c.h.b16 %v4763
  %v5887 = vunpack.c.l.b16 %v4764
  %v5888 = vunpack.c.h.b16 %v4764
  %v5889 = vunpack.c.l.b16 %v4765
  %v5890 = vunpack.c.h.b16 %v4765
  %v5891 = vunpack.c.l.b16 %v4766
  %v5892 = vunpack.c.h.b16 %v4766
  %v5893 = vunpack.c.l.b16 %v4767
  %v5894 = vunpack.c.h.b16 %v4767
  %v5895 = vunpack.c.l.b16 %v4768
  %v5896 = vunpack.c.h.b16 %v4768
  %v5897 = vunpack.c.l.b16 %v4769
  %v5898 = vunpack.c.h.b16 %v4769
  %v5899 = vunpack.c.l.b16 %v4770
  %v5900 = vunpack.c.h.b16 %v4770
  %v5901 = vunpack.c.l.b16 %v4771
  %v5902 = vunpack.c.h.b16 %v4771
  %v5903 = vunpack.c.l.b16 %v4772
  %v5904 = vunpack.c.h.b16 %v4772
  %v5905 = vunpack.c.l.b16 %v4773
  %v5906 = vunpack.c.h.b16 %v4773
  %v5907 = vunpack.c.l.b16 %v4774
  %v5908 = vunpack.c.h.b16 %v4774
  %v5909 = vunpack.c.l.b16 %v4775
  %v5910 = vunpack.c.h.b16 %v4775
  %v5911 = vunpack.c.l.b16 %v4776
  %v5912 = vunpack.c.h.b16 %v4776
  %v5913 = vunpack.c.l.b16 %v4777
  %v5914 = vunpack.c.h.b16 %v4777
  %v5915 = vunpack.c.l.b16 %v4778
  %v5916 = vunpack.c.h.b16 %v4778
  %v5917 = vunpack.c.l.b16 %v4779
  %v5918 = vunpack.c.h.b16 %v4779
  %v5919 = vunpack.c.l.b16 %v4780
  %v5920 = vunpack.c.h.b16 %v4780
  %v5921 = vunpack.c.l.b16 %v4781
  %v5922 = vunpack.c.h.b16 %v4781
  %v5923 = vunpack.c.l.b16 %v4782
  %v5924 = vunpack.c.h.b16 %v4782
  %v5925 = vunpack.c.l.b16 %v4783
  %v5926 = vunpack.c.h.b16 %v4783
  %v5927 = vunpack.c.l.b16 %v4784
  %v5928 = vunpack.c.h.b16 %v4784
  %v5929 = vunpack.c.l.b16 %v4785
  %v5930 = vunpack.c.h.b16 %v4785
  %v5931 = vunpack.c.l.b16 %v4786
  %v5932 = vunpack.c.h.b16 %v4786
  %v5933 = vunpack.c.l.b16 %v4787
  %v5934 = vunpack.c.h.b16 %v4787
  %v5935 = vunpack.c.l.b16 %v4788
  %v5936 = vunpack.c.h.b16 %v4788
  %v5937 = vunpack.c.l.b16 %v4789
  %v5938 = vunpack.c.h.b16 %v4789
  %v5939 = vunpack.c.l.b16 %v4790
  %v5940 = vunpack.c.h.b16 %v4790
  %v5941 = vunpack.c.l.b16 %v4791
  %v5942 = vunpack.c.h.b16 %v4791
  %v5943 = vunpack.c.l.b16 %v4792
  %v5944 = vunpack.c.h.b16 %v4792
  %v5945 = vunpack.c.l.b16 %v4793
  %v5946 = vunpack.c.h.b16 %v4793
  %v5947 = vunpack.c.l.b16 %v4794
  %v5948 = vunpack.c.h.b16 %v4794
  %v5949 = vunpack.c.l.b16 %v4795
  %v5950 = vunpack.c.h.b16 %v4795
  %v5951 = vunpack.c.l.b16 %v4796
  %v5952 = vunpack.c.h.b16 %v4796
  %v5953 = vunpack.c.l.b16 %v4797
  %v5954 = vunpack.c.h.b16 %v4797
  %v5955 = vunpack.c.l.b16 %v4798
  %v5956 = vunpack.c.h.b16 %v4798
  %v5957 = vunpack.c.l.b16 %v4799
  %v5958 = vunpack.c.h.b16 %v4799
  %v5959 = vunpack.c.l.b16 %v4800
  %v5960 = vunpack.c.h.b16 %v4800
  %v5961 = vunpack.c.l.b16 %v4801
  %v5962 = vunpack.c.h.b16 %v4801
  %v5963 = vunpack.c.l.b16 %v4802
  %v5964 = vunpack.c.h.b16 %v4802
  %v5965 = vunpack.c.l.b16 %v4803
  %v5966 = vunpack.c.h.b16 %v4803
  %v5967 = vunpack.c.l.b16 %v4804
  %v5968 = vunpack.c.h.b16 %v4804
  %v5969 = vunpack.c.l.b16 %v4805
  %v5970 = vunpack.c.h.b16 %v4805
  %v5971 = vunpack.c.l.b16 %v4806
  %v5972 = vunpack.c.h.b16 %v4806
  %v5973 = vunpack.c.l.b16 %v4807
  %v5974 = vunpack.c.h.b16 %v4807
  %v5975 = vunpack.c.l.b16 %v4808
  %v5976 = vunpack.c.h.b16 %v4808
  %v5977 = vunpack.c.l.b16 %v4809
  %v5978 = vunpack.c.h.b16 %v4809
  %v5979 = vunpack.c.l.b16 %v4810
  %v5980 = vunpack.c.h.b16 %v4810
  %v5981 = vunpack.c.l.b16 %v4811
  %v5982 = vunpack.c.h.b16 %v4811
  %v5983 = vunpack.c.l.b16 %v4812
  %v5984 = vunpack.c.h.b16 %v4812
  %v5985 = vunpack.c.l.b16 %v4813
  %v5986 = vunpack.c.h.b16 %v4813
  %v5987 = vunpack.c.l.b16 %v4814
  %v5988 = vunpack.c.h.b16 %v4814
  %v5989 = vunpack.c.l.b16 %v4815
  %v5990 = vunpack.c.h.b16 %v4815
  %v5991 = vunpack.c.l.b16 %v4816
  %v5992 = vunpack.c.h.b16 %v4816
  %v5993 = vunpack.c.l.b16 %v4817
  %v5994 = vunpack.c.h.b16 %v4817
  %v5995 = vunpack.c.l.b16 %v4818
  %v5996 = vunpack.c.h.b16 %v4818
  %v5997 = vunpack.c.l.b16 %v4819
  %v5998 = vunpack.c.h.b16 %v4819
  %v5999 = vunpack.c.l.b16 %v4820
  %v6000 = vunpack.c.h.b16 %v4820
  %v6001 = vunpack.c.l.b16 %v4821
  %v6002 = vunpack.c.h.b16 %v4821
  %v6003 = vunpack.c.l.b16 %v4822
  %v6004 = vunpack.c.h.b16 %v4822
  %v6005 = vunpack.c.l.b16 %v4823
  %v6006 = vunpack.c.h.b16 %v4823
  %v6007 = vunpack.c.l.b16 %v4824
  %v6008 = vunpack.c.h.b16 %v4824
  %v6009 = vunpack.c.l.b16 %v4825
  %v6010 = vunpack.c.h.b16 %v4825
  %v6011 = vunpack.c.l.b16 %v4826
  %v6012 = vunpack.c.h.b16 %v4826
  %v6013 = vunpack.c.l.b16 %v4827
  %v6014 = vunpack.c.h.b16 %v4827
  %v6015 = vunpack.c.l.b16 %v4828
  %v6016 = vunpack.c.h.b16 %v4828
  %v6017 = vunpack.c.l.b16 %v4829
  %v6018 = vunpack.c.h.b16 %v4829
  %v6019 = vunpack.c.l.b16 %v4830
  %v6020 = vunpack.c.h.b16 %v4830
  %v6021 = vunpack.c.l.b16 %v4831
  %v6022 = vunpack.c.h.b16 %v4831
  %v6023 = vunpack.c.l.b16 %v4832
  %v6024 = vunpack.c.h.b16 %v4832
  %v6025 = vunpack.c.l.b16 %v4833
  %v6026 = vunpack.c.h.b16 %v4833
  %v6027 = vunpack.c.l.b16 %v4834
  %v6028 = vunpack.c.h.b16 %v4834
  %v6029 = vunpack.c.l.b16 %v4835
  %v6030 = vunpack.c.h.b16 %v4835
  %v6031 = vunpack.c.l.b16 %v4836
  %v6032 = vunpack.c.h.b16 %v4836
  %v6033 = vunpack.c.l.b16 %v4837
  %v6034 = vunpack.c.h.b16 %v4837
  %v6035 = vunpack.c.l.b16 %v4838
  %v6036 = vunpack.c.h.b16 %v4838
  %v6037 = vunpack.c.l.b16 %v4839
  %v6038 = vunpack.c.h.b16 %v4839
  %v6039 = vunpack.c.l.b16 %v4840
  %v6040 = vunpack.c.h.b16 %v4840
  %v6041 = vunpack.c.l.b16 %v4841
  %v6042 = vunpack.c.h.b16 %v4841
  %v6043 = vunpack.c.l.b16 %v4842
  %v6044 = vunpack.c.h.b16 %v4842
  %v6045 = vunpack.c.l.b16 %v4843
  %v6046 = vunpack.c.h.b16 %v4843
  %v6047 = vunpack.c.l.b16 %v4844
  %v6048 = vunpack.c.h.b16 %v4844
  %v6049 = vunpack.c.l.b16 %v4845
  %v6050 = vunpack.c.h.b16 %v4845
  %v6051 = vunpack.c.l.b16 %v4846
  %v6052 = vunpack.c.h.b16 %v4846
  %v6053 = vunpack.c.l.b16 %v4847
  %v6054 = vunpack.c.h.b16 %v4847
  %v6055 = vunpack.c.l.b16 %v4848
  %v6056 = vunpack.c.h.b16 %v4848
  %v6057 = vunpack.c.l.b16 %v4849
  %v6058 = vunpack.c.h.b16 %v4849
  %v6059 = vunpack.c.l.b16 %v4850
  %v6060 = vunpack.c.h.b16 %v4850
  %v6061 = vunpack.c.l.b16 %v4851
  %v6062 = vunpack.c.h.b16 %v4851
  %v6063 = vunpack.c.l.b16 %v4852
  %v6064 = vunpack.c.h.b16 %v4852
  %v6065 = vunpack.c.l.b16 %v4853
  %v6066 = vunpack.c.h.b16 %v4853
  %v6067 = vunpack.c.l.b16 %v4854
  %v6068 = vunpack.c.h.b16 %v4854
  %v6069 = vunpack.c.l.b16 %v4855
  %v6070 = vunpack.c.h.b16 %v4855
  %v6071 = vunpack.c.l.b16 %v4856
  %v6072 = vunpack.c.h.b16 %v4856
  %v6073 = vunpack.c.l.b16 %v4857
  %v6074 = vunpack.c.h.b16 %v4857
  %v6075 = vunpack.c.l.b16 %v4858
  %v6076 = vunpack.c.h.b16 %v4858
  %v6077 = vunpack.c.l.b16 %v4859
  %v6078 = vunpack.c.h.b16 %v4859
  %v6079 = vunpack.c.l.b16 %v4860
  %v6080 = vunpack.c.h.b16 %v4860
  %v6081 = vunpack.c.l.b16 %v4861
  %v6082 = vunpack.c.h.b16 %v4861
  %v6083 = vunpack.c.l.b16 %v4862
  %v6084 = vunpack.c.h.b16 %v4862
  %v6085 = vunpack.c.l.b16 %v4863
  %v6086 = vunpack.c.h.b16 %v4863
  %v6087 = vunpack.c.l.b16 %v4864
  %v6088 = vunpack.c.h.b16 %v4864
  %v6089 = vunpack.c.l.b16 %v4865
  %v6090 = vunpack.c.h.b16 %v4865
  %v6091 = vunpack.c.l.b16 %v4866
  %v6092 = vunpack.c.h.b16 %v4866
  %v6093 = vunpack.c.l.b16 %v4867
  %v6094 = vunpack.c.h.b16 %v4867
  %v6095 = vunpack.c.l.b16 %v4868
  %v6096 = vunpack.c.h.b16 %v4868
  %v6097 = vunpack.c.l.b16 %v4869
  %v6098 = vunpack.c.h.b16 %v4869
  %v6099 = vunpack.c.l.b16 %v4870
  %v6100 = vunpack.c.h.b16 %v4870
  %v6101 = vunpack.c.l.b16 %v4871
  %v6102 = vunpack.c.h.b16 %v4871
  %v6103 = vunpack.c.l.b16 %v4872
  %v6104 = vunpack.c.h.b16 %v4872
  %v6105 = vunpack.c.l.b16 %v4873
  %v6106 = vunpack.c.h.b16 %v4873
  %v6107 = vunpack.c.l.b16 %v4874
  %v6108 = vunpack.c.h.b16 %v4874
  %v6109 = vunpack.c.l.b16 %v4875
  %v6110 = vunpack.c.h.b16 %v4875
  %v6111 = vunpack.c.l.b16 %v4876
  %v6112 = vunpack.c.h.b16 %v4876
  %v6113 = vunpack.c.l.b16 %v4877
  %v6114 = vunpack.c.h.b16 %v4877
  %v6115 = vunpack.c.l.b16 %v4878
  %v6116 = vunpack.c.h.b16 %v4878
  %v6117 = vunpack.c.l.b16 %v4879
  %v6118 = vunpack.c.h.b16 %v4879
  %v6119 = vunpack.c.l.b16 %v4880
  %v6120 = vunpack.c.h.b16 %v4880
  %v6121 = vunpack.c.l.b16 %v4881
  %v6122 = vunpack.c.h.b16 %v4881
  %v6123 = vunpack.c.l.b16 %v4882
  %v6124 = vunpack.c.h.b16 %v4882
  %v6125 = vunpack.c.l.b16 %v4883
  %v6126 = vunpack.c.h.b16 %v4883
  %v6127 = vunpack.c.l.b16 %v4884
  %v6128 = vunpack.c.h.b16 %v4884
  %v6129 = vunpack.c.l.b16 %v4885
  %v6130 = vunpack.c.h.b16 %v4885
  %v6131 = vunpack.c.l.b16 %v4886
  %v6132 = vunpack.c.h.b16 %v4886
  %v6133 = vunpack.c.l.b16 %v4887
  %v6134 = vunpack.c.h.b16 %v4887
  %v6135 = vunpack.c.l.b16 %v4888
  %v6136 = vunpack.c.h.b16 %v4888
  %v6137 = vunpack.c.l.b16 %v4889
  %v6138 = vunpack.c.h.b16 %v4889
  %v6139 = vunpack.c.l.b16 %v4890
  %v6140 = vunpack.c.h.b16 %v4890
  %v6141 = vunpack.c.l.b16 %v4891
  %v6142 = vunpack.c.h.b16 %v4891
  %v6143 = vunpack.c.l.b16 %v4892
  %v6144 = vunpack.c.h.b16 %v4892
  %v6145 = vunpack.c.l.b16 %v4893
  %v6146 = vunpack.c.h.b16 %v4893
  %v6147 = vunpack.c.l.b16 %v4894
  %v6148 = vunpack.c.h.b16 %v4894
  %v6149 = vunpack.c.l.b16 %v4895
  %v6150 = vunpack.c.h.b16 %v4895
  %v6151 = vunpack.c.l.b16 %v4896
  %v6152 = vunpack.c.h.b16 %v4896
  %v6153 = vunpack.c.l.b16 %v4897
  %v6154 = vunpack.c.h.b16 %v4897
  %v6155 = vunpack.c.l.b16 %v4898
  %v6156 = vunpack.c.h.b16 %v4898
  %v6157 = vunpack.c.l.b16 %v4899
  %v6158 = vunpack.c.h.b16 %v4899
  %v6159 = vunpack.c.l.b16 %v4900
  %v6160 = vunpack.c.h.b16 %v4900
  %v6161 = vunpack.c.l.b16 %v4901
  %v6162 = vunpack.c.h.b16 %v4901
  %v6163 = vunpack.c.l.b16 %v4902
  %v6164 = vunpack.c.h.b16 %v4902
  %v6165 = vunpack.c.l.b16 %v4903
  %v6166 = vunpack.c.h.b16 %v4903
  %v6167 = vunpack.c.l.b16 %v4904
  %v6168 = vunpack.c.h.b16 %v4904
  %v6169 = vunpack.c.l.b16 %v4905
  %v6170 = vunpack.c.h.b16 %v4905
  %v6171 = vunpack.c.l.b16 %v4906
  %v6172 = vunpack.c.h.b16 %v4906
  %v6173 = vunpack.c.l.b16 %v4907
  %v6174 = vunpack.c.h.b16 %v4907
  %v6175 = vunpack.c.l.b16 %v4908
  %v6176 = vunpack.c.h.b16 %v4908
  %v6177 = vunpack.c.l.b16 %v4909
  %v6178 = vunpack.c.h.b16 %v4909
  %v6179 = vunpack.c.l.b16 %v4910
  %v6180 = vunpack.c.h.b16 %v4910
  %v6181 = vunpack.c.l.b16 %v4911
  %v6182 = vunpack.c.h.b16 %v4911
  %v6183 = vunpack.c.l.b16 %v4912
  %v6184 = vunpack.c.h.b16 %v4912
  %v6185 = vunpack.c.l.b16 %v4913
  %v6186 = vunpack.c.h.b16 %v4913
  %v6187 = vunpack.c.l.b16 %v4914
  %v6188 = vunpack.c.h.b16 %v4914
  %v6189 = vunpack.c.l.b16 %v4915
  %v6190 = vunpack.c.h.b16 %v4915
  %v6191 = vunpack.c.l.b16 %v4916
  %v6192 = vunpack.c.h.b16 %v4916
  %v6193 = vunpack.c.l.b16 %v4917
  %v6194 = vunpack.c.h.b16 %v4917
  %v6195 = vunpack.c.l.b16 %v4918
  %v6196 = vunpack.c.h.b16 %v4918
  %v6197 = vunpack.c.l.b16 %v4919
  %v6198 = vunpack.c.h.b16 %v4919
  %v6199 = vunpack.c.l.b16 %v4920
  %v6200 = vunpack.c.h.b16 %v4920
  %v6201 = vunpack.c.l.b16 %v4921
  %v6202 = vunpack.c.h.b16 %v4921
  %v6203 = vunpack.c.l.b16 %v4922
  %v6204 = vunpack.c.h.b16 %v4922
  %v6205 = vunpack.c.l.b16 %v4923
  %v6206 = vunpack.c.h.b16 %v4923
  %v6207 = vunpack.c.l.b16 %v4924
  %v6208 = vunpack.c.h.b16 %v4924
  %v6209 = vunpack.c.l.b16 %v4925
  %v6210 = vunpack.c.h.b16 %v4925
  %v6211 = vunpack.c.l.b16 %v4926
  %v6212 = vunpack.c.h.b16 %v4926
  %v6213 = vunpack.c.l.b16 %v4927
  %v6214 = vunpack.c.h.b16 %v4927
  %v6215 = vunpack.c.l.b16 %v4928
  %v6216 = vunpack.c.h.b16 %v4928
  %v6217 = vunpack.c.l.b16 %v4929
  %v6218 = vunpack.c.h.b16 %v4929
  %v6219 = vunpack.c.l.b16 %v4930
  %v6220 = vunpack.c.h.b16 %v4930
  %v6221 = vunpack.c.l.b16 %v4931
  %v6222 = vunpack.c.h.b16 %v4931
  %v6223 = vunpack.c.l.b16 %v4932
  %v6224 = vunpack.c.h.b16 %v4932
  %v6225 = vunpack.c.l.b16 %v4933
  %v6226 = vunpack.c.h.b16 %v4933
  %v6227 = vunpack.c.l.b16 %v4934
  %v6228 = vunpack.c.h.b16 %v4934
  %v6229 = vunpack.c.l.b16 %v4935
  %v6230 = vunpack.c.h.b16 %v4935
  %v6231 = vunpack.c.l.b16 %v4936
  %v6232 = vunpack.c.h.b16 %v4936
  %v6233 = vunpack.c.l.b16 %v4937
  %v6234 = vunpack.c.h.b16 %v4937
  %v6235 = vunpack.c.l.b16 %v4938
  %v6236 = vunpack.c.h.b16 %v4938
  %v6237 = vunpack.c.l.b16 %v4939
  %v6238 = vunpack.c.h.b16 %v4939
  %v6239 = vunpack.c.l.b16 %v4940
  %v6240 = vunpack.c.h.b16 %v4940
  %v6241 = vunpack.c.l.b16 %v4941
  %v6242 = vunpack.c.h.b16 %v4941
  %v6243 = vunpack.c.l.b16 %v4942
  %v6244 = vunpack.c.h.b16 %v4942
  %v6245 = vunpack.c.l.b16 %v4943
  %v6246 = vunpack.c.h.b16 %v4943
  %v6247 = vunpack.c.l.b16 %v4944
  %v6248 = vunpack.c.h.b16 %v4944
  %v6249 = vunpack.c.l.b16 %v4945
  %v6250 = vunpack.c.h.b16 %v4945
  %v6251 = vunpack.c.l.b16 %v4946
  %v6252 = vunpack.c.h.b16 %v4946
  %v6253 = vunpack.c.l.b16 %v4947
  %v6254 = vunpack.c.h.b16 %v4947
  %v6255 = vunpack.c.l.b16 %v4948
  %v6256 = vunpack.c.h.b16 %v4948
  %v6257 = vunpack.c.l.b16 %v4949
  %v6258 = vunpack.c.h.b16 %v4949
  %v6259 = vunpack.c.l.b16 %v4950
  %v6260 = vunpack.c.h.b16 %v4950
  %v6261 = vunpack.c.l.b16 %v4951
  %v6262 = vunpack.c.h.b16 %v4951
  %v6263 = vunpack.c.l.b16 %v4952
  %v6264 = vunpack.c.h.b16 %v4952
  %v6265 = vunpack.c.l.b16 %v4953
  %v6266 = vunpack.c.h.b16 %v4953
  %v6267 = vunpack.c.l.b16 %v4954
  %v6268 = vunpack.c.h.b16 %v4954
  %v6269 = vunpack.c.l.b16 %v4955
  %v6270 = vunpack.c.h.b16 %v4955
  %v6271 = vunpack.c.l.b16 %v4956
  %v6272 = vunpack.c.h.b16 %v4956
  %v6273 = vunpack.c.l.b16 %v4957
  %v6274 = vunpack.c.h.b16 %v4957
  %v6275 = vunpack.c.l.b16 %v4958
  %v6276 = vunpack.c.h.b16 %v4958
  %v6277 = vunpack.c.l.b16 %v4959
  %v6278 = vunpack.c.h.b16 %v4959
  %v6279 = vunpack.c.l.b16 %v4960
  %v6280 = vunpack.c.h.b16 %v4960
  %v6281 = vunpack.c.l.b16 %v4961
  %v6282 = vunpack.c.h.b16 %v4961
  %v6283 = vunpack.c.l.b16 %v4962
  %v6284 = vunpack.c.h.b16 %v4962
  %v6285 = vunpack.c.l.b16 %v4963
  %v6286 = vunpack.c.h.b16 %v4963
  %v6287 = vunpack.c.l.b16 %v4964
  %v6288 = vunpack.c.h.b16 %v4964
  %v6289 = vunpack.c.l.b16 %v4965
  %v6290 = vunpack.c.h.b16 %v4965
  %v6291 = vunpack.c.l.b16 %v4966
  %v6292 = vunpack.c.h.b16 %v4966
  %v6293 = vunpack.c.l.b16 %v4967
  %v6294 = vunpack.c.h.b16 %v4967
  %v6295 = vunpack.c.l.b16 %v4968
  %v6296 = vunpack.c.h.b16 %v4968
  %v6297 = vunpack.c.l.b16 %v4969
  %v6298 = vunpack.c.h.b16 %v4969
  %v6299 = vunpack.c.l.b16 %v4970
  %v6300 = vunpack.c.h.b16 %v4970
  %v6301 = vunpack.c.l.b16 %v4971
  %v6302 = vunpack.c.h.b16 %v4971
  %v6303 = vunpack.c.l.b16 %v4972
  %v6304 = vunpack.c.h.b16 %v4972
  %v6305 = vunpack.c.l.b16 %v4973
  %v6306 = vunpack.c.h.b16 %v4973
  %v6307 = vunpack.c.l.b16 %v4974
  %v6308 = vunpack.c.h.b16 %v4974
  %v6309 = vunpack.c.l.b16 %v4975
  %v6310 = vunpack.c.h.b16 %v4975
  %v6311 = vunpack.c.l.b16 %v4976
  %v6312 = vunpack.c.h.b16 %v4976
  %v6313 = vunpack.c.l.b16 %v4977
  %v6314 = vunpack.c.h.b16 %v4977
  %v6315 = vunpack.c.l.b16 %v4978
  %v6316 = vunpack.c.h.b16 %v4978
  %v6317 = vunpack.c.l.b16 %v4979
  %v6318 = vunpack.c.h.b16 %v4979
  %v6319 = vunpack.c.l.b16 %v4980
  %v6320 = vunpack.c.h.b16 %v4980
  %v6321 = vunpack.c.l.b16 %v4981
  %v6322 = vunpack.c.h.b16 %v4981
  %v6323 = vunpack.c.l.b16 %v4982
  %v6324 = vunpack.c.h.b16 %v4982
  %v6325 = vunpack.c.l.b16 %v4983
  %v6326 = vunpack.c.h.b16 %v4983
  %v6327 = vunpack.c.l.b16 %v4984
  %v6328 = vunpack.c.h.b16 %v4984
  %v6329 = vunpack.c.l.b16 %v4985
  %v6330 = vunpack.c.h.b16 %v4985
  %v6331 = vunpack.c.l.b16 %v4986
  %v6332 = vunpack.c.h.b16 %v4986
  %v6333 = vunpack.c.l.b16 %v4987
  %v6334 = vunpack.c.h.b16 %v4987
  %v6335 = vunpack.c.l.b16 %v4988
  %v6336 = vunpack.c.h.b16 %v4988
  %v6337 = vunpack.c.l.b16 %v4989
  %v6338 = vunpack.c.h.b16 %v4989
  %v6339 = vunpack.c.l.b16 %v4990
  %v6340 = vunpack.c.h.b16 %v4990
  %v6341 = vunpack.c.l.b16 %v4991
  %v6342 = vunpack.c.h.b16 %v4991
  %v6343 = vunpack.c.l.b16 %v4992
  %v6344 = vunpack.c.h.b16 %v4992
  %v6345 = vunpack.c.l.b16 %v4993
  %v6346 = vunpack.c.h.b16 %v4993
  %v6347 = vunpack.c.l.b16 %v4994
  %v6348 = vunpack.c.h.b16 %v4994
  %v6349 = vunpack.c.l.b16 %v4995
  %v6350 = vunpack.c.h.b16 %v4995
  %v6351 = vunpack.c.l.b16 %v4996
  %v6352 = vunpack.c.h.b16 %v4996
  %v6353 = vunpack.c.l.b16 %v4997
  %v6354 = vunpack.c.h.b16 %v4997
  %v6355 = vunpack.c.l.b16 %v4998
  %v6356 = vunpack.c.h.b16 %v4998
  %v6357 = vunpack.c.l.b16 %v4999
  %v6358 = vunpack.c.h.b16 %v4999
  %v6359 = vunpack.c.l.b16 %v5000
  %v6360 = vunpack.c.h.b16 %v5000
  %v6361 = vunpack.c.l.b16 %v5001
  %v6362 = vunpack.c.h.b16 %v5001
  %v6363 = vunpack.c.l.b16 %v5002
  %v6364 = vunpack.c.h.b16 %v5002
  %v6365 = vunpack.c.l.b16 %v5003
  %v6366 = vunpack.c.h.b16 %v5003
  %v6367 = vunpack.c.l.b16 %v5004
  %v6368 = vunpack.c.h.b16 %v5004
  %v6369 = vunpack.c.l.b16 %v5005
  %v6370 = vunpack.c.h.b16 %v5005
  %v6371 = vunpack.c.l.b16 %v5006
  %v6372 = vunpack.c.h.b16 %v5006
  %v6373 = vunpack.c.l.b16 %v5007
  %v6374 = vunpack.c.h.b16 %v5007
  %v6375 = vunpack.c.l.b16 %v5008
  %v6376 = vunpack.c.h.b16 %v5008
  %v6377 = vunpack.c.l.b16 %v5009
  %v6378 = vunpack.c.h.b16 %v5009
  %v6379 = vunpack.c.l.b16 %v5010
  %v6380 = vunpack.c.h.b16 %v5010
  %v6381 = vunpack.c.l.b16 %v5011
  %v6382 = vunpack.c.h.b16 %v5011
  %v6383 = vunpack.c.l.b16 %v5012
  %v6384 = vunpack.c.h.b16 %v5012
  %v6385 = vunpack.c.l.b16 %v5013
  %v6386 = vunpack.c.h.b16 %v5013
  %v6387 = vunpack.c.l.b16 %v5014
  %v6388 = vunpack.c.h.b16 %v5014
  %v6389 = vunpack.c.l.b16 %v5015
  %v6390 = vunpack.c.h.b16 %v5015
  %v6391 = vunpack.c.l.b16 %v5016
  %v6392 = vunpack.c.h.b16 %v5016
  %v6393 = vunpack.c.l.b16 %v5017
  %v6394 = vunpack.c.h.b16 %v5017
  %v6395 = vunpack.c.l.b16 %v5018
  %v6396 = vunpack.c.h.b16 %v5018
  %v6397 = vunpack.c.l.b16 %v5019
  %v6398 = vunpack.c.h.b16 %v5019
  %v6399 = vunpack.c.l.b16 %v5020
  %v6400 = vunpack.c.h.b16 %v5020
  %v6401 = vunpack.c.l.b16 %v5021
  %v6402 = vunpack.c.h.b16 %v5021
  %v6403 = vunpack.c.l.b16 %v5022
  %v6404 = vunpack.c.h.b16 %v5022
  %v6405 = vunpack.c.l.b16 %v5023
  %v6406 = vunpack.c.h.b16 %v5023
  %v6407 = vunpack.c.l.b16 %v5024
  %v6408 = vunpack.c.h.b16 %v5024
  %v6409 = vunpack.c.l.b16 %v5025
  %v6410 = vunpack.c.h.b16 %v5025
  %v6411 = vunpack.c.l.b16 %v5026
  %v6412 = vunpack.c.h.b16 %v5026
  %v6413 = vunpack.c.l.b16 %v5027
  %v6414 = vunpack.c.h.b16 %v5027
  %v6415 = vunpack.c.l.b16 %v5028
  %v6416 = vunpack.c.h.b16 %v5028
  %v6417 = vunpack.c.l.b16 %v5029
  %v6418 = vunpack.c.h.b16 %v5029
  %v6419 = vunpack.c.l.b16 %v5030
  %v6420 = vunpack.c.h.b16 %v5030
  %v6421 = vunpack.c.l.b16 %v5031
  %v6422 = vunpack.c.h.b16 %v5031
  %v6423 = vunpack.c.l.b16 %v5032
  %v6424 = vunpack.c.h.b16 %v5032
  %v6425 = vunpack.c.l.b16 %v5033
  %v6426 = vunpack.c.h.b16 %v5033
  %v6427 = vunpack.c.l.b16 %v5034
  %v6428 = vunpack.c.h.b16 %v5034
  %v6429 = vunpack.c.l.b16 %v5035
  %v6430 = vunpack.c.h.b16 %v5035
  %v6431 = vunpack.c.l.b16 %v5036
  %v6432 = vunpack.c.h.b16 %v5036
  %v6433 = vunpack.c.l.b16 %v5037
  %v6434 = vunpack.c.h.b16 %v5037
  %v6435 = vunpack.c.l.b16 %v5038
  %v6436 = vunpack.c.h.b16 %v5038
  %v6437 = vunpack.c.l.b16 %v5039
  %v6438 = vunpack.c.h.b16 %v5039
  %v6439 = vunpack.c.l.b16 %v5040
  %v6440 = vunpack.c.h.b16 %v5040
  %v6441 = vunpack.c.l.b16 %v5041
  %v6442 = vunpack.c.h.b16 %v5041
  %v6443 = vunpack.c.l.b16 %v5042
  %v6444 = vunpack.c.h.b16 %v5042
  %v6445 = vunpack.c.l.b16 %v5043
  %v6446 = vunpack.c.h.b16 %v5043
  %v6447 = vunpack.c.l.b16 %v5044
  %v6448 = vunpack.c.h.b16 %v5044
  %v6449 = vunpack.c.l.b16 %v5045
  %v6450 = vunpack.c.h.b16 %v5045
  %v6451 = vunpack.c.l.b16 %v5046
  %v6452 = vunpack.c.h.b16 %v5046
  %v6453 = vunpack.c.l.b16 %v5047
  %v6454 = vunpack.c.h.b16 %v5047
  %v6455 = vunpack.c.l.b16 %v5048
  %v6456 = vunpack.c.h.b16 %v5048
  %v6457 = vunpack.c.l.b16 %v5049
  %v6458 = vunpack.c.h.b16 %v5049
  %v6459 = vunpack.c.l.b16 %v5050
  %v6460 = vunpack.c.h.b16 %v5050
  %v6461 = vunpack.c.l.b16 %v5051
  %v6462 = vunpack.c.h.b16 %v5051
  %v6463 = vunpack.c.l.b16 %v5052
  %v6464 = vunpack.c.h.b16 %v5052
  %v6465 = vunpack.c.l.b16 %v5053
  %v6466 = vunpack.c.h.b16 %v5053
  %v6467 = vunpack.c.l.b16 %v5054
  %v6468 = vunpack.c.h.b16 %v5054
  %v6469 = vunpack.c.l.b16 %v5055
  %v6470 = vunpack.c.h.b16 %v5055
  %v6471 = vunpack.c.l.b16 %v5056
  %v6472 = vunpack.c.h.b16 %v5056
  %v6473 = vunpack.c.l.b16 %v5057
  %v6474 = vunpack.c.h.b16 %v5057
  %v6475 = vunpack.c.l.b16 %v5058
  %v6476 = vunpack.c.h.b16 %v5058
  %v6477 = vunpack.c.l.b16 %v5059
  %v6478 = vunpack.c.h.b16 %v5059
  %v6479 = vunpack.c.l.b16 %v5060
  %v6480 = vunpack.c.h.b16 %v5060
  %v6481 = vunpack.c.l.b16 %v5061
  %v6482 = vunpack.c.h.b16 %v5061
  %v6483 = vunpack.c.l.b16 %v5062
  %v6484 = vunpack.c.h.b16 %v5062
  %v6485 = vunpack.c.l.b16 %v5063
  %v6486 = vunpack.c.h.b16 %v5063
  %v6487 = vunpack.c.l.b16 %v5064
  %v6488 = vunpack.c.h.b16 %v5064
  %v6489 = vunpack.c.l.b16 %v5065
  %v6490 = vunpack.c.h.b16 %v5065
  %v6491 = vunpack.c.l.b16 %v5066
  %v6492 = vunpack.c.h.b16 %v5066
  %v6493 = vunpack.c.l.b16 %v5067
  %v6494 = vunpack.c.h.b16 %v5067
  %v6495 = vunpack.c.l.b16 %v5068
  %v6496 = vunpack.c.h.b16 %v5068
  %v6497 = vunpack.c.l.b16 %v5069
  %v6498 = vunpack.c.h.b16 %v5069
  %v6499 = vunpack.c.l.b16 %v5070
  %v6500 = vunpack.c.h.b16 %v5070
  %v6501 = vunpack.c.l.b16 %v5071
  %v6502 = vunpack.c.h.b16 %v5071
  %v6503 = vunpack.c.l.b16 %v5072
  %v6504 = vunpack.c.h.b16 %v5072
  %v6505 = vunpack.c.l.b16 %v5073
  %v6506 = vunpack.c.h.b16 %v5073
  %v6507 = vunpack.c.l.b16 %v5074
  %v6508 = vunpack.c.h.b16 %v5074
  %v6509 = vunpack.c.l.b16 %v5075
  %v6510 = vunpack.c.h.b16 %v5075
  %v6511 = vunpack.c.l.b16 %v5076
  %v6512 = vunpack.c.h.b16 %v5076
  %v6513 = vunpack.c.l.b16 %v5077
  %v6514 = vunpack.c.h.b16 %v5077
  %v6515 = vunpack.c.l.b16 %v5078
  %v6516 = vunpack.c.h.b16 %v5078
  %v6517 = vunpack.c.l.b16 %v5079
  %v6518 = vunpack.c.h.b16 %v5079
  %v6519 = vunpack.c.l.b16 %v5080
  %v6520 = vunpack.c.h.b16 %v5080
  %v6521 = vunpack.c.l.b16 %v5081
  %v6522 = vunpack.c.h.b16 %v5081
  %v6523 = vunpack.c.l.b16 %v5082
  %v6524 = vunpack.c.h.b16 %v5082
  %v6525 = vunpack.c.l.b16 %v5083
  %v6526 = vunpack.c.h.b16 %v5083
  %v6527 = vunpack.c.l.b16 %v5084
  %v6528 = vunpack.c.h.b16 %v5084
  %v6529 = vunpack.c.l.b16 %v5085
  %v6530 = vunpack.c.h.b16 %v5085
  %v6531 = vunpack.c.l.b16 %v5086
  %v6532 = vunpack.c.h.b16 %v5086
  %v6533 = vunpack.c.l.b16 %v5087
  %v6534 = vunpack.c.h.b16 %v5087
  %v6535 = vunpack.c.l.b16 %v5088
  %v6536 = vunpack.c.h.b16 %v5088
  %v6537 = vunpack.c.l.b16 %v5089
  %v6538 = vunpack.c.h.b16 %v5089
  %v6539 = vunpack.c.l.b16 %v5090
  %v6540 = vunpack.c.h.b16 %v5090
  %v6541 = vunpack.c.l.b16 %v5091
  %v6542 = vunpack.c.h.b16 %v5091
  %v6543 = vunpack.c.l.b16 %v5092
  %v6544 = vunpack.c.h.b16 %v5092
  %v6545 = vunpack.c.l.b16 %v5093
  %v6546 = vunpack.c.h.b16 %v5093
  %v6547 = vunpack.c.l.b16 %v5094
  %v6548 = vunpack.c.h.b16 %v5094
  %v6549 = vunpack.c.l.b16 %v5095
  %v6550 = vunpack.c.h.b16 %v5095
  %v6551 = vunpack.c.l.b16 %v5096
  %v6552 = vunpack.c.h.b16 %v5096
  %v6553 = vunpack.c.l.b16 %v5097
  %v6554 = vunpack.c.h.b16 %v5097
  %v6555 = vunpack.c.l.b16 %v5098
  %v6556 = vunpack.c.h.b16 %v5098
  %v6557 = vunpack.c.l.b16 %v5099
  %v6558 = vunpack.c.h.b16 %v5099
  %v6559 = vunpack.c.l.b16 %v5100
  %v6560 = vunpack.c.h.b16 %v5100
  %v6561 = vunpack.c.l.b16 %v5101
  %v6562 = vunpack.c.h.b16 %v5101
  %v6563 = vunpack.c.l.b16 %v5102
  %v6564 = vunpack.c.h.b16 %v5102
  %v6565 = vunpack.c.l.b16 %v5103
  %v6566 = vunpack.c.h.b16 %v5103
  %v6567 = vunpack.c.l.b16 %v5104
  %v6568 = vunpack.c.h.b16 %v5104
  %v6569 = vunpack.c.l.b16 %v5105
  %v6570 = vunpack.c.h.b16 %v5105
  %v6571 = vunpack.c.l.b16 %v5106
  %v6572 = vunpack.c.h.b16 %v5106
  %v6573 = vunpack.c.l.b16 %v5107
  %v6574 = vunpack.c.h.b16 %v5107
  %v6575 = vunpack.c.l.b16 %v5108
  %v6576 = vunpack.c.h.b16 %v5108
  %v6577 = vunpack.c.l.b16 %v5109
  %v6578 = vunpack.c.h.b16 %v5109
  %v6579 = vunpack.c.l.b16 %v5110
  %v6580 = vunpack.c.h.b16 %v5110
  %v6581 = vunpack.c.l.b16 %v5111
  %v6582 = vunpack.c.h.b16 %v5111
  %v6583 = vunpack.c.l.b16 %v5112
  %v6584 = vunpack.c.h.b16 %v5112
  %v6585 = vunpack.c.l.b16 %v5113
  %v6586 = vunpack.c.h.b16 %v5113
  %v6587 = vunpack.c.l.b16 %v5114
  %v6588 = vunpack.c.h.b16 %v5114
  %v6589 = vunpack.c.l.b16 %v5115
  %v6590 = vunpack.c.h.b16 %v5115
  %v6591 = vunpack.c.l.b16 %v5116
  %v6592 = vunpack.c.h.b16 %v5116
  %v6593 = vunpack.c.l.b16 %v5117
  %v6594 = vunpack.c.h.b16 %v5117
  %v6595 = vunpack.c.l.b16 %v5118
  %v6596 = vunpack.c.h.b16 %v5118
  %v6597 = vunpack.c.l.b16 %v5119
  %v6598 = vunpack.c.h.b16 %v5119
  %v6599 = vunpack.c.l.b16 %v5120
  %v6600 = vunpack.c.h.b16 %v5120
  %v6601 = vunpack.c.l.b16 %v5121
  %v6602 = vunpack.c.h.b16 %v5121
  %v6603 = vunpack.c.l.b16 %v5122
  %v6604 = vunpack.c.h.b16 %v5122
  %v6605 = vunpack.c.l.b16 %v5123
  %v6606 = vunpack.c.h.b16 %v5123
  %v6607 = vunpack.c.l.b16 %v5124
  %v6608 = vunpack.c.h.b16 %v5124
  %v6609 = vunpack.c.l.b16 %v5125
  %v6610 = vunpack.c.h.b16 %v5125
  %v6611 = vunpack.c.l.b16 %v5126
  %v6612 = vunpack.c.h.b16 %v5126
  %v6613 = vunpack.c.l.b16 %v5127
  %v6614 = vunpack.c.h.b16 %v5127
  %v6615 = vunpack.c.l.b16 %v5128
  %v6616 = vunpack.c.h.b16 %v5128
  %v6617 = vunpack.c.l.b16 %v5129
  %v6618 = vunpack.c.h.b16 %v5129
  %v6619 = vunpack.c.l.b16 %v5130
  %v6620 = vunpack.c.h.b16 %v5130
  %v6621 = vunpack.c.l.b16 %v5131
  %v6622 = vunpack.c.h.b16 %v5131
  %v6623 = vunpack.c.l.b16 %v5132
  %v6624 = vunpack.c.h.b16 %v5132
  %v6625 = vunpack.c.l.b16 %v5133
  %v6626 = vunpack.c.h.b16 %v5133
  %v6627 = vunpack.c.l.b16 %v5134
  %v6628 = vunpack.c.h.b16 %v5134
  %v6629 = vunpack.c.l.b16 %v5135
  %v6630 = vunpack.c.h.b16 %v5135
  %v6631 = vunpack.c.l.b16 %v5136
  %v6632 = vunpack.c.h.b16 %v5136
  %v6633 = vunpack.c.l.b16 %v5137
  %v6634 = vunpack.c.h.b16 %v5137
  %v6635 = vunpack.c.l.b16 %v5138
  %v6636 = vunpack.c.h.b16 %v5138
  %v6637 = vunpack.c.l.b16 %v5139
  %v6638 = vunpack.c.h.b16 %v5139
  %v6639 = vunpack.c.l.b16 %v5140
  %v6640 = vunpack.c.h.b16 %v5140
  %v6641 = vunpack.c.l.b16 %v5141
  %v6642 = vunpack.c.h.b16 %v5141
  %v6643 = vunpack.c.l.b16 %v5142
  %v6644 = vunpack.c.h.b16 %v5142
  %v6645 = vunpack.c.l.b16 %v5143
  %v6646 = vunpack.c.h.b16 %v5143
  %v6647 = vunpack.c.l.b16 %v5144
  %v6648 = vunpack.c.h.b16 %v5144
  %v6649 = vunpack.c.l.b16 %v5145
  %v6650 = vunpack.c.h.b16 %v5145
  %v6651 = vunpack.c.l.b16 %v5146
  %v6652 = vunpack.c.h.b16 %v5146
  %v6653 = vunpack.c.l.b16 %v5147
  %v6654 = vunpack.c.h.b16 %v5147
  %v6655 = vunpack.c.l.b16 %v5148
  %v6656 = vunpack.c.h.b16 %v5148
  %v6657 = vunpack.c.l.b16 %v5149
  %v6658 = vunpack.c.h.b16 %v5149
  %v6659 = vunpack.c.l.b16 %v5150
  %v6660 = vunpack.c.h.b16 %v5150
  %v6661 = vunpack.c.l.b16 %v5151
  %v6662 = vunpack.c.h.b16 %v5151
  %v6663 = vunpack.c.l.b16 %v5152
  %v6664 = vunpack.c.h.b16 %v5152
  %v6665 = vunpack.c.l.b16 %v5153
  %v6666 = vunpack.c.h.b16 %v5153
  %v6667 = vunpack.c.l.b16 %v5154
  %v6668 = vunpack.c.h.b16 %v5154
  %v6669 = vunpack.c.l.b16 %v5155
  %v6670 = vunpack.c.h.b16 %v5155
  %v6671 = vunpack.c.l.b16 %v5156
  %v6672 = vunpack.c.h.b16 %v5156
  %v6673 = vunpack.c.l.b16 %v5157
  %v6674 = vunpack.c.h.b16 %v5157
  %v6675 = vunpack.c.l.b16 %v5158
  %v6676 = vunpack.c.h.b16 %v5158
  %v6677 = vunpack.c.l.b16 %v5159
  %v6678 = vunpack.c.h.b16 %v5159
  %v6679 = vunpack.c.l.b16 %v5160
  %v6680 = vunpack.c.h.b16 %v5160
  %v6681 = vunpack.c.l.b16 %v5161
  %v6682 = vunpack.c.h.b16 %v5161
  %v6683 = vunpack.c.l.b16 %v5162
  %v6684 = vunpack.c.h.b16 %v5162
  %v6685 = vunpack.c.l.b16 %v5163
  %v6686 = vunpack.c.h.b16 %v5163
  %v6687 = vunpack.c.l.b16 %v5164
  %v6688 = vunpack.c.h.b16 %v5164
  %v6689 = vunpack.c.l.b16 %v5165
  %v6690 = vunpack.c.h.b16 %v5165
  %v6691 = vunpack.c.l.b16 %v5166
  %v6692 = vunpack.c.h.b16 %v5166
  %v6693 = vunpack.c.l.b16 %v5167
  %v6694 = vunpack.c.h.b16 %v5167
  %v6695 = vunpack.c.l.b16 %v5168
  %v6696 = vunpack.c.h.b16 %v5168
  %v6697 = vunpack.c.l.b16 %v5169
  %v6698 = vunpack.c.h.b16 %v5169
  %v6699 = vunpack.c.l.b16 %v5170
  %v6700 = vunpack.c.h.b16 %v5170
  %v6701 = vunpack.c.l.b16 %v5171
  %v6702 = vunpack.c.h.b16 %v5171
  %v6703 = vunpack.c.l.b16 %v5172
  %v6704 = vunpack.c.h.b16 %v5172
  %v6705 = vunpack.c.l.b16 %v5173
  %v6706 = vunpack.c.h.b16 %v5173
  %v6707 = vunpack.c.l.b16 %v5174
  %v6708 = vunpack.c.h.b16 %v5174
  %v6709 = vunpack.c.l.b16 %v5175
  %v6710 = vunpack.c.h.b16 %v5175
  %v6711 = vunpack.c.l.b16 %v5176
  %v6712 = vunpack.c.h.b16 %v5176
  %v6713 = vpack.c.b16 %v5705, %v5689
  %v6714 = vpack.c.b16 %v5706, %v5690
  %v6715 = vpack.c.b16 %v5707, %v5691
  %v6716 = vpack.c.b16 %v5708, %v5692
  %v6717 = vpack.c.b16 %v5709, %v5693
  %v6718 = vpack.c.b16 %v5710, %v5694
  %v6719 = vpack.c.b16 %v5711, %v5695
  %v6720 = vpack.c.b16 %v5712, %v5696
  %v6721 = vpack.c.b16 %v5713, %v5697
  %v6722 = vpack.c.b16 %v5714, %v5698
  %v6723 = vpack.c.b16 %v5715, %v5699
  %v6724 = vpack.c.b16 %v5716, %v5700
  %v6725 = vpack.c.b16 %v5717, %v5701
  %v6726 = vpack.c.b16 %v5718, %v5702
  %v6727 = vpack.c.b16 %v5719, %v5703
  %v6728 = vpack.c.b16 %v5720, %v5704
  %v6729 = vpack.c.b16 %v5737, %v5721
  %v6730 = vpack.c.b16 %v5738, %v5722
  %v6731 = vpack.c.b16 %v5739, %v5723
  %v6732 = vpack.c.b16 %v5740, %v5724
  %v6733 = vpack.c.b16 %v5741, %v5725
  %v6734 = vpack.c.b16 %v5742, %v5726
  %v6735 = vpack.c.b16 %v5743, %v5727
  %v6736 = vpack.c.b16 %v5744, %v5728
  %v6737 = vpack.c.b16 %v5745, %v5729
  %v6738 = vpack.c.b16 %v5746, %v5730
  %v6739 = vpack.c.b16 %v5747, %v5731
  %v6740 = vpack.c.b16 %v5748, %v5732
  %v6741 = vpack.c.b16 %v5749, %v5733
  %v6742 = vpack.c.b16 %v5750, %v5734
  %v6743 = vpack.c.b16 %v5751, %v5735
  %v6744 = vpack.c.b16 %v5752, %v5736
  %v6745 = vpack.c.b16 %v5769, %v5753
  %v6746 = vpack.c.b16 %v5770, %v5754
  %v6747 = vpack.c.b16 %v5771, %v5755
  %v6748 = vpack.c.b16 %v5772, %v5756
  %v6749 = vpack.c.b16 %v5773, %v5757
  %v6750 = vpack.c.b16 %v5774, %v5758
  %v6751 = vpack.c.b16 %v5775, %v5759
  %v6752 = vpack.c.b16 %v5776, %v5760
  %v6753 = vpack.c.b16 %v5777, %v5761
  %v6754 = vpack.c.b16 %v5778, %v5762
  %v6755 = vpack.c.b16 %v5779, %v5763
  %v6756 = vpack.c.b16 %v5780, %v5764
  %v6757 = vpack.c.b16 %v5781, %v5765
  %v6758 = vpack.c.b16 %v5782, %v5766
  %v6759 = vpack.c.b16 %v5783, %v5767
  %v6760 = vpack.c.b16 %v5784, %v5768
  %v6761 = vpack.c.b16 %v5801, %v5785
  %v6762 = vpack.c.b16 %v5802, %v5786
  %v6763 = vpack.c.b16 %v5803, %v5787
  %v6764 = vpack.c.b16 %v5804, %v5788
  %v6765 = vpack.c.b16 %v5805, %v5789
  %v6766 = vpack.c.b16 %v5806, %v5790
  %v6767 = vpack.c.b16 %v5807, %v5791
  %v6768 = vpack.c.b16 %v5808, %v5792
  %v6769 = vpack.c.b16 %v5809, %v5793
  %v6770 = vpack.c.b16 %v5810, %v5794
  %v6771 = vpack.c.b16 %v5811, %v5795
  %v6772 = vpack.c.b16 %v5812, %v5796
  %v6773 = vpack.c.b16 %v5813, %v5797
  %v6774 = vpack.c.b16 %v5814, %v5798
  %v6775 = vpack.c.b16 %v5815, %v5799
  %v6776 = vpack.c.b16 %v5816, %v5800
  %v6777 = vpack.c.b16 %v5833, %v5817
  %v6778 = vpack.c.b16 %v5834, %v5818
  %v6779 = vpack.c.b16 %v5835, %v5819
  %v6780 = vpack.c.b16 %v5836, %v5820
  %v6781 = vpack.c.b16 %v5837, %v5821
  %v6782 = vpack.c.b16 %v5838, %v5822
  %v6783 = vpack.c.b16 %v5839, %v5823
  %v6784 = vpack.c.b16 %v5840, %v5824
  %v6785 = vpack.c.b16 %v5841, %v5825
  %v6786 = vpack.c.b16 %v5842, %v5826
  %v6787 = vpack.c.b16 %v5843, %v5827
  %v6788 = vpack.c.b16 %v5844, %v5828
  %v6789 = vpack.c.b16 %v5845, %v5829
  %v6790 = vpack.c.b16 %v5846, %v5830
  %v6791 = vpack.c.b16 %v5847, %v5831
  %v6792 = vpack.c.b16 %v5848, %v5832
  %v6793 = vpack.c.b16 %v5865, %v5849
  %v6794 = vpack.c.b16 %v5866, %v5850
  %v6795 = vpack.c.b16 %v5867, %v5851
  %v6796 = vpack.c.b16 %v5868, %v5852
  %v6797 = vpack.c.b16 %v5869, %v5853
  %v6798 = vpack.c.b16 %v5870, %v5854
  %v6799 = vpack.c.b16 %v5871, %v5855
  %v6800 = vpack.c.b16 %v5872, %v5856
  %v6801 = vpack.c.b16 %v5873, %v5857
  %v6802 = vpack.c.b16 %v5874, %v5858
  %v6803 = vpack.c.b16 %v5875, %v5859
  %v6804 = vpack.c.b16 %v5876, %v5860
  %v6805 = vpack.c.b16 %v5877, %v5861
  %v6806 = vpack.c.b16 %v5878, %v5862
  %v6807 = vpack.c.b16 %v5879, %v5863
  %v6808 = vpack.c.b16 %v5880, %v5864
  %v6809 = vpack.c.b16 %v5897, %v5881
  %v6810 = vpack.c.b16 %v5898, %v5882
  %v6811 = vpack.c.b16 %v5899, %v5883
  %v6812 = vpack.c.b16 %v5900, %v5884
  %v6813 = vpack.c.b16 %v5901, %v5885
  %v6814 = vpack.c.b16 %v5902, %v5886
  %v6815 = vpack.c.b16 %v5903, %v5887
  %v6816 = vpack.c.b16 %v5904, %v5888
  %v6817 = vpack.c.b16 %v5905, %v5889
  %v6818 = vpack.c.b16 %v5906, %v5890
  %v6819 = vpack.c.b16 %v5907, %v5891
  %v6820 = vpack.c.b16 %v5908, %v5892
  %v6821 = vpack.c.b16 %v5909, %v5893
  %v6822 = vpack.c.b16 %v5910, %v5894
  %v6823 = vpack.c.b16 %v5911, %v5895
  %v6824 = vpack.c.b16 %v5912, %v5896
  %v6825 = vpack.c.b16 %v5929, %v5913
  %v6826 = vpack.c.b16 %v5930, %v5914
  %v6827 = vpack.c.b16 %v5931, %v5915
  %v6828 = vpack.c.b16 %v5932, %v5916
  %v6829 = vpack.c.b16 %v5933, %v5917
  %v6830 = vpack.c.b16 %v5934, %v5918
  %v6831 = vpack.c.b16 %v5935, %v5919
  %v6832 = vpack.c.b16 %v5936, %v5920
  %v6833 = vpack.c.b16 %v5937, %v5921
  %v6834 = vpack.c.b16 %v5938, %v5922
  %v6835 = vpack.c.b16 %v5939, %v5923
  %v6836 = vpack.c.b16 %v5940, %v5924
  %v6837 = vpack.c.b16 %v5941, %v5925
  %v6838 = vpack.c.b16 %v5942, %v5926
  %v6839 = vpack.c.b16 %v5943, %v5927
  %v6840 = vpack.c.b16 %v5944, %v5928
  %v6841 = vpack.c.b16 %v5961, %v5945
  %v6842 = vpack.c.b16 %v5962, %v5946
  %v6843 = vpack.c.b16 %v5963, %v5947
  %v6844 = vpack.c.b16 %v5964, %v5948
  %v6845 = vpack.c.b16 %v5965, %v5949
  %v6846 = vpack.c.b16 %v5966, %v5950
  %v6847 = vpack.c.b16 %v5967, %v5951
  %v6848 = vpack.c.b16 %v5968, %v5952
  %v6849 = vpack.c.b16 %v5969, %v5953
  %v6850 = vpack.c.b16 %v5970, %v5954
  %v6851 = vpack.c.b16 %v5971, %v5955
  %v6852 = vpack.c.b16 %v5972, %v5956
  %v6853 = vpack.c.b16 %v5973, %v5957
  %v6854 = vpack.c.b16 %v5974, %v5958
  %v6855 = vpack.c.b16 %v5975, %v5959
  %v6856 = vpack.c.b16 %v5976, %v5960
  %v6857 = vpack.c.b16 %v5993, %v5977
  %v6858 = vpack.c.b16 %v5994, %v5978
  %v6859 = vpack.c.b16 %v5995, %v5979
  %v6860 = vpack.c.b16 %v5996, %v5980
  %v6861 = vpack.c.b16 %v5997, %v5981
  %v6862 = vpack.c.b16 %v5998, %v5982
  %v6863 = vpack.c.b16 %v5999, %v5983
  %v6864 = vpack.c.b16 %v6000, %v5984
  %v6865 = vpack.c.b16 %v6001, %v5985
  %v6866 = vpack.c.b16 %v6002, %v5986
  %v6867 = vpack.c.b16 %v6003, %v5987
  %v6868 = vpack.c.b16 %v6004, %v5988
  %v6869 = vpack.c.b16 %v6005, %v5989
  %v6870 = vpack.c.b16 %v6006, %v5990
  %v6871 = vpack.c.b16 %v6007, %v5991
  %v6872 = vpack.c.b16 %v6008, %v5992
  %v6873 = vpack.c.b16 %v6025, %v6009
  %v6874 = vpack.c.b16 %v6026, %v6010
  %v6875 = vpack.c.b16 %v6027, %v6011
  %v6876 = vpack.c.b16 %v6028, %v6012
  %v6877 = vpack.c.b16 %v6029, %v6013
  %v6878 = vpack.c.b16 %v6030, %v6014
  %v6879 = vpack.c.b16 %v6031, %v6015
  %v6880 = vpack.c.b16 %v6032, %v6016
  %v6881 = vpack.c.b16 %v6033, %v6017
  %v6882 = vpack.c.b16 %v6034, %v6018
  %v6883 = vpack.c.b16 %v6035, %v6019
  %v6884 = vpack.c.b16 %v6036, %v6020
  %v6885 = vpack.c.b16 %v6037, %v6021
  %v6886 = vpack.c.b16 %v6038, %v6022
  %v6887 = vpack.c.b16 %v6039, %v6023
  %v6888 = vpack.c.b16 %v6040, %v6024
  %v6889 = vpack.c.b16 %v6057, %v6041
  %v6890 = vpack.c.b16 %v6058, %v6042
  %v6891 = vpack.c.b16 %v6059, %v6043
  %v6892 = vpack.c.b16 %v6060, %v6044
  %v6893 = vpack.c.b16 %v6061, %v6045
  %v6894 = vpack.c.b16 %v6062, %v6046
  %v6895 = vpack.c.b16 %v6063, %v6047
  %v6896 = vpack.c.b16 %v6064, %v6048
  %v6897 = vpack.c.b16 %v6065, %v6049
  %v6898 = vpack.c.b16 %v6066, %v6050
  %v6899 = vpack.c.b16 %v6067, %v6051
  %v6900 = vpack.c.b16 %v6068, %v6052
  %v6901 = vpack.c.b16 %v6069, %v6053
  %v6902 = vpack.c.b16 %v6070, %v6054
  %v6903 = vpack.c.b16 %v6071, %v6055
  %v6904 = vpack.c.b16 %v6072, %v6056
  %v6905 = vpack.c.b16 %v6089, %v6073
  %v6906 = vpack.c.b16 %v6090, %v6074
  %v6907 = vpack.c.b16 %v6091, %v6075
  %v6908 = vpack.c.b16 %v6092, %v6076
  %v6909 = vpack.c.b16 %v6093, %v6077
  %v6910 = vpack.c.b16 %v6094, %v6078
  %v6911 = vpack.c.b16 %v6095, %v6079
  %v6912 = vpack.c.b16 %v6096, %v6080
  %v6913 = vpack.c.b16 %v6097, %v6081
  %v6914 = vpack.c.b16 %v6098, %v6082
  %v6915 = vpack.c.b16 %v6099, %v6083
  %v6916 = vpack.c.b16 %v6100, %v6084
  %v6917 = vpack.c.b16 %v6101, %v6085
  %v6918 = vpack.c.b16 %v6102, %v6086
  %v6919 = vpack.c.b16 %v6103, %v6087
  %v6920 = vpack.c.b16 %v6104, %v6088
  %v6921 = vpack.c.b16 %v6121, %v6105
  %v6922 = vpack.c.b16 %v6122, %v6106
  %v6923 = vpack.c.b16 %v6123, %v6107
  %v6924 = vpack.c.b16 %v6124, %v6108
  %v6925 = vpack.c.b16 %v6125, %v6109
  %v6926 = vpack.c.b16 %v6126, %v6110
  %v6927 = vpack.c.b16 %v6127, %v6111
  %v6928 = vpack.c.b16 %v6128, %v6112
  %v6929 = vpack.c.b16 %v6129, %v6113
  %v6930 = vpack.c.b16 %v6130, %v6114
  %v6931 = vpack.c.b16 %v6131, %v6115
  %v6932 = vpack.c.b16 %v6132, %v6116
  %v6933 = vpack.c.b16 %v6133, %v6117
  %v6934 = vpack.c.b16 %v6134, %v6118
  %v6935 = vpack.c.b16 %v6135, %v6119
  %v6936 = vpack.c.b16 %v6136, %v6120
  %v6937 = vpack.c.b16 %v6153, %v6137
  %v6938 = vpack.c.b16 %v6154, %v6138
  %v6939 = vpack.c.b16 %v6155, %v6139
  %v6940 = vpack.c.b16 %v6156, %v6140
  %v6941 = vpack.c.b16 %v6157, %v6141
  %v6942 = vpack.c.b16 %v6158, %v6142
  %v6943 = vpack.c.b16 %v6159, %v6143
  %v6944 = vpack.c.b16 %v6160, %v6144
  %v6945 = vpack.c.b16 %v6161, %v6145
  %v6946 = vpack.c.b16 %v6162, %v6146
  %v6947 = vpack.c.b16 %v6163, %v6147
  %v6948 = vpack.c.b16 %v6164, %v6148
  %v6949 = vpack.c.b16 %v6165, %v6149
  %v6950 = vpack.c.b16 %v6166, %v6150
  %v6951 = vpack.c.b16 %v6167, %v6151
  %v6952 = vpack.c.b16 %v6168, %v6152
  %v6953 = vpack.c.b16 %v6185, %v6169
  %v6954 = vpack.c.b16 %v6186, %v6170
  %v6955 = vpack.c.b16 %v6187, %v6171
  %v6956 = vpack.c.b16 %v6188, %v6172
  %v6957 = vpack.c.b16 %v6189, %v6173
  %v6958 = vpack.c.b16 %v6190, %v6174
  %v6959 = vpack.c.b16 %v6191, %v6175
  %v6960 = vpack.c.b16 %v6192, %v6176
  %v6961 = vpack.c.b16 %v6193, %v6177
  %v6962 = vpack.c.b16 %v6194, %v6178
  %v6963 = vpack.c.b16 %v6195, %v6179
  %v6964 = vpack.c.b16 %v6196, %v6180
  %v6965 = vpack.c.b16 %v6197, %v6181
  %v6966 = vpack.c.b16 %v6198, %v6182
  %v6967 = vpack.c.b16 %v6199, %v6183
  %v6968 = vpack.c.b16 %v6200, %v6184
  %v6969 = vpack.c.b16 %v6217, %v6201
  %v6970 = vpack.c.b16 %v6218, %v6202
  %v6971 = vpack.c.b16 %v6219, %v6203
  %v6972 = vpack.c.b16 %v6220, %v6204
  %v6973 = vpack.c.b16 %v6221, %v6205
  %v6974 = vpack.c.b16 %v6222, %v6206
  %v6975 = vpack.c.b16 %v6223, %v6207
  %v6976 = vpack.c.b16 %v6224, %v6208
  %v6977 = vpack.c.b16 %v6225, %v6209
  %v6978 = vpack.c.b16 %v6226, %v6210
  %v6979 = vpack.c.b16 %v6227, %v6211
  %v6980 = vpack.c.b16 %v6228, %v6212
  %v6981 = vpack.c.b16 %v6229, %v6213
  %v6982 = vpack.c.b16 %v6230, %v6214
  %v6983 = vpack.c.b16 %v6231, %v6215
  %v6984 = vpack.c.b16 %v6232, %v6216
  %v6985 = vpack.c.b16 %v6249, %v6233
  %v6986 = vpack.c.b16 %v6250, %v6234
  %v6987 = vpack.c.b16 %v6251, %v6235
  %v6988 = vpack.c.b16 %v6252, %v6236
  %v6989 = vpack.c.b16 %v6253, %v6237
  %v6990 = vpack.c.b16 %v6254, %v6238
  %v6991 = vpack.c.b16 %v6255, %v6239
  %v6992 = vpack.c.b16 %v6256, %v6240
  %v6993 = vpack.c.b16 %v6257, %v6241
  %v6994 = vpack.c.b16 %v6258, %v6242
  %v6995 = vpack.c.b16 %v6259, %v6243
  %v6996 = vpack.c.b16 %v6260, %v6244
  %v6997 = vpack.c.b16 %v6261, %v6245
  %v6998 = vpack.c.b16 %v6262, %v6246
  %v6999 = vpack.c.b16 %v6263, %v6247
  %v7000 = vpack.c.b16 %v6264, %v6248
  %v7001 = vpack.c.b16 %v6281, %v6265
  %v7002 = vpack.c.b16 %v6282, %v6266
  %v7003 = vpack.c.b16 %v6283, %v6267
  %v7004 = vpack.c.b16 %v6284, %v6268
  %v7005 = vpack.c.b16 %v6285, %v6269
  %v7006 = vpack.c.b16 %v6286, %v6270
  %v7007 = vpack.c.b16 %v6287, %v6271
  %v7008 = vpack.c.b16 %v6288, %v6272
  %v7009 = vpack.c.b16 %v6289, %v6273
  %v7010 = vpack.c.b16 %v6290, %v6274
  %v7011 = vpack.c.b16 %v6291, %v6275
  %v7012 = vpack.c.b16 %v6292, %v6276
  %v7013 = vpack.c.b16 %v6293, %v6277
  %v7014 = vpack.c.b16 %v6294, %v6278
  %v7015 = vpack.c.b16 %v6295, %v6279
  %v7016 = vpack.c.b16 %v6296, %v6280
  %v7017 = vpack.c.b16 %v6313, %v6297
  %v7018 = vpack.c.b16 %v6314, %v6298
  %v7019 = vpack.c.b16 %v6315, %v6299
  %v7020 = vpack.c.b16 %v6316, %v6300
  %v7021 = vpack.c.b16 %v6317, %v6301
  %v7022 = vpack.c.b16 %v6318, %v6302
  %v7023 = vpack.c.b16 %v6319, %v6303
  %v7024 = vpack.c.b16 %v6320, %v6304
  %v7025 = vpack.c.b16 %v6321, %v6305
  %v7026 = vpack.c.b16 %v6322, %v6306
  %v7027 = vpack.c.b16 %v6323, %v6307
  %v7028 = vpack.c.b16 %v6324, %v6308
  %v7029 = vpack.c.b16 %v6325, %v6309
  %v7030 = vpack.c.b16 %v6326, %v6310
  %v7031 = vpack.c.b16 %v6327, %v6311
  %v7032 = vpack.c.b16 %v6328, %v6312
  %v7033 = vpack.c.b16 %v6345, %v6329
  %v7034 = vpack.c.b16 %v6346, %v6330
  %v7035 = vpack.c.b16 %v6347, %v6331
  %v7036 = vpack.c.b16 %v6348, %v6332
  %v7037 = vpack.c.b16 %v6349, %v6333
  %v7038 = vpack.c.b16 %v6350, %v6334
  %v7039 = vpack.c.b16 %v6351, %v6335
  %v7040 = vpack.c.b16 %v6352, %v6336
  %v7041 = vpack.c.b16 %v6353, %v6337
  %v7042 = vpack.c.b16 %v6354, %v6338
  %v7043 = vpack.c.b16 %v6355, %v6339
  %v7044 = vpack.c.b16 %v6356, %v6340
  %v7045 = vpack.c.b16 %v6357, %v6341
  %v7046 = vpack.c.b16 %v6358, %v6342
  %v7047 = vpack.c.b16 %v6359, %v6343
  %v7048 = vpack.c.b16 %v6360, %v6344
  %v7049 = vpack.c.b16 %v6377, %v6361
  %v7050 = vpack.c.b16 %v6378, %v6362
  %v7051 = vpack.c.b16 %v6379, %v6363
  %v7052 = vpack.c.b16 %v6380, %v6364
  %v7053 = vpack.c.b16 %v6381, %v6365
  %v7054 = vpack.c.b16 %v6382, %v6366
  %v7055 = vpack.c.b16 %v6383, %v6367
  %v7056 = vpack.c.b16 %v6384, %v6368
  %v7057 = vpack.c.b16 %v6385, %v6369
  %v7058 = vpack.c.b16 %v6386, %v6370
  %v7059 = vpack.c.b16 %v6387, %v6371
  %v7060 = vpack.c.b16 %v6388, %v6372
  %v7061 = vpack.c.b16 %v6389, %v6373
  %v7062 = vpack.c.b16 %v6390, %v6374
  %v7063 = vpack.c.b16 %v6391, %v6375
  %v7064 = vpack.c.b16 %v6392, %v6376
  %v7065 = vpack.c.b16 %v6409, %v6393
  %v7066 = vpack.c.b16 %v6410, %v6394
  %v7067 = vpack.c.b16 %v6411, %v6395
  %v7068 = vpack.c.b16 %v6412, %v6396
  %v7069 = vpack.c.b16 %v6413, %v6397
  %v7070 = vpack.c.b16 %v6414, %v6398
  %v7071 = vpack.c.b16 %v6415, %v6399
  %v7072 = vpack.c.b16 %v6416, %v6400
  %v7073 = vpack.c.b16 %v6417, %v6401
  %v7074 = vpack.c.b16 %v6418, %v6402
  %v7075 = vpack.c.b16 %v6419, %v6403
  %v7076 = vpack.c.b16 %v6420, %v6404
  %v7077 = vpack.c.b16 %v6421, %v6405
  %v7078 = vpack.c.b16 %v6422, %v6406
  %v7079 = vpack.c.b16 %v6423, %v6407
  %v7080 = vpack.c.b16 %v6424, %v6408
  %v7081 = vpack.c.b16 %v6441, %v6425
  %v7082 = vpack.c.b16 %v6442, %v6426
  %v7083 = vpack.c.b16 %v6443, %v6427
  %v7084 = vpack.c.b16 %v6444, %v6428
  %v7085 = vpack.c.b16 %v6445, %v6429
  %v7086 = vpack.c.b16 %v6446, %v6430
  %v7087 = vpack.c.b16 %v6447, %v6431
  %v7088 = vpack.c.b16 %v6448, %v6432
  %v7089 = vpack.c.b16 %v6449, %v6433
  %v7090 = vpack.c.b16 %v6450, %v6434
  %v7091 = vpack.c.b16 %v6451, %v6435
  %v7092 = vpack.c.b16 %v6452, %v6436
  %v7093 = vpack.c.b16 %v6453, %v6437
  %v7094 = vpack.c.b16 %v6454, %v6438
  %v7095 = vpack.c.b16 %v6455, %v6439
  %v7096 = vpack.c.b16 %v6456, %v6440
  %v7097 = vpack.c.b16 %v6473, %v6457
  %v7098 = vpack.c.b16 %v6474, %v6458
  %v7099 = vpack.c.b16 %v6475, %v6459
  %v7100 = vpack.c.b16 %v6476, %v6460
  %v7101 = vpack.c.b16 %v6477, %v6461
  %v7102 = vpack.c.b16 %v6478, %v6462
  %v7103 = vpack.c.b16 %v6479, %v6463
  %v7104 = vpack.c.b16 %v6480, %v6464
  %v7105 = vpack.c.b16 %v6481, %v6465
  %v7106 = vpack.c.b16 %v6482, %v6466
  %v7107 = vpack.c.b16 %v6483, %v6467
  %v7108 = vpack.c.b16 %v6484, %v6468
  %v7109 = vpack.c.b16 %v6485, %v6469
  %v7110 = vpack.c.b16 %v6486, %v6470
  %v7111 = vpack.c.b16 %v6487, %v6471
  %v7112 = vpack.c.b16 %v6488, %v6472
  %v7113 = vpack.c.b16 %v6505, %v6489
  %v7114 = vpack.c.b16 %v6506, %v6490
  %v7115 = vpack.c.b16 %v6507, %v6491
  %v7116 = vpack.c.b16 %v6508, %v6492
  %v7117 = vpack.c.b16 %v6509, %v6493
  %v7118 = vpack.c.b16 %v6510, %v6494
  %v7119 = vpack.c.b16 %v6511, %v6495
  %v7120 = vpack.c.b16 %v6512, %v6496
  %v7121 = vpack.c.b16 %v6513, %v6497
  %v7122 = vpack.c.b16 %v6514, %v6498
  %v7123 = vpack.c.b16 %v6515, %v6499
  %v7124 = vpack.c.b16 %v6516, %v6500
  %v7125 = vpack.c.b16 %v6517, %v6501
  %v7126 = vpack.c.b16 %v6518, %v6502
  %v7127 = vpack.c.b16 %v6519, %v6503
  %v7128 = vpack.c.b16 %v6520, %v6504
  %v7129 = vpack.c.b16 %v6537, %v6521
  %v7130 = vpack.c.b16 %v6538, %v6522
  %v7131 = vpack.c.b16 %v6539, %v6523
  %v7132 = vpack.c.b16 %v6540, %v6524
  %v7133 = vpack.c.b16 %v6541, %v6525
  %v7134 = vpack.c.b16 %v6542, %v6526
  %v7135 = vpack.c.b16 %v6543, %v6527
  %v7136 = vpack.c.b16 %v6544, %v6528
  %v7137 = vpack.c.b16 %v6545, %v6529
  %v7138 = vpack.c.b16 %v6546, %v6530
  %v7139 = vpack.c.b16 %v6547, %v6531
  %v7140 = vpack.c.b16 %v6548, %v6532
  %v7141 = vpack.c.b16 %v6549, %v6533
  %v7142 = vpack.c.b16 %v6550, %v6534
  %v7143 = vpack.c.b16 %v6551, %v6535
  %v7144 = vpack.c.b16 %v6552, %v6536
  %v7145 = vpack.c.b16 %v6569, %v6553
  %v7146 = vpack.c.b16 %v6570, %v6554
  %v7147 = vpack.c.b16 %v6571, %v6555
  %v7148 = vpack.c.b16 %v6572, %v6556
  %v7149 = vpack.c.b16 %v6573, %v6557
  %v7150 = vpack.c.b16 %v6574, %v6558
  %v7151 = vpack.c.b16 %v6575, %v6559
  %v7152 = vpack.c.b16 %v6576, %v6560
  %v7153 = vpack.c.b16 %v6577, %v6561
  %v7154 = vpack.c.b16 %v6578, %v6562
  %v7155 = vpack.c.b16 %v6579, %v6563
  %v7156 = vpack.c.b16 %v6580, %v6564
  %v7157 = vpack.c.b16 %v6581, %v6565
  %v7158 = vpack.c.b16 %v6582, %v6566
  %v7159 = vpack.c.b16 %v6583, %v6567
  %v7160 = vpack.c.b16 %v6584, %v6568
  %v7161 = vpack.c.b16 %v6601, %v6585
  %v7162 = vpack.c.b16 %v6602, %v6586
  %v7163 = vpack.c.b16 %v6603, %v6587
  %v7164 = vpack.c.b16 %v6604, %v6588
  %v7165 = vpack.c.b16 %v6605, %v6589
  %v7166 = vpack.c.b16 %v6606, %v6590
  %v7167 = vpack.c.b16 %v6607, %v6591
  %v7168 = vpack.c.b16 %v6608, %v6592
  %v7169 = vpack.c.b16 %v6609, %v6593
  %v7170 = vpack.c.b16 %v6610, %v6594
  %v7171 = vpack.c.b16 %v6611, %v6595
  %v7172 = vpack.c.b16 %v6612, %v6596
  %v7173 = vpack.c.b16 %v6613, %v6597
  %v7174 = vpack.c.b16 %v6614, %v6598
  %v7175 = vpack.c.b16 %v6615, %v6599
  %v7176 = vpack.c.b16 %v6616, %v6600
  %v7177 = vpack.c.b16 %v6633, %v6617
  %v7178 = vpack.c.b16 %v6634, %v6618
  %v7179 = vpack.c.b16 %v6635, %v6619
  %v7180 = vpack.c.b16 %v6636, %v6620
  %v7181 = vpack.c.b16 %v6637, %v6621
  %v7182 = vpack.c.b16 %v6638, %v6622
  %v7183 = vpack.c.b16 %v6639, %v6623
  %v7184 = vpack.c.b16 %v6640, %v6624
  %v7185 = vpack.c.b16 %v6641, %v6625
  %v7186 = vpack.c.b16 %v6642, %v6626
  %v7187 = vpack.c.b16 %v6643, %v6627
  %v7188 = vpack.c.b16 %v6644, %v6628
  %v7189 = vpack.c.b16 %v6645, %v6629
  %v7190 = vpack.c.b16 %v6646, %v6630
  %v7191 = vpack.c.b16 %v6647, %v6631
  %v7192 = vpack.c.b16 %v6648, %v6632
  %v7193 = vpack.c.b16 %v6665, %v6649
  %v7194 = vpack.c.b16 %v6666, %v6650
  %v7195 = vpack.c.b16 %v6667, %v6651
  %v7196 = vpack.c.b16 %v6668, %v6652
  %v7197 = vpack.c.b16 %v6669, %v6653
  %v7198 = vpack.c.b16 %v6670, %v6654
  %v7199 = vpack.c.b16 %v6671, %v6655
  %v7200 = vpack.c.b16 %v6672, %v6656
  %v7201 = vpack.c.b16 %v6673, %v6657
  %v7202 = vpack.c.b16 %v6674, %v6658
  %v7203 = vpack.c.b16 %v6675, %v6659
  %v7204 = vpack.c.b16 %v6676, %v6660
  %v7205 = vpack.c.b16 %v6677, %v6661
  %v7206 = vpack.c.b16 %v6678, %v6662
  %v7207 = vpack.c.b16 %v6679, %v6663
  %v7208 = vpack.c.b16 %v6680, %v6664
  %v7209 = vpack.c.b16 %v6697, %v6681
  %v7210 = vpack.c.b16 %v6698, %v6682
  %v7211 = vpack.c.b16 %v6699, %v6683
  %v7212 = vpack.c.b16 %v6700, %v6684
  %v7213 = vpack.c.b16 %v6701, %v6685
  %v7214 = vpack.c.b16 %v6702, %v6686
  %v7215 = vpack.c.b16 %v6703, %v6687
  %v7216 = vpack.c.b16 %v6704, %v6688
  %v7217 = vpack.c.b16 %v6705, %v6689
  %v7218 = vpack.c.b16 %v6706, %v6690
  %v7219 = vpack.c.b16 %v6707, %v6691
  %v7220 = vpack.c.b16 %v6708, %v6692
  %v7221 = vpack.c.b16 %v6709, %v6693
  %v7222 = vpack.c.b16 %v6710, %v6694
  %v7223 = vpack.c.b16 %v6711, %v6695
  %v7224 = vpack.c.b16 %v6712, %v6696
  %7737 = vmatprep.subr.bf16.mxu0 %v6714
  %7738 = vmatpush1.bf16.msra.mxu0 %v6713
  %7739 = vmatprep.subr.bf16.mxu0 %v6730
  %7740 = vmatpush1.bf16.msra.mxu0 %v6729
  %7741 = vmatprep.subr.bf16.mxu0 %v6746
  %7742 = vmatpush1.bf16.msra.mxu0 %v6745
  %7743 = vmatprep.subr.bf16.mxu0 %v6762
  %7744 = vmatpush1.bf16.msra.mxu0 %v6761
  %7745 = vmatprep.subr.bf16.mxu0 %v6778
  %7746 = vmatpush1.bf16.msra.mxu0 %v6777
  %7747 = vmatprep.subr.bf16.mxu0 %v6794
  %7748 = vmatpush1.bf16.msra.mxu0 %v6793
  %7749 = vmatprep.subr.bf16.mxu0 %v6810
  %7750 = vmatpush1.bf16.msra.mxu0 %v6809
  %7751 = vmatprep.subr.bf16.mxu0 %v6826
  %7752 = vmatpush1.bf16.msra.mxu0 %v6825
  %7753 = vmatprep.subr.bf16.mxu0 %v6842
  %7754 = vmatpush1.bf16.msra.mxu0 %v6841
  %7755 = vmatprep.subr.bf16.mxu0 %v6858
  %7756 = vmatpush1.bf16.msra.mxu0 %v6857
  %7757 = vmatprep.subr.bf16.mxu0 %v6874
  %7758 = vmatpush1.bf16.msra.mxu0 %v6873
  %7759 = vmatprep.subr.bf16.mxu0 %v6890
  %7760 = vmatpush1.bf16.msra.mxu0 %v6889
  %7761 = vmatprep.subr.bf16.mxu0 %v6906
  %7762 = vmatpush1.bf16.msra.mxu0 %v6905
  %7763 = vmatprep.subr.bf16.mxu0 %v6922
  %7764 = vmatpush1.bf16.msra.mxu0 %v6921
  %7765 = vmatprep.subr.bf16.mxu0 %v6938
  %7766 = vmatpush1.bf16.msra.mxu0 %v6937
  %7767 = vmatprep.subr.bf16.mxu0 %v6954
  %7768 = vmatpush1.bf16.msra.mxu0 %v6953
  %7769 = vmatprep.mubr.bf16.mxu0 %v4662
  %7770 = vmatmul.mubr.bf16.gmra.mrb[0].mxu0 %v4661
  %v7771 = vpop.f32.mrb[0].mxu0
  %v7772 = vadd.f32 0.0, %v7771
  %v7773 = vpop.f32.mrb[0].mxu0
  %v7774 = vadd.f32 0.0, %v7773
  %v7775 = vpop.f32.mrb[0].mxu0
  %v7776 = vadd.f32 0.0, %v7775
  %v7777 = vpop.f32.mrb[0].mxu0
  %v7778 = vadd.f32 0.0, %v7777
  %7779 = vdwg.mxu0
  %7780 = vmatprep.subr.bf16.mxu0 %v6970
  %7781 = vmatpush1.bf16.msra.mxu0 %v6969
  %7782 = vmatprep.subr.bf16.mxu0 %v6986
  %7783 = vmatpush1.bf16.msra.mxu0 %v6985
  %7784 = vmatprep.subr.bf16.mxu0 %v7002
  %7785 = vmatpush1.bf16.msra.mxu0 %v7001
  %7786 = vmatprep.subr.bf16.mxu0 %v7018
  %7787 = vmatpush1.bf16.msra.mxu0 %v7017
  %7788 = vmatprep.subr.bf16.mxu0 %v7034
  %7789 = vmatpush1.bf16.msra.mxu0 %v7033
  %7790 = vmatprep.subr.bf16.mxu0 %v7050
  %7791 = vmatpush1.bf16.msra.mxu0 %v7049
  %7792 = vmatprep.subr.bf16.mxu0 %v7066
  %7793 = vmatpush1.bf16.msra.mxu0 %v7065
  %7794 = vmatprep.subr.bf16.mxu0 %v7082
  %7795 = vmatpush1.bf16.msra.mxu0 %v7081
  %7796 = vmatprep.subr.bf16.mxu0 %v7098
  %7797 = vmatpush1.bf16.msra.mxu0 %v7097
  %7798 = vmatprep.subr.bf16.mxu0 %v7114
  %7799 = vmatpush1.bf16.msra.mxu0 %v7113
  %7800 = vmatprep.subr.bf16.mxu0 %v7130
  %7801 = vmatpush1.bf16.msra.mxu0 %v7129
  %7802 = vmatprep.subr.bf16.mxu0 %v7146
  %7803 = vmatpush1.bf16.msra.mxu0 %v7145
  %7804 = vmatprep.subr.bf16.mxu0 %v7162
  %7805 = vmatpush1.bf16.msra.mxu0 %v7161
  %7806 = vmatprep.subr.bf16.mxu0 %v7178
  %7807 = vmatpush1.bf16.msra.mxu0 %v7177
  %7808 = vmatprep.subr.bf16.mxu0 %v7194
  %7809 = vmatpush1.bf16.msra.mxu0 %v7193
  %7810 = vmatprep.subr.bf16.mxu0 %v7210
  %7811 = vmatpush1.bf16.msra.mxu0 %v7209
  %7812 = vmatprep.mubr.bf16.mxu0 %v4664
  %7813 = vmatmul.mubr.bf16.gmra.mrb[0].mxu0 %v4663
  %v7814 = vpop.f32.mrb[0].mxu0
  %v7815 = vadd.f32 %v7772, %v7814
  %v7816 = vpop.f32.mrb[0].mxu0
  %v7817 = vadd.f32 %v7774, %v7816
  %v7818 = vpop.f32.mrb[0].mxu0
  %v7819 = vadd.f32 %v7776, %v7818
  %v7820 = vpop.f32.mrb[0].mxu0
  %v7821 = vadd.f32 %v7778, %v7820
  %7822 = vdwg.mxu0
  %7823 = vmatprep.subr.bf16.mxu0 %v6716
  %7824 = vmatpush1.bf16.msra.mxu0 %v6715
  %7825 = vmatprep.subr.bf16.mxu0 %v6732
  %7826 = vmatpush1.bf16.msra.mxu0 %v6731
  %7827 = vmatprep.subr.bf16.mxu0 %v6748
  %7828 = vmatpush1.bf16.msra.mxu0 %v6747
  %7829 = vmatprep.subr.bf16.mxu0 %v6764
  %7830 = vmatpush1.bf16.msra.mxu0 %v6763
  %7831 = vmatprep.subr.bf16.mxu0 %v6780
  %7832 = vmatpush1.bf16.msra.mxu0 %v6779
  %7833 = vmatprep.subr.bf16.mxu0 %v6796
  %7834 = vmatpush1.bf16.msra.mxu0 %v6795
  %7835 = vmatprep.subr.bf16.mxu0 %v6812
  %7836 = vmatpush1.bf16.msra.mxu0 %v6811
  %7837 = vmatprep.subr.bf16.mxu0 %v6828
  %7838 = vmatpush1.bf16.msra.mxu0 %v6827
  %7839 = vmatprep.subr.bf16.mxu0 %v6844
  %7840 = vmatpush1.bf16.msra.mxu0 %v6843
  %7841 = vmatprep.subr.bf16.mxu0 %v6860
  %7842 = vmatpush1.bf16.msra.mxu0 %v6859
  %7843 = vmatprep.subr.bf16.mxu0 %v6876
  %7844 = vmatpush1.bf16.msra.mxu0 %v6875
  %7845 = vmatprep.subr.bf16.mxu0 %v6892
  %7846 = vmatpush1.bf16.msra.mxu0 %v6891
  %7847 = vmatprep.subr.bf16.mxu0 %v6908
  %7848 = vmatpush1.bf16.msra.mxu0 %v6907
  %7849 = vmatprep.subr.bf16.mxu0 %v6924
  %7850 = vmatpush1.bf16.msra.mxu0 %v6923
  %7851 = vmatprep.subr.bf16.mxu0 %v6940
  %7852 = vmatpush1.bf16.msra.mxu0 %v6939
  %7853 = vmatprep.subr.bf16.mxu0 %v6956
  %7854 = vmatpush1.bf16.msra.mxu0 %v6955
  %7855 = vmatprep.mubr.bf16.mxu0 %v4662
  %7856 = vmatmul.mubr.bf16.gmra.mrb[0].mxu0 %v4661
  %v7857 = vpop.f32.mrb[0].mxu0
  %v7858 = vadd.f32 0.0, %v7857
  %v7859 = vpop.f32.mrb[0].mxu0
  %v7860 = vadd.f32 0.0, %v7859
  %v7861 = vpop.f32.mrb[0].mxu0
  %v7862 = vadd.f32 0.0, %v7861
  %v7863 = vpop.f32.mrb[0].mxu0
  %v7864 = vadd.f32 0.0, %v7863
  %7865 = vdwg.mxu0
  %7866 = vmatprep.subr.bf16.mxu0 %v6972
  %7867 = vmatpush1.bf16.msra.mxu0 %v6971
  %7868 = vmatprep.subr.bf16.mxu0 %v6988
  %7869 = vmatpush1.bf16.msra.mxu0 %v6987
  %7870 = vmatprep.subr.bf16.mxu0 %v7004
  %7871 = vmatpush1.bf16.msra.mxu0 %v7003
  %7872 = vmatprep.subr.bf16.mxu0 %v7020
  %7873 = vmatpush1.bf16.msra.mxu0 %v7019
  %7874 = vmatprep.subr.bf16.mxu0 %v7036
  %7875 = vmatpush1.bf16.msra.mxu0 %v7035
  %7876 = vmatprep.subr.bf16.mxu0 %v7052
  %7877 = vmatpush1.bf16.msra.mxu0 %v7051
  %7878 = vmatprep.subr.bf16.mxu0 %v7068
  %7879 = vmatpush1.bf16.msra.mxu0 %v7067
  %7880 = vmatprep.subr.bf16.mxu0 %v7084
  %7881 = vmatpush1.bf16.msra.mxu0 %v7083
  %7882 = vmatprep.subr.bf16.mxu0 %v7100
  %7883 = vmatpush1.bf16.msra.mxu0 %v7099
  %7884 = vmatprep.subr.bf16.mxu0 %v7116
  %7885 = vmatpush1.bf16.msra.mxu0 %v7115
  %7886 = vmatprep.subr.bf16.mxu0 %v7132
  %7887 = vmatpush1.bf16.msra.mxu0 %v7131
  %7888 = vmatprep.subr.bf16.mxu0 %v7148
  %7889 = vmatpush1.bf16.msra.mxu0 %v7147
  %7890 = vmatprep.subr.bf16.mxu0 %v7164
  %7891 = vmatpush1.bf16.msra.mxu0 %v7163
  %7892 = vmatprep.subr.bf16.mxu0 %v7180
  %7893 = vmatpush1.bf16.msra.mxu0 %v7179
  %7894 = vmatprep.subr.bf16.mxu0 %v7196
  %7895 = vmatpush1.bf16.msra.mxu0 %v7195
  %7896 = vmatprep.subr.bf16.mxu0 %v7212
  %7897 = vmatpush1.bf16.msra.mxu0 %v7211
  %7898 = vmatprep.mubr.bf16.mxu0 %v4664
  %7899 = vmatmul.mubr.bf16.gmra.mrb[0].mxu0 %v4663
  %v7900 = vpop.f32.mrb[0].mxu0
  %v7901 = vadd.f32 %v7858, %v7900
  %v7902 = vpop.f32.mrb[0].mxu0
  %v7903 = vadd.f32 %v7860, %v7902
  %v7904 = vpop.f32.mrb[0].mxu0
  %v7905 = vadd.f32 %v7862, %v7904
  %v7906 = vpop.f32.mrb[0].mxu0
  %v7907 = vadd.f32 %v7864, %v7906
  %7908 = vdwg.mxu0
  %7909 = vmatprep.subr.bf16.mxu0 %v6718
  %7910 = vmatpush1.bf16.msra.mxu0 %v6717
  %7911 = vmatprep.subr.bf16.mxu0 %v6734
  %7912 = vmatpush1.bf16.msra.mxu0 %v6733
  %7913 = vmatprep.subr.bf16.mxu0 %v6750
  %7914 = vmatpush1.bf16.msra.mxu0 %v6749
  %7915 = vmatprep.subr.bf16.mxu0 %v6766
  %7916 = vmatpush1.bf16.msra.mxu0 %v6765
  %7917 = vmatprep.subr.bf16.mxu0 %v6782
  %7918 = vmatpush1.bf16.msra.mxu0 %v6781
  %7919 = vmatprep.subr.bf16.mxu0 %v6798
  %7920 = vmatpush1.bf16.msra.mxu0 %v6797
  %7921 = vmatprep.subr.bf16.mxu0 %v6814
  %7922 = vmatpush1.bf16.msra.mxu0 %v6813
  %7923 = vmatprep.subr.bf16.mxu0 %v6830
  %7924 = vmatpush1.bf16.msra.mxu0 %v6829
  %7925 = vmatprep.subr.bf16.mxu0 %v6846
  %7926 = vmatpush1.bf16.msra.mxu0 %v6845
  %7927 = vmatprep.subr.bf16.mxu0 %v6862
  %7928 = vmatpush1.bf16.msra.mxu0 %v6861
  %7929 = vmatprep.subr.bf16.mxu0 %v6878
  %7930 = vmatpush1.bf16.msra.mxu0 %v6877
  %7931 = vmatprep.subr.bf16.mxu0 %v6894
  %7932 = vmatpush1.bf16.msra.mxu0 %v6893
  %7933 = vmatprep.subr.bf16.mxu0 %v6910
  %7934 = vmatpush1.bf16.msra.mxu0 %v6909
  %7935 = vmatprep.subr.bf16.mxu0 %v6926
  %7936 = vmatpush1.bf16.msra.mxu0 %v6925
  %7937 = vmatprep.subr.bf16.mxu0 %v6942
  %7938 = vmatpush1.bf16.msra.mxu0 %v6941
  %7939 = vmatprep.subr.bf16.mxu0 %v6958
  %7940 = vmatpush1.bf16.msra.mxu0 %v6957
  %7941 = vmatprep.mubr.bf16.mxu0 %v4662
  %7942 = vmatmul.mubr.bf16.gmra.mrb[0].mxu0 %v4661
  %v7943 = vpop.f32.mrb[0].mxu0
  %v7944 = vadd.f32 0.0, %v7943
  %v7945 = vpop.f32.mrb[0].mxu0
  %v7946 = vadd.f32 0.0, %v7945
  %v7947 = vpop.f32.mrb[0].mxu0
  %v7948 = vadd.f32 0.0, %v7947
  %v7949 = vpop.f32.mrb[0].mxu0
  %v7950 = vadd.f32 0.0, %v7949
  %7951 = vdwg.mxu0
  %7952 = vmatprep.subr.bf16.mxu0 %v6974
  %7953 = vmatpush1.bf16.msra.mxu0 %v6973
  %7954 = vmatprep.subr.bf16.mxu0 %v6990
  %7955 = vmatpush1.bf16.msra.mxu0 %v6989
  %7956 = vmatprep.subr.bf16.mxu0 %v7006
  %7957 = vmatpush1.bf16.msra.mxu0 %v7005
  %7958 = vmatprep.subr.bf16.mxu0 %v7022
  %7959 = vmatpush1.bf16.msra.mxu0 %v7021
  %7960 = vmatprep.subr.bf16.mxu0 %v7038
  %7961 = vmatpush1.bf16.msra.mxu0 %v7037
  %7962 = vmatprep.subr.bf16.mxu0 %v7054
  %7963 = vmatpush1.bf16.msra.mxu0 %v7053
  %7964 = vmatprep.subr.bf16.mxu0 %v7070
  %7965 = vmatpush1.bf16.msra.mxu0 %v7069
  %7966 = vmatprep.subr.bf16.mxu0 %v7086
  %7967 = vmatpush1.bf16.msra.mxu0 %v7085
  %7968 = vmatprep.subr.bf16.mxu0 %v7102
  %7969 = vmatpush1.bf16.msra.mxu0 %v7101
  %7970 = vmatprep.subr.bf16.mxu0 %v7118
  %7971 = vmatpush1.bf16.msra.mxu0 %v7117
  %7972 = vmatprep.subr.bf16.mxu0 %v7134
  %7973 = vmatpush1.bf16.msra.mxu0 %v7133
  %7974 = vmatprep.subr.bf16.mxu0 %v7150
  %7975 = vmatpush1.bf16.msra.mxu0 %v7149
  %7976 = vmatprep.subr.bf16.mxu0 %v7166
  %7977 = vmatpush1.bf16.msra.mxu0 %v7165
  %7978 = vmatprep.subr.bf16.mxu0 %v7182
  %7979 = vmatpush1.bf16.msra.mxu0 %v7181
  %7980 = vmatprep.subr.bf16.mxu0 %v7198
  %7981 = vmatpush1.bf16.msra.mxu0 %v7197
  %7982 = vmatprep.subr.bf16.mxu0 %v7214
  %7983 = vmatpush1.bf16.msra.mxu0 %v7213
  %7984 = vmatprep.mubr.bf16.mxu0 %v4664
  %7985 = vmatmul.mubr.bf16.gmra.mrb[0].mxu0 %v4663
  %v7986 = vpop.f32.mrb[0].mxu0
  %v7987 = vadd.f32 %v7944, %v7986
  %v7988 = vpop.f32.mrb[0].mxu0
  %v7989 = vadd.f32 %v7946, %v7988
  %v7990 = vpop.f32.mrb[0].mxu0
  %v7991 = vadd.f32 %v7948, %v7990
  %v7992 = vpop.f32.mrb[0].mxu0
  %v7993 = vadd.f32 %v7950, %v7992
  %7994 = vdwg.mxu0
  %7995 = vmatprep.subr.bf16.mxu0 %v6720
  %7996 = vmatpush1.bf16.msra.mxu0 %v6719
  %7997 = vmatprep.subr.bf16.mxu0 %v6736
  %7998 = vmatpush1.bf16.msra.mxu0 %v6735
  %7999 = vmatprep.subr.bf16.mxu0 %v6752
  %8000 = vmatpush1.bf16.msra.mxu0 %v6751
  %8001 = vmatprep.subr.bf16.mxu0 %v6768
  %8002 = vmatpush1.bf16.msra.mxu0 %v6767
  %8003 = vmatprep.subr.bf16.mxu0 %v6784
  %8004 = vmatpush1.bf16.msra.mxu0 %v6783
  %8005 = vmatprep.subr.bf16.mxu0 %v6800
  %8006 = vmatpush1.bf16.msra.mxu0 %v6799
  %8007 = vmatprep.subr.bf16.mxu0 %v6816
  %8008 = vmatpush1.bf16.msra.mxu0 %v6815
  %8009 = vmatprep.subr.bf16.mxu0 %v6832
  %8010 = vmatpush1.bf16.msra.mxu0 %v6831
  %8011 = vmatprep.subr.bf16.mxu0 %v6848
  %8012 = vmatpush1.bf16.msra.mxu0 %v6847
  %8013 = vmatprep.subr.bf16.mxu0 %v6864
  %8014 = vmatpush1.bf16.msra.mxu0 %v6863
  %8015 = vmatprep.subr.bf16.mxu0 %v6880
  %8016 = vmatpush1.bf16.msra.mxu0 %v6879
  %8017 = vmatprep.subr.bf16.mxu0 %v6896
  %8018 = vmatpush1.bf16.msra.mxu0 %v6895
  %8019 = vmatprep.subr.bf16.mxu0 %v6912
  %8020 = vmatpush1.bf16.msra.mxu0 %v6911
  %8021 = vmatprep.subr.bf16.mxu0 %v6928
  %8022 = vmatpush1.bf16.msra.mxu0 %v6927
  %8023 = vmatprep.subr.bf16.mxu0 %v6944
  %8024 = vmatpush1.bf16.msra.mxu0 %v6943
  %8025 = vmatprep.subr.bf16.mxu0 %v6960
  %8026 = vmatpush1.bf16.msra.mxu0 %v6959
  %8027 = vmatprep.mubr.bf16.mxu0 %v4662
  %8028 = vmatmul.mubr.bf16.gmra.mrb[0].mxu0 %v4661
  %v8029 = vpop.f32.mrb[0].mxu0
  %v8030 = vadd.f32 0.0, %v8029
  %v8031 = vpop.f32.mrb[0].mxu0
  %v8032 = vadd.f32 0.0, %v8031
  %v8033 = vpop.f32.mrb[0].mxu0
  %v8034 = vadd.f32 0.0, %v8033
  %v8035 = vpop.f32.mrb[0].mxu0
  %v8036 = vadd.f32 0.0, %v8035
  %8037 = vdwg.mxu0
  %8038 = vmatprep.subr.bf16.mxu0 %v6976
  %8039 = vmatpush1.bf16.msra.mxu0 %v6975
  %8040 = vmatprep.subr.bf16.mxu0 %v6992
  %8041 = vmatpush1.bf16.msra.mxu0 %v6991
  %8042 = vmatprep.subr.bf16.mxu0 %v7008
  %8043 = vmatpush1.bf16.msra.mxu0 %v7007
  %8044 = vmatprep.subr.bf16.mxu0 %v7024
  %8045 = vmatpush1.bf16.msra.mxu0 %v7023
  %8046 = vmatprep.subr.bf16.mxu0 %v7040
  %8047 = vmatpush1.bf16.msra.mxu0 %v7039
  %8048 = vmatprep.subr.bf16.mxu0 %v7056
  %8049 = vmatpush1.bf16.msra.mxu0 %v7055
  %8050 = vmatprep.subr.bf16.mxu0 %v7072
  %8051 = vmatpush1.bf16.msra.mxu0 %v7071
  %8052 = vmatprep.subr.bf16.mxu0 %v7088
  %8053 = vmatpush1.bf16.msra.mxu0 %v7087
  %8054 = vmatprep.subr.bf16.mxu0 %v7104
  %8055 = vmatpush1.bf16.msra.mxu0 %v7103
  %8056 = vmatprep.subr.bf16.mxu0 %v7120
  %8057 = vmatpush1.bf16.msra.mxu0 %v7119
  %8058 = vmatprep.subr.bf16.mxu0 %v7136
  %8059 = vmatpush1.bf16.msra.mxu0 %v7135
  %8060 = vmatprep.subr.bf16.mxu0 %v7152
  %8061 = vmatpush1.bf16.msra.mxu0 %v7151
  %8062 = vmatprep.subr.bf16.mxu0 %v7168
  %8063 = vmatpush1.bf16.msra.mxu0 %v7167
  %8064 = vmatprep.subr.bf16.mxu0 %v7184
  %8065 = vmatpush1.bf16.msra.mxu0 %v7183
  %8066 = vmatprep.subr.bf16.mxu0 %v7200
  %8067 = vmatpush1.bf16.msra.mxu0 %v7199
  %8068 = vmatprep.subr.bf16.mxu0 %v7216
  %8069 = vmatpush1.bf16.msra.mxu0 %v7215
  %8070 = vmatprep.mubr.bf16.mxu0 %v4664
  %8071 = vmatmul.mubr.bf16.gmra.mrb[0].mxu0 %v4663
  %v8072 = vpop.f32.mrb[0].mxu0
  %v8073 = vadd.f32 %v8030, %v8072
  %v8074 = vpop.f32.mrb[0].mxu0
  %v8075 = vadd.f32 %v8032, %v8074
  %v8076 = vpop.f32.mrb[0].mxu0
  %v8077 = vadd.f32 %v8034, %v8076
  %v8078 = vpop.f32.mrb[0].mxu0
  %v8079 = vadd.f32 %v8036, %v8078
  %8080 = vdwg.mxu0
  %8081 = vmatprep.subr.bf16.mxu0 %v6722
  %8082 = vmatpush1.bf16.msra.mxu0 %v6721
  %8083 = vmatprep.subr.bf16.mxu0 %v6738
  %8084 = vmatpush1.bf16.msra.mxu0 %v6737
  %8085 = vmatprep.subr.bf16.mxu0 %v6754
  %8086 = vmatpush1.bf16.msra.mxu0 %v6753
  %8087 = vmatprep.subr.bf16.mxu0 %v6770
  %8088 = vmatpush1.bf16.msra.mxu0 %v6769
  %8089 = vmatprep.subr.bf16.mxu0 %v6786
  %8090 = vmatpush1.bf16.msra.mxu0 %v6785
  %8091 = vmatprep.subr.bf16.mxu0 %v6802
  %8092 = vmatpush1.bf16.msra.mxu0 %v6801
  %8093 = vmatprep.subr.bf16.mxu0 %v6818
  %8094 = vmatpush1.bf16.msra.mxu0 %v6817
  %8095 = vmatprep.subr.bf16.mxu0 %v6834
  %8096 = vmatpush1.bf16.msra.mxu0 %v6833
  %8097 = vmatprep.subr.bf16.mxu0 %v6850
  %8098 = vmatpush1.bf16.msra.mxu0 %v6849
  %8099 = vmatprep.subr.bf16.mxu0 %v6866
  %8100 = vmatpush1.bf16.msra.mxu0 %v6865
  %8101 = vmatprep.subr.bf16.mxu0 %v6882
  %8102 = vmatpush1.bf16.msra.mxu0 %v6881
  %8103 = vmatprep.subr.bf16.mxu0 %v6898
  %8104 = vmatpush1.bf16.msra.mxu0 %v6897
  %8105 = vmatprep.subr.bf16.mxu0 %v6914
  %8106 = vmatpush1.bf16.msra.mxu0 %v6913
  %8107 = vmatprep.subr.bf16.mxu0 %v6930
  %8108 = vmatpush1.bf16.msra.mxu0 %v6929
  %8109 = vmatprep.subr.bf16.mxu0 %v6946
  %8110 = vmatpush1.bf16.msra.mxu0 %v6945
  %8111 = vmatprep.subr.bf16.mxu0 %v6962
  %8112 = vmatpush1.bf16.msra.mxu0 %v6961
  %8113 = vmatprep.mubr.bf16.mxu0 %v4662
  %8114 = vmatmul.mubr.bf16.gmra.mrb[0].mxu0 %v4661
  %v8115 = vpop.f32.mrb[0].mxu0
  %v8116 = vadd.f32 0.0, %v8115
  %v8117 = vpop.f32.mrb[0].mxu0
  %v8118 = vadd.f32 0.0, %v8117
  %v8119 = vpop.f32.mrb[0].mxu0
  %v8120 = vadd.f32 0.0, %v8119
  %v8121 = vpop.f32.mrb[0].mxu0
  %v8122 = vadd.f32 0.0, %v8121
  %8123 = vdwg.mxu0
  %8124 = vmatprep.subr.bf16.mxu0 %v6978
  %8125 = vmatpush1.bf16.msra.mxu0 %v6977
  %8126 = vmatprep.subr.bf16.mxu0 %v6994
  %8127 = vmatpush1.bf16.msra.mxu0 %v6993
  %8128 = vmatprep.subr.bf16.mxu0 %v7010
  %8129 = vmatpush1.bf16.msra.mxu0 %v7009
  %8130 = vmatprep.subr.bf16.mxu0 %v7026
  %8131 = vmatpush1.bf16.msra.mxu0 %v7025
  %8132 = vmatprep.subr.bf16.mxu0 %v7042
  %8133 = vmatpush1.bf16.msra.mxu0 %v7041
  %8134 = vmatprep.subr.bf16.mxu0 %v7058
  %8135 = vmatpush1.bf16.msra.mxu0 %v7057
  %8136 = vmatprep.subr.bf16.mxu0 %v7074
  %8137 = vmatpush1.bf16.msra.mxu0 %v7073
  %8138 = vmatprep.subr.bf16.mxu0 %v7090
  %8139 = vmatpush1.bf16.msra.mxu0 %v7089
  %8140 = vmatprep.subr.bf16.mxu0 %v7106
  %8141 = vmatpush1.bf16.msra.mxu0 %v7105
  %8142 = vmatprep.subr.bf16.mxu0 %v7122
  %8143 = vmatpush1.bf16.msra.mxu0 %v7121
  %8144 = vmatprep.subr.bf16.mxu0 %v7138
  %8145 = vmatpush1.bf16.msra.mxu0 %v7137
  %8146 = vmatprep.subr.bf16.mxu0 %v7154
  %8147 = vmatpush1.bf16.msra.mxu0 %v7153
  %8148 = vmatprep.subr.bf16.mxu0 %v7170
  %8149 = vmatpush1.bf16.msra.mxu0 %v7169
  %8150 = vmatprep.subr.bf16.mxu0 %v7186
  %8151 = vmatpush1.bf16.msra.mxu0 %v7185
  %8152 = vmatprep.subr.bf16.mxu0 %v7202
  %8153 = vmatpush1.bf16.msra.mxu0 %v7201
  %8154 = vmatprep.subr.bf16.mxu0 %v7218
  %8155 = vmatpush1.bf16.msra.mxu0 %v7217
  %8156 = vmatprep.mubr.bf16.mxu0 %v4664
  %8157 = vmatmul.mubr.bf16.gmra.mrb[0].mxu0 %v4663
  %v8158 = vpop.f32.mrb[0].mxu0
  %v8159 = vadd.f32 %v8116, %v8158
  %v8160 = vpop.f32.mrb[0].mxu0
  %v8161 = vadd.f32 %v8118, %v8160
  %v8162 = vpop.f32.mrb[0].mxu0
  %v8163 = vadd.f32 %v8120, %v8162
  %v8164 = vpop.f32.mrb[0].mxu0
  %v8165 = vadd.f32 %v8122, %v8164
  %8166 = vdwg.mxu0
  %8167 = vmatprep.subr.bf16.mxu0 %v6724
  %8168 = vmatpush1.bf16.msra.mxu0 %v6723
  %8169 = vmatprep.subr.bf16.mxu0 %v6740
  %8170 = vmatpush1.bf16.msra.mxu0 %v6739
  %8171 = vmatprep.subr.bf16.mxu0 %v6756
  %8172 = vmatpush1.bf16.msra.mxu0 %v6755
  %8173 = vmatprep.subr.bf16.mxu0 %v6772
  %8174 = vmatpush1.bf16.msra.mxu0 %v6771
  %8175 = vmatprep.subr.bf16.mxu0 %v6788
  %8176 = vmatpush1.bf16.msra.mxu0 %v6787
  %8177 = vmatprep.subr.bf16.mxu0 %v6804
  %8178 = vmatpush1.bf16.msra.mxu0 %v6803
  %8179 = vmatprep.subr.bf16.mxu0 %v6820
  %8180 = vmatpush1.bf16.msra.mxu0 %v6819
  %8181 = vmatprep.subr.bf16.mxu0 %v6836
  %8182 = vmatpush1.bf16.msra.mxu0 %v6835
  %8183 = vmatprep.subr.bf16.mxu0 %v6852
  %8184 = vmatpush1.bf16.msra.mxu0 %v6851
  %8185 = vmatprep.subr.bf16.mxu0 %v6868
  %8186 = vmatpush1.bf16.msra.mxu0 %v6867
  %8187 = vmatprep.subr.bf16.mxu0 %v6884
  %8188 = vmatpush1.bf16.msra.mxu0 %v6883
  %8189 = vmatprep.subr.bf16.mxu0 %v6900
  %8190 = vmatpush1.bf16.msra.mxu0 %v6899
  %8191 = vmatprep.subr.bf16.mxu0 %v6916
  %8192 = vmatpush1.bf16.msra.mxu0 %v6915
  %8193 = vmatprep.subr.bf16.mxu0 %v6932
  %8194 = vmatpush1.bf16.msra.mxu0 %v6931
  %8195 = vmatprep.subr.bf16.mxu0 %v6948
  %8196 = vmatpush1.bf16.msra.mxu0 %v6947
  %8197 = vmatprep.subr.bf16.mxu0 %v6964
  %8198 = vmatpush1.bf16.msra.mxu0 %v6963
  %8199 = vmatprep.mubr.bf16.mxu0 %v4662
  %8200 = vmatmul.mubr.bf16.gmra.mrb[0].mxu0 %v4661
  %v8201 = vpop.f32.mrb[0].mxu0
  %v8202 = vadd.f32 0.0, %v8201
  %v8203 = vpop.f32.mrb[0].mxu0
  %v8204 = vadd.f32 0.0, %v8203
  %v8205 = vpop.f32.mrb[0].mxu0
  %v8206 = vadd.f32 0.0, %v8205
  %v8207 = vpop.f32.mrb[0].mxu0
  %v8208 = vadd.f32 0.0, %v8207
  %8209 = vdwg.mxu0
  %8210 = vmatprep.subr.bf16.mxu0 %v6980
  %8211 = vmatpush1.bf16.msra.mxu0 %v6979
  %8212 = vmatprep.subr.bf16.mxu0 %v6996
  %8213 = vmatpush1.bf16.msra.mxu0 %v6995
  %8214 = vmatprep.subr.bf16.mxu0 %v7012
  %8215 = vmatpush1.bf16.msra.mxu0 %v7011
  %8216 = vmatprep.subr.bf16.mxu0 %v7028
  %8217 = vmatpush1.bf16.msra.mxu0 %v7027
  %8218 = vmatprep.subr.bf16.mxu0 %v7044
  %8219 = vmatpush1.bf16.msra.mxu0 %v7043
  %8220 = vmatprep.subr.bf16.mxu0 %v7060
  %8221 = vmatpush1.bf16.msra.mxu0 %v7059
  %8222 = vmatprep.subr.bf16.mxu0 %v7076
  %8223 = vmatpush1.bf16.msra.mxu0 %v7075
  %8224 = vmatprep.subr.bf16.mxu0 %v7092
  %8225 = vmatpush1.bf16.msra.mxu0 %v7091
  %8226 = vmatprep.subr.bf16.mxu0 %v7108
  %8227 = vmatpush1.bf16.msra.mxu0 %v7107
  %8228 = vmatprep.subr.bf16.mxu0 %v7124
  %8229 = vmatpush1.bf16.msra.mxu0 %v7123
  %8230 = vmatprep.subr.bf16.mxu0 %v7140
  %8231 = vmatpush1.bf16.msra.mxu0 %v7139
  %8232 = vmatprep.subr.bf16.mxu0 %v7156
  %8233 = vmatpush1.bf16.msra.mxu0 %v7155
  %8234 = vmatprep.subr.bf16.mxu0 %v7172
  %8235 = vmatpush1.bf16.msra.mxu0 %v7171
  %8236 = vmatprep.subr.bf16.mxu0 %v7188
  %8237 = vmatpush1.bf16.msra.mxu0 %v7187
  %8238 = vmatprep.subr.bf16.mxu0 %v7204
  %8239 = vmatpush1.bf16.msra.mxu0 %v7203
  %8240 = vmatprep.subr.bf16.mxu0 %v7220
  %8241 = vmatpush1.bf16.msra.mxu0 %v7219
  %8242 = vmatprep.mubr.bf16.mxu0 %v4664
  %8243 = vmatmul.mubr.bf16.gmra.mrb[0].mxu0 %v4663
  %v8244 = vpop.f32.mrb[0].mxu0
  %v8245 = vadd.f32 %v8202, %v8244
  %v8246 = vpop.f32.mrb[0].mxu0
  %v8247 = vadd.f32 %v8204, %v8246
  %v8248 = vpop.f32.mrb[0].mxu0
  %v8249 = vadd.f32 %v8206, %v8248
  %v8250 = vpop.f32.mrb[0].mxu0
  %v8251 = vadd.f32 %v8208, %v8250
  %8252 = vdwg.mxu0
  %8253 = vmatprep.subr.bf16.mxu0 %v6726
  %8254 = vmatpush1.bf16.msra.mxu0 %v6725
  %8255 = vmatprep.subr.bf16.mxu0 %v6742
  %8256 = vmatpush1.bf16.msra.mxu0 %v6741
  %8257 = vmatprep.subr.bf16.mxu0 %v6758
  %8258 = vmatpush1.bf16.msra.mxu0 %v6757
  %8259 = vmatprep.subr.bf16.mxu0 %v6774
  %8260 = vmatpush1.bf16.msra.mxu0 %v6773
  %8261 = vmatprep.subr.bf16.mxu0 %v6790
  %8262 = vmatpush1.bf16.msra.mxu0 %v6789
  %8263 = vmatprep.subr.bf16.mxu0 %v6806
  %8264 = vmatpush1.bf16.msra.mxu0 %v6805
  %8265 = vmatprep.subr.bf16.mxu0 %v6822
  %8266 = vmatpush1.bf16.msra.mxu0 %v6821
  %8267 = vmatprep.subr.bf16.mxu0 %v6838
  %8268 = vmatpush1.bf16.msra.mxu0 %v6837
  %8269 = vmatprep.subr.bf16.mxu0 %v6854
  %8270 = vmatpush1.bf16.msra.mxu0 %v6853
  %8271 = vmatprep.subr.bf16.mxu0 %v6870
  %8272 = vmatpush1.bf16.msra.mxu0 %v6869
  %8273 = vmatprep.subr.bf16.mxu0 %v6886
  %8274 = vmatpush1.bf16.msra.mxu0 %v6885
  %8275 = vmatprep.subr.bf16.mxu0 %v6902
  %8276 = vmatpush1.bf16.msra.mxu0 %v6901
  %8277 = vmatprep.subr.bf16.mxu0 %v6918
  %8278 = vmatpush1.bf16.msra.mxu0 %v6917
  %8279 = vmatprep.subr.bf16.mxu0 %v6934
  %8280 = vmatpush1.bf16.msra.mxu0 %v6933
  %8281 = vmatprep.subr.bf16.mxu0 %v6950
  %8282 = vmatpush1.bf16.msra.mxu0 %v6949
  %8283 = vmatprep.subr.bf16.mxu0 %v6966
  %8284 = vmatpush1.bf16.msra.mxu0 %v6965
  %8285 = vmatprep.mubr.bf16.mxu0 %v4662
  %8286 = vmatmul.mubr.bf16.gmra.mrb[0].mxu0 %v4661
  %v8287 = vpop.f32.mrb[0].mxu0
  %v8288 = vadd.f32 0.0, %v8287
  %v8289 = vpop.f32.mrb[0].mxu0
  %v8290 = vadd.f32 0.0, %v8289
  %v8291 = vpop.f32.mrb[0].mxu0
  %v8292 = vadd.f32 0.0, %v8291
  %v8293 = vpop.f32.mrb[0].mxu0
  %v8294 = vadd.f32 0.0, %v8293
  %8295 = vdwg.mxu0
  %8296 = vmatprep.subr.bf16.mxu0 %v6982
  %8297 = vmatpush1.bf16.msra.mxu0 %v6981
  %8298 = vmatprep.subr.bf16.mxu0 %v6998
  %8299 = vmatpush1.bf16.msra.mxu0 %v6997
  %8300 = vmatprep.subr.bf16.mxu0 %v7014
  %8301 = vmatpush1.bf16.msra.mxu0 %v7013
  %8302 = vmatprep.subr.bf16.mxu0 %v7030
  %8303 = vmatpush1.bf16.msra.mxu0 %v7029
  %8304 = vmatprep.subr.bf16.mxu0 %v7046
  %8305 = vmatpush1.bf16.msra.mxu0 %v7045
  %8306 = vmatprep.subr.bf16.mxu0 %v7062
  %8307 = vmatpush1.bf16.msra.mxu0 %v7061
  %8308 = vmatprep.subr.bf16.mxu0 %v7078
  %8309 = vmatpush1.bf16.msra.mxu0 %v7077
  %8310 = vmatprep.subr.bf16.mxu0 %v7094
  %8311 = vmatpush1.bf16.msra.mxu0 %v7093
  %8312 = vmatprep.subr.bf16.mxu0 %v7110
  %8313 = vmatpush1.bf16.msra.mxu0 %v7109
  %8314 = vmatprep.subr.bf16.mxu0 %v7126
  %8315 = vmatpush1.bf16.msra.mxu0 %v7125
  %8316 = vmatprep.subr.bf16.mxu0 %v7142
  %8317 = vmatpush1.bf16.msra.mxu0 %v7141
  %8318 = vmatprep.subr.bf16.mxu0 %v7158
  %8319 = vmatpush1.bf16.msra.mxu0 %v7157
  %8320 = vmatprep.subr.bf16.mxu0 %v7174
  %8321 = vmatpush1.bf16.msra.mxu0 %v7173
  %8322 = vmatprep.subr.bf16.mxu0 %v7190
  %8323 = vmatpush1.bf16.msra.mxu0 %v7189
  %8324 = vmatprep.subr.bf16.mxu0 %v7206
  %8325 = vmatpush1.bf16.msra.mxu0 %v7205
  %8326 = vmatprep.subr.bf16.mxu0 %v7222
  %8327 = vmatpush1.bf16.msra.mxu0 %v7221
  %8328 = vmatprep.mubr.bf16.mxu0 %v4664
  %8329 = vmatmul.mubr.bf16.gmra.mrb[0].mxu0 %v4663
  %v8330 = vpop.f32.mrb[0].mxu0
  %v8331 = vadd.f32 %v8288, %v8330
  %v8332 = vpop.f32.mrb[0].mxu0
  %v8333 = vadd.f32 %v8290, %v8332
  %v8334 = vpop.f32.mrb[0].mxu0
  %v8335 = vadd.f32 %v8292, %v8334
  %v8336 = vpop.f32.mrb[0].mxu0
  %v8337 = vadd.f32 %v8294, %v8336
  %8338 = vdwg.mxu0
  %8339 = vmatprep.subr.bf16.mxu0 %v6728
  %8340 = vmatpush1.bf16.msra.mxu0 %v6727
  %8341 = vmatprep.subr.bf16.mxu0 %v6744
  %8342 = vmatpush1.bf16.msra.mxu0 %v6743
  %8343 = vmatprep.subr.bf16.mxu0 %v6760
  %8344 = vmatpush1.bf16.msra.mxu0 %v6759
  %8345 = vmatprep.subr.bf16.mxu0 %v6776
  %8346 = vmatpush1.bf16.msra.mxu0 %v6775
  %8347 = vmatprep.subr.bf16.mxu0 %v6792
  %8348 = vmatpush1.bf16.msra.mxu0 %v6791
  %8349 = vmatprep.subr.bf16.mxu0 %v6808
  %8350 = vmatpush1.bf16.msra.mxu0 %v6807
  %8351 = vmatprep.subr.bf16.mxu0 %v6824
  %8352 = vmatpush1.bf16.msra.mxu0 %v6823
  %8353 = vmatprep.subr.bf16.mxu0 %v6840
  %8354 = vmatpush1.bf16.msra.mxu0 %v6839
  %8355 = vmatprep.subr.bf16.mxu0 %v6856
  %8356 = vmatpush1.bf16.msra.mxu0 %v6855
  %8357 = vmatprep.subr.bf16.mxu0 %v6872
  %8358 = vmatpush1.bf16.msra.mxu0 %v6871
  %8359 = vmatprep.subr.bf16.mxu0 %v6888
  %8360 = vmatpush1.bf16.msra.mxu0 %v6887
  %8361 = vmatprep.subr.bf16.mxu0 %v6904
  %8362 = vmatpush1.bf16.msra.mxu0 %v6903
  %8363 = vmatprep.subr.bf16.mxu0 %v6920
  %8364 = vmatpush1.bf16.msra.mxu0 %v6919
  %8365 = vmatprep.subr.bf16.mxu0 %v6936
  %8366 = vmatpush1.bf16.msra.mxu0 %v6935
  %8367 = vmatprep.subr.bf16.mxu0 %v6952
  %8368 = vmatpush1.bf16.msra.mxu0 %v6951
  %8369 = vmatprep.subr.bf16.mxu0 %v6968
  %8370 = vmatpush1.bf16.msra.mxu0 %v6967
  %8371 = vmatprep.mubr.bf16.mxu0 %v4662
  %8372 = vmatmul.mubr.bf16.gmra.mrb[0].mxu0 %v4661
  %v8373 = vpop.f32.mrb[0].mxu0
  %v8374 = vadd.f32 0.0, %v8373
  %v8375 = vpop.f32.mrb[0].mxu0
  %v8376 = vadd.f32 0.0, %v8375
  %v8377 = vpop.f32.mrb[0].mxu0
  %v8378 = vadd.f32 0.0, %v8377
  %v8379 = vpop.f32.mrb[0].mxu0
  %v8380 = vadd.f32 0.0, %v8379
  %8381 = vdwg.mxu0
  %8382 = vmatprep.subr.bf16.mxu0 %v6984
  %8383 = vmatpush1.bf16.msra.mxu0 %v6983
  %8384 = vmatprep.subr.bf16.mxu0 %v7000
  %8385 = vmatpush1.bf16.msra.mxu0 %v6999
  %8386 = vmatprep.subr.bf16.mxu0 %v7016
  %8387 = vmatpush1.bf16.msra.mxu0 %v7015
  %8388 = vmatprep.subr.bf16.mxu0 %v7032
  %8389 = vmatpush1.bf16.msra.mxu0 %v7031
  %8390 = vmatprep.subr.bf16.mxu0 %v7048
  %8391 = vmatpush1.bf16.msra.mxu0 %v7047
  %8392 = vmatprep.subr.bf16.mxu0 %v7064
  %8393 = vmatpush1.bf16.msra.mxu0 %v7063
  %8394 = vmatprep.subr.bf16.mxu0 %v7080
  %8395 = vmatpush1.bf16.msra.mxu0 %v7079
  %8396 = vmatprep.subr.bf16.mxu0 %v7096
  %8397 = vmatpush1.bf16.msra.mxu0 %v7095
  %8398 = vmatprep.subr.bf16.mxu0 %v7112
  %8399 = vmatpush1.bf16.msra.mxu0 %v7111
  %8400 = vmatprep.subr.bf16.mxu0 %v7128
  %8401 = vmatpush1.bf16.msra.mxu0 %v7127
  %8402 = vmatprep.subr.bf16.mxu0 %v7144
  %8403 = vmatpush1.bf16.msra.mxu0 %v7143
  %8404 = vmatprep.subr.bf16.mxu0 %v7160
  %8405 = vmatpush1.bf16.msra.mxu0 %v7159
  %8406 = vmatprep.subr.bf16.mxu0 %v7176
  %8407 = vmatpush1.bf16.msra.mxu0 %v7175
  %8408 = vmatprep.subr.bf16.mxu0 %v7192
  %8409 = vmatpush1.bf16.msra.mxu0 %v7191
  %8410 = vmatprep.subr.bf16.mxu0 %v7208
  %8411 = vmatpush1.bf16.msra.mxu0 %v7207
  %8412 = vmatprep.subr.bf16.mxu0 %v7224
  %8413 = vmatpush1.bf16.msra.mxu0 %v7223
  %8414 = vmatprep.mubr.bf16.mxu0 %v4664
  %8415 = vmatmul.mubr.bf16.gmra.mrb[0].mxu0 %v4663
  %v8416 = vpop.f32.mrb[0].mxu0
  %v8417 = vadd.f32 %v8374, %v8416
  %v8418 = vpop.f32.mrb[0].mxu0
  %v8419 = vadd.f32 %v8376, %v8418
  %v8420 = vpop.f32.mrb[0].mxu0
  %v8421 = vadd.f32 %v8378, %v8420
  %v8422 = vpop.f32.mrb[0].mxu0
  %v8423 = vadd.f32 %v8380, %v8422
  %8424 = vdwg.mxu0
  %v8425 = vpack.c.bf16 %v7819, %v7815
  %v8426 = vpack.c.bf16 %v7821, %v7817
  %v8427 = vpack.c.bf16 %v7905, %v7901
  %v8428 = vpack.c.bf16 %v7907, %v7903
  %v8429 = vpack.c.bf16 %v7991, %v7987
  %v8430 = vpack.c.bf16 %v7993, %v7989
  %v8431 = vpack.c.bf16 %v8077, %v8073
  %v8432 = vpack.c.bf16 %v8079, %v8075
  %v8433 = vpack.c.bf16 %v8163, %v8159
  %v8434 = vpack.c.bf16 %v8165, %v8161
  %v8435 = vpack.c.bf16 %v8249, %v8245
  %v8436 = vpack.c.bf16 %v8251, %v8247
  %v8437 = vpack.c.bf16 %v8335, %v8331
  %v8438 = vpack.c.bf16 %v8337, %v8333
  %v8439 = vpack.c.bf16 %v8421, %v8417
  %v8440 = vpack.c.bf16 %v8423, %v8419
  %v8441 = vld [vmem:[%s6] sm:$0xf]
  %v8442 = vld [vmem:[%s6 + $0x4] sm:$0xf]
  %v8443 = vld [vmem:[%s6 + $0x8] sm:$0xf]
  %v8444 = vld [vmem:[%s6 + $0xc] sm:$0xf]
  %v8445 = vld [vmem:[%s6 + $0x10] sm:$0xf]
  %v8446 = vld [vmem:[%s6 + $0x14] sm:$0xf]
  %v8447 = vld [vmem:[%s6 + $0x18] sm:$0xf]
  %v8448 = vld [vmem:[%s6 + $0x1c] sm:$0xf]
  %v8449 = vld [vmem:[%s6 + $0x20] sm:$0xf]
  %v8450 = vld [vmem:[%s6 + $0x24] sm:$0xf]
  %v8451 = vld [vmem:[%s6 + $0x28] sm:$0xf]
  %v8452 = vld [vmem:[%s6 + $0x2c] sm:$0xf]
  %v8453 = vld [vmem:[%s6 + $0x30] sm:$0xf]
  %v8454 = vld [vmem:[%s6 + $0x34] sm:$0xf]
  %v8455 = vld [vmem:[%s6 + $0x38] sm:$0xf]
  %v8456 = vld [vmem:[%s6 + $0x3c] sm:$0xf]
  %v8457 = vld [vmem:[%s6 + $0x40] sm:$0xf]
  %v8458 = vld [vmem:[%s6 + $0x44] sm:$0xf]
  %v8459 = vld [vmem:[%s6 + $0x48] sm:$0xf]
  %v8460 = vld [vmem:[%s6 + $0x4c] sm:$0xf]
  %v8461 = vld [vmem:[%s6 + $0x50] sm:$0xf]
  %v8462 = vld [vmem:[%s6 + $0x54] sm:$0xf]
  %v8463 = vld [vmem:[%s6 + $0x58] sm:$0xf]
  %v8464 = vld [vmem:[%s6 + $0x5c] sm:$0xf]
  %v8465 = vld [vmem:[%s6 + $0x60] sm:$0xf]
  %v8466 = vld [vmem:[%s6 + $0x64] sm:$0xf]
  %v8467 = vld [vmem:[%s6 + $0x68] sm:$0xf]
  %v8468 = vld [vmem:[%s6 + $0x6c] sm:$0xf]
  %v8469 = vld [vmem:[%s6 + $0x70] sm:$0xf]
  %v8470 = vld [vmem:[%s6 + $0x74] sm:$0xf]
  %v8471 = vld [vmem:[%s6 + $0x78] sm:$0xf]
  %v8472 = vld [vmem:[%s6 + $0x7c] sm:$0xf]
  %v8473 = vld [vmem:[%s6 + $0x80] sm:$0xf]
  %v8474 = vld [vmem:[%s6 + $0x84] sm:$0xf]
  %v8475 = vld [vmem:[%s6 + $0x88] sm:$0xf]
  %v8476 = vld [vmem:[%s6 + $0x8c] sm:$0xf]
  %v8477 = vld [vmem:[%s6 + $0x90] sm:$0xf]
  %v8478 = vld [vmem:[%s6 + $0x94] sm:$0xf]
  %v8479 = vld [vmem:[%s6 + $0x98] sm:$0xf]
  %v8480 = vld [vmem:[%s6 + $0x9c] sm:$0xf]
  %v8481 = vld [vmem:[%s6 + $0xa0] sm:$0xf]
  %v8482 = vld [vmem:[%s6 + $0xa4] sm:$0xf]
  %v8483 = vld [vmem:[%s6 + $0xa8] sm:$0xf]
  %v8484 = vld [vmem:[%s6 + $0xac] sm:$0xf]
  %v8485 = vld [vmem:[%s6 + $0xb0] sm:$0xf]
  %v8486 = vld [vmem:[%s6 + $0xb4] sm:$0xf]
  %v8487 = vld [vmem:[%s6 + $0xb8] sm:$0xf]
  %v8488 = vld [vmem:[%s6 + $0xbc] sm:$0xf]
  %v8489 = vld [vmem:[%s6 + $0xc0] sm:$0xf]
  %v8490 = vld [vmem:[%s6 + $0xc4] sm:$0xf]
  %v8491 = vld [vmem:[%s6 + $0xc8] sm:$0xf]
  %v8492 = vld [vmem:[%s6 + $0xcc] sm:$0xf]
  %v8493 = vld [vmem:[%s6 + $0xd0] sm:$0xf]
  %v8494 = vld [vmem:[%s6 + $0xd4] sm:$0xf]
  %v8495 = vld [vmem:[%s6 + $0xd8] sm:$0xf]
  %v8496 = vld [vmem:[%s6 + $0xdc] sm:$0xf]
  %v8497 = vld [vmem:[%s6 + $0xe0] sm:$0xf]
  %v8498 = vld [vmem:[%s6 + $0xe4] sm:$0xf]
  %v8499 = vld [vmem:[%s6 + $0xe8] sm:$0xf]
  %v8500 = vld [vmem:[%s6 + $0xec] sm:$0xf]
  %v8501 = vld [vmem:[%s6 + $0xf0] sm:$0xf]
  %v8502 = vld [vmem:[%s6 + $0xf4] sm:$0xf]
  %v8503 = vld [vmem:[%s6 + $0xf8] sm:$0xf]
  %v8504 = vld [vmem:[%s6 + $0xfc] sm:$0xf]
  %v8505 = vld [vmem:[%s7] sm:$0xff]
  %v8506 = vld [vmem:[%s7 + $0x8] sm:$0xff]
  %v8507 = vld [vmem:[%s7 + $0x10] sm:$0xff]
  %v8508 = vld [vmem:[%s7 + $0x18] sm:$0xff]
  %v8509 = vld [vmem:[%s8] sm:$0xff]
  %v8510 = vld [vmem:[%s8 + $0x8] sm:$0xff]
  %v8511 = vld [vmem:[%s8 + $0x10] sm:$0xff]
  %v8512 = vld [vmem:[%s8 + $0x18] sm:$0xff]
  %v8517 = vunpack.c.l.b16 %v8445
  %v8518 = vunpack.c.l.b16 %v8446
  %v8519 = vunpack.c.l.b16 %v8447
  %v8520 = vunpack.c.l.b16 %v8448
  %v8521 = vpack.c.b16 %v8518, %v8517
  %v8522 = vpack.c.b16 %v8520, %v8519
  %vm8523 = vcmask 130048
  %v8525 = vsel %vm8523, %v8521, 0
  %v8528 = vsel %vm8523, %v8522, 0
  %8530 = vmatprep.subr.bf16.mxu0 0
  %8531 = vmatpush1.bf16.msra.mxu0 %v8426
  %8532 = vmatprep.subr.bf16.mxu0 0
  %8533 = vmatpush1.bf16.msra.mxu0 0
  %8534 = vmatprep.subr.bf16.mxu0 0
  %8535 = vmatpush1.bf16.msra.mxu0 0
  %8536 = vmatprep.subr.bf16.mxu0 0
  %8537 = vmatpush1.bf16.msra.mxu0 0
  %8538 = vmatprep.subr.bf16.mxu0 0
  %8539 = vmatpush1.bf16.msra.mxu0 0
  %8540 = vmatprep.subr.bf16.mxu0 0
  %8541 = vmatpush1.bf16.msra.mxu0 0
  %8542 = vmatprep.subr.bf16.mxu0 0
  %8543 = vmatpush1.bf16.msra.mxu0 0
  %8544 = vmatprep.subr.bf16.mxu0 0
  %8545 = vmatpush1.bf16.msra.mxu0 0
  %8546 = vmatprep.subr.bf16.mxu0 0
  %8547 = vmatpush1.bf16.msra.mxu0 0
  %8548 = vmatprep.subr.bf16.mxu0 0
  %8549 = vmatpush1.bf16.msra.mxu0 0
  %8550 = vmatprep.subr.bf16.mxu0 0
  %8551 = vmatpush1.bf16.msra.mxu0 0
  %8552 = vmatprep.subr.bf16.mxu0 0
  %8553 = vmatpush1.bf16.msra.mxu0 0
  %8554 = vmatprep.subr.bf16.mxu0 0
  %8555 = vmatpush1.bf16.msra.mxu0 0
  %8556 = vmatprep.subr.bf16.mxu0 0
  %8557 = vmatpush1.bf16.msra.mxu0 0
  %8558 = vmatprep.subr.bf16.mxu0 0
  %8559 = vmatpush1.bf16.msra.mxu0 0
  %8560 = vmatprep.subr.bf16.mxu0 0
  %8561 = vmatpush1.bf16.msra.mxu0 0
  %8562 = vmatprep.mubr.bf16.mxu0 0
  %8563 = vmatmul.mubr.bf16.gmra.mrb[0].mxu0 %v8525
  %v8564 = vpop.f32.mrb[0].mxu0
  %v8565 = vadd.f32 0.0, %v8564
  %v8566 = vpop.f32.mrb[0].mxu0
  %v8567 = vpop.f32.mrb[0].mxu0
  %v8568 = vadd.f32 0.0, %v8567
  %v8569 = vpop.f32.mrb[0].mxu0
  %8570 = vmatprep.mubr.bf16.mxu0 0
  %8571 = vmatmul.mubr.bf16.gmra.mrb[0].mxu0 %v8528
  %v8572 = vpop.f32.mrb[0].mxu0
  %v8573 = vadd.f32 0.0, %v8572
  %v8574 = vpop.f32.mrb[0].mxu0
  %v8575 = vpop.f32.mrb[0].mxu0
  %v8576 = vadd.f32 0.0, %v8575
  %v8577 = vpop.f32.mrb[0].mxu0
  %8578 = vdwg.mxu0
  %v8583 = vunpack.c.l.b16 %v8441
  %v8584 = vunpack.c.l.b16 %v8442
  %v8585 = vunpack.c.l.b16 %v8443
  %v8586 = vunpack.c.l.b16 %v8444
  %v8587 = vpack.c.b16 %v8584, %v8583
  %v8588 = vpack.c.b16 %v8586, %v8585
  %v8590 = vsel %vm8523, %v8587, 0
  %v8593 = vsel %vm8523, %v8588, 0
  %8595 = vmatprep.subr.bf16.mxu0 0
  %8596 = vmatpush1.bf16.msra.mxu0 %v8425
  %8597 = vmatprep.subr.bf16.mxu0 0
  %8598 = vmatpush1.bf16.msra.mxu0 0
  %8599 = vmatprep.subr.bf16.mxu0 0
  %8600 = vmatpush1.bf16.msra.mxu0 0
  %8601 = vmatprep.subr.bf16.mxu0 0
  %8602 = vmatpush1.bf16.msra.mxu0 0
  %8603 = vmatprep.subr.bf16.mxu0 0
  %8604 = vmatpush1.bf16.msra.mxu0 0
  %8605 = vmatprep.subr.bf16.mxu0 0
  %8606 = vmatpush1.bf16.msra.mxu0 0
  %8607 = vmatprep.subr.bf16.mxu0 0
  %8608 = vmatpush1.bf16.msra.mxu0 0
  %8609 = vmatprep.subr.bf16.mxu0 0
  %8610 = vmatpush1.bf16.msra.mxu0 0
  %8611 = vmatprep.subr.bf16.mxu0 0
  %8612 = vmatpush1.bf16.msra.mxu0 0
  %8613 = vmatprep.subr.bf16.mxu0 0
  %8614 = vmatpush1.bf16.msra.mxu0 0
  %8615 = vmatprep.subr.bf16.mxu0 0
  %8616 = vmatpush1.bf16.msra.mxu0 0
  %8617 = vmatprep.subr.bf16.mxu0 0
  %8618 = vmatpush1.bf16.msra.mxu0 0
  %8619 = vmatprep.subr.bf16.mxu0 0
  %8620 = vmatpush1.bf16.msra.mxu0 0
  %8621 = vmatprep.subr.bf16.mxu0 0
  %8622 = vmatpush1.bf16.msra.mxu0 0
  %8623 = vmatprep.subr.bf16.mxu0 0
  %8624 = vmatpush1.bf16.msra.mxu0 0
  %8625 = vmatprep.subr.bf16.mxu0 0
  %8626 = vmatpush1.bf16.msra.mxu0 0
  %8627 = vmatprep.mubr.bf16.mxu0 0
  %8628 = vmatmul.mubr.bf16.gmra.mrb[0].mxu0 %v8590
  %v8629 = vpop.f32.mrb[0].mxu0
  %v8630 = vadd.f32 %v8565, %v8629
  %v8631 = vpop.f32.mrb[0].mxu0
  %v8632 = vpop.f32.mrb[0].mxu0
  %v8633 = vadd.f32 %v8568, %v8632
  %v8634 = vpop.f32.mrb[0].mxu0
  %8635 = vmatprep.mubr.bf16.mxu0 0
  %8636 = vmatmul.mubr.bf16.gmra.mrb[0].mxu0 %v8593
  %v8637 = vpop.f32.mrb[0].mxu0
  %v8638 = vadd.f32 %v8573, %v8637
  %v8639 = vpop.f32.mrb[0].mxu0
  %v8640 = vpop.f32.mrb[0].mxu0
  %v8641 = vadd.f32 %v8576, %v8640
  %v8642 = vpop.f32.mrb[0].mxu0
  %8643 = vdwg.mxu0
  %v8648 = vunpack.c.l.b16 %v8449
  %v8649 = vunpack.c.l.b16 %v8450
  %v8650 = vunpack.c.l.b16 %v8451
  %v8651 = vunpack.c.l.b16 %v8452
  %v8652 = vpack.c.b16 %v8649, %v8648
  %v8653 = vpack.c.b16 %v8651, %v8650
  %v8655 = vsel %vm8523, %v8652, 0
  %v8658 = vsel %vm8523, %v8653, 0
  %8660 = vmatprep.subr.bf16.mxu0 0
  %8661 = vmatpush1.bf16.msra.mxu0 %v8427
  %8662 = vmatprep.subr.bf16.mxu0 0
  %8663 = vmatpush1.bf16.msra.mxu0 0
  %8664 = vmatprep.subr.bf16.mxu0 0
  %8665 = vmatpush1.bf16.msra.mxu0 0
  %8666 = vmatprep.subr.bf16.mxu0 0
  %8667 = vmatpush1.bf16.msra.mxu0 0
  %8668 = vmatprep.subr.bf16.mxu0 0
  %8669 = vmatpush1.bf16.msra.mxu0 0
  %8670 = vmatprep.subr.bf16.mxu0 0
  %8671 = vmatpush1.bf16.msra.mxu0 0
  %8672 = vmatprep.subr.bf16.mxu0 0
  %8673 = vmatpush1.bf16.msra.mxu0 0
  %8674 = vmatprep.subr.bf16.mxu0 0
  %8675 = vmatpush1.bf16.msra.mxu0 0
  %8676 = vmatprep.subr.bf16.mxu0 0
  %8677 = vmatpush1.bf16.msra.mxu0 0
  %8678 = vmatprep.subr.bf16.mxu0 0
  %8679 = vmatpush1.bf16.msra.mxu0 0
  %8680 = vmatprep.subr.bf16.mxu0 0
  %8681 = vmatpush1.bf16.msra.mxu0 0
  %8682 = vmatprep.subr.bf16.mxu0 0
  %8683 = vmatpush1.bf16.msra.mxu0 0
  %8684 = vmatprep.subr.bf16.mxu0 0
  %8685 = vmatpush1.bf16.msra.mxu0 0
  %8686 = vmatprep.subr.bf16.mxu0 0
  %8687 = vmatpush1.bf16.msra.mxu0 0
  %8688 = vmatprep.subr.bf16.mxu0 0
  %8689 = vmatpush1.bf16.msra.mxu0 0
  %8690 = vmatprep.subr.bf16.mxu0 0
  %8691 = vmatpush1.bf16.msra.mxu0 0
  %8692 = vmatprep.mubr.bf16.mxu0 0
  %8693 = vmatmul.mubr.bf16.gmra.mrb[0].mxu0 %v8655
  %v8694 = vpop.f32.mrb[0].mxu0
  %v8695 = vadd.f32 0.0, %v8694
  %v8696 = vpop.f32.mrb[0].mxu0
  %v8697 = vpop.f32.mrb[0].mxu0
  %v8698 = vadd.f32 0.0, %v8697
  %v8699 = vpop.f32.mrb[0].mxu0
  %8700 = vmatprep.mubr.bf16.mxu0 0
  %8701 = vmatmul.mubr.bf16.gmra.mrb[0].mxu0 %v8658
  %v8702 = vpop.f32.mrb[0].mxu0
  %v8703 = vadd.f32 0.0, %v8702
  %v8704 = vpop.f32.mrb[0].mxu0
  %v8705 = vpop.f32.mrb[0].mxu0
  %v8706 = vadd.f32 0.0, %v8705
  %v8707 = vpop.f32.mrb[0].mxu0
  %8708 = vdwg.mxu0
  %v8709 = vadd.f32 %v8630, %v8695
  %v8710 = vadd.f32 %v8633, %v8698
  %v8711 = vadd.f32 %v8638, %v8703
  %v8712 = vadd.f32 %v8641, %v8706
  %v8717 = vunpack.c.l.b16 %v8453
  %v8718 = vunpack.c.l.b16 %v8454
  %v8719 = vunpack.c.l.b16 %v8455
  %v8720 = vunpack.c.l.b16 %v8456
  %v8721 = vpack.c.b16 %v8718, %v8717
  %v8722 = vpack.c.b16 %v8720, %v8719
  %v8724 = vsel %vm8523, %v8721, 0
  %v8727 = vsel %vm8523, %v8722, 0
  %8729 = vmatprep.subr.bf16.mxu0 0
  %8730 = vmatpush1.bf16.msra.mxu0 %v8428
  %8731 = vmatprep.subr.bf16.mxu0 0
  %8732 = vmatpush1.bf16.msra.mxu0 0
  %8733 = vmatprep.subr.bf16.mxu0 0
  %8734 = vmatpush1.bf16.msra.mxu0 0
  %8735 = vmatprep.subr.bf16.mxu0 0
  %8736 = vmatpush1.bf16.msra.mxu0 0
  %8737 = vmatprep.subr.bf16.mxu0 0
  %8738 = vmatpush1.bf16.msra.mxu0 0
  %8739 = vmatprep.subr.bf16.mxu0 0
  %8740 = vmatpush1.bf16.msra.mxu0 0
  %8741 = vmatprep.subr.bf16.mxu0 0
  %8742 = vmatpush1.bf16.msra.mxu0 0
  %8743 = vmatprep.subr.bf16.mxu0 0
  %8744 = vmatpush1.bf16.msra.mxu0 0
  %8745 = vmatprep.subr.bf16.mxu0 0
  %8746 = vmatpush1.bf16.msra.mxu0 0
  %8747 = vmatprep.subr.bf16.mxu0 0
  %8748 = vmatpush1.bf16.msra.mxu0 0
  %8749 = vmatprep.subr.bf16.mxu0 0
  %8750 = vmatpush1.bf16.msra.mxu0 0
  %8751 = vmatprep.subr.bf16.mxu0 0
  %8752 = vmatpush1.bf16.msra.mxu0 0
  %8753 = vmatprep.subr.bf16.mxu0 0
  %8754 = vmatpush1.bf16.msra.mxu0 0
  %8755 = vmatprep.subr.bf16.mxu0 0
  %8756 = vmatpush1.bf16.msra.mxu0 0
  %8757 = vmatprep.subr.bf16.mxu0 0
  %8758 = vmatpush1.bf16.msra.mxu0 0
  %8759 = vmatprep.subr.bf16.mxu0 0
  %8760 = vmatpush1.bf16.msra.mxu0 0
  %8761 = vmatprep.mubr.bf16.mxu0 0
  %8762 = vmatmul.mubr.bf16.gmra.mrb[0].mxu0 %v8724
  %v8763 = vpop.f32.mrb[0].mxu0
  %v8764 = vadd.f32 0.0, %v8763
  %v8765 = vpop.f32.mrb[0].mxu0
  %v8766 = vpop.f32.mrb[0].mxu0
  %v8767 = vadd.f32 0.0, %v8766
  %v8768 = vpop.f32.mrb[0].mxu0
  %8769 = vmatprep.mubr.bf16.mxu0 0
  %8770 = vmatmul.mubr.bf16.gmra.mrb[0].mxu0 %v8727
  %v8771 = vpop.f32.mrb[0].mxu0
  %v8772 = vadd.f32 0.0, %v8771
  %v8773 = vpop.f32.mrb[0].mxu0
  %v8774 = vpop.f32.mrb[0].mxu0
  %v8775 = vadd.f32 0.0, %v8774
  %v8776 = vpop.f32.mrb[0].mxu0
  %8777 = vdwg.mxu0
  %v8778 = vadd.f32 %v8709, %v8764
  %v8779 = vadd.f32 %v8710, %v8767
  %v8780 = vadd.f32 %v8711, %v8772
  %v8781 = vadd.f32 %v8712, %v8775
  %v8786 = vunpack.c.l.b16 %v8457
  %v8787 = vunpack.c.l.b16 %v8458
  %v8788 = vunpack.c.l.b16 %v8459
  %v8789 = vunpack.c.l.b16 %v8460
  %v8790 = vpack.c.b16 %v8787, %v8786
  %v8791 = vpack.c.b16 %v8789, %v8788
  %v8793 = vsel %vm8523, %v8790, 0
  %v8796 = vsel %vm8523, %v8791, 0
  %8798 = vmatprep.subr.bf16.mxu0 0
  %8799 = vmatpush1.bf16.msra.mxu0 %v8429
  %8800 = vmatprep.subr.bf16.mxu0 0
  %8801 = vmatpush1.bf16.msra.mxu0 0
  %8802 = vmatprep.subr.bf16.mxu0 0
  %8803 = vmatpush1.bf16.msra.mxu0 0
  %8804 = vmatprep.subr.bf16.mxu0 0
  %8805 = vmatpush1.bf16.msra.mxu0 0
  %8806 = vmatprep.subr.bf16.mxu0 0
  %8807 = vmatpush1.bf16.msra.mxu0 0
  %8808 = vmatprep.subr.bf16.mxu0 0
  %8809 = vmatpush1.bf16.msra.mxu0 0
  %8810 = vmatprep.subr.bf16.mxu0 0
  %8811 = vmatpush1.bf16.msra.mxu0 0
  %8812 = vmatprep.subr.bf16.mxu0 0
  %8813 = vmatpush1.bf16.msra.mxu0 0
  %8814 = vmatprep.subr.bf16.mxu0 0
  %8815 = vmatpush1.bf16.msra.mxu0 0
  %8816 = vmatprep.subr.bf16.mxu0 0
  %8817 = vmatpush1.bf16.msra.mxu0 0
  %8818 = vmatprep.subr.bf16.mxu0 0
  %8819 = vmatpush1.bf16.msra.mxu0 0
  %8820 = vmatprep.subr.bf16.mxu0 0
  %8821 = vmatpush1.bf16.msra.mxu0 0
  %8822 = vmatprep.subr.bf16.mxu0 0
  %8823 = vmatpush1.bf16.msra.mxu0 0
  %8824 = vmatprep.subr.bf16.mxu0 0
  %8825 = vmatpush1.bf16.msra.mxu0 0
  %8826 = vmatprep.subr.bf16.mxu0 0
  %8827 = vmatpush1.bf16.msra.mxu0 0
  %8828 = vmatprep.subr.bf16.mxu0 0
  %8829 = vmatpush1.bf16.msra.mxu0 0
  %8830 = vmatprep.mubr.bf16.mxu0 0
  %8831 = vmatmul.mubr.bf16.gmra.mrb[0].mxu0 %v8793
  %v8832 = vpop.f32.mrb[0].mxu0
  %v8833 = vadd.f32 0.0, %v8832
  %v8834 = vpop.f32.mrb[0].mxu0
  %v8835 = vpop.f32.mrb[0].mxu0
  %v8836 = vadd.f32 0.0, %v8835
  %v8837 = vpop.f32.mrb[0].mxu0
  %8838 = vmatprep.mubr.bf16.mxu0 0
  %8839 = vmatmul.mubr.bf16.gmra.mrb[0].mxu0 %v8796
  %v8840 = vpop.f32.mrb[0].mxu0
  %v8841 = vadd.f32 0.0, %v8840
  %v8842 = vpop.f32.mrb[0].mxu0
  %v8843 = vpop.f32.mrb[0].mxu0
  %v8844 = vadd.f32 0.0, %v8843
  %v8845 = vpop.f32.mrb[0].mxu0
  %8846 = vdwg.mxu0
  %v8847 = vadd.f32 %v8778, %v8833
  %v8848 = vadd.f32 %v8779, %v8836
  %v8849 = vadd.f32 %v8780, %v8841
  %v8850 = vadd.f32 %v8781, %v8844
  %v8855 = vunpack.c.l.b16 %v8461
  %v8856 = vunpack.c.l.b16 %v8462
  %v8857 = vunpack.c.l.b16 %v8463
  %v8858 = vunpack.c.l.b16 %v8464
  %v8859 = vpack.c.b16 %v8856, %v8855
  %v8860 = vpack.c.b16 %v8858, %v8857
  %v8862 = vsel %vm8523, %v8859, 0
  %v8865 = vsel %vm8523, %v8860, 0
  %8867 = vmatprep.subr.bf16.mxu0 0
  %8868 = vmatpush1.bf16.msra.mxu0 %v8430
  %8869 = vmatprep.subr.bf16.mxu0 0
  %8870 = vmatpush1.bf16.msra.mxu0 0
  %8871 = vmatprep.subr.bf16.mxu0 0
  %8872 = vmatpush1.bf16.msra.mxu0 0
  %8873 = vmatprep.subr.bf16.mxu0 0
  %8874 = vmatpush1.bf16.msra.mxu0 0
  %8875 = vmatprep.subr.bf16.mxu0 0
  %8876 = vmatpush1.bf16.msra.mxu0 0
  %8877 = vmatprep.subr.bf16.mxu0 0
  %8878 = vmatpush1.bf16.msra.mxu0 0
  %8879 = vmatprep.subr.bf16.mxu0 0
  %8880 = vmatpush1.bf16.msra.mxu0 0
  %8881 = vmatprep.subr.bf16.mxu0 0
  %8882 = vmatpush1.bf16.msra.mxu0 0
  %8883 = vmatprep.subr.bf16.mxu0 0
  %8884 = vmatpush1.bf16.msra.mxu0 0
  %8885 = vmatprep.subr.bf16.mxu0 0
  %8886 = vmatpush1.bf16.msra.mxu0 0
  %8887 = vmatprep.subr.bf16.mxu0 0
  %8888 = vmatpush1.bf16.msra.mxu0 0
  %8889 = vmatprep.subr.bf16.mxu0 0
  %8890 = vmatpush1.bf16.msra.mxu0 0
  %8891 = vmatprep.subr.bf16.mxu0 0
  %8892 = vmatpush1.bf16.msra.mxu0 0
  %8893 = vmatprep.subr.bf16.mxu0 0
  %8894 = vmatpush1.bf16.msra.mxu0 0
  %8895 = vmatprep.subr.bf16.mxu0 0
  %8896 = vmatpush1.bf16.msra.mxu0 0
  %8897 = vmatprep.subr.bf16.mxu0 0
  %8898 = vmatpush1.bf16.msra.mxu0 0
  %8899 = vmatprep.mubr.bf16.mxu0 0
  %8900 = vmatmul.mubr.bf16.gmra.mrb[0].mxu0 %v8862
  %v8901 = vpop.f32.mrb[0].mxu0
  %v8902 = vadd.f32 0.0, %v8901
  %v8903 = vpop.f32.mrb[0].mxu0
  %v8904 = vpop.f32.mrb[0].mxu0
  %v8905 = vadd.f32 0.0, %v8904
  %v8906 = vpop.f32.mrb[0].mxu0
  %8907 = vmatprep.mubr.bf16.mxu0 0
  %8908 = vmatmul.mubr.bf16.gmra.mrb[0].mxu0 %v8865
  %v8909 = vpop.f32.mrb[0].mxu0
  %v8910 = vadd.f32 0.0, %v8909
  %v8911 = vpop.f32.mrb[0].mxu0
  %v8912 = vpop.f32.mrb[0].mxu0
  %v8913 = vadd.f32 0.0, %v8912
  %v8914 = vpop.f32.mrb[0].mxu0
  %8915 = vdwg.mxu0
  %v8916 = vadd.f32 %v8847, %v8902
  %v8917 = vadd.f32 %v8848, %v8905
  %v8918 = vadd.f32 %v8849, %v8910
  %v8919 = vadd.f32 %v8850, %v8913
  %v8924 = vunpack.c.l.b16 %v8465
  %v8925 = vunpack.c.l.b16 %v8466
  %v8926 = vunpack.c.l.b16 %v8467
  %v8927 = vunpack.c.l.b16 %v8468
  %v8928 = vpack.c.b16 %v8925, %v8924
  %v8929 = vpack.c.b16 %v8927, %v8926
  %v8931 = vsel %vm8523, %v8928, 0
  %v8934 = vsel %vm8523, %v8929, 0
  %8936 = vmatprep.subr.bf16.mxu0 0
  %8937 = vmatpush1.bf16.msra.mxu0 %v8431
  %8938 = vmatprep.subr.bf16.mxu0 0
  %8939 = vmatpush1.bf16.msra.mxu0 0
  %8940 = vmatprep.subr.bf16.mxu0 0
  %8941 = vmatpush1.bf16.msra.mxu0 0
  %8942 = vmatprep.subr.bf16.mxu0 0
  %8943 = vmatpush1.bf16.msra.mxu0 0
  %8944 = vmatprep.subr.bf16.mxu0 0
  %8945 = vmatpush1.bf16.msra.mxu0 0
  %8946 = vmatprep.subr.bf16.mxu0 0
  %8947 = vmatpush1.bf16.msra.mxu0 0
  %8948 = vmatprep.subr.bf16.mxu0 0
  %8949 = vmatpush1.bf16.msra.mxu0 0
  %8950 = vmatprep.subr.bf16.mxu0 0
  %8951 = vmatpush1.bf16.msra.mxu0 0
  %8952 = vmatprep.subr.bf16.mxu0 0
  %8953 = vmatpush1.bf16.msra.mxu0 0
  %8954 = vmatprep.subr.bf16.mxu0 0
  %8955 = vmatpush1.bf16.msra.mxu0 0
  %8956 = vmatprep.subr.bf16.mxu0 0
  %8957 = vmatpush1.bf16.msra.mxu0 0
  %8958 = vmatprep.subr.bf16.mxu0 0
  %8959 = vmatpush1.bf16.msra.mxu0 0
  %8960 = vmatprep.subr.bf16.mxu0 0
  %8961 = vmatpush1.bf16.msra.mxu0 0
  %8962 = vmatprep.subr.bf16.mxu0 0
  %8963 = vmatpush1.bf16.msra.mxu0 0
  %8964 = vmatprep.subr.bf16.mxu0 0
  %8965 = vmatpush1.bf16.msra.mxu0 0
  %8966 = vmatprep.subr.bf16.mxu0 0
  %8967 = vmatpush1.bf16.msra.mxu0 0
  %8968 = vmatprep.mubr.bf16.mxu0 0
  %8969 = vmatmul.mubr.bf16.gmra.mrb[0].mxu0 %v8931
  %v8970 = vpop.f32.mrb[0].mxu0
  %v8971 = vadd.f32 0.0, %v8970
  %v8972 = vpop.f32.mrb[0].mxu0
  %v8973 = vpop.f32.mrb[0].mxu0
  %v8974 = vadd.f32 0.0, %v8973
  %v8975 = vpop.f32.mrb[0].mxu0
  %8976 = vmatprep.mubr.bf16.mxu0 0
  %8977 = vmatmul.mubr.bf16.gmra.mrb[0].mxu0 %v8934
  %v8978 = vpop.f32.mrb[0].mxu0
  %v8979 = vadd.f32 0.0, %v8978
  %v8980 = vpop.f32.mrb[0].mxu0
  %v8981 = vpop.f32.mrb[0].mxu0
  %v8982 = vadd.f32 0.0, %v8981
  %v8983 = vpop.f32.mrb[0].mxu0
  %8984 = vdwg.mxu0
  %v8985 = vadd.f32 %v8916, %v8971
  %v8986 = vadd.f32 %v8917, %v8974
  %v8987 = vadd.f32 %v8918, %v8979
  %v8988 = vadd.f32 %v8919, %v8982
  %v8993 = vunpack.c.l.b16 %v8469
  %v8994 = vunpack.c.l.b16 %v8470
  %v8995 = vunpack.c.l.b16 %v8471
  %v8996 = vunpack.c.l.b16 %v8472
  %v8997 = vpack.c.b16 %v8994, %v8993
  %v8998 = vpack.c.b16 %v8996, %v8995
  %v9000 = vsel %vm8523, %v8997, 0
  %v9003 = vsel %vm8523, %v8998, 0
  %9005 = vmatprep.subr.bf16.mxu0 0
  %9006 = vmatpush1.bf16.msra.mxu0 %v8432
  %9007 = vmatprep.subr.bf16.mxu0 0
  %9008 = vmatpush1.bf16.msra.mxu0 0
  %9009 = vmatprep.subr.bf16.mxu0 0
  %9010 = vmatpush1.bf16.msra.mxu0 0
  %9011 = vmatprep.subr.bf16.mxu0 0
  %9012 = vmatpush1.bf16.msra.mxu0 0
  %9013 = vmatprep.subr.bf16.mxu0 0
  %9014 = vmatpush1.bf16.msra.mxu0 0
  %9015 = vmatprep.subr.bf16.mxu0 0
  %9016 = vmatpush1.bf16.msra.mxu0 0
  %9017 = vmatprep.subr.bf16.mxu0 0
  %9018 = vmatpush1.bf16.msra.mxu0 0
  %9019 = vmatprep.subr.bf16.mxu0 0
  %9020 = vmatpush1.bf16.msra.mxu0 0
  %9021 = vmatprep.subr.bf16.mxu0 0
  %9022 = vmatpush1.bf16.msra.mxu0 0
  %9023 = vmatprep.subr.bf16.mxu0 0
  %9024 = vmatpush1.bf16.msra.mxu0 0
  %9025 = vmatprep.subr.bf16.mxu0 0
  %9026 = vmatpush1.bf16.msra.mxu0 0
  %9027 = vmatprep.subr.bf16.mxu0 0
  %9028 = vmatpush1.bf16.msra.mxu0 0
  %9029 = vmatprep.subr.bf16.mxu0 0
  %9030 = vmatpush1.bf16.msra.mxu0 0
  %9031 = vmatprep.subr.bf16.mxu0 0
  %9032 = vmatpush1.bf16.msra.mxu0 0
  %9033 = vmatprep.subr.bf16.mxu0 0
  %9034 = vmatpush1.bf16.msra.mxu0 0
  %9035 = vmatprep.subr.bf16.mxu0 0
  %9036 = vmatpush1.bf16.msra.mxu0 0
  %9037 = vmatprep.mubr.bf16.mxu0 0
  %9038 = vmatmul.mubr.bf16.gmra.mrb[0].mxu0 %v9000
  %v9039 = vpop.f32.mrb[0].mxu0
  %v9040 = vadd.f32 0.0, %v9039
  %v9041 = vpop.f32.mrb[0].mxu0
  %v9042 = vpop.f32.mrb[0].mxu0
  %v9043 = vadd.f32 0.0, %v9042
  %v9044 = vpop.f32.mrb[0].mxu0
  %9045 = vmatprep.mubr.bf16.mxu0 0
  %9046 = vmatmul.mubr.bf16.gmra.mrb[0].mxu0 %v9003
  %v9047 = vpop.f32.mrb[0].mxu0
  %v9048 = vadd.f32 0.0, %v9047
  %v9049 = vpop.f32.mrb[0].mxu0
  %v9050 = vpop.f32.mrb[0].mxu0
  %v9051 = vadd.f32 0.0, %v9050
  %v9052 = vpop.f32.mrb[0].mxu0
  %9053 = vdwg.mxu0
  %v9054 = vadd.f32 %v8985, %v9040
  %v9055 = vadd.f32 %v8986, %v9043
  %v9056 = vadd.f32 %v8987, %v9048
  %v9057 = vadd.f32 %v8988, %v9051
  %v9062 = vunpack.c.l.b16 %v8473
  %v9063 = vunpack.c.l.b16 %v8474
  %v9064 = vunpack.c.l.b16 %v8475
  %v9065 = vunpack.c.l.b16 %v8476
  %v9066 = vpack.c.b16 %v9063, %v9062
  %v9067 = vpack.c.b16 %v9065, %v9064
  %v9069 = vsel %vm8523, %v9066, 0
  %v9072 = vsel %vm8523, %v9067, 0
  %9074 = vmatprep.subr.bf16.mxu0 0
  %9075 = vmatpush1.bf16.msra.mxu0 %v8433
  %9076 = vmatprep.subr.bf16.mxu0 0
  %9077 = vmatpush1.bf16.msra.mxu0 0
  %9078 = vmatprep.subr.bf16.mxu0 0
  %9079 = vmatpush1.bf16.msra.mxu0 0
  %9080 = vmatprep.subr.bf16.mxu0 0
  %9081 = vmatpush1.bf16.msra.mxu0 0
  %9082 = vmatprep.subr.bf16.mxu0 0
  %9083 = vmatpush1.bf16.msra.mxu0 0
  %9084 = vmatprep.subr.bf16.mxu0 0
  %9085 = vmatpush1.bf16.msra.mxu0 0
  %9086 = vmatprep.subr.bf16.mxu0 0
  %9087 = vmatpush1.bf16.msra.mxu0 0
  %9088 = vmatprep.subr.bf16.mxu0 0
  %9089 = vmatpush1.bf16.msra.mxu0 0
  %9090 = vmatprep.subr.bf16.mxu0 0
  %9091 = vmatpush1.bf16.msra.mxu0 0
  %9092 = vmatprep.subr.bf16.mxu0 0
  %9093 = vmatpush1.bf16.msra.mxu0 0
  %9094 = vmatprep.subr.bf16.mxu0 0
  %9095 = vmatpush1.bf16.msra.mxu0 0
  %9096 = vmatprep.subr.bf16.mxu0 0
  %9097 = vmatpush1.bf16.msra.mxu0 0
  %9098 = vmatprep.subr.bf16.mxu0 0
  %9099 = vmatpush1.bf16.msra.mxu0 0
  %9100 = vmatprep.subr.bf16.mxu0 0
  %9101 = vmatpush1.bf16.msra.mxu0 0
  %9102 = vmatprep.subr.bf16.mxu0 0
  %9103 = vmatpush1.bf16.msra.mxu0 0
  %9104 = vmatprep.subr.bf16.mxu0 0
  %9105 = vmatpush1.bf16.msra.mxu0 0
  %9106 = vmatprep.mubr.bf16.mxu0 0
  %9107 = vmatmul.mubr.bf16.gmra.mrb[0].mxu0 %v9069
  %v9108 = vpop.f32.mrb[0].mxu0
  %v9109 = vadd.f32 0.0, %v9108
  %v9110 = vpop.f32.mrb[0].mxu0
  %v9111 = vpop.f32.mrb[0].mxu0
  %v9112 = vadd.f32 0.0, %v9111
  %v9113 = vpop.f32.mrb[0].mxu0
  %9114 = vmatprep.mubr.bf16.mxu0 0
  %9115 = vmatmul.mubr.bf16.gmra.mrb[0].mxu0 %v9072
  %v9116 = vpop.f32.mrb[0].mxu0
  %v9117 = vadd.f32 0.0, %v9116
  %v9118 = vpop.f32.mrb[0].mxu0
  %v9119 = vpop.f32.mrb[0].mxu0
  %v9120 = vadd.f32 0.0, %v9119
  %v9121 = vpop.f32.mrb[0].mxu0
  %9122 = vdwg.mxu0
  %v9123 = vadd.f32 %v9054, %v9109
  %v9124 = vadd.f32 %v9055, %v9112
  %v9125 = vadd.f32 %v9056, %v9117
  %v9126 = vadd.f32 %v9057, %v9120
  %v9131 = vunpack.c.l.b16 %v8477
  %v9132 = vunpack.c.l.b16 %v8478
  %v9133 = vunpack.c.l.b16 %v8479
  %v9134 = vunpack.c.l.b16 %v8480
  %v9135 = vpack.c.b16 %v9132, %v9131
  %v9136 = vpack.c.b16 %v9134, %v9133
  %v9138 = vsel %vm8523, %v9135, 0
  %v9141 = vsel %vm8523, %v9136, 0
  %9143 = vmatprep.subr.bf16.mxu0 0
  %9144 = vmatpush1.bf16.msra.mxu0 %v8434
  %9145 = vmatprep.subr.bf16.mxu0 0
  %9146 = vmatpush1.bf16.msra.mxu0 0
  %9147 = vmatprep.subr.bf16.mxu0 0
  %9148 = vmatpush1.bf16.msra.mxu0 0
  %9149 = vmatprep.subr.bf16.mxu0 0
  %9150 = vmatpush1.bf16.msra.mxu0 0
  %9151 = vmatprep.subr.bf16.mxu0 0
  %9152 = vmatpush1.bf16.msra.mxu0 0
  %9153 = vmatprep.subr.bf16.mxu0 0
  %9154 = vmatpush1.bf16.msra.mxu0 0
  %9155 = vmatprep.subr.bf16.mxu0 0
  %9156 = vmatpush1.bf16.msra.mxu0 0
  %9157 = vmatprep.subr.bf16.mxu0 0
  %9158 = vmatpush1.bf16.msra.mxu0 0
  %9159 = vmatprep.subr.bf16.mxu0 0
  %9160 = vmatpush1.bf16.msra.mxu0 0
  %9161 = vmatprep.subr.bf16.mxu0 0
  %9162 = vmatpush1.bf16.msra.mxu0 0
  %9163 = vmatprep.subr.bf16.mxu0 0
  %9164 = vmatpush1.bf16.msra.mxu0 0
  %9165 = vmatprep.subr.bf16.mxu0 0
  %9166 = vmatpush1.bf16.msra.mxu0 0
  %9167 = vmatprep.subr.bf16.mxu0 0
  %9168 = vmatpush1.bf16.msra.mxu0 0
  %9169 = vmatprep.subr.bf16.mxu0 0
  %9170 = vmatpush1.bf16.msra.mxu0 0
  %9171 = vmatprep.subr.bf16.mxu0 0
  %9172 = vmatpush1.bf16.msra.mxu0 0
  %9173 = vmatprep.subr.bf16.mxu0 0
  %9174 = vmatpush1.bf16.msra.mxu0 0
  %9175 = vmatprep.mubr.bf16.mxu0 0
  %9176 = vmatmul.mubr.bf16.gmra.mrb[0].mxu0 %v9138
  %v9177 = vpop.f32.mrb[0].mxu0
  %v9178 = vadd.f32 0.0, %v9177
  %v9179 = vpop.f32.mrb[0].mxu0
  %v9180 = vpop.f32.mrb[0].mxu0
  %v9181 = vadd.f32 0.0, %v9180
  %v9182 = vpop.f32.mrb[0].mxu0
  %9183 = vmatprep.mubr.bf16.mxu0 0
  %9184 = vmatmul.mubr.bf16.gmra.mrb[0].mxu0 %v9141
  %v9185 = vpop.f32.mrb[0].mxu0
  %v9186 = vadd.f32 0.0, %v9185
  %v9187 = vpop.f32.mrb[0].mxu0
  %v9188 = vpop.f32.mrb[0].mxu0
  %v9189 = vadd.f32 0.0, %v9188
  %v9190 = vpop.f32.mrb[0].mxu0
  %9191 = vdwg.mxu0
  %v9192 = vadd.f32 %v9123, %v9178
  %v9193 = vadd.f32 %v9124, %v9181
  %v9194 = vadd.f32 %v9125, %v9186
  %v9195 = vadd.f32 %v9126, %v9189
  %v9200 = vunpack.c.l.b16 %v8481
  %v9201 = vunpack.c.l.b16 %v8482
  %v9202 = vunpack.c.l.b16 %v8483
  %v9203 = vunpack.c.l.b16 %v8484
  %v9204 = vpack.c.b16 %v9201, %v9200
  %v9205 = vpack.c.b16 %v9203, %v9202
  %v9207 = vsel %vm8523, %v9204, 0
  %v9210 = vsel %vm8523, %v9205, 0
  %9212 = vmatprep.subr.bf16.mxu0 0
  %9213 = vmatpush1.bf16.msra.mxu0 %v8435
  %9214 = vmatprep.subr.bf16.mxu0 0
  %9215 = vmatpush1.bf16.msra.mxu0 0
  %9216 = vmatprep.subr.bf16.mxu0 0
  %9217 = vmatpush1.bf16.msra.mxu0 0
  %9218 = vmatprep.subr.bf16.mxu0 0
  %9219 = vmatpush1.bf16.msra.mxu0 0
  %9220 = vmatprep.subr.bf16.mxu0 0
  %9221 = vmatpush1.bf16.msra.mxu0 0
  %9222 = vmatprep.subr.bf16.mxu0 0
  %9223 = vmatpush1.bf16.msra.mxu0 0
  %9224 = vmatprep.subr.bf16.mxu0 0
  %9225 = vmatpush1.bf16.msra.mxu0 0
  %9226 = vmatprep.subr.bf16.mxu0 0
  %9227 = vmatpush1.bf16.msra.mxu0 0
  %9228 = vmatprep.subr.bf16.mxu0 0
  %9229 = vmatpush1.bf16.msra.mxu0 0
  %9230 = vmatprep.subr.bf16.mxu0 0
  %9231 = vmatpush1.bf16.msra.mxu0 0
  %9232 = vmatprep.subr.bf16.mxu0 0
  %9233 = vmatpush1.bf16.msra.mxu0 0
  %9234 = vmatprep.subr.bf16.mxu0 0
  %9235 = vmatpush1.bf16.msra.mxu0 0
  %9236 = vmatprep.subr.bf16.mxu0 0
  %9237 = vmatpush1.bf16.msra.mxu0 0
  %9238 = vmatprep.subr.bf16.mxu0 0
  %9239 = vmatpush1.bf16.msra.mxu0 0
  %9240 = vmatprep.subr.bf16.mxu0 0
  %9241 = vmatpush1.bf16.msra.mxu0 0
  %9242 = vmatprep.subr.bf16.mxu0 0
  %9243 = vmatpush1.bf16.msra.mxu0 0
  %9244 = vmatprep.mubr.bf16.mxu0 0
  %9245 = vmatmul.mubr.bf16.gmra.mrb[0].mxu0 %v9207
  %v9246 = vpop.f32.mrb[0].mxu0
  %v9247 = vadd.f32 0.0, %v9246
  %v9248 = vpop.f32.mrb[0].mxu0
  %v9249 = vpop.f32.mrb[0].mxu0
  %v9250 = vadd.f32 0.0, %v9249
  %v9251 = vpop.f32.mrb[0].mxu0
  %9252 = vmatprep.mubr.bf16.mxu0 0
  %9253 = vmatmul.mubr.bf16.gmra.mrb[0].mxu0 %v9210
  %v9254 = vpop.f32.mrb[0].mxu0
  %v9255 = vadd.f32 0.0, %v9254
  %v9256 = vpop.f32.mrb[0].mxu0
  %v9257 = vpop.f32.mrb[0].mxu0
  %v9258 = vadd.f32 0.0, %v9257
  %v9259 = vpop.f32.mrb[0].mxu0
  %9260 = vdwg.mxu0
  %v9261 = vadd.f32 %v9192, %v9247
  %v9262 = vadd.f32 %v9193, %v9250
  %v9263 = vadd.f32 %v9194, %v9255
  %v9264 = vadd.f32 %v9195, %v9258
  %v9269 = vunpack.c.l.b16 %v8485
  %v9270 = vunpack.c.l.b16 %v8486
  %v9271 = vunpack.c.l.b16 %v8487
  %v9272 = vunpack.c.l.b16 %v8488
  %v9273 = vpack.c.b16 %v9270, %v9269
  %v9274 = vpack.c.b16 %v9272, %v9271
  %v9276 = vsel %vm8523, %v9273, 0
  %v9279 = vsel %vm8523, %v9274, 0
  %9281 = vmatprep.subr.bf16.mxu0 0
  %9282 = vmatpush1.bf16.msra.mxu0 %v8436
  %9283 = vmatprep.subr.bf16.mxu0 0
  %9284 = vmatpush1.bf16.msra.mxu0 0
  %9285 = vmatprep.subr.bf16.mxu0 0
  %9286 = vmatpush1.bf16.msra.mxu0 0
  %9287 = vmatprep.subr.bf16.mxu0 0
  %9288 = vmatpush1.bf16.msra.mxu0 0
  %9289 = vmatprep.subr.bf16.mxu0 0
  %9290 = vmatpush1.bf16.msra.mxu0 0
  %9291 = vmatprep.subr.bf16.mxu0 0
  %9292 = vmatpush1.bf16.msra.mxu0 0
  %9293 = vmatprep.subr.bf16.mxu0 0
  %9294 = vmatpush1.bf16.msra.mxu0 0
  %9295 = vmatprep.subr.bf16.mxu0 0
  %9296 = vmatpush1.bf16.msra.mxu0 0
  %9297 = vmatprep.subr.bf16.mxu0 0
  %9298 = vmatpush1.bf16.msra.mxu0 0
  %9299 = vmatprep.subr.bf16.mxu0 0
  %9300 = vmatpush1.bf16.msra.mxu0 0
  %9301 = vmatprep.subr.bf16.mxu0 0
  %9302 = vmatpush1.bf16.msra.mxu0 0
  %9303 = vmatprep.subr.bf16.mxu0 0
  %9304 = vmatpush1.bf16.msra.mxu0 0
  %9305 = vmatprep.subr.bf16.mxu0 0
  %9306 = vmatpush1.bf16.msra.mxu0 0
  %9307 = vmatprep.subr.bf16.mxu0 0
  %9308 = vmatpush1.bf16.msra.mxu0 0
  %9309 = vmatprep.subr.bf16.mxu0 0
  %9310 = vmatpush1.bf16.msra.mxu0 0
  %9311 = vmatprep.subr.bf16.mxu0 0
  %9312 = vmatpush1.bf16.msra.mxu0 0
  %9313 = vmatprep.mubr.bf16.mxu0 0
  %9314 = vmatmul.mubr.bf16.gmra.mrb[0].mxu0 %v9276
  %v9315 = vpop.f32.mrb[0].mxu0
  %v9316 = vadd.f32 0.0, %v9315
  %v9317 = vpop.f32.mrb[0].mxu0
  %v9318 = vpop.f32.mrb[0].mxu0
  %v9319 = vadd.f32 0.0, %v9318
  %v9320 = vpop.f32.mrb[0].mxu0
  %9321 = vmatprep.mubr.bf16.mxu0 0
  %9322 = vmatmul.mubr.bf16.gmra.mrb[0].mxu0 %v9279
  %v9323 = vpop.f32.mrb[0].mxu0
  %v9324 = vadd.f32 0.0, %v9323
  %v9325 = vpop.f32.mrb[0].mxu0
  %v9326 = vpop.f32.mrb[0].mxu0
  %v9327 = vadd.f32 0.0, %v9326
  %v9328 = vpop.f32.mrb[0].mxu0
  %9329 = vdwg.mxu0
  %v9330 = vadd.f32 %v9261, %v9316
  %v9331 = vadd.f32 %v9262, %v9319
  %v9332 = vadd.f32 %v9263, %v9324
  %v9333 = vadd.f32 %v9264, %v9327
  %v9338 = vunpack.c.l.b16 %v8489
  %v9339 = vunpack.c.l.b16 %v8490
  %v9340 = vunpack.c.l.b16 %v8491
  %v9341 = vunpack.c.l.b16 %v8492
  %v9342 = vpack.c.b16 %v9339, %v9338
  %v9343 = vpack.c.b16 %v9341, %v9340
  %v9345 = vsel %vm8523, %v9342, 0
  %v9348 = vsel %vm8523, %v9343, 0
  %9350 = vmatprep.subr.bf16.mxu0 0
  %9351 = vmatpush1.bf16.msra.mxu0 %v8437
  %9352 = vmatprep.subr.bf16.mxu0 0
  %9353 = vmatpush1.bf16.msra.mxu0 0
  %9354 = vmatprep.subr.bf16.mxu0 0
  %9355 = vmatpush1.bf16.msra.mxu0 0
  %9356 = vmatprep.subr.bf16.mxu0 0
  %9357 = vmatpush1.bf16.msra.mxu0 0
  %9358 = vmatprep.subr.bf16.mxu0 0
  %9359 = vmatpush1.bf16.msra.mxu0 0
  %9360 = vmatprep.subr.bf16.mxu0 0
  %9361 = vmatpush1.bf16.msra.mxu0 0
  %9362 = vmatprep.subr.bf16.mxu0 0
  %9363 = vmatpush1.bf16.msra.mxu0 0
  %9364 = vmatprep.subr.bf16.mxu0 0
  %9365 = vmatpush1.bf16.msra.mxu0 0
  %9366 = vmatprep.subr.bf16.mxu0 0
  %9367 = vmatpush1.bf16.msra.mxu0 0
  %9368 = vmatprep.subr.bf16.mxu0 0
  %9369 = vmatpush1.bf16.msra.mxu0 0
  %9370 = vmatprep.subr.bf16.mxu0 0
  %9371 = vmatpush1.bf16.msra.mxu0 0
  %9372 = vmatprep.subr.bf16.mxu0 0
  %9373 = vmatpush1.bf16.msra.mxu0 0
  %9374 = vmatprep.subr.bf16.mxu0 0
  %9375 = vmatpush1.bf16.msra.mxu0 0
  %9376 = vmatprep.subr.bf16.mxu0 0
  %9377 = vmatpush1.bf16.msra.mxu0 0
  %9378 = vmatprep.subr.bf16.mxu0 0
  %9379 = vmatpush1.bf16.msra.mxu0 0
  %9380 = vmatprep.subr.bf16.mxu0 0
  %9381 = vmatpush1.bf16.msra.mxu0 0
  %9382 = vmatprep.mubr.bf16.mxu0 0
  %9383 = vmatmul.mubr.bf16.gmra.mrb[0].mxu0 %v9345
  %v9384 = vpop.f32.mrb[0].mxu0
  %v9385 = vadd.f32 0.0, %v9384
  %v9386 = vpop.f32.mrb[0].mxu0
  %v9387 = vpop.f32.mrb[0].mxu0
  %v9388 = vadd.f32 0.0, %v9387
  %v9389 = vpop.f32.mrb[0].mxu0
  %9390 = vmatprep.mubr.bf16.mxu0 0
  %9391 = vmatmul.mubr.bf16.gmra.mrb[0].mxu0 %v9348
  %v9392 = vpop.f32.mrb[0].mxu0
  %v9393 = vadd.f32 0.0, %v9392
  %v9394 = vpop.f32.mrb[0].mxu0
  %v9395 = vpop.f32.mrb[0].mxu0
  %v9396 = vadd.f32 0.0, %v9395
  %v9397 = vpop.f32.mrb[0].mxu0
  %9398 = vdwg.mxu0
  %v9399 = vadd.f32 %v9330, %v9385
  %v9400 = vadd.f32 %v9331, %v9388
  %v9401 = vadd.f32 %v9332, %v9393
  %v9402 = vadd.f32 %v9333, %v9396
  %v9407 = vunpack.c.l.b16 %v8493
  %v9408 = vunpack.c.l.b16 %v8494
  %v9409 = vunpack.c.l.b16 %v8495
  %v9410 = vunpack.c.l.b16 %v8496
  %v9411 = vpack.c.b16 %v9408, %v9407
  %v9412 = vpack.c.b16 %v9410, %v9409
  %v9414 = vsel %vm8523, %v9411, 0
  %v9417 = vsel %vm8523, %v9412, 0
  %9419 = vmatprep.subr.bf16.mxu0 0
  %9420 = vmatpush1.bf16.msra.mxu0 %v8438
  %9421 = vmatprep.subr.bf16.mxu0 0
  %9422 = vmatpush1.bf16.msra.mxu0 0
  %9423 = vmatprep.subr.bf16.mxu0 0
  %9424 = vmatpush1.bf16.msra.mxu0 0
  %9425 = vmatprep.subr.bf16.mxu0 0
  %9426 = vmatpush1.bf16.msra.mxu0 0
  %9427 = vmatprep.subr.bf16.mxu0 0
  %9428 = vmatpush1.bf16.msra.mxu0 0
  %9429 = vmatprep.subr.bf16.mxu0 0
  %9430 = vmatpush1.bf16.msra.mxu0 0
  %9431 = vmatprep.subr.bf16.mxu0 0
  %9432 = vmatpush1.bf16.msra.mxu0 0
  %9433 = vmatprep.subr.bf16.mxu0 0
  %9434 = vmatpush1.bf16.msra.mxu0 0
  %9435 = vmatprep.subr.bf16.mxu0 0
  %9436 = vmatpush1.bf16.msra.mxu0 0
  %9437 = vmatprep.subr.bf16.mxu0 0
  %9438 = vmatpush1.bf16.msra.mxu0 0
  %9439 = vmatprep.subr.bf16.mxu0 0
  %9440 = vmatpush1.bf16.msra.mxu0 0
  %9441 = vmatprep.subr.bf16.mxu0 0
  %9442 = vmatpush1.bf16.msra.mxu0 0
  %9443 = vmatprep.subr.bf16.mxu0 0
  %9444 = vmatpush1.bf16.msra.mxu0 0
  %9445 = vmatprep.subr.bf16.mxu0 0
  %9446 = vmatpush1.bf16.msra.mxu0 0
  %9447 = vmatprep.subr.bf16.mxu0 0
  %9448 = vmatpush1.bf16.msra.mxu0 0
  %9449 = vmatprep.subr.bf16.mxu0 0
  %9450 = vmatpush1.bf16.msra.mxu0 0
  %9451 = vmatprep.mubr.bf16.mxu0 0
  %9452 = vmatmul.mubr.bf16.gmra.mrb[0].mxu0 %v9414
  %v9453 = vpop.f32.mrb[0].mxu0
  %v9454 = vadd.f32 0.0, %v9453
  %v9455 = vpop.f32.mrb[0].mxu0
  %v9456 = vpop.f32.mrb[0].mxu0
  %v9457 = vadd.f32 0.0, %v9456
  %v9458 = vpop.f32.mrb[0].mxu0
  %9459 = vmatprep.mubr.bf16.mxu0 0
  %9460 = vmatmul.mubr.bf16.gmra.mrb[0].mxu0 %v9417
  %v9461 = vpop.f32.mrb[0].mxu0
  %v9462 = vadd.f32 0.0, %v9461
  %v9463 = vpop.f32.mrb[0].mxu0
  %v9464 = vpop.f32.mrb[0].mxu0
  %v9465 = vadd.f32 0.0, %v9464
  %v9466 = vpop.f32.mrb[0].mxu0
  %9467 = vdwg.mxu0
  %v9468 = vadd.f32 %v9399, %v9454
  %v9469 = vadd.f32 %v9400, %v9457
  %v9470 = vadd.f32 %v9401, %v9462
  %v9471 = vadd.f32 %v9402, %v9465
  %v9476 = vunpack.c.l.b16 %v8497
  %v9477 = vunpack.c.l.b16 %v8498
  %v9478 = vunpack.c.l.b16 %v8499
  %v9479 = vunpack.c.l.b16 %v8500
  %v9480 = vpack.c.b16 %v9477, %v9476
  %v9481 = vpack.c.b16 %v9479, %v9478
  %v9483 = vsel %vm8523, %v9480, 0
  %v9486 = vsel %vm8523, %v9481, 0
  %9488 = vmatprep.subr.bf16.mxu0 0
  %9489 = vmatpush1.bf16.msra.mxu0 %v8439
  %9490 = vmatprep.subr.bf16.mxu0 0
  %9491 = vmatpush1.bf16.msra.mxu0 0
  %9492 = vmatprep.subr.bf16.mxu0 0
  %9493 = vmatpush1.bf16.msra.mxu0 0
  %9494 = vmatprep.subr.bf16.mxu0 0
  %9495 = vmatpush1.bf16.msra.mxu0 0
  %9496 = vmatprep.subr.bf16.mxu0 0
  %9497 = vmatpush1.bf16.msra.mxu0 0
  %9498 = vmatprep.subr.bf16.mxu0 0
  %9499 = vmatpush1.bf16.msra.mxu0 0
  %9500 = vmatprep.subr.bf16.mxu0 0
  %9501 = vmatpush1.bf16.msra.mxu0 0
  %9502 = vmatprep.subr.bf16.mxu0 0
  %9503 = vmatpush1.bf16.msra.mxu0 0
  %9504 = vmatprep.subr.bf16.mxu0 0
  %9505 = vmatpush1.bf16.msra.mxu0 0
  %9506 = vmatprep.subr.bf16.mxu0 0
  %9507 = vmatpush1.bf16.msra.mxu0 0
  %9508 = vmatprep.subr.bf16.mxu0 0
  %9509 = vmatpush1.bf16.msra.mxu0 0
  %9510 = vmatprep.subr.bf16.mxu0 0
  %9511 = vmatpush1.bf16.msra.mxu0 0
  %9512 = vmatprep.subr.bf16.mxu0 0
  %9513 = vmatpush1.bf16.msra.mxu0 0
  %9514 = vmatprep.subr.bf16.mxu0 0
  %9515 = vmatpush1.bf16.msra.mxu0 0
  %9516 = vmatprep.subr.bf16.mxu0 0
  %9517 = vmatpush1.bf16.msra.mxu0 0
  %9518 = vmatprep.subr.bf16.mxu0 0
  %9519 = vmatpush1.bf16.msra.mxu0 0
  %9520 = vmatprep.mubr.bf16.mxu0 0
  %9521 = vmatmul.mubr.bf16.gmra.mrb[0].mxu0 %v9483
  %v9522 = vpop.f32.mrb[0].mxu0
  %v9523 = vadd.f32 0.0, %v9522
  %v9524 = vpop.f32.mrb[0].mxu0
  %v9525 = vpop.f32.mrb[0].mxu0
  %v9526 = vadd.f32 0.0, %v9525
  %v9527 = vpop.f32.mrb[0].mxu0
  %9528 = vmatprep.mubr.bf16.mxu0 0
  %9529 = vmatmul.mubr.bf16.gmra.mrb[0].mxu0 %v9486
  %v9530 = vpop.f32.mrb[0].mxu0
  %v9531 = vadd.f32 0.0, %v9530
  %v9532 = vpop.f32.mrb[0].mxu0
  %v9533 = vpop.f32.mrb[0].mxu0
  %v9534 = vadd.f32 0.0, %v9533
  %v9535 = vpop.f32.mrb[0].mxu0
  %9536 = vdwg.mxu0
  %v9537 = vadd.f32 %v9468, %v9523
  %v9538 = vadd.f32 %v9469, %v9526
  %v9539 = vadd.f32 %v9470, %v9531
  %v9540 = vadd.f32 %v9471, %v9534
  %v9545 = vunpack.c.l.b16 %v8501
  %v9546 = vunpack.c.l.b16 %v8502
  %v9547 = vunpack.c.l.b16 %v8503
  %v9548 = vunpack.c.l.b16 %v8504
  %v9549 = vpack.c.b16 %v9546, %v9545
  %v9550 = vpack.c.b16 %v9548, %v9547
  %v9552 = vsel %vm8523, %v9549, 0
  %v9555 = vsel %vm8523, %v9550, 0
  %9557 = vmatprep.subr.bf16.mxu0 0
  %9558 = vmatpush1.bf16.msra.mxu0 %v8440
  %9559 = vmatprep.subr.bf16.mxu0 0
  %9560 = vmatpush1.bf16.msra.mxu0 0
  %9561 = vmatprep.subr.bf16.mxu0 0
  %9562 = vmatpush1.bf16.msra.mxu0 0
  %9563 = vmatprep.subr.bf16.mxu0 0
  %9564 = vmatpush1.bf16.msra.mxu0 0
  %9565 = vmatprep.subr.bf16.mxu0 0
  %9566 = vmatpush1.bf16.msra.mxu0 0
  %9567 = vmatprep.subr.bf16.mxu0 0
  %9568 = vmatpush1.bf16.msra.mxu0 0
  %9569 = vmatprep.subr.bf16.mxu0 0
  %9570 = vmatpush1.bf16.msra.mxu0 0
  %9571 = vmatprep.subr.bf16.mxu0 0
  %9572 = vmatpush1.bf16.msra.mxu0 0
  %9573 = vmatprep.subr.bf16.mxu0 0
  %9574 = vmatpush1.bf16.msra.mxu0 0
  %9575 = vmatprep.subr.bf16.mxu0 0
  %9576 = vmatpush1.bf16.msra.mxu0 0
  %9577 = vmatprep.subr.bf16.mxu0 0
  %9578 = vmatpush1.bf16.msra.mxu0 0
  %9579 = vmatprep.subr.bf16.mxu0 0
  %9580 = vmatpush1.bf16.msra.mxu0 0
  %9581 = vmatprep.subr.bf16.mxu0 0
  %9582 = vmatpush1.bf16.msra.mxu0 0
  %9583 = vmatprep.subr.bf16.mxu0 0
  %9584 = vmatpush1.bf16.msra.mxu0 0
  %9585 = vmatprep.subr.bf16.mxu0 0
  %9586 = vmatpush1.bf16.msra.mxu0 0
  %9587 = vmatprep.subr.bf16.mxu0 0
  %9588 = vmatpush1.bf16.msra.mxu0 0
  %9589 = vmatprep.mubr.bf16.mxu0 0
  %9590 = vmatmul.mubr.bf16.gmra.mrb[0].mxu0 %v9552
  %v9591 = vpop.f32.mrb[0].mxu0
  %v9592 = vadd.f32 0.0, %v9591
  %v9593 = vpop.f32.mrb[0].mxu0
  %v9594 = vpop.f32.mrb[0].mxu0
  %v9595 = vadd.f32 0.0, %v9594
  %v9596 = vpop.f32.mrb[0].mxu0
  %9597 = vmatprep.mubr.bf16.mxu0 0
  %9598 = vmatmul.mubr.bf16.gmra.mrb[0].mxu0 %v9555
  %v9599 = vpop.f32.mrb[0].mxu0
  %v9600 = vadd.f32 0.0, %v9599
  %v9601 = vpop.f32.mrb[0].mxu0
  %v9602 = vpop.f32.mrb[0].mxu0
  %v9603 = vadd.f32 0.0, %v9602
  %v9604 = vpop.f32.mrb[0].mxu0
  %9605 = vdwg.mxu0
  %v9606 = vadd.f32 %v9537, %v9592
  %v9607 = vadd.f32 %v9538, %v9595
  %v9608 = vadd.f32 %v9539, %v9600
  %v9609 = vadd.f32 %v9540, %v9603
  %9610 = vadd.xlane.f32.xlu0 %v9606
  %v9611 = vpop.xlane.xlu0 %9610
  %9612 = vadd.xlane.f32.xlu0 %v9607
  %v9613 = vpop.xlane.xlu0 %9612
  %9614 = vadd.xlane.f32.xlu0 %v9608
  %v9615 = vpop.xlane.xlu0 %9614
  %9616 = vadd.xlane.f32.xlu0 %v9609
  %v9617 = vpop.xlane.xlu0 %9616
  %v9618 = vrcp.pop 128.0
  %v9619 = vmul.f32 %v9611, %v9618
  %v9620 = vmul.f32 %v9613, %v9618
  %v9621 = vmul.f32 %v9615, %v9618
  %v9622 = vmul.f32 %v9617, %v9618
  %v9623 = vmul.f32 %v9606, %v9606
  %v9624 = vmul.f32 %v9607, %v9607
  %v9625 = vmul.f32 %v9608, %v9608
  %v9626 = vmul.f32 %v9609, %v9609
  %9627 = vadd.xlane.f32.xlu0 %v9623
  %v9628 = vpop.xlane.xlu0 %9627
  %9629 = vadd.xlane.f32.xlu0 %v9624
  %v9630 = vpop.xlane.xlu0 %9629
  %9631 = vadd.xlane.f32.xlu0 %v9625
  %v9632 = vpop.xlane.xlu0 %9631
  %9633 = vadd.xlane.f32.xlu0 %v9626
  %v9634 = vpop.xlane.xlu0 %9633
  %v9635 = vmul.f32 %v9628, %v9618
  %v9636 = vmul.f32 %v9630, %v9618
  %v9637 = vmul.f32 %v9632, %v9618
  %v9638 = vmul.f32 %v9634, %v9618
  %v9639 = vmul.f32 %v9619, %v9619
  %v9640 = vmul.f32 %v9620, %v9620
  %v9641 = vmul.f32 %v9621, %v9621
  %v9642 = vmul.f32 %v9622, %v9622
  %v9643 = vsub.f32 %v9635, %v9639
  %v9644 = vsub.f32 %v9636, %v9640
  %v9645 = vsub.f32 %v9637, %v9641
  %v9646 = vsub.f32 %v9638, %v9642
  %v9647 = vsub.f32 %v9606, %v9619
  %v9648 = vsub.f32 %v9607, %v9620
  %v9649 = vsub.f32 %v9608, %v9621
  %v9650 = vsub.f32 %v9609, %v9622
  %v9651 = vadd.f32 %v9643, 1e-05
  %v9652 = vadd.f32 %v9644, 1e-05
  %v9653 = vadd.f32 %v9645, 1e-05
  %v9654 = vadd.f32 %v9646, 1e-05
  %v9655 = vrsqrt.pop %v9651
  %v9656 = vrsqrt.pop %v9652
  %v9657 = vrsqrt.pop %v9653
  %v9658 = vrsqrt.pop %v9654
  %v9659 = vmul.f32 %v8505, %v9655
  %v9660 = vmul.f32 %v8506, %v9656
  %v9661 = vmul.f32 %v8507, %v9657
  %v9662 = vmul.f32 %v8508, %v9658
  %9664 = vset.pattern.permute.xlu0 0
  %9665 = vperm.xlu0 %9664, %v9659
  %v9666 = vpop.permute.xlu0 %9665
  %9669 = vset.pattern.permute.xlu0 0
  %9670 = vperm.xlu0 %9669, %v9660
  %v9671 = vpop.permute.xlu0 %9670
  %9674 = vset.pattern.permute.xlu0 0
  %9675 = vperm.xlu0 %9674, %v9661
  %v9676 = vpop.permute.xlu0 %9675
  %9679 = vset.pattern.permute.xlu0 0
  %9680 = vperm.xlu0 %9679, %v9662
  %v9681 = vpop.permute.xlu0 %9680
  %v9683 = vmul.f32 %v9647, %v9666
  %v9684 = vmul.f32 %v9648, %v9671
  %v9685 = vmul.f32 %v9649, %v9676
  %v9686 = vmul.f32 %v9650, %v9681
  %9688 = vset.pattern.permute.xlu0 0
  %9689 = vperm.xlu0 %9688, %v8509
  %v9690 = vpop.permute.xlu0 %9689
  %9693 = vset.pattern.permute.xlu0 0
  %9694 = vperm.xlu0 %9693, %v8510
  %v9695 = vpop.permute.xlu0 %9694
  %9698 = vset.pattern.permute.xlu0 0
  %9699 = vperm.xlu0 %9698, %v8511
  %v9700 = vpop.permute.xlu0 %9699
  %9703 = vset.pattern.permute.xlu0 0
  %9704 = vperm.xlu0 %9703, %v8512
  %v9705 = vpop.permute.xlu0 %9704
  %v9707 = vadd.f32 %v9683, %v9690
  %v9708 = vadd.f32 %v9684, %v9695
  %v9709 = vadd.f32 %v9685, %v9700
  %v9710 = vadd.f32 %v9686, %v9705
  %v9711 = vmul.f32 %v9707, 0.2
  %v9712 = vmul.f32 %v9708, 0.2
  %v9713 = vmul.f32 %v9709, 0.2
  %v9714 = vmul.f32 %v9710, 0.2
  %v9715 = vmax.f32 %v9707, %v9711
  %v9716 = vmax.f32 %v9708, %v9712
  %v9717 = vmax.f32 %v9709, %v9713
  %v9718 = vmax.f32 %v9710, %v9714
  %v9719 = vpack.c.bf16 %v9716, %v9715
  %v9720 = vpack.c.bf16 %v9718, %v9717
  %v9721 = vld [vmem:[%s9] sm:$0xff]
  %v9722 = vld [vmem:[%s9 + $0x8] sm:$0xff]
  %v9723 = vld [vmem:[%s9 + $0x10] sm:$0xff]
  %v9724 = vld [vmem:[%s9 + $0x18] sm:$0xff]
  %v9725 = vld [vmem:[%s9 + $0x20] sm:$0xff]
  %v9726 = vld [vmem:[%s9 + $0x28] sm:$0xff]
  %v9727 = vld [vmem:[%s9 + $0x30] sm:$0xff]
  %v9728 = vld [vmem:[%s9 + $0x38] sm:$0xff]
  %v9729 = vld [vmem:[%s9 + $0x40] sm:$0xff]
  %v9730 = vld [vmem:[%s9 + $0x48] sm:$0xff]
  %v9731 = vld [vmem:[%s9 + $0x50] sm:$0xff]
  %v9732 = vld [vmem:[%s9 + $0x58] sm:$0xff]
  %v9733 = vld [vmem:[%s9 + $0x60] sm:$0xff]
  %v9734 = vld [vmem:[%s9 + $0x68] sm:$0xff]
  %v9735 = vld [vmem:[%s9 + $0x70] sm:$0xff]
  %v9736 = vld [vmem:[%s9 + $0x78] sm:$0xff]
  %v9737 = vld [vmem:[%s9 + $0x80] sm:$0xff]
  %v9738 = vld [vmem:[%s9 + $0x88] sm:$0xff]
  %v9739 = vld [vmem:[%s9 + $0x90] sm:$0xff]
  %v9740 = vld [vmem:[%s9 + $0x98] sm:$0xff]
  %v9741 = vld [vmem:[%s9 + $0xa0] sm:$0xff]
  %v9742 = vld [vmem:[%s9 + $0xa8] sm:$0xff]
  %v9743 = vld [vmem:[%s9 + $0xb0] sm:$0xff]
  %v9744 = vld [vmem:[%s9 + $0xb8] sm:$0xff]
  %v9745 = vld [vmem:[%s9 + $0xc0] sm:$0xff]
  %v9746 = vld [vmem:[%s9 + $0xc8] sm:$0xff]
  %v9747 = vld [vmem:[%s9 + $0xd0] sm:$0xff]
  %v9748 = vld [vmem:[%s9 + $0xd8] sm:$0xff]
  %v9749 = vld [vmem:[%s9 + $0xe0] sm:$0xff]
  %v9750 = vld [vmem:[%s9 + $0xe8] sm:$0xff]
  %v9751 = vld [vmem:[%s9 + $0xf0] sm:$0xff]
  %v9752 = vld [vmem:[%s9 + $0xf8] sm:$0xff]
  %v9785 = vunpack.c.l.b16 %v9721
  %v9786 = vunpack.c.h.b16 %v9721
  %v9787 = vunpack.c.l.b16 %v9722
  %v9788 = vunpack.c.h.b16 %v9722
  %v9789 = vunpack.c.l.b16 %v9723
  %v9790 = vunpack.c.h.b16 %v9723
  %v9791 = vunpack.c.l.b16 %v9724
  %v9792 = vunpack.c.h.b16 %v9724
  %v9793 = vunpack.c.l.b16 %v9725
  %v9794 = vunpack.c.h.b16 %v9725
  %v9795 = vunpack.c.l.b16 %v9726
  %v9796 = vunpack.c.h.b16 %v9726
  %v9797 = vunpack.c.l.b16 %v9727
  %v9798 = vunpack.c.h.b16 %v9727
  %v9799 = vunpack.c.l.b16 %v9728
  %v9800 = vunpack.c.h.b16 %v9728
  %v9801 = vunpack.c.l.b16 %v9729
  %v9802 = vunpack.c.h.b16 %v9729
  %v9803 = vunpack.c.l.b16 %v9730
  %v9804 = vunpack.c.h.b16 %v9730
  %v9805 = vunpack.c.l.b16 %v9731
  %v9806 = vunpack.c.h.b16 %v9731
  %v9807 = vunpack.c.l.b16 %v9732
  %v9808 = vunpack.c.h.b16 %v9732
  %v9809 = vunpack.c.l.b16 %v9733
  %v9810 = vunpack.c.h.b16 %v9733
  %v9811 = vunpack.c.l.b16 %v9734
  %v9812 = vunpack.c.h.b16 %v9734
  %v9813 = vunpack.c.l.b16 %v9735
  %v9814 = vunpack.c.h.b16 %v9735
  %v9815 = vunpack.c.l.b16 %v9736
  %v9816 = vunpack.c.h.b16 %v9736
  %v9817 = vunpack.c.l.b16 %v9737
  %v9818 = vunpack.c.h.b16 %v9737
  %v9819 = vunpack.c.l.b16 %v9738
  %v9820 = vunpack.c.h.b16 %v9738
  %v9821 = vunpack.c.l.b16 %v9739
  %v9822 = vunpack.c.h.b16 %v9739
  %v9823 = vunpack.c.l.b16 %v9740
  %v9824 = vunpack.c.h.b16 %v9740
  %v9825 = vunpack.c.l.b16 %v9741
  %v9826 = vunpack.c.h.b16 %v9741
  %v9827 = vunpack.c.l.b16 %v9742
  %v9828 = vunpack.c.h.b16 %v9742
  %v9829 = vunpack.c.l.b16 %v9743
  %v9830 = vunpack.c.h.b16 %v9743
  %v9831 = vunpack.c.l.b16 %v9744
  %v9832 = vunpack.c.h.b16 %v9744
  %v9833 = vunpack.c.l.b16 %v9745
  %v9834 = vunpack.c.h.b16 %v9745
  %v9835 = vunpack.c.l.b16 %v9746
  %v9836 = vunpack.c.h.b16 %v9746
  %v9837 = vunpack.c.l.b16 %v9747
  %v9838 = vunpack.c.h.b16 %v9747
  %v9839 = vunpack.c.l.b16 %v9748
  %v9840 = vunpack.c.h.b16 %v9748
  %v9841 = vunpack.c.l.b16 %v9749
  %v9842 = vunpack.c.h.b16 %v9749
  %v9843 = vunpack.c.l.b16 %v9750
  %v9844 = vunpack.c.h.b16 %v9750
  %v9845 = vunpack.c.l.b16 %v9751
  %v9846 = vunpack.c.h.b16 %v9751
  %v9847 = vunpack.c.l.b16 %v9752
  %v9848 = vunpack.c.h.b16 %v9752
  %v9849 = vpack.c.b16 %v9789, %v9785
  %v9850 = vpack.c.b16 %v9790, %v9786
  %v9851 = vpack.c.b16 %v9791, %v9787
  %v9852 = vpack.c.b16 %v9792, %v9788
  %v9853 = vpack.c.b16 %v9797, %v9793
  %v9854 = vpack.c.b16 %v9798, %v9794
  %v9855 = vpack.c.b16 %v9799, %v9795
  %v9856 = vpack.c.b16 %v9800, %v9796
  %v9857 = vpack.c.b16 %v9805, %v9801
  %v9858 = vpack.c.b16 %v9806, %v9802
  %v9859 = vpack.c.b16 %v9807, %v9803
  %v9860 = vpack.c.b16 %v9808, %v9804
  %v9861 = vpack.c.b16 %v9813, %v9809
  %v9862 = vpack.c.b16 %v9814, %v9810
  %v9863 = vpack.c.b16 %v9815, %v9811
  %v9864 = vpack.c.b16 %v9816, %v9812
  %v9865 = vpack.c.b16 %v9821, %v9817
  %v9866 = vpack.c.b16 %v9822, %v9818
  %v9867 = vpack.c.b16 %v9823, %v9819
  %v9868 = vpack.c.b16 %v9824, %v9820
  %v9869 = vpack.c.b16 %v9829, %v9825
  %v9870 = vpack.c.b16 %v9830, %v9826
  %v9871 = vpack.c.b16 %v9831, %v9827
  %v9872 = vpack.c.b16 %v9832, %v9828
  %v9873 = vpack.c.b16 %v9837, %v9833
  %v9874 = vpack.c.b16 %v9838, %v9834
  %v9875 = vpack.c.b16 %v9839, %v9835
  %v9876 = vpack.c.b16 %v9840, %v9836
  %v9877 = vpack.c.b16 %v9845, %v9841
  %v9878 = vpack.c.b16 %v9846, %v9842
  %v9879 = vpack.c.b16 %v9847, %v9843
  %v9880 = vpack.c.b16 %v9848, %v9844
  %9913 = vmatprep.subr.bf16.mxu0 %v9850
  %9914 = vmatpush1.bf16.msra.mxu0 %v9849
  %9915 = vmatprep.subr.bf16.mxu0 %v9854
  %9916 = vmatpush1.bf16.msra.mxu0 %v9853
  %9917 = vmatprep.subr.bf16.mxu0 %v9858
  %9918 = vmatpush1.bf16.msra.mxu0 %v9857
  %9919 = vmatprep.subr.bf16.mxu0 %v9862
  %9920 = vmatpush1.bf16.msra.mxu0 %v9861
  %9921 = vmatprep.subr.bf16.mxu0 %v9866
  %9922 = vmatpush1.bf16.msra.mxu0 %v9865
  %9923 = vmatprep.subr.bf16.mxu0 %v9870
  %9924 = vmatpush1.bf16.msra.mxu0 %v9869
  %9925 = vmatprep.subr.bf16.mxu0 %v9874
  %9926 = vmatpush1.bf16.msra.mxu0 %v9873
  %9927 = vmatprep.subr.bf16.mxu0 %v9878
  %9928 = vmatpush1.bf16.msra.mxu0 %v9877
  %9929 = vmatprep.subr.bf16.mxu0 0
  %9930 = vmatpush1.bf16.msra.mxu0 0
  %9931 = vmatprep.subr.bf16.mxu0 0
  %9932 = vmatpush1.bf16.msra.mxu0 0
  %9933 = vmatprep.subr.bf16.mxu0 0
  %9934 = vmatpush1.bf16.msra.mxu0 0
  %9935 = vmatprep.subr.bf16.mxu0 0
  %9936 = vmatpush1.bf16.msra.mxu0 0
  %9937 = vmatprep.subr.bf16.mxu0 0
  %9938 = vmatpush1.bf16.msra.mxu0 0
  %9939 = vmatprep.subr.bf16.mxu0 0
  %9940 = vmatpush1.bf16.msra.mxu0 0
  %9941 = vmatprep.subr.bf16.mxu0 0
  %9942 = vmatpush1.bf16.msra.mxu0 0
  %9943 = vmatprep.subr.bf16.mxu0 0
  %9944 = vmatpush1.bf16.msra.mxu0 0
  %9945 = vmatprep.mubr.bf16.mxu0 0
  %9946 = vmatmul.mubr.bf16.gmra.mrb[0].mxu0 %v9719
  %v9947 = vpop.f32.mrb[0].mxu0
  %v9948 = vadd.f32 0.0, %v9947
  %v9949 = vpop.f32.mrb[0].mxu0
  %v9950 = vadd.f32 0.0, %v9949
  %v9951 = vpop.f32.mrb[0].mxu0
  %v9952 = vadd.f32 0.0, %v9951
  %v9953 = vpop.f32.mrb[0].mxu0
  %v9954 = vadd.f32 0.0, %v9953
  %9955 = vmatprep.mubr.bf16.mxu0 0
  %9956 = vmatmul.mubr.bf16.gmra.mrb[0].mxu0 %v9720
  %v9957 = vpop.f32.mrb[0].mxu0
  %v9958 = vadd.f32 0.0, %v9957
  %v9959 = vpop.f32.mrb[0].mxu0
  %v9960 = vadd.f32 0.0, %v9959
  %v9961 = vpop.f32.mrb[0].mxu0
  %v9962 = vadd.f32 0.0, %v9961
  %v9963 = vpop.f32.mrb[0].mxu0
  %v9964 = vadd.f32 0.0, %v9963
  %9965 = vdwg.mxu0
  %9966 = vmatprep.subr.bf16.mxu0 %v9852
  %9967 = vmatpush1.bf16.msra.mxu0 %v9851
  %9968 = vmatprep.subr.bf16.mxu0 %v9856
  %9969 = vmatpush1.bf16.msra.mxu0 %v9855
  %9970 = vmatprep.subr.bf16.mxu0 %v9860
  %9971 = vmatpush1.bf16.msra.mxu0 %v9859
  %9972 = vmatprep.subr.bf16.mxu0 %v9864
  %9973 = vmatpush1.bf16.msra.mxu0 %v9863
  %9974 = vmatprep.subr.bf16.mxu0 %v9868
  %9975 = vmatpush1.bf16.msra.mxu0 %v9867
  %9976 = vmatprep.subr.bf16.mxu0 %v9872
  %9977 = vmatpush1.bf16.msra.mxu0 %v9871
  %9978 = vmatprep.subr.bf16.mxu0 %v9876
  %9979 = vmatpush1.bf16.msra.mxu0 %v9875
  %9980 = vmatprep.subr.bf16.mxu0 %v9880
  %9981 = vmatpush1.bf16.msra.mxu0 %v9879
  %9982 = vmatprep.subr.bf16.mxu0 0
  %9983 = vmatpush1.bf16.msra.mxu0 0
  %9984 = vmatprep.subr.bf16.mxu0 0
  %9985 = vmatpush1.bf16.msra.mxu0 0
  %9986 = vmatprep.subr.bf16.mxu0 0
  %9987 = vmatpush1.bf16.msra.mxu0 0
  %9988 = vmatprep.subr.bf16.mxu0 0
  %9989 = vmatpush1.bf16.msra.mxu0 0
  %9990 = vmatprep.subr.bf16.mxu0 0
  %9991 = vmatpush1.bf16.msra.mxu0 0
  %9992 = vmatprep.subr.bf16.mxu0 0
  %9993 = vmatpush1.bf16.msra.mxu0 0
  %9994 = vmatprep.subr.bf16.mxu0 0
  %9995 = vmatpush1.bf16.msra.mxu0 0
  %9996 = vmatprep.subr.bf16.mxu0 0
  %9997 = vmatpush1.bf16.msra.mxu0 0
  %9998 = vmatprep.mubr.bf16.mxu0 0
  %9999 = vmatmul.mubr.bf16.gmra.mrb[0].mxu0 %v9719
  %v10000 = vpop.f32.mrb[0].mxu0
  %v10001 = vadd.f32 0.0, %v10000
  %v10002 = vpop.f32.mrb[0].mxu0
  %v10003 = vadd.f32 0.0, %v10002
  %v10004 = vpop.f32.mrb[0].mxu0
  %v10005 = vadd.f32 0.0, %v10004
  %v10006 = vpop.f32.mrb[0].mxu0
  %v10007 = vadd.f32 0.0, %v10006
  %10008 = vmatprep.mubr.bf16.mxu0 0
  %10009 = vmatmul.mubr.bf16.gmra.mrb[0].mxu0 %v9720
  %v10010 = vpop.f32.mrb[0].mxu0
  %v10011 = vadd.f32 0.0, %v10010
  %v10012 = vpop.f32.mrb[0].mxu0
  %v10013 = vadd.f32 0.0, %v10012
  %v10014 = vpop.f32.mrb[0].mxu0
  %v10015 = vadd.f32 0.0, %v10014
  %v10016 = vpop.f32.mrb[0].mxu0
  %v10017 = vadd.f32 0.0, %v10016
  %10018 = vdwg.mxu0
  %v10019 = vpack.c.bf16 %v9952, %v9948
  %v10020 = vpack.c.bf16 %v9954, %v9950
  %v10021 = vpack.c.bf16 %v10005, %v10001
  %v10022 = vpack.c.bf16 %v10007, %v10003
  %v10023 = vpack.c.bf16 %v9962, %v9958
  %v10024 = vpack.c.bf16 %v9964, %v9960
  %v10025 = vpack.c.bf16 %v10015, %v10011
  %v10026 = vpack.c.bf16 %v10017, %v10013
  %v10027 = vld [vmem:[%s10] sm:$0xf]
  %v10028 = vld [vmem:[%s10 + $0x4] sm:$0xf]
  %v10029 = vld [vmem:[%s10 + $0x8] sm:$0xf]
  %v10030 = vld [vmem:[%s10 + $0xc] sm:$0xf]
  %v10031 = vld [vmem:[%s10 + $0x10] sm:$0xf]
  %v10032 = vld [vmem:[%s10 + $0x14] sm:$0xf]
  %v10033 = vld [vmem:[%s10 + $0x18] sm:$0xf]
  %v10034 = vld [vmem:[%s10 + $0x1c] sm:$0xf]
  %v10035 = vld [vmem:[%s10 + $0x20] sm:$0xf]
  %v10036 = vld [vmem:[%s10 + $0x24] sm:$0xf]
  %v10037 = vld [vmem:[%s10 + $0x28] sm:$0xf]
  %v10038 = vld [vmem:[%s10 + $0x2c] sm:$0xf]
  %v10039 = vld [vmem:[%s10 + $0x30] sm:$0xf]
  %v10040 = vld [vmem:[%s10 + $0x34] sm:$0xf]
  %v10041 = vld [vmem:[%s10 + $0x38] sm:$0xf]
  %v10042 = vld [vmem:[%s10 + $0x3c] sm:$0xf]
  %v10043 = vld [vmem:[%s10 + $0x40] sm:$0xf]
  %v10044 = vld [vmem:[%s10 + $0x44] sm:$0xf]
  %v10045 = vld [vmem:[%s10 + $0x48] sm:$0xf]
  %v10046 = vld [vmem:[%s10 + $0x4c] sm:$0xf]
  %v10047 = vld [vmem:[%s10 + $0x50] sm:$0xf]
  %v10048 = vld [vmem:[%s10 + $0x54] sm:$0xf]
  %v10049 = vld [vmem:[%s10 + $0x58] sm:$0xf]
  %v10050 = vld [vmem:[%s10 + $0x5c] sm:$0xf]
  %v10051 = vld [vmem:[%s10 + $0x60] sm:$0xf]
  %v10052 = vld [vmem:[%s10 + $0x64] sm:$0xf]
  %v10053 = vld [vmem:[%s10 + $0x68] sm:$0xf]
  %v10054 = vld [vmem:[%s10 + $0x6c] sm:$0xf]
  %v10055 = vld [vmem:[%s10 + $0x70] sm:$0xf]
  %v10056 = vld [vmem:[%s10 + $0x74] sm:$0xf]
  %v10057 = vld [vmem:[%s10 + $0x78] sm:$0xf]
  %v10058 = vld [vmem:[%s10 + $0x7c] sm:$0xf]
  %v10059 = vld [vmem:[%s10 + $0x80] sm:$0xf]
  %v10060 = vld [vmem:[%s10 + $0x84] sm:$0xf]
  %v10061 = vld [vmem:[%s10 + $0x88] sm:$0xf]
  %v10062 = vld [vmem:[%s10 + $0x8c] sm:$0xf]
  %v10063 = vld [vmem:[%s10 + $0x90] sm:$0xf]
  %v10064 = vld [vmem:[%s10 + $0x94] sm:$0xf]
  %v10065 = vld [vmem:[%s10 + $0x98] sm:$0xf]
  %v10066 = vld [vmem:[%s10 + $0x9c] sm:$0xf]
  %v10067 = vld [vmem:[%s10 + $0xa0] sm:$0xf]
  %v10068 = vld [vmem:[%s10 + $0xa4] sm:$0xf]
  %v10069 = vld [vmem:[%s10 + $0xa8] sm:$0xf]
  %v10070 = vld [vmem:[%s10 + $0xac] sm:$0xf]
  %v10071 = vld [vmem:[%s10 + $0xb0] sm:$0xf]
  %v10072 = vld [vmem:[%s10 + $0xb4] sm:$0xf]
  %v10073 = vld [vmem:[%s10 + $0xb8] sm:$0xf]
  %v10074 = vld [vmem:[%s10 + $0xbc] sm:$0xf]
  %v10075 = vld [vmem:[%s10 + $0xc0] sm:$0xf]
  %v10076 = vld [vmem:[%s10 + $0xc4] sm:$0xf]
  %v10077 = vld [vmem:[%s10 + $0xc8] sm:$0xf]
  %v10078 = vld [vmem:[%s10 + $0xcc] sm:$0xf]
  %v10079 = vld [vmem:[%s10 + $0xd0] sm:$0xf]
  %v10080 = vld [vmem:[%s10 + $0xd4] sm:$0xf]
  %v10081 = vld [vmem:[%s10 + $0xd8] sm:$0xf]
  %v10082 = vld [vmem:[%s10 + $0xdc] sm:$0xf]
  %v10083 = vld [vmem:[%s10 + $0xe0] sm:$0xf]
  %v10084 = vld [vmem:[%s10 + $0xe4] sm:$0xf]
  %v10085 = vld [vmem:[%s10 + $0xe8] sm:$0xf]
  %v10086 = vld [vmem:[%s10 + $0xec] sm:$0xf]
  %v10087 = vld [vmem:[%s10 + $0xf0] sm:$0xf]
  %v10088 = vld [vmem:[%s10 + $0xf4] sm:$0xf]
  %v10089 = vld [vmem:[%s10 + $0xf8] sm:$0xf]
  %v10090 = vld [vmem:[%s10 + $0xfc] sm:$0xf]
  %v10091 = vld [vmem:[%s10 + $0x100] sm:$0xf]
  %v10092 = vld [vmem:[%s10 + $0x104] sm:$0xf]
  %v10093 = vld [vmem:[%s10 + $0x108] sm:$0xf]
  %v10094 = vld [vmem:[%s10 + $0x10c] sm:$0xf]
  %v10095 = vld [vmem:[%s10 + $0x110] sm:$0xf]
  %v10096 = vld [vmem:[%s10 + $0x114] sm:$0xf]
  %v10097 = vld [vmem:[%s10 + $0x118] sm:$0xf]
  %v10098 = vld [vmem:[%s10 + $0x11c] sm:$0xf]
  %v10099 = vld [vmem:[%s10 + $0x120] sm:$0xf]
  %v10100 = vld [vmem:[%s10 + $0x124] sm:$0xf]
  %v10101 = vld [vmem:[%s10 + $0x128] sm:$0xf]
  %v10102 = vld [vmem:[%s10 + $0x12c] sm:$0xf]
  %v10103 = vld [vmem:[%s10 + $0x130] sm:$0xf]
  %v10104 = vld [vmem:[%s10 + $0x134] sm:$0xf]
  %v10105 = vld [vmem:[%s10 + $0x138] sm:$0xf]
  %v10106 = vld [vmem:[%s10 + $0x13c] sm:$0xf]
  %v10107 = vld [vmem:[%s10 + $0x140] sm:$0xf]
  %v10108 = vld [vmem:[%s10 + $0x144] sm:$0xf]
  %v10109 = vld [vmem:[%s10 + $0x148] sm:$0xf]
  %v10110 = vld [vmem:[%s10 + $0x14c] sm:$0xf]
  %v10111 = vld [vmem:[%s10 + $0x150] sm:$0xf]
  %v10112 = vld [vmem:[%s10 + $0x154] sm:$0xf]
  %v10113 = vld [vmem:[%s10 + $0x158] sm:$0xf]
  %v10114 = vld [vmem:[%s10 + $0x15c] sm:$0xf]
  %v10115 = vld [vmem:[%s10 + $0x160] sm:$0xf]
  %v10116 = vld [vmem:[%s10 + $0x164] sm:$0xf]
  %v10117 = vld [vmem:[%s10 + $0x168] sm:$0xf]
  %v10118 = vld [vmem:[%s10 + $0x16c] sm:$0xf]
  %v10119 = vld [vmem:[%s10 + $0x170] sm:$0xf]
  %v10120 = vld [vmem:[%s10 + $0x174] sm:$0xf]
  %v10121 = vld [vmem:[%s10 + $0x178] sm:$0xf]
  %v10122 = vld [vmem:[%s10 + $0x17c] sm:$0xf]
  %v10123 = vld [vmem:[%s10 + $0x180] sm:$0xf]
  %v10124 = vld [vmem:[%s10 + $0x184] sm:$0xf]
  %v10125 = vld [vmem:[%s10 + $0x188] sm:$0xf]
  %v10126 = vld [vmem:[%s10 + $0x18c] sm:$0xf]
  %v10127 = vld [vmem:[%s10 + $0x190] sm:$0xf]
  %v10128 = vld [vmem:[%s10 + $0x194] sm:$0xf]
  %v10129 = vld [vmem:[%s10 + $0x198] sm:$0xf]
  %v10130 = vld [vmem:[%s10 + $0x19c] sm:$0xf]
  %v10131 = vld [vmem:[%s10 + $0x1a0] sm:$0xf]
  %v10132 = vld [vmem:[%s10 + $0x1a4] sm:$0xf]
  %v10133 = vld [vmem:[%s10 + $0x1a8] sm:$0xf]
  %v10134 = vld [vmem:[%s10 + $0x1ac] sm:$0xf]
  %v10135 = vld [vmem:[%s10 + $0x1b0] sm:$0xf]
  %v10136 = vld [vmem:[%s10 + $0x1b4] sm:$0xf]
  %v10137 = vld [vmem:[%s10 + $0x1b8] sm:$0xf]
  %v10138 = vld [vmem:[%s10 + $0x1bc] sm:$0xf]
  %v10139 = vld [vmem:[%s10 + $0x1c0] sm:$0xf]
  %v10140 = vld [vmem:[%s10 + $0x1c4] sm:$0xf]
  %v10141 = vld [vmem:[%s10 + $0x1c8] sm:$0xf]
  %v10142 = vld [vmem:[%s10 + $0x1cc] sm:$0xf]
  %v10143 = vld [vmem:[%s10 + $0x1d0] sm:$0xf]
  %v10144 = vld [vmem:[%s10 + $0x1d4] sm:$0xf]
  %v10145 = vld [vmem:[%s10 + $0x1d8] sm:$0xf]
  %v10146 = vld [vmem:[%s10 + $0x1dc] sm:$0xf]
  %v10147 = vld [vmem:[%s10 + $0x1e0] sm:$0xf]
  %v10148 = vld [vmem:[%s10 + $0x1e4] sm:$0xf]
  %v10149 = vld [vmem:[%s10 + $0x1e8] sm:$0xf]
  %v10150 = vld [vmem:[%s10 + $0x1ec] sm:$0xf]
  %v10151 = vld [vmem:[%s10 + $0x1f0] sm:$0xf]
  %v10152 = vld [vmem:[%s10 + $0x1f4] sm:$0xf]
  %v10153 = vld [vmem:[%s10 + $0x1f8] sm:$0xf]
  %v10154 = vld [vmem:[%s10 + $0x1fc] sm:$0xf]
  %v10155 = vld [vmem:[%s11] sm:$0xff]
  %v10156 = vld [vmem:[%s11 + $0x8] sm:$0xff]
  %v10157 = vld [vmem:[%s11 + $0x10] sm:$0xff]
  %v10158 = vld [vmem:[%s11 + $0x18] sm:$0xff]
  %v10159 = vld [vmem:[%s11 + $0x20] sm:$0xff]
  %v10160 = vld [vmem:[%s11 + $0x28] sm:$0xff]
  %v10161 = vld [vmem:[%s11 + $0x30] sm:$0xff]
  %v10162 = vld [vmem:[%s11 + $0x38] sm:$0xff]
  %v10163 = vld [vmem:[%s12] sm:$0xff]
  %v10164 = vld [vmem:[%s12 + $0x8] sm:$0xff]
  %v10165 = vld [vmem:[%s12 + $0x10] sm:$0xff]
  %v10166 = vld [vmem:[%s12 + $0x18] sm:$0xff]
  %v10167 = vld [vmem:[%s12 + $0x20] sm:$0xff]
  %v10168 = vld [vmem:[%s12 + $0x28] sm:$0xff]
  %v10169 = vld [vmem:[%s12 + $0x30] sm:$0xff]
  %v10170 = vld [vmem:[%s12 + $0x38] sm:$0xff]
  %v10179 = vunpack.c.l.b16 %v10035
  %v10180 = vunpack.c.l.b16 %v10036
  %v10181 = vunpack.c.l.b16 %v10037
  %v10182 = vunpack.c.l.b16 %v10038
  %v10183 = vunpack.c.l.b16 %v10039
  %v10184 = vunpack.c.l.b16 %v10040
  %v10185 = vunpack.c.l.b16 %v10041
  %v10186 = vunpack.c.l.b16 %v10042
  %v10187 = vpack.c.b16 %v10180, %v10179
  %v10188 = vpack.c.b16 %v10182, %v10181
  %v10189 = vpack.c.b16 %v10184, %v10183
  %v10190 = vpack.c.b16 %v10186, %v10185
  %10193 = vrot.lane.b32.xlu0 %v10019, 96
  %v10194 = vpop.permute.xlu0 %10193
  %10195 = vrot.lane.b32.xlu0 %v10023, 96
  %v10196 = vpop.permute.xlu0 %10195
  %vm10199 = vcmask 261120
  %v10201 = vsel %vm10199, %v10187, 0
  %v10204 = vsel %vm10199, %v10188, 0
  %v10207 = vsel %vm10199, %v10189, 0
  %v10210 = vsel %vm10199, %v10190, 0
  %10212 = vmatprep.subr.bf16.mxu0 0
  %10213 = vmatpush1.bf16.msra.mxu0 %v10194
  %10214 = vmatprep.subr.bf16.mxu0 0
  %10215 = vmatpush1.bf16.msra.mxu0 %v10196
  %10216 = vmatprep.subr.bf16.mxu0 0
  %10217 = vmatpush1.bf16.msra.mxu0 0
  %10218 = vmatprep.subr.bf16.mxu0 0
  %10219 = vmatpush1.bf16.msra.mxu0 0
  %10220 = vmatprep.subr.bf16.mxu0 0
  %10221 = vmatpush1.bf16.msra.mxu0 0
  %10222 = vmatprep.subr.bf16.mxu0 0
  %10223 = vmatpush1.bf16.msra.mxu0 0
  %10224 = vmatprep.subr.bf16.mxu0 0
  %10225 = vmatpush1.bf16.msra.mxu0 0
  %10226 = vmatprep.subr.bf16.mxu0 0
  %10227 = vmatpush1.bf16.msra.mxu0 0
  %10228 = vmatprep.subr.bf16.mxu0 0
  %10229 = vmatpush1.bf16.msra.mxu0 0
  %10230 = vmatprep.subr.bf16.mxu0 0
  %10231 = vmatpush1.bf16.msra.mxu0 0
  %10232 = vmatprep.subr.bf16.mxu0 0
  %10233 = vmatpush1.bf16.msra.mxu0 0
  %10234 = vmatprep.subr.bf16.mxu0 0
  %10235 = vmatpush1.bf16.msra.mxu0 0
  %10236 = vmatprep.subr.bf16.mxu0 0
  %10237 = vmatpush1.bf16.msra.mxu0 0
  %10238 = vmatprep.subr.bf16.mxu0 0
  %10239 = vmatpush1.bf16.msra.mxu0 0
  %10240 = vmatprep.subr.bf16.mxu0 0
  %10241 = vmatpush1.bf16.msra.mxu0 0
  %10242 = vmatprep.subr.bf16.mxu0 0
  %10243 = vmatpush1.bf16.msra.mxu0 0
  %10244 = vmatprep.mubr.bf16.mxu0 0
  %10245 = vmatmul.mubr.bf16.gmra.mrb[0].mxu0 %v10201
  %v10246 = vpop.f32.mrb[0].mxu0
  %v10247 = vadd.f32 0.0, %v10246
  %v10248 = vpop.f32.mrb[0].mxu0
  %v10249 = vpop.f32.mrb[0].mxu0
  %v10250 = vadd.f32 0.0, %v10249
  %v10251 = vpop.f32.mrb[0].mxu0
  %10252 = vmatprep.mubr.bf16.mxu0 0
  %10253 = vmatmul.mubr.bf16.gmra.mrb[0].mxu0 %v10204
  %v10254 = vpop.f32.mrb[0].mxu0
  %v10255 = vadd.f32 0.0, %v10254
  %v10256 = vpop.f32.mrb[0].mxu0
  %v10257 = vpop.f32.mrb[0].mxu0
  %v10258 = vadd.f32 0.0, %v10257
  %v10259 = vpop.f32.mrb[0].mxu0
  %10260 = vmatprep.mubr.bf16.mxu0 0
  %10261 = vmatmul.mubr.bf16.gmra.mrb[0].mxu0 %v10207
  %v10262 = vpop.f32.mrb[0].mxu0
  %v10263 = vadd.f32 0.0, %v10262
  %v10264 = vpop.f32.mrb[0].mxu0
  %v10265 = vpop.f32.mrb[0].mxu0
  %v10266 = vadd.f32 0.0, %v10265
  %v10267 = vpop.f32.mrb[0].mxu0
  %10268 = vmatprep.mubr.bf16.mxu0 0
  %10269 = vmatmul.mubr.bf16.gmra.mrb[0].mxu0 %v10210
  %v10270 = vpop.f32.mrb[0].mxu0
  %v10271 = vadd.f32 0.0, %v10270
  %v10272 = vpop.f32.mrb[0].mxu0
  %v10273 = vpop.f32.mrb[0].mxu0
  %v10274 = vadd.f32 0.0, %v10273
  %v10275 = vpop.f32.mrb[0].mxu0
  %10276 = vdwg.mxu0
  %v10285 = vunpack.c.l.b16 %v10027
  %v10286 = vunpack.c.l.b16 %v10028
  %v10287 = vunpack.c.l.b16 %v10029
  %v10288 = vunpack.c.l.b16 %v10030
  %v10289 = vunpack.c.l.b16 %v10031
  %v10290 = vunpack.c.l.b16 %v10032
  %v10291 = vunpack.c.l.b16 %v10033
  %v10292 = vunpack.c.l.b16 %v10034
  %v10293 = vpack.c.b16 %v10286, %v10285
  %v10294 = vpack.c.b16 %v10288, %v10287
  %v10295 = vpack.c.b16 %v10290, %v10289
  %v10296 = vpack.c.b16 %v10292, %v10291
  %v10298 = vsel %vm10199, %v10293, 0
  %v10301 = vsel %vm10199, %v10294, 0
  %v10304 = vsel %vm10199, %v10295, 0
  %v10307 = vsel %vm10199, %v10296, 0
  %10309 = vmatprep.subr.bf16.mxu0 0
  %10310 = vmatpush1.bf16.msra.mxu0 %v10019
  %10311 = vmatprep.subr.bf16.mxu0 0
  %10312 = vmatpush1.bf16.msra.mxu0 %v10023
  %10313 = vmatprep.subr.bf16.mxu0 0
  %10314 = vmatpush1.bf16.msra.mxu0 0
  %10315 = vmatprep.subr.bf16.mxu0 0
  %10316 = vmatpush1.bf16.msra.mxu0 0
  %10317 = vmatprep.subr.bf16.mxu0 0
  %10318 = vmatpush1.bf16.msra.mxu0 0
  %10319 = vmatprep.subr.bf16.mxu0 0
  %10320 = vmatpush1.bf16.msra.mxu0 0
  %10321 = vmatprep.subr.bf16.mxu0 0
  %10322 = vmatpush1.bf16.msra.mxu0 0
  %10323 = vmatprep.subr.bf16.mxu0 0
  %10324 = vmatpush1.bf16.msra.mxu0 0
  %10325 = vmatprep.subr.bf16.mxu0 0
  %10326 = vmatpush1.bf16.msra.mxu0 0
  %10327 = vmatprep.subr.bf16.mxu0 0
  %10328 = vmatpush1.bf16.msra.mxu0 0
  %10329 = vmatprep.subr.bf16.mxu0 0
  %10330 = vmatpush1.bf16.msra.mxu0 0
  %10331 = vmatprep.subr.bf16.mxu0 0
  %10332 = vmatpush1.bf16.msra.mxu0 0
  %10333 = vmatprep.subr.bf16.mxu0 0
  %10334 = vmatpush1.bf16.msra.mxu0 0
  %10335 = vmatprep.subr.bf16.mxu0 0
  %10336 = vmatpush1.bf16.msra.mxu0 0
  %10337 = vmatprep.subr.bf16.mxu0 0
  %10338 = vmatpush1.bf16.msra.mxu0 0
  %10339 = vmatprep.subr.bf16.mxu0 0
  %10340 = vmatpush1.bf16.msra.mxu0 0
  %10341 = vmatprep.mubr.bf16.mxu0 0
  %10342 = vmatmul.mubr.bf16.gmra.mrb[0].mxu0 %v10298
  %v10343 = vpop.f32.mrb[0].mxu0
  %v10344 = vadd.f32 %v10247, %v10343
  %v10345 = vpop.f32.mrb[0].mxu0
  %v10346 = vpop.f32.mrb[0].mxu0
  %v10347 = vadd.f32 %v10250, %v10346
  %v10348 = vpop.f32.mrb[0].mxu0
  %10349 = vmatprep.mubr.bf16.mxu0 0
  %10350 = vmatmul.mubr.bf16.gmra.mrb[0].mxu0 %v10301
  %v10351 = vpop.f32.mrb[0].mxu0
  %v10352 = vadd.f32 %v10255, %v10351
  %v10353 = vpop.f32.mrb[0].mxu0
  %v10354 = vpop.f32.mrb[0].mxu0
  %v10355 = vadd.f32 %v10258, %v10354
  %v10356 = vpop.f32.mrb[0].mxu0
  %10357 = vmatprep.mubr.bf16.mxu0 0
  %10358 = vmatmul.mubr.bf16.gmra.mrb[0].mxu0 %v10304
  %v10359 = vpop.f32.mrb[0].mxu0
  %v10360 = vadd.f32 %v10263, %v10359
  %v10361 = vpop.f32.mrb[0].mxu0
  %v10362 = vpop.f32.mrb[0].mxu0
  %v10363 = vadd.f32 %v10266, %v10362
  %v10364 = vpop.f32.mrb[0].mxu0
  %10365 = vmatprep.mubr.bf16.mxu0 0
  %10366 = vmatmul.mubr.bf16.gmra.mrb[0].mxu0 %v10307
  %v10367 = vpop.f32.mrb[0].mxu0
  %v10368 = vadd.f32 %v10271, %v10367
  %v10369 = vpop.f32.mrb[0].mxu0
  %v10370 = vpop.f32.mrb[0].mxu0
  %v10371 = vadd.f32 %v10274, %v10370
  %v10372 = vpop.f32.mrb[0].mxu0
  %10373 = vdwg.mxu0
  %v10382 = vunpack.c.l.b16 %v10043
  %v10383 = vunpack.c.l.b16 %v10044
  %v10384 = vunpack.c.l.b16 %v10045
  %v10385 = vunpack.c.l.b16 %v10046
  %v10386 = vunpack.c.l.b16 %v10047
  %v10387 = vunpack.c.l.b16 %v10048
  %v10388 = vunpack.c.l.b16 %v10049
  %v10389 = vunpack.c.l.b16 %v10050
  %v10390 = vpack.c.b16 %v10383, %v10382
  %v10391 = vpack.c.b16 %v10385, %v10384
  %v10392 = vpack.c.b16 %v10387, %v10386
  %v10393 = vpack.c.b16 %v10389, %v10388
  %10394 = vrot.lane.b32.xlu0 %v10019, 64
  %v10395 = vpop.permute.xlu0 %10394
  %10396 = vrot.lane.b32.xlu0 %v10023, 64
  %v10397 = vpop.permute.xlu0 %10396
  %v10401 = vsel %vm10199, %v10390, 0
  %v10404 = vsel %vm10199, %v10391, 0
  %v10407 = vsel %vm10199, %v10392, 0
  %v10410 = vsel %vm10199, %v10393, 0
  %10412 = vmatprep.subr.bf16.mxu0 0
  %10413 = vmatpush1.bf16.msra.mxu0 %v10395
  %10414 = vmatprep.subr.bf16.mxu0 0
  %10415 = vmatpush1.bf16.msra.mxu0 %v10397
  %10416 = vmatprep.subr.bf16.mxu0 0
  %10417 = vmatpush1.bf16.msra.mxu0 0
  %10418 = vmatprep.subr.bf16.mxu0 0
  %10419 = vmatpush1.bf16.msra.mxu0 0
  %10420 = vmatprep.subr.bf16.mxu0 0
  %10421 = vmatpush1.bf16.msra.mxu0 0
  %10422 = vmatprep.subr.bf16.mxu0 0
  %10423 = vmatpush1.bf16.msra.mxu0 0
  %10424 = vmatprep.subr.bf16.mxu0 0
  %10425 = vmatpush1.bf16.msra.mxu0 0
  %10426 = vmatprep.subr.bf16.mxu0 0
  %10427 = vmatpush1.bf16.msra.mxu0 0
  %10428 = vmatprep.subr.bf16.mxu0 0
  %10429 = vmatpush1.bf16.msra.mxu0 0
  %10430 = vmatprep.subr.bf16.mxu0 0
  %10431 = vmatpush1.bf16.msra.mxu0 0
  %10432 = vmatprep.subr.bf16.mxu0 0
  %10433 = vmatpush1.bf16.msra.mxu0 0
  %10434 = vmatprep.subr.bf16.mxu0 0
  %10435 = vmatpush1.bf16.msra.mxu0 0
  %10436 = vmatprep.subr.bf16.mxu0 0
  %10437 = vmatpush1.bf16.msra.mxu0 0
  %10438 = vmatprep.subr.bf16.mxu0 0
  %10439 = vmatpush1.bf16.msra.mxu0 0
  %10440 = vmatprep.subr.bf16.mxu0 0
  %10441 = vmatpush1.bf16.msra.mxu0 0
  %10442 = vmatprep.subr.bf16.mxu0 0
  %10443 = vmatpush1.bf16.msra.mxu0 0
  %10444 = vmatprep.mubr.bf16.mxu0 0
  %10445 = vmatmul.mubr.bf16.gmra.mrb[0].mxu0 %v10401
  %v10446 = vpop.f32.mrb[0].mxu0
  %v10447 = vadd.f32 0.0, %v10446
  %v10448 = vpop.f32.mrb[0].mxu0
  %v10449 = vpop.f32.mrb[0].mxu0
  %v10450 = vadd.f32 0.0, %v10449
  %v10451 = vpop.f32.mrb[0].mxu0
  %10452 = vmatprep.mubr.bf16.mxu0 0
  %10453 = vmatmul.mubr.bf16.gmra.mrb[0].mxu0 %v10404
  %v10454 = vpop.f32.mrb[0].mxu0
  %v10455 = vadd.f32 0.0, %v10454
  %v10456 = vpop.f32.mrb[0].mxu0
  %v10457 = vpop.f32.mrb[0].mxu0
  %v10458 = vadd.f32 0.0, %v10457
  %v10459 = vpop.f32.mrb[0].mxu0
  %10460 = vmatprep.mubr.bf16.mxu0 0
  %10461 = vmatmul.mubr.bf16.gmra.mrb[0].mxu0 %v10407
  %v10462 = vpop.f32.mrb[0].mxu0
  %v10463 = vadd.f32 0.0, %v10462
  %v10464 = vpop.f32.mrb[0].mxu0
  %v10465 = vpop.f32.mrb[0].mxu0
  %v10466 = vadd.f32 0.0, %v10465
  %v10467 = vpop.f32.mrb[0].mxu0
  %10468 = vmatprep.mubr.bf16.mxu0 0
  %10469 = vmatmul.mubr.bf16.gmra.mrb[0].mxu0 %v10410
  %v10470 = vpop.f32.mrb[0].mxu0
  %v10471 = vadd.f32 0.0, %v10470
  %v10472 = vpop.f32.mrb[0].mxu0
  %v10473 = vpop.f32.mrb[0].mxu0
  %v10474 = vadd.f32 0.0, %v10473
  %v10475 = vpop.f32.mrb[0].mxu0
  %10476 = vdwg.mxu0
  %v10477 = vadd.f32 %v10344, %v10447
  %v10478 = vadd.f32 %v10347, %v10450
  %v10479 = vadd.f32 %v10352, %v10455
  %v10480 = vadd.f32 %v10355, %v10458
  %v10481 = vadd.f32 %v10360, %v10463
  %v10482 = vadd.f32 %v10363, %v10466
  %v10483 = vadd.f32 %v10368, %v10471
  %v10484 = vadd.f32 %v10371, %v10474
  %v10493 = vunpack.c.l.b16 %v10051
  %v10494 = vunpack.c.l.b16 %v10052
  %v10495 = vunpack.c.l.b16 %v10053
  %v10496 = vunpack.c.l.b16 %v10054
  %v10497 = vunpack.c.l.b16 %v10055
  %v10498 = vunpack.c.l.b16 %v10056
  %v10499 = vunpack.c.l.b16 %v10057
  %v10500 = vunpack.c.l.b16 %v10058
  %v10501 = vpack.c.b16 %v10494, %v10493
  %v10502 = vpack.c.b16 %v10496, %v10495
  %v10503 = vpack.c.b16 %v10498, %v10497
  %v10504 = vpack.c.b16 %v10500, %v10499
  %10505 = vrot.lane.b32.xlu0 %v10019, 32
  %v10506 = vpop.permute.xlu0 %10505
  %10507 = vrot.lane.b32.xlu0 %v10023, 32
  %v10508 = vpop.permute.xlu0 %10507
  %v10512 = vsel %vm10199, %v10501, 0
  %v10515 = vsel %vm10199, %v10502, 0
  %v10518 = vsel %vm10199, %v10503, 0
  %v10521 = vsel %vm10199, %v10504, 0
  %10523 = vmatprep.subr.bf16.mxu0 0
  %10524 = vmatpush1.bf16.msra.mxu0 %v10506
  %10525 = vmatprep.subr.bf16.mxu0 0
  %10526 = vmatpush1.bf16.msra.mxu0 %v10508
  %10527 = vmatprep.subr.bf16.mxu0 0
  %10528 = vmatpush1.bf16.msra.mxu0 0
  %10529 = vmatprep.subr.bf16.mxu0 0
  %10530 = vmatpush1.bf16.msra.mxu0 0
  %10531 = vmatprep.subr.bf16.mxu0 0
  %10532 = vmatpush1.bf16.msra.mxu0 0
  %10533 = vmatprep.subr.bf16.mxu0 0
  %10534 = vmatpush1.bf16.msra.mxu0 0
  %10535 = vmatprep.subr.bf16.mxu0 0
  %10536 = vmatpush1.bf16.msra.mxu0 0
  %10537 = vmatprep.subr.bf16.mxu0 0
  %10538 = vmatpush1.bf16.msra.mxu0 0
  %10539 = vmatprep.subr.bf16.mxu0 0
  %10540 = vmatpush1.bf16.msra.mxu0 0
  %10541 = vmatprep.subr.bf16.mxu0 0
  %10542 = vmatpush1.bf16.msra.mxu0 0
  %10543 = vmatprep.subr.bf16.mxu0 0
  %10544 = vmatpush1.bf16.msra.mxu0 0
  %10545 = vmatprep.subr.bf16.mxu0 0
  %10546 = vmatpush1.bf16.msra.mxu0 0
  %10547 = vmatprep.subr.bf16.mxu0 0
  %10548 = vmatpush1.bf16.msra.mxu0 0
  %10549 = vmatprep.subr.bf16.mxu0 0
  %10550 = vmatpush1.bf16.msra.mxu0 0
  %10551 = vmatprep.subr.bf16.mxu0 0
  %10552 = vmatpush1.bf16.msra.mxu0 0
  %10553 = vmatprep.subr.bf16.mxu0 0
  %10554 = vmatpush1.bf16.msra.mxu0 0
  %10555 = vmatprep.mubr.bf16.mxu0 0
  %10556 = vmatmul.mubr.bf16.gmra.mrb[0].mxu0 %v10512
  %v10557 = vpop.f32.mrb[0].mxu0
  %v10558 = vadd.f32 0.0, %v10557
  %v10559 = vpop.f32.mrb[0].mxu0
  %v10560 = vpop.f32.mrb[0].mxu0
  %v10561 = vadd.f32 0.0, %v10560
  %v10562 = vpop.f32.mrb[0].mxu0
  %10563 = vmatprep.mubr.bf16.mxu0 0
  %10564 = vmatmul.mubr.bf16.gmra.mrb[0].mxu0 %v10515
  %v10565 = vpop.f32.mrb[0].mxu0
  %v10566 = vadd.f32 0.0, %v10565
  %v10567 = vpop.f32.mrb[0].mxu0
  %v10568 = vpop.f32.mrb[0].mxu0
  %v10569 = vadd.f32 0.0, %v10568
  %v10570 = vpop.f32.mrb[0].mxu0
  %10571 = vmatprep.mubr.bf16.mxu0 0
  %10572 = vmatmul.mubr.bf16.gmra.mrb[0].mxu0 %v10518
  %v10573 = vpop.f32.mrb[0].mxu0
  %v10574 = vadd.f32 0.0, %v10573
  %v10575 = vpop.f32.mrb[0].mxu0
  %v10576 = vpop.f32.mrb[0].mxu0
  %v10577 = vadd.f32 0.0, %v10576
  %v10578 = vpop.f32.mrb[0].mxu0
  %10579 = vmatprep.mubr.bf16.mxu0 0
  %10580 = vmatmul.mubr.bf16.gmra.mrb[0].mxu0 %v10521
  %v10581 = vpop.f32.mrb[0].mxu0
  %v10582 = vadd.f32 0.0, %v10581
  %v10583 = vpop.f32.mrb[0].mxu0
  %v10584 = vpop.f32.mrb[0].mxu0
  %v10585 = vadd.f32 0.0, %v10584
  %v10586 = vpop.f32.mrb[0].mxu0
  %10587 = vdwg.mxu0
  %v10588 = vadd.f32 %v10477, %v10558
  %v10589 = vadd.f32 %v10478, %v10561
  %v10590 = vadd.f32 %v10479, %v10566
  %v10591 = vadd.f32 %v10480, %v10569
  %v10592 = vadd.f32 %v10481, %v10574
  %v10593 = vadd.f32 %v10482, %v10577
  %v10594 = vadd.f32 %v10483, %v10582
  %v10595 = vadd.f32 %v10484, %v10585
  %v10604 = vunpack.c.l.b16 %v10059
  %v10605 = vunpack.c.l.b16 %v10060
  %v10606 = vunpack.c.l.b16 %v10061
  %v10607 = vunpack.c.l.b16 %v10062
  %v10608 = vunpack.c.l.b16 %v10063
  %v10609 = vunpack.c.l.b16 %v10064
  %v10610 = vunpack.c.l.b16 %v10065
  %v10611 = vunpack.c.l.b16 %v10066
  %v10612 = vpack.c.b16 %v10605, %v10604
  %v10613 = vpack.c.b16 %v10607, %v10606
  %v10614 = vpack.c.b16 %v10609, %v10608
  %v10615 = vpack.c.b16 %v10611, %v10610
  %v10617 = vsel %vm10199, %v10612, 0
  %v10620 = vsel %vm10199, %v10613, 0
  %v10623 = vsel %vm10199, %v10614, 0
  %v10626 = vsel %vm10199, %v10615, 0
  %10628 = vmatprep.subr.bf16.mxu0 0
  %10629 = vmatpush1.bf16.msra.mxu0 %v10020
  %10630 = vmatprep.subr.bf16.mxu0 0
  %10631 = vmatpush1.bf16.msra.mxu0 %v10024
  %10632 = vmatprep.subr.bf16.mxu0 0
  %10633 = vmatpush1.bf16.msra.mxu0 0
  %10634 = vmatprep.subr.bf16.mxu0 0
  %10635 = vmatpush1.bf16.msra.mxu0 0
  %10636 = vmatprep.subr.bf16.mxu0 0
  %10637 = vmatpush1.bf16.msra.mxu0 0
  %10638 = vmatprep.subr.bf16.mxu0 0
  %10639 = vmatpush1.bf16.msra.mxu0 0
  %10640 = vmatprep.subr.bf16.mxu0 0
  %10641 = vmatpush1.bf16.msra.mxu0 0
  %10642 = vmatprep.subr.bf16.mxu0 0
  %10643 = vmatpush1.bf16.msra.mxu0 0
  %10644 = vmatprep.subr.bf16.mxu0 0
  %10645 = vmatpush1.bf16.msra.mxu0 0
  %10646 = vmatprep.subr.bf16.mxu0 0
  %10647 = vmatpush1.bf16.msra.mxu0 0
  %10648 = vmatprep.subr.bf16.mxu0 0
  %10649 = vmatpush1.bf16.msra.mxu0 0
  %10650 = vmatprep.subr.bf16.mxu0 0
  %10651 = vmatpush1.bf16.msra.mxu0 0
  %10652 = vmatprep.subr.bf16.mxu0 0
  %10653 = vmatpush1.bf16.msra.mxu0 0
  %10654 = vmatprep.subr.bf16.mxu0 0
  %10655 = vmatpush1.bf16.msra.mxu0 0
  %10656 = vmatprep.subr.bf16.mxu0 0
  %10657 = vmatpush1.bf16.msra.mxu0 0
  %10658 = vmatprep.subr.bf16.mxu0 0
  %10659 = vmatpush1.bf16.msra.mxu0 0
  %10660 = vmatprep.mubr.bf16.mxu0 0
  %10661 = vmatmul.mubr.bf16.gmra.mrb[0].mxu0 %v10617
  %v10662 = vpop.f32.mrb[0].mxu0
  %v10663 = vadd.f32 0.0, %v10662
  %v10664 = vpop.f32.mrb[0].mxu0
  %v10665 = vpop.f32.mrb[0].mxu0
  %v10666 = vadd.f32 0.0, %v10665
  %v10667 = vpop.f32.mrb[0].mxu0
  %10668 = vmatprep.mubr.bf16.mxu0 0
  %10669 = vmatmul.mubr.bf16.gmra.mrb[0].mxu0 %v10620
  %v10670 = vpop.f32.mrb[0].mxu0
  %v10671 = vadd.f32 0.0, %v10670
  %v10672 = vpop.f32.mrb[0].mxu0
  %v10673 = vpop.f32.mrb[0].mxu0
  %v10674 = vadd.f32 0.0, %v10673
  %v10675 = vpop.f32.mrb[0].mxu0
  %10676 = vmatprep.mubr.bf16.mxu0 0
  %10677 = vmatmul.mubr.bf16.gmra.mrb[0].mxu0 %v10623
  %v10678 = vpop.f32.mrb[0].mxu0
  %v10679 = vadd.f32 0.0, %v10678
  %v10680 = vpop.f32.mrb[0].mxu0
  %v10681 = vpop.f32.mrb[0].mxu0
  %v10682 = vadd.f32 0.0, %v10681
  %v10683 = vpop.f32.mrb[0].mxu0
  %10684 = vmatprep.mubr.bf16.mxu0 0
  %10685 = vmatmul.mubr.bf16.gmra.mrb[0].mxu0 %v10626
  %v10686 = vpop.f32.mrb[0].mxu0
  %v10687 = vadd.f32 0.0, %v10686
  %v10688 = vpop.f32.mrb[0].mxu0
  %v10689 = vpop.f32.mrb[0].mxu0
  %v10690 = vadd.f32 0.0, %v10689
  %v10691 = vpop.f32.mrb[0].mxu0
  %10692 = vdwg.mxu0
  %v10693 = vadd.f32 %v10588, %v10663
  %v10694 = vadd.f32 %v10589, %v10666
  %v10695 = vadd.f32 %v10590, %v10671
  %v10696 = vadd.f32 %v10591, %v10674
  %v10697 = vadd.f32 %v10592, %v10679
  %v10698 = vadd.f32 %v10593, %v10682
  %v10699 = vadd.f32 %v10594, %v10687
  %v10700 = vadd.f32 %v10595, %v10690
  %v10709 = vunpack.c.l.b16 %v10067
  %v10710 = vunpack.c.l.b16 %v10068
  %v10711 = vunpack.c.l.b16 %v10069
  %v10712 = vunpack.c.l.b16 %v10070
  %v10713 = vunpack.c.l.b16 %v10071
  %v10714 = vunpack.c.l.b16 %v10072
  %v10715 = vunpack.c.l.b16 %v10073
  %v10716 = vunpack.c.l.b16 %v10074
  %v10717 = vpack.c.b16 %v10710, %v10709
  %v10718 = vpack.c.b16 %v10712, %v10711
  %v10719 = vpack.c.b16 %v10714, %v10713
  %v10720 = vpack.c.b16 %v10716, %v10715
  %10723 = vrot.lane.b32.xlu0 %v10020, 96
  %v10724 = vpop.permute.xlu0 %10723
  %10725 = vrot.lane.b32.xlu0 %v10024, 96
  %v10726 = vpop.permute.xlu0 %10725
  %v10730 = vsel %vm10199, %v10717, 0
  %v10733 = vsel %vm10199, %v10718, 0
  %v10736 = vsel %vm10199, %v10719, 0
  %v10739 = vsel %vm10199, %v10720, 0
  %10741 = vmatprep.subr.bf16.mxu0 0
  %10742 = vmatpush1.bf16.msra.mxu0 %v10724
  %10743 = vmatprep.subr.bf16.mxu0 0
  %10744 = vmatpush1.bf16.msra.mxu0 %v10726
  %10745 = vmatprep.subr.bf16.mxu0 0
  %10746 = vmatpush1.bf16.msra.mxu0 0
  %10747 = vmatprep.subr.bf16.mxu0 0
  %10748 = vmatpush1.bf16.msra.mxu0 0
  %10749 = vmatprep.subr.bf16.mxu0 0
  %10750 = vmatpush1.bf16.msra.mxu0 0
  %10751 = vmatprep.subr.bf16.mxu0 0
  %10752 = vmatpush1.bf16.msra.mxu0 0
  %10753 = vmatprep.subr.bf16.mxu0 0
  %10754 = vmatpush1.bf16.msra.mxu0 0
  %10755 = vmatprep.subr.bf16.mxu0 0
  %10756 = vmatpush1.bf16.msra.mxu0 0
  %10757 = vmatprep.subr.bf16.mxu0 0
  %10758 = vmatpush1.bf16.msra.mxu0 0
  %10759 = vmatprep.subr.bf16.mxu0 0
  %10760 = vmatpush1.bf16.msra.mxu0 0
  %10761 = vmatprep.subr.bf16.mxu0 0
  %10762 = vmatpush1.bf16.msra.mxu0 0
  %10763 = vmatprep.subr.bf16.mxu0 0
  %10764 = vmatpush1.bf16.msra.mxu0 0
  %10765 = vmatprep.subr.bf16.mxu0 0
  %10766 = vmatpush1.bf16.msra.mxu0 0
  %10767 = vmatprep.subr.bf16.mxu0 0
  %10768 = vmatpush1.bf16.msra.mxu0 0
  %10769 = vmatprep.subr.bf16.mxu0 0
  %10770 = vmatpush1.bf16.msra.mxu0 0
  %10771 = vmatprep.subr.bf16.mxu0 0
  %10772 = vmatpush1.bf16.msra.mxu0 0
  %10773 = vmatprep.mubr.bf16.mxu0 0
  %10774 = vmatmul.mubr.bf16.gmra.mrb[0].mxu0 %v10730
  %v10775 = vpop.f32.mrb[0].mxu0
  %v10776 = vadd.f32 0.0, %v10775
  %v10777 = vpop.f32.mrb[0].mxu0
  %v10778 = vpop.f32.mrb[0].mxu0
  %v10779 = vadd.f32 0.0, %v10778
  %v10780 = vpop.f32.mrb[0].mxu0
  %10781 = vmatprep.mubr.bf16.mxu0 0
  %10782 = vmatmul.mubr.bf16.gmra.mrb[0].mxu0 %v10733
  %v10783 = vpop.f32.mrb[0].mxu0
  %v10784 = vadd.f32 0.0, %v10783
  %v10785 = vpop.f32.mrb[0].mxu0
  %v10786 = vpop.f32.mrb[0].mxu0
  %v10787 = vadd.f32 0.0, %v10786
  %v10788 = vpop.f32.mrb[0].mxu0
  %10789 = vmatprep.mubr.bf16.mxu0 0
  %10790 = vmatmul.mubr.bf16.gmra.mrb[0].mxu0 %v10736
  %v10791 = vpop.f32.mrb[0].mxu0
  %v10792 = vadd.f32 0.0, %v10791
  %v10793 = vpop.f32.mrb[0].mxu0
  %v10794 = vpop.f32.mrb[0].mxu0
  %v10795 = vadd.f32 0.0, %v10794
  %v10796 = vpop.f32.mrb[0].mxu0
  %10797 = vmatprep.mubr.bf16.mxu0 0
  %10798 = vmatmul.mubr.bf16.gmra.mrb[0].mxu0 %v10739
  %v10799 = vpop.f32.mrb[0].mxu0
  %v10800 = vadd.f32 0.0, %v10799
  %v10801 = vpop.f32.mrb[0].mxu0
  %v10802 = vpop.f32.mrb[0].mxu0
  %v10803 = vadd.f32 0.0, %v10802
  %v10804 = vpop.f32.mrb[0].mxu0
  %10805 = vdwg.mxu0
  %v10806 = vadd.f32 %v10693, %v10776
  %v10807 = vadd.f32 %v10694, %v10779
  %v10808 = vadd.f32 %v10695, %v10784
  %v10809 = vadd.f32 %v10696, %v10787
  %v10810 = vadd.f32 %v10697, %v10792
  %v10811 = vadd.f32 %v10698, %v10795
  %v10812 = vadd.f32 %v10699, %v10800
  %v10813 = vadd.f32 %v10700, %v10803
  %v10822 = vunpack.c.l.b16 %v10075
  %v10823 = vunpack.c.l.b16 %v10076
  %v10824 = vunpack.c.l.b16 %v10077
  %v10825 = vunpack.c.l.b16 %v10078
  %v10826 = vunpack.c.l.b16 %v10079
  %v10827 = vunpack.c.l.b16 %v10080
  %v10828 = vunpack.c.l.b16 %v10081
  %v10829 = vunpack.c.l.b16 %v10082
  %v10830 = vpack.c.b16 %v10823, %v10822
  %v10831 = vpack.c.b16 %v10825, %v10824
  %v10832 = vpack.c.b16 %v10827, %v10826
  %v10833 = vpack.c.b16 %v10829, %v10828
  %10834 = vrot.lane.b32.xlu0 %v10020, 64
  %v10835 = vpop.permute.xlu0 %10834
  %10836 = vrot.lane.b32.xlu0 %v10024, 64
  %v10837 = vpop.permute.xlu0 %10836
  %v10841 = vsel %vm10199, %v10830, 0
  %v10844 = vsel %vm10199, %v10831, 0
  %v10847 = vsel %vm10199, %v10832, 0
  %v10850 = vsel %vm10199, %v10833, 0
  %10852 = vmatprep.subr.bf16.mxu0 0
  %10853 = vmatpush1.bf16.msra.mxu0 %v10835
  %10854 = vmatprep.subr.bf16.mxu0 0
  %10855 = vmatpush1.bf16.msra.mxu0 %v10837
  %10856 = vmatprep.subr.bf16.mxu0 0
  %10857 = vmatpush1.bf16.msra.mxu0 0
  %10858 = vmatprep.subr.bf16.mxu0 0
  %10859 = vmatpush1.bf16.msra.mxu0 0
  %10860 = vmatprep.subr.bf16.mxu0 0
  %10861 = vmatpush1.bf16.msra.mxu0 0
  %10862 = vmatprep.subr.bf16.mxu0 0
  %10863 = vmatpush1.bf16.msra.mxu0 0
  %10864 = vmatprep.subr.bf16.mxu0 0
  %10865 = vmatpush1.bf16.msra.mxu0 0
  %10866 = vmatprep.subr.bf16.mxu0 0
  %10867 = vmatpush1.bf16.msra.mxu0 0
  %10868 = vmatprep.subr.bf16.mxu0 0
  %10869 = vmatpush1.bf16.msra.mxu0 0
  %10870 = vmatprep.subr.bf16.mxu0 0
  %10871 = vmatpush1.bf16.msra.mxu0 0
  %10872 = vmatprep.subr.bf16.mxu0 0
  %10873 = vmatpush1.bf16.msra.mxu0 0
  %10874 = vmatprep.subr.bf16.mxu0 0
  %10875 = vmatpush1.bf16.msra.mxu0 0
  %10876 = vmatprep.subr.bf16.mxu0 0
  %10877 = vmatpush1.bf16.msra.mxu0 0
  %10878 = vmatprep.subr.bf16.mxu0 0
  %10879 = vmatpush1.bf16.msra.mxu0 0
  %10880 = vmatprep.subr.bf16.mxu0 0
  %10881 = vmatpush1.bf16.msra.mxu0 0
  %10882 = vmatprep.subr.bf16.mxu0 0
  %10883 = vmatpush1.bf16.msra.mxu0 0
  %10884 = vmatprep.mubr.bf16.mxu0 0
  %10885 = vmatmul.mubr.bf16.gmra.mrb[0].mxu0 %v10841
  %v10886 = vpop.f32.mrb[0].mxu0
  %v10887 = vadd.f32 0.0, %v10886
  %v10888 = vpop.f32.mrb[0].mxu0
  %v10889 = vpop.f32.mrb[0].mxu0
  %v10890 = vadd.f32 0.0, %v10889
  %v10891 = vpop.f32.mrb[0].mxu0
  %10892 = vmatprep.mubr.bf16.mxu0 0
  %10893 = vmatmul.mubr.bf16.gmra.mrb[0].mxu0 %v10844
  %v10894 = vpop.f32.mrb[0].mxu0
  %v10895 = vadd.f32 0.0, %v10894
  %v10896 = vpop.f32.mrb[0].mxu0
  %v10897 = vpop.f32.mrb[0].mxu0
  %v10898 = vadd.f32 0.0, %v10897
  %v10899 = vpop.f32.mrb[0].mxu0
  %10900 = vmatprep.mubr.bf16.mxu0 0
  %10901 = vmatmul.mubr.bf16.gmra.mrb[0].mxu0 %v10847
  %v10902 = vpop.f32.mrb[0].mxu0
  %v10903 = vadd.f32 0.0, %v10902
  %v10904 = vpop.f32.mrb[0].mxu0
  %v10905 = vpop.f32.mrb[0].mxu0
  %v10906 = vadd.f32 0.0, %v10905
  %v10907 = vpop.f32.mrb[0].mxu0
  %10908 = vmatprep.mubr.bf16.mxu0 0
  %10909 = vmatmul.mubr.bf16.gmra.mrb[0].mxu0 %v10850
  %v10910 = vpop.f32.mrb[0].mxu0
  %v10911 = vadd.f32 0.0, %v10910
  %v10912 = vpop.f32.mrb[0].mxu0
  %v10913 = vpop.f32.mrb[0].mxu0
  %v10914 = vadd.f32 0.0, %v10913
  %v10915 = vpop.f32.mrb[0].mxu0
  %10916 = vdwg.mxu0
  %v10917 = vadd.f32 %v10806, %v10887
  %v10918 = vadd.f32 %v10807, %v10890
  %v10919 = vadd.f32 %v10808, %v10895
  %v10920 = vadd.f32 %v10809, %v10898
  %v10921 = vadd.f32 %v10810, %v10903
  %v10922 = vadd.f32 %v10811, %v10906
  %v10923 = vadd.f32 %v10812, %v10911
  %v10924 = vadd.f32 %v10813, %v10914
  %v10933 = vunpack.c.l.b16 %v10083
  %v10934 = vunpack.c.l.b16 %v10084
  %v10935 = vunpack.c.l.b16 %v10085
  %v10936 = vunpack.c.l.b16 %v10086
  %v10937 = vunpack.c.l.b16 %v10087
  %v10938 = vunpack.c.l.b16 %v10088
  %v10939 = vunpack.c.l.b16 %v10089
  %v10940 = vunpack.c.l.b16 %v10090
  %v10941 = vpack.c.b16 %v10934, %v10933
  %v10942 = vpack.c.b16 %v10936, %v10935
  %v10943 = vpack.c.b16 %v10938, %v10937
  %v10944 = vpack.c.b16 %v10940, %v10939
  %10945 = vrot.lane.b32.xlu0 %v10020, 32
  %v10946 = vpop.permute.xlu0 %10945
  %10947 = vrot.lane.b32.xlu0 %v10024, 32
  %v10948 = vpop.permute.xlu0 %10947
  %v10952 = vsel %vm10199, %v10941, 0
  %v10955 = vsel %vm10199, %v10942, 0
  %v10958 = vsel %vm10199, %v10943, 0
  %v10961 = vsel %vm10199, %v10944, 0
  %10963 = vmatprep.subr.bf16.mxu0 0
  %10964 = vmatpush1.bf16.msra.mxu0 %v10946
  %10965 = vmatprep.subr.bf16.mxu0 0
  %10966 = vmatpush1.bf16.msra.mxu0 %v10948
  %10967 = vmatprep.subr.bf16.mxu0 0
  %10968 = vmatpush1.bf16.msra.mxu0 0
  %10969 = vmatprep.subr.bf16.mxu0 0
  %10970 = vmatpush1.bf16.msra.mxu0 0
  %10971 = vmatprep.subr.bf16.mxu0 0
  %10972 = vmatpush1.bf16.msra.mxu0 0
  %10973 = vmatprep.subr.bf16.mxu0 0
  %10974 = vmatpush1.bf16.msra.mxu0 0
  %10975 = vmatprep.subr.bf16.mxu0 0
  %10976 = vmatpush1.bf16.msra.mxu0 0
  %10977 = vmatprep.subr.bf16.mxu0 0
  %10978 = vmatpush1.bf16.msra.mxu0 0
  %10979 = vmatprep.subr.bf16.mxu0 0
  %10980 = vmatpush1.bf16.msra.mxu0 0
  %10981 = vmatprep.subr.bf16.mxu0 0
  %10982 = vmatpush1.bf16.msra.mxu0 0
  %10983 = vmatprep.subr.bf16.mxu0 0
  %10984 = vmatpush1.bf16.msra.mxu0 0
  %10985 = vmatprep.subr.bf16.mxu0 0
  %10986 = vmatpush1.bf16.msra.mxu0 0
  %10987 = vmatprep.subr.bf16.mxu0 0
  %10988 = vmatpush1.bf16.msra.mxu0 0
  %10989 = vmatprep.subr.bf16.mxu0 0
  %10990 = vmatpush1.bf16.msra.mxu0 0
  %10991 = vmatprep.subr.bf16.mxu0 0
  %10992 = vmatpush1.bf16.msra.mxu0 0
  %10993 = vmatprep.subr.bf16.mxu0 0
  %10994 = vmatpush1.bf16.msra.mxu0 0
  %10995 = vmatprep.mubr.bf16.mxu0 0
  %10996 = vmatmul.mubr.bf16.gmra.mrb[0].mxu0 %v10952
  %v10997 = vpop.f32.mrb[0].mxu0
  %v10998 = vadd.f32 0.0, %v10997
  %v10999 = vpop.f32.mrb[0].mxu0
  %v11000 = vpop.f32.mrb[0].mxu0
  %v11001 = vadd.f32 0.0, %v11000
  %v11002 = vpop.f32.mrb[0].mxu0
  %11003 = vmatprep.mubr.bf16.mxu0 0
  %11004 = vmatmul.mubr.bf16.gmra.mrb[0].mxu0 %v10955
  %v11005 = vpop.f32.mrb[0].mxu0
  %v11006 = vadd.f32 0.0, %v11005
  %v11007 = vpop.f32.mrb[0].mxu0
  %v11008 = vpop.f32.mrb[0].mxu0
  %v11009 = vadd.f32 0.0, %v11008
  %v11010 = vpop.f32.mrb[0].mxu0
  %11011 = vmatprep.mubr.bf16.mxu0 0
  %11012 = vmatmul.mubr.bf16.gmra.mrb[0].mxu0 %v10958
  %v11013 = vpop.f32.mrb[0].mxu0
  %v11014 = vadd.f32 0.0, %v11013
  %v11015 = vpop.f32.mrb[0].mxu0
  %v11016 = vpop.f32.mrb[0].mxu0
  %v11017 = vadd.f32 0.0, %v11016
  %v11018 = vpop.f32.mrb[0].mxu0
  %11019 = vmatprep.mubr.bf16.mxu0 0
  %11020 = vmatmul.mubr.bf16.gmra.mrb[0].mxu0 %v10961
  %v11021 = vpop.f32.mrb[0].mxu0
  %v11022 = vadd.f32 0.0, %v11021
  %v11023 = vpop.f32.mrb[0].mxu0
  %v11024 = vpop.f32.mrb[0].mxu0
  %v11025 = vadd.f32 0.0, %v11024
  %v11026 = vpop.f32.mrb[0].mxu0
  %11027 = vdwg.mxu0
  %v11028 = vadd.f32 %v10917, %v10998
  %v11029 = vadd.f32 %v10918, %v11001
  %v11030 = vadd.f32 %v10919, %v11006
  %v11031 = vadd.f32 %v10920, %v11009
  %v11032 = vadd.f32 %v10921, %v11014
  %v11033 = vadd.f32 %v10922, %v11017
  %v11034 = vadd.f32 %v10923, %v11022
  %v11035 = vadd.f32 %v10924, %v11025
  %v11044 = vunpack.c.l.b16 %v10091
  %v11045 = vunpack.c.l.b16 %v10092
  %v11046 = vunpack.c.l.b16 %v10093
  %v11047 = vunpack.c.l.b16 %v10094
  %v11048 = vunpack.c.l.b16 %v10095
  %v11049 = vunpack.c.l.b16 %v10096
  %v11050 = vunpack.c.l.b16 %v10097
  %v11051 = vunpack.c.l.b16 %v10098
  %v11052 = vpack.c.b16 %v11045, %v11044
  %v11053 = vpack.c.b16 %v11047, %v11046
  %v11054 = vpack.c.b16 %v11049, %v11048
  %v11055 = vpack.c.b16 %v11051, %v11050
  %v11057 = vsel %vm10199, %v11052, 0
  %v11060 = vsel %vm10199, %v11053, 0
  %v11063 = vsel %vm10199, %v11054, 0
  %v11066 = vsel %vm10199, %v11055, 0
  %11068 = vmatprep.subr.bf16.mxu0 0
  %11069 = vmatpush1.bf16.msra.mxu0 %v10021
  %11070 = vmatprep.subr.bf16.mxu0 0
  %11071 = vmatpush1.bf16.msra.mxu0 %v10025
  %11072 = vmatprep.subr.bf16.mxu0 0
  %11073 = vmatpush1.bf16.msra.mxu0 0
  %11074 = vmatprep.subr.bf16.mxu0 0
  %11075 = vmatpush1.bf16.msra.mxu0 0
  %11076 = vmatprep.subr.bf16.mxu0 0
  %11077 = vmatpush1.bf16.msra.mxu0 0
  %11078 = vmatprep.subr.bf16.mxu0 0
  %11079 = vmatpush1.bf16.msra.mxu0 0
  %11080 = vmatprep.subr.bf16.mxu0 0
  %11081 = vmatpush1.bf16.msra.mxu0 0
  %11082 = vmatprep.subr.bf16.mxu0 0
  %11083 = vmatpush1.bf16.msra.mxu0 0
  %11084 = vmatprep.subr.bf16.mxu0 0
  %11085 = vmatpush1.bf16.msra.mxu0 0
  %11086 = vmatprep.subr.bf16.mxu0 0
  %11087 = vmatpush1.bf16.msra.mxu0 0
  %11088 = vmatprep.subr.bf16.mxu0 0
  %11089 = vmatpush1.bf16.msra.mxu0 0
  %11090 = vmatprep.subr.bf16.mxu0 0
  %11091 = vmatpush1.bf16.msra.mxu0 0
  %11092 = vmatprep.subr.bf16.mxu0 0
  %11093 = vmatpush1.bf16.msra.mxu0 0
  %11094 = vmatprep.subr.bf16.mxu0 0
  %11095 = vmatpush1.bf16.msra.mxu0 0
  %11096 = vmatprep.subr.bf16.mxu0 0
  %11097 = vmatpush1.bf16.msra.mxu0 0
  %11098 = vmatprep.subr.bf16.mxu0 0
  %11099 = vmatpush1.bf16.msra.mxu0 0
  %11100 = vmatprep.mubr.bf16.mxu0 0
  %11101 = vmatmul.mubr.bf16.gmra.mrb[0].mxu0 %v11057
  %v11102 = vpop.f32.mrb[0].mxu0
  %v11103 = vadd.f32 0.0, %v11102
  %v11104 = vpop.f32.mrb[0].mxu0
  %v11105 = vpop.f32.mrb[0].mxu0
  %v11106 = vadd.f32 0.0, %v11105
  %v11107 = vpop.f32.mrb[0].mxu0
  %11108 = vmatprep.mubr.bf16.mxu0 0
  %11109 = vmatmul.mubr.bf16.gmra.mrb[0].mxu0 %v11060
  %v11110 = vpop.f32.mrb[0].mxu0
  %v11111 = vadd.f32 0.0, %v11110
  %v11112 = vpop.f32.mrb[0].mxu0
  %v11113 = vpop.f32.mrb[0].mxu0
  %v11114 = vadd.f32 0.0, %v11113
  %v11115 = vpop.f32.mrb[0].mxu0
  %11116 = vmatprep.mubr.bf16.mxu0 0
  %11117 = vmatmul.mubr.bf16.gmra.mrb[0].mxu0 %v11063
  %v11118 = vpop.f32.mrb[0].mxu0
  %v11119 = vadd.f32 0.0, %v11118
  %v11120 = vpop.f32.mrb[0].mxu0
  %v11121 = vpop.f32.mrb[0].mxu0
  %v11122 = vadd.f32 0.0, %v11121
  %v11123 = vpop.f32.mrb[0].mxu0
  %11124 = vmatprep.mubr.bf16.mxu0 0
  %11125 = vmatmul.mubr.bf16.gmra.mrb[0].mxu0 %v11066
  %v11126 = vpop.f32.mrb[0].mxu0
  %v11127 = vadd.f32 0.0, %v11126
  %v11128 = vpop.f32.mrb[0].mxu0
  %v11129 = vpop.f32.mrb[0].mxu0
  %v11130 = vadd.f32 0.0, %v11129
  %v11131 = vpop.f32.mrb[0].mxu0
  %11132 = vdwg.mxu0
  %v11133 = vadd.f32 %v11028, %v11103
  %v11134 = vadd.f32 %v11029, %v11106
  %v11135 = vadd.f32 %v11030, %v11111
  %v11136 = vadd.f32 %v11031, %v11114
  %v11137 = vadd.f32 %v11032, %v11119
  %v11138 = vadd.f32 %v11033, %v11122
  %v11139 = vadd.f32 %v11034, %v11127
  %v11140 = vadd.f32 %v11035, %v11130
  %v11149 = vunpack.c.l.b16 %v10099
  %v11150 = vunpack.c.l.b16 %v10100
  %v11151 = vunpack.c.l.b16 %v10101
  %v11152 = vunpack.c.l.b16 %v10102
  %v11153 = vunpack.c.l.b16 %v10103
  %v11154 = vunpack.c.l.b16 %v10104
  %v11155 = vunpack.c.l.b16 %v10105
  %v11156 = vunpack.c.l.b16 %v10106
  %v11157 = vpack.c.b16 %v11150, %v11149
  %v11158 = vpack.c.b16 %v11152, %v11151
  %v11159 = vpack.c.b16 %v11154, %v11153
  %v11160 = vpack.c.b16 %v11156, %v11155
  %11163 = vrot.lane.b32.xlu0 %v10021, 96
  %v11164 = vpop.permute.xlu0 %11163
  %11165 = vrot.lane.b32.xlu0 %v10025, 96
  %v11166 = vpop.permute.xlu0 %11165
  %v11170 = vsel %vm10199, %v11157, 0
  %v11173 = vsel %vm10199, %v11158, 0
  %v11176 = vsel %vm10199, %v11159, 0
  %v11179 = vsel %vm10199, %v11160, 0
  %11181 = vmatprep.subr.bf16.mxu0 0
  %11182 = vmatpush1.bf16.msra.mxu0 %v11164
  %11183 = vmatprep.subr.bf16.mxu0 0
  %11184 = vmatpush1.bf16.msra.mxu0 %v11166
  %11185 = vmatprep.subr.bf16.mxu0 0
  %11186 = vmatpush1.bf16.msra.mxu0 0
  %11187 = vmatprep.subr.bf16.mxu0 0
  %11188 = vmatpush1.bf16.msra.mxu0 0
  %11189 = vmatprep.subr.bf16.mxu0 0
  %11190 = vmatpush1.bf16.msra.mxu0 0
  %11191 = vmatprep.subr.bf16.mxu0 0
  %11192 = vmatpush1.bf16.msra.mxu0 0
  %11193 = vmatprep.subr.bf16.mxu0 0
  %11194 = vmatpush1.bf16.msra.mxu0 0
  %11195 = vmatprep.subr.bf16.mxu0 0
  %11196 = vmatpush1.bf16.msra.mxu0 0
  %11197 = vmatprep.subr.bf16.mxu0 0
  %11198 = vmatpush1.bf16.msra.mxu0 0
  %11199 = vmatprep.subr.bf16.mxu0 0
  %11200 = vmatpush1.bf16.msra.mxu0 0
  %11201 = vmatprep.subr.bf16.mxu0 0
  %11202 = vmatpush1.bf16.msra.mxu0 0
  %11203 = vmatprep.subr.bf16.mxu0 0
  %11204 = vmatpush1.bf16.msra.mxu0 0
  %11205 = vmatprep.subr.bf16.mxu0 0
  %11206 = vmatpush1.bf16.msra.mxu0 0
  %11207 = vmatprep.subr.bf16.mxu0 0
  %11208 = vmatpush1.bf16.msra.mxu0 0
  %11209 = vmatprep.subr.bf16.mxu0 0
  %11210 = vmatpush1.bf16.msra.mxu0 0
  %11211 = vmatprep.subr.bf16.mxu0 0
  %11212 = vmatpush1.bf16.msra.mxu0 0
  %11213 = vmatprep.mubr.bf16.mxu0 0
  %11214 = vmatmul.mubr.bf16.gmra.mrb[0].mxu0 %v11170
  %v11215 = vpop.f32.mrb[0].mxu0
  %v11216 = vadd.f32 0.0, %v11215
  %v11217 = vpop.f32.mrb[0].mxu0
  %v11218 = vpop.f32.mrb[0].mxu0
  %v11219 = vadd.f32 0.0, %v11218
  %v11220 = vpop.f32.mrb[0].mxu0
  %11221 = vmatprep.mubr.bf16.mxu0 0
  %11222 = vmatmul.mubr.bf16.gmra.mrb[0].mxu0 %v11173
  %v11223 = vpop.f32.mrb[0].mxu0
  %v11224 = vadd.f32 0.0, %v11223
  %v11225 = vpop.f32.mrb[0].mxu0
  %v11226 = vpop.f32.mrb[0].mxu0
  %v11227 = vadd.f32 0.0, %v11226
  %v11228 = vpop.f32.mrb[0].mxu0
  %11229 = vmatprep.mubr.bf16.mxu0 0
  %11230 = vmatmul.mubr.bf16.gmra.mrb[0].mxu0 %v11176
  %v11231 = vpop.f32.mrb[0].mxu0
  %v11232 = vadd.f32 0.0, %v11231
  %v11233 = vpop.f32.mrb[0].mxu0
  %v11234 = vpop.f32.mrb[0].mxu0
  %v11235 = vadd.f32 0.0, %v11234
  %v11236 = vpop.f32.mrb[0].mxu0
  %11237 = vmatprep.mubr.bf16.mxu0 0
  %11238 = vmatmul.mubr.bf16.gmra.mrb[0].mxu0 %v11179
  %v11239 = vpop.f32.mrb[0].mxu0
  %v11240 = vadd.f32 0.0, %v11239
  %v11241 = vpop.f32.mrb[0].mxu0
  %v11242 = vpop.f32.mrb[0].mxu0
  %v11243 = vadd.f32 0.0, %v11242
  %v11244 = vpop.f32.mrb[0].mxu0
  %11245 = vdwg.mxu0
  %v11246 = vadd.f32 %v11133, %v11216
  %v11247 = vadd.f32 %v11134, %v11219
  %v11248 = vadd.f32 %v11135, %v11224
  %v11249 = vadd.f32 %v11136, %v11227
  %v11250 = vadd.f32 %v11137, %v11232
  %v11251 = vadd.f32 %v11138, %v11235
  %v11252 = vadd.f32 %v11139, %v11240
  %v11253 = vadd.f32 %v11140, %v11243
  %v11262 = vunpack.c.l.b16 %v10107
  %v11263 = vunpack.c.l.b16 %v10108
  %v11264 = vunpack.c.l.b16 %v10109
  %v11265 = vunpack.c.l.b16 %v10110
  %v11266 = vunpack.c.l.b16 %v10111
  %v11267 = vunpack.c.l.b16 %v10112
  %v11268 = vunpack.c.l.b16 %v10113
  %v11269 = vunpack.c.l.b16 %v10114
  %v11270 = vpack.c.b16 %v11263, %v11262
  %v11271 = vpack.c.b16 %v11265, %v11264
  %v11272 = vpack.c.b16 %v11267, %v11266
  %v11273 = vpack.c.b16 %v11269, %v11268
  %11274 = vrot.lane.b32.xlu0 %v10021, 64
  %v11275 = vpop.permute.xlu0 %11274
  %11276 = vrot.lane.b32.xlu0 %v10025, 64
  %v11277 = vpop.permute.xlu0 %11276
  %v11281 = vsel %vm10199, %v11270, 0
  %v11284 = vsel %vm10199, %v11271, 0
  %v11287 = vsel %vm10199, %v11272, 0
  %v11290 = vsel %vm10199, %v11273, 0
  %11292 = vmatprep.subr.bf16.mxu0 0
  %11293 = vmatpush1.bf16.msra.mxu0 %v11275
  %11294 = vmatprep.subr.bf16.mxu0 0
  %11295 = vmatpush1.bf16.msra.mxu0 %v11277
  %11296 = vmatprep.subr.bf16.mxu0 0
  %11297 = vmatpush1.bf16.msra.mxu0 0
  %11298 = vmatprep.subr.bf16.mxu0 0
  %11299 = vmatpush1.bf16.msra.mxu0 0
  %11300 = vmatprep.subr.bf16.mxu0 0
  %11301 = vmatpush1.bf16.msra.mxu0 0
  %11302 = vmatprep.subr.bf16.mxu0 0
  %11303 = vmatpush1.bf16.msra.mxu0 0
  %11304 = vmatprep.subr.bf16.mxu0 0
  %11305 = vmatpush1.bf16.msra.mxu0 0
  %11306 = vmatprep.subr.bf16.mxu0 0
  %11307 = vmatpush1.bf16.msra.mxu0 0
  %11308 = vmatprep.subr.bf16.mxu0 0
  %11309 = vmatpush1.bf16.msra.mxu0 0
  %11310 = vmatprep.subr.bf16.mxu0 0
  %11311 = vmatpush1.bf16.msra.mxu0 0
  %11312 = vmatprep.subr.bf16.mxu0 0
  %11313 = vmatpush1.bf16.msra.mxu0 0
  %11314 = vmatprep.subr.bf16.mxu0 0
  %11315 = vmatpush1.bf16.msra.mxu0 0
  %11316 = vmatprep.subr.bf16.mxu0 0
  %11317 = vmatpush1.bf16.msra.mxu0 0
  %11318 = vmatprep.subr.bf16.mxu0 0
  %11319 = vmatpush1.bf16.msra.mxu0 0
  %11320 = vmatprep.subr.bf16.mxu0 0
  %11321 = vmatpush1.bf16.msra.mxu0 0
  %11322 = vmatprep.subr.bf16.mxu0 0
  %11323 = vmatpush1.bf16.msra.mxu0 0
  %11324 = vmatprep.mubr.bf16.mxu0 0
  %11325 = vmatmul.mubr.bf16.gmra.mrb[0].mxu0 %v11281
  %v11326 = vpop.f32.mrb[0].mxu0
  %v11327 = vadd.f32 0.0, %v11326
  %v11328 = vpop.f32.mrb[0].mxu0
  %v11329 = vpop.f32.mrb[0].mxu0
  %v11330 = vadd.f32 0.0, %v11329
  %v11331 = vpop.f32.mrb[0].mxu0
  %11332 = vmatprep.mubr.bf16.mxu0 0
  %11333 = vmatmul.mubr.bf16.gmra.mrb[0].mxu0 %v11284
  %v11334 = vpop.f32.mrb[0].mxu0
  %v11335 = vadd.f32 0.0, %v11334
  %v11336 = vpop.f32.mrb[0].mxu0
  %v11337 = vpop.f32.mrb[0].mxu0
  %v11338 = vadd.f32 0.0, %v11337
  %v11339 = vpop.f32.mrb[0].mxu0
  %11340 = vmatprep.mubr.bf16.mxu0 0
  %11341 = vmatmul.mubr.bf16.gmra.mrb[0].mxu0 %v11287
  %v11342 = vpop.f32.mrb[0].mxu0
  %v11343 = vadd.f32 0.0, %v11342
  %v11344 = vpop.f32.mrb[0].mxu0
  %v11345 = vpop.f32.mrb[0].mxu0
  %v11346 = vadd.f32 0.0, %v11345
  %v11347 = vpop.f32.mrb[0].mxu0
  %11348 = vmatprep.mubr.bf16.mxu0 0
  %11349 = vmatmul.mubr.bf16.gmra.mrb[0].mxu0 %v11290
  %v11350 = vpop.f32.mrb[0].mxu0
  %v11351 = vadd.f32 0.0, %v11350
  %v11352 = vpop.f32.mrb[0].mxu0
  %v11353 = vpop.f32.mrb[0].mxu0
  %v11354 = vadd.f32 0.0, %v11353
  %v11355 = vpop.f32.mrb[0].mxu0
  %11356 = vdwg.mxu0
  %v11357 = vadd.f32 %v11246, %v11327
  %v11358 = vadd.f32 %v11247, %v11330
  %v11359 = vadd.f32 %v11248, %v11335
  %v11360 = vadd.f32 %v11249, %v11338
  %v11361 = vadd.f32 %v11250, %v11343
  %v11362 = vadd.f32 %v11251, %v11346
  %v11363 = vadd.f32 %v11252, %v11351
  %v11364 = vadd.f32 %v11253, %v11354
  %v11373 = vunpack.c.l.b16 %v10115
  %v11374 = vunpack.c.l.b16 %v10116
  %v11375 = vunpack.c.l.b16 %v10117
  %v11376 = vunpack.c.l.b16 %v10118
  %v11377 = vunpack.c.l.b16 %v10119
  %v11378 = vunpack.c.l.b16 %v10120
  %v11379 = vunpack.c.l.b16 %v10121
  %v11380 = vunpack.c.l.b16 %v10122
  %v11381 = vpack.c.b16 %v11374, %v11373
  %v11382 = vpack.c.b16 %v11376, %v11375
  %v11383 = vpack.c.b16 %v11378, %v11377
  %v11384 = vpack.c.b16 %v11380, %v11379
  %11385 = vrot.lane.b32.xlu0 %v10021, 32
  %v11386 = vpop.permute.xlu0 %11385
  %11387 = vrot.lane.b32.xlu0 %v10025, 32
  %v11388 = vpop.permute.xlu0 %11387
  %v11392 = vsel %vm10199, %v11381, 0
  %v11395 = vsel %vm10199, %v11382, 0
  %v11398 = vsel %vm10199, %v11383, 0
  %v11401 = vsel %vm10199, %v11384, 0
  %11403 = vmatprep.subr.bf16.mxu0 0
  %11404 = vmatpush1.bf16.msra.mxu0 %v11386
  %11405 = vmatprep.subr.bf16.mxu0 0
  %11406 = vmatpush1.bf16.msra.mxu0 %v11388
  %11407 = vmatprep.subr.bf16.mxu0 0
  %11408 = vmatpush1.bf16.msra.mxu0 0
  %11409 = vmatprep.subr.bf16.mxu0 0
  %11410 = vmatpush1.bf16.msra.mxu0 0
  %11411 = vmatprep.subr.bf16.mxu0 0
  %11412 = vmatpush1.bf16.msra.mxu0 0
  %11413 = vmatprep.subr.bf16.mxu0 0
  %11414 = vmatpush1.bf16.msra.mxu0 0
  %11415 = vmatprep.subr.bf16.mxu0 0
  %11416 = vmatpush1.bf16.msra.mxu0 0
  %11417 = vmatprep.subr.bf16.mxu0 0
  %11418 = vmatpush1.bf16.msra.mxu0 0
  %11419 = vmatprep.subr.bf16.mxu0 0
  %11420 = vmatpush1.bf16.msra.mxu0 0
  %11421 = vmatprep.subr.bf16.mxu0 0
  %11422 = vmatpush1.bf16.msra.mxu0 0
  %11423 = vmatprep.subr.bf16.mxu0 0
  %11424 = vmatpush1.bf16.msra.mxu0 0
  %11425 = vmatprep.subr.bf16.mxu0 0
  %11426 = vmatpush1.bf16.msra.mxu0 0
  %11427 = vmatprep.subr.bf16.mxu0 0
  %11428 = vmatpush1.bf16.msra.mxu0 0
  %11429 = vmatprep.subr.bf16.mxu0 0
  %11430 = vmatpush1.bf16.msra.mxu0 0
  %11431 = vmatprep.subr.bf16.mxu0 0
  %11432 = vmatpush1.bf16.msra.mxu0 0
  %11433 = vmatprep.subr.bf16.mxu0 0
  %11434 = vmatpush1.bf16.msra.mxu0 0
  %11435 = vmatprep.mubr.bf16.mxu0 0
  %11436 = vmatmul.mubr.bf16.gmra.mrb[0].mxu0 %v11392
  %v11437 = vpop.f32.mrb[0].mxu0
  %v11438 = vadd.f32 0.0, %v11437
  %v11439 = vpop.f32.mrb[0].mxu0
  %v11440 = vpop.f32.mrb[0].mxu0
  %v11441 = vadd.f32 0.0, %v11440
  %v11442 = vpop.f32.mrb[0].mxu0
  %11443 = vmatprep.mubr.bf16.mxu0 0
  %11444 = vmatmul.mubr.bf16.gmra.mrb[0].mxu0 %v11395
  %v11445 = vpop.f32.mrb[0].mxu0
  %v11446 = vadd.f32 0.0, %v11445
  %v11447 = vpop.f32.mrb[0].mxu0
  %v11448 = vpop.f32.mrb[0].mxu0
  %v11449 = vadd.f32 0.0, %v11448
  %v11450 = vpop.f32.mrb[0].mxu0
  %11451 = vmatprep.mubr.bf16.mxu0 0
  %11452 = vmatmul.mubr.bf16.gmra.mrb[0].mxu0 %v11398
  %v11453 = vpop.f32.mrb[0].mxu0
  %v11454 = vadd.f32 0.0, %v11453
  %v11455 = vpop.f32.mrb[0].mxu0
  %v11456 = vpop.f32.mrb[0].mxu0
  %v11457 = vadd.f32 0.0, %v11456
  %v11458 = vpop.f32.mrb[0].mxu0
  %11459 = vmatprep.mubr.bf16.mxu0 0
  %11460 = vmatmul.mubr.bf16.gmra.mrb[0].mxu0 %v11401
  %v11461 = vpop.f32.mrb[0].mxu0
  %v11462 = vadd.f32 0.0, %v11461
  %v11463 = vpop.f32.mrb[0].mxu0
  %v11464 = vpop.f32.mrb[0].mxu0
  %v11465 = vadd.f32 0.0, %v11464
  %v11466 = vpop.f32.mrb[0].mxu0
  %11467 = vdwg.mxu0
  %v11468 = vadd.f32 %v11357, %v11438
  %v11469 = vadd.f32 %v11358, %v11441
  %v11470 = vadd.f32 %v11359, %v11446
  %v11471 = vadd.f32 %v11360, %v11449
  %v11472 = vadd.f32 %v11361, %v11454
  %v11473 = vadd.f32 %v11362, %v11457
  %v11474 = vadd.f32 %v11363, %v11462
  %v11475 = vadd.f32 %v11364, %v11465
  %v11484 = vunpack.c.l.b16 %v10123
  %v11485 = vunpack.c.l.b16 %v10124
  %v11486 = vunpack.c.l.b16 %v10125
  %v11487 = vunpack.c.l.b16 %v10126
  %v11488 = vunpack.c.l.b16 %v10127
  %v11489 = vunpack.c.l.b16 %v10128
  %v11490 = vunpack.c.l.b16 %v10129
  %v11491 = vunpack.c.l.b16 %v10130
  %v11492 = vpack.c.b16 %v11485, %v11484
  %v11493 = vpack.c.b16 %v11487, %v11486
  %v11494 = vpack.c.b16 %v11489, %v11488
  %v11495 = vpack.c.b16 %v11491, %v11490
  %v11497 = vsel %vm10199, %v11492, 0
  %v11500 = vsel %vm10199, %v11493, 0
  %v11503 = vsel %vm10199, %v11494, 0
  %v11506 = vsel %vm10199, %v11495, 0
  %11508 = vmatprep.subr.bf16.mxu0 0
  %11509 = vmatpush1.bf16.msra.mxu0 %v10022
  %11510 = vmatprep.subr.bf16.mxu0 0
  %11511 = vmatpush1.bf16.msra.mxu0 %v10026
  %11512 = vmatprep.subr.bf16.mxu0 0
  %11513 = vmatpush1.bf16.msra.mxu0 0
  %11514 = vmatprep.subr.bf16.mxu0 0
  %11515 = vmatpush1.bf16.msra.mxu0 0
  %11516 = vmatprep.subr.bf16.mxu0 0
  %11517 = vmatpush1.bf16.msra.mxu0 0
  %11518 = vmatprep.subr.bf16.mxu0 0
  %11519 = vmatpush1.bf16.msra.mxu0 0
  %11520 = vmatprep.subr.bf16.mxu0 0
  %11521 = vmatpush1.bf16.msra.mxu0 0
  %11522 = vmatprep.subr.bf16.mxu0 0
  %11523 = vmatpush1.bf16.msra.mxu0 0
  %11524 = vmatprep.subr.bf16.mxu0 0
  %11525 = vmatpush1.bf16.msra.mxu0 0
  %11526 = vmatprep.subr.bf16.mxu0 0
  %11527 = vmatpush1.bf16.msra.mxu0 0
  %11528 = vmatprep.subr.bf16.mxu0 0
  %11529 = vmatpush1.bf16.msra.mxu0 0
  %11530 = vmatprep.subr.bf16.mxu0 0
  %11531 = vmatpush1.bf16.msra.mxu0 0
  %11532 = vmatprep.subr.bf16.mxu0 0
  %11533 = vmatpush1.bf16.msra.mxu0 0
  %11534 = vmatprep.subr.bf16.mxu0 0
  %11535 = vmatpush1.bf16.msra.mxu0 0
  %11536 = vmatprep.subr.bf16.mxu0 0
  %11537 = vmatpush1.bf16.msra.mxu0 0
  %11538 = vmatprep.subr.bf16.mxu0 0
  %11539 = vmatpush1.bf16.msra.mxu0 0
  %11540 = vmatprep.mubr.bf16.mxu0 0
  %11541 = vmatmul.mubr.bf16.gmra.mrb[0].mxu0 %v11497
  %v11542 = vpop.f32.mrb[0].mxu0
  %v11543 = vadd.f32 0.0, %v11542
  %v11544 = vpop.f32.mrb[0].mxu0
  %v11545 = vpop.f32.mrb[0].mxu0
  %v11546 = vadd.f32 0.0, %v11545
  %v11547 = vpop.f32.mrb[0].mxu0
  %11548 = vmatprep.mubr.bf16.mxu0 0
  %11549 = vmatmul.mubr.bf16.gmra.mrb[0].mxu0 %v11500
  %v11550 = vpop.f32.mrb[0].mxu0
  %v11551 = vadd.f32 0.0, %v11550
  %v11552 = vpop.f32.mrb[0].mxu0
  %v11553 = vpop.f32.mrb[0].mxu0
  %v11554 = vadd.f32 0.0, %v11553
  %v11555 = vpop.f32.mrb[0].mxu0
  %11556 = vmatprep.mubr.bf16.mxu0 0
  %11557 = vmatmul.mubr.bf16.gmra.mrb[0].mxu0 %v11503
  %v11558 = vpop.f32.mrb[0].mxu0
  %v11559 = vadd.f32 0.0, %v11558
  %v11560 = vpop.f32.mrb[0].mxu0
  %v11561 = vpop.f32.mrb[0].mxu0
  %v11562 = vadd.f32 0.0, %v11561
  %v11563 = vpop.f32.mrb[0].mxu0
  %11564 = vmatprep.mubr.bf16.mxu0 0
  %11565 = vmatmul.mubr.bf16.gmra.mrb[0].mxu0 %v11506
  %v11566 = vpop.f32.mrb[0].mxu0
  %v11567 = vadd.f32 0.0, %v11566
  %v11568 = vpop.f32.mrb[0].mxu0
  %v11569 = vpop.f32.mrb[0].mxu0
  %v11570 = vadd.f32 0.0, %v11569
  %v11571 = vpop.f32.mrb[0].mxu0
  %11572 = vdwg.mxu0
  %v11573 = vadd.f32 %v11468, %v11543
  %v11574 = vadd.f32 %v11469, %v11546
  %v11575 = vadd.f32 %v11470, %v11551
  %v11576 = vadd.f32 %v11471, %v11554
  %v11577 = vadd.f32 %v11472, %v11559
  %v11578 = vadd.f32 %v11473, %v11562
  %v11579 = vadd.f32 %v11474, %v11567
  %v11580 = vadd.f32 %v11475, %v11570
  %v11589 = vunpack.c.l.b16 %v10131
  %v11590 = vunpack.c.l.b16 %v10132
  %v11591 = vunpack.c.l.b16 %v10133
  %v11592 = vunpack.c.l.b16 %v10134
  %v11593 = vunpack.c.l.b16 %v10135
  %v11594 = vunpack.c.l.b16 %v10136
  %v11595 = vunpack.c.l.b16 %v10137
  %v11596 = vunpack.c.l.b16 %v10138
  %v11597 = vpack.c.b16 %v11590, %v11589
  %v11598 = vpack.c.b16 %v11592, %v11591
  %v11599 = vpack.c.b16 %v11594, %v11593
  %v11600 = vpack.c.b16 %v11596, %v11595
  %11603 = vrot.lane.b32.xlu0 %v10022, 96
  %v11604 = vpop.permute.xlu0 %11603
  %11605 = vrot.lane.b32.xlu0 %v10026, 96
  %v11606 = vpop.permute.xlu0 %11605
  %v11610 = vsel %vm10199, %v11597, 0
  %v11613 = vsel %vm10199, %v11598, 0
  %v11616 = vsel %vm10199, %v11599, 0
  %v11619 = vsel %vm10199, %v11600, 0
  %11621 = vmatprep.subr.bf16.mxu0 0
  %11622 = vmatpush1.bf16.msra.mxu0 %v11604
  %11623 = vmatprep.subr.bf16.mxu0 0
  %11624 = vmatpush1.bf16.msra.mxu0 %v11606
  %11625 = vmatprep.subr.bf16.mxu0 0
  %11626 = vmatpush1.bf16.msra.mxu0 0
  %11627 = vmatprep.subr.bf16.mxu0 0
  %11628 = vmatpush1.bf16.msra.mxu0 0
  %11629 = vmatprep.subr.bf16.mxu0 0
  %11630 = vmatpush1.bf16.msra.mxu0 0
  %11631 = vmatprep.subr.bf16.mxu0 0
  %11632 = vmatpush1.bf16.msra.mxu0 0
  %11633 = vmatprep.subr.bf16.mxu0 0
  %11634 = vmatpush1.bf16.msra.mxu0 0
  %11635 = vmatprep.subr.bf16.mxu0 0
  %11636 = vmatpush1.bf16.msra.mxu0 0
  %11637 = vmatprep.subr.bf16.mxu0 0
  %11638 = vmatpush1.bf16.msra.mxu0 0
  %11639 = vmatprep.subr.bf16.mxu0 0
  %11640 = vmatpush1.bf16.msra.mxu0 0
  %11641 = vmatprep.subr.bf16.mxu0 0
  %11642 = vmatpush1.bf16.msra.mxu0 0
  %11643 = vmatprep.subr.bf16.mxu0 0
  %11644 = vmatpush1.bf16.msra.mxu0 0
  %11645 = vmatprep.subr.bf16.mxu0 0
  %11646 = vmatpush1.bf16.msra.mxu0 0
  %11647 = vmatprep.subr.bf16.mxu0 0
  %11648 = vmatpush1.bf16.msra.mxu0 0
  %11649 = vmatprep.subr.bf16.mxu0 0
  %11650 = vmatpush1.bf16.msra.mxu0 0
  %11651 = vmatprep.subr.bf16.mxu0 0
  %11652 = vmatpush1.bf16.msra.mxu0 0
  %11653 = vmatprep.mubr.bf16.mxu0 0
  %11654 = vmatmul.mubr.bf16.gmra.mrb[0].mxu0 %v11610
  %v11655 = vpop.f32.mrb[0].mxu0
  %v11656 = vadd.f32 0.0, %v11655
  %v11657 = vpop.f32.mrb[0].mxu0
  %v11658 = vpop.f32.mrb[0].mxu0
  %v11659 = vadd.f32 0.0, %v11658
  %v11660 = vpop.f32.mrb[0].mxu0
  %11661 = vmatprep.mubr.bf16.mxu0 0
  %11662 = vmatmul.mubr.bf16.gmra.mrb[0].mxu0 %v11613
  %v11663 = vpop.f32.mrb[0].mxu0
  %v11664 = vadd.f32 0.0, %v11663
  %v11665 = vpop.f32.mrb[0].mxu0
  %v11666 = vpop.f32.mrb[0].mxu0
  %v11667 = vadd.f32 0.0, %v11666
  %v11668 = vpop.f32.mrb[0].mxu0
  %11669 = vmatprep.mubr.bf16.mxu0 0
  %11670 = vmatmul.mubr.bf16.gmra.mrb[0].mxu0 %v11616
  %v11671 = vpop.f32.mrb[0].mxu0
  %v11672 = vadd.f32 0.0, %v11671
  %v11673 = vpop.f32.mrb[0].mxu0
  %v11674 = vpop.f32.mrb[0].mxu0
  %v11675 = vadd.f32 0.0, %v11674
  %v11676 = vpop.f32.mrb[0].mxu0
  %11677 = vmatprep.mubr.bf16.mxu0 0
  %11678 = vmatmul.mubr.bf16.gmra.mrb[0].mxu0 %v11619
  %v11679 = vpop.f32.mrb[0].mxu0
  %v11680 = vadd.f32 0.0, %v11679
  %v11681 = vpop.f32.mrb[0].mxu0
  %v11682 = vpop.f32.mrb[0].mxu0
  %v11683 = vadd.f32 0.0, %v11682
  %v11684 = vpop.f32.mrb[0].mxu0
  %11685 = vdwg.mxu0
  %v11686 = vadd.f32 %v11573, %v11656
  %v11687 = vadd.f32 %v11574, %v11659
  %v11688 = vadd.f32 %v11575, %v11664
  %v11689 = vadd.f32 %v11576, %v11667
  %v11690 = vadd.f32 %v11577, %v11672
  %v11691 = vadd.f32 %v11578, %v11675
  %v11692 = vadd.f32 %v11579, %v11680
  %v11693 = vadd.f32 %v11580, %v11683
  %v11702 = vunpack.c.l.b16 %v10139
  %v11703 = vunpack.c.l.b16 %v10140
  %v11704 = vunpack.c.l.b16 %v10141
  %v11705 = vunpack.c.l.b16 %v10142
  %v11706 = vunpack.c.l.b16 %v10143
  %v11707 = vunpack.c.l.b16 %v10144
  %v11708 = vunpack.c.l.b16 %v10145
  %v11709 = vunpack.c.l.b16 %v10146
  %v11710 = vpack.c.b16 %v11703, %v11702
  %v11711 = vpack.c.b16 %v11705, %v11704
  %v11712 = vpack.c.b16 %v11707, %v11706
  %v11713 = vpack.c.b16 %v11709, %v11708
  %11714 = vrot.lane.b32.xlu0 %v10022, 64
  %v11715 = vpop.permute.xlu0 %11714
  %11716 = vrot.lane.b32.xlu0 %v10026, 64
  %v11717 = vpop.permute.xlu0 %11716
  %v11721 = vsel %vm10199, %v11710, 0
  %v11724 = vsel %vm10199, %v11711, 0
  %v11727 = vsel %vm10199, %v11712, 0
  %v11730 = vsel %vm10199, %v11713, 0
  %11732 = vmatprep.subr.bf16.mxu0 0
  %11733 = vmatpush1.bf16.msra.mxu0 %v11715
  %11734 = vmatprep.subr.bf16.mxu0 0
  %11735 = vmatpush1.bf16.msra.mxu0 %v11717
  %11736 = vmatprep.subr.bf16.mxu0 0
  %11737 = vmatpush1.bf16.msra.mxu0 0
  %11738 = vmatprep.subr.bf16.mxu0 0
  %11739 = vmatpush1.bf16.msra.mxu0 0
  %11740 = vmatprep.subr.bf16.mxu0 0
  %11741 = vmatpush1.bf16.msra.mxu0 0
  %11742 = vmatprep.subr.bf16.mxu0 0
  %11743 = vmatpush1.bf16.msra.mxu0 0
  %11744 = vmatprep.subr.bf16.mxu0 0
  %11745 = vmatpush1.bf16.msra.mxu0 0
  %11746 = vmatprep.subr.bf16.mxu0 0
  %11747 = vmatpush1.bf16.msra.mxu0 0
  %11748 = vmatprep.subr.bf16.mxu0 0
  %11749 = vmatpush1.bf16.msra.mxu0 0
  %11750 = vmatprep.subr.bf16.mxu0 0
  %11751 = vmatpush1.bf16.msra.mxu0 0
  %11752 = vmatprep.subr.bf16.mxu0 0
  %11753 = vmatpush1.bf16.msra.mxu0 0
  %11754 = vmatprep.subr.bf16.mxu0 0
  %11755 = vmatpush1.bf16.msra.mxu0 0
  %11756 = vmatprep.subr.bf16.mxu0 0
  %11757 = vmatpush1.bf16.msra.mxu0 0
  %11758 = vmatprep.subr.bf16.mxu0 0
  %11759 = vmatpush1.bf16.msra.mxu0 0
  %11760 = vmatprep.subr.bf16.mxu0 0
  %11761 = vmatpush1.bf16.msra.mxu0 0
  %11762 = vmatprep.subr.bf16.mxu0 0
  %11763 = vmatpush1.bf16.msra.mxu0 0
  %11764 = vmatprep.mubr.bf16.mxu0 0
  %11765 = vmatmul.mubr.bf16.gmra.mrb[0].mxu0 %v11721
  %v11766 = vpop.f32.mrb[0].mxu0
  %v11767 = vadd.f32 0.0, %v11766
  %v11768 = vpop.f32.mrb[0].mxu0
  %v11769 = vpop.f32.mrb[0].mxu0
  %v11770 = vadd.f32 0.0, %v11769
  %v11771 = vpop.f32.mrb[0].mxu0
  %11772 = vmatprep.mubr.bf16.mxu0 0
  %11773 = vmatmul.mubr.bf16.gmra.mrb[0].mxu0 %v11724
  %v11774 = vpop.f32.mrb[0].mxu0
  %v11775 = vadd.f32 0.0, %v11774
  %v11776 = vpop.f32.mrb[0].mxu0
  %v11777 = vpop.f32.mrb[0].mxu0
  %v11778 = vadd.f32 0.0, %v11777
  %v11779 = vpop.f32.mrb[0].mxu0
  %11780 = vmatprep.mubr.bf16.mxu0 0
  %11781 = vmatmul.mubr.bf16.gmra.mrb[0].mxu0 %v11727
  %v11782 = vpop.f32.mrb[0].mxu0
  %v11783 = vadd.f32 0.0, %v11782
  %v11784 = vpop.f32.mrb[0].mxu0
  %v11785 = vpop.f32.mrb[0].mxu0
  %v11786 = vadd.f32 0.0, %v11785
  %v11787 = vpop.f32.mrb[0].mxu0
  %11788 = vmatprep.mubr.bf16.mxu0 0
  %11789 = vmatmul.mubr.bf16.gmra.mrb[0].mxu0 %v11730
  %v11790 = vpop.f32.mrb[0].mxu0
  %v11791 = vadd.f32 0.0, %v11790
  %v11792 = vpop.f32.mrb[0].mxu0
  %v11793 = vpop.f32.mrb[0].mxu0
  %v11794 = vadd.f32 0.0, %v11793
  %v11795 = vpop.f32.mrb[0].mxu0
  %11796 = vdwg.mxu0
  %v11797 = vadd.f32 %v11686, %v11767
  %v11798 = vadd.f32 %v11687, %v11770
  %v11799 = vadd.f32 %v11688, %v11775
  %v11800 = vadd.f32 %v11689, %v11778
  %v11801 = vadd.f32 %v11690, %v11783
  %v11802 = vadd.f32 %v11691, %v11786
  %v11803 = vadd.f32 %v11692, %v11791
  %v11804 = vadd.f32 %v11693, %v11794
  %v11813 = vunpack.c.l.b16 %v10147
  %v11814 = vunpack.c.l.b16 %v10148
  %v11815 = vunpack.c.l.b16 %v10149
  %v11816 = vunpack.c.l.b16 %v10150
  %v11817 = vunpack.c.l.b16 %v10151
  %v11818 = vunpack.c.l.b16 %v10152
  %v11819 = vunpack.c.l.b16 %v10153
  %v11820 = vunpack.c.l.b16 %v10154
  %v11821 = vpack.c.b16 %v11814, %v11813
  %v11822 = vpack.c.b16 %v11816, %v11815
  %v11823 = vpack.c.b16 %v11818, %v11817
  %v11824 = vpack.c.b16 %v11820, %v11819
  %11825 = vrot.lane.b32.xlu0 %v10022, 32
  %v11826 = vpop.permute.xlu0 %11825
  %11827 = vrot.lane.b32.xlu0 %v10026, 32
  %v11828 = vpop.permute.xlu0 %11827
  %v11832 = vsel %vm10199, %v11821, 0
  %v11835 = vsel %vm10199, %v11822, 0
  %v11838 = vsel %vm10199, %v11823, 0
  %v11841 = vsel %vm10199, %v11824, 0
  %11843 = vmatprep.subr.bf16.mxu0 0
  %11844 = vmatpush1.bf16.msra.mxu0 %v11826
  %11845 = vmatprep.subr.bf16.mxu0 0
  %11846 = vmatpush1.bf16.msra.mxu0 %v11828
  %11847 = vmatprep.subr.bf16.mxu0 0
  %11848 = vmatpush1.bf16.msra.mxu0 0
  %11849 = vmatprep.subr.bf16.mxu0 0
  %11850 = vmatpush1.bf16.msra.mxu0 0
  %11851 = vmatprep.subr.bf16.mxu0 0
  %11852 = vmatpush1.bf16.msra.mxu0 0
  %11853 = vmatprep.subr.bf16.mxu0 0
  %11854 = vmatpush1.bf16.msra.mxu0 0
  %11855 = vmatprep.subr.bf16.mxu0 0
  %11856 = vmatpush1.bf16.msra.mxu0 0
  %11857 = vmatprep.subr.bf16.mxu0 0
  %11858 = vmatpush1.bf16.msra.mxu0 0
  %11859 = vmatprep.subr.bf16.mxu0 0
  %11860 = vmatpush1.bf16.msra.mxu0 0
  %11861 = vmatprep.subr.bf16.mxu0 0
  %11862 = vmatpush1.bf16.msra.mxu0 0
  %11863 = vmatprep.subr.bf16.mxu0 0
  %11864 = vmatpush1.bf16.msra.mxu0 0
  %11865 = vmatprep.subr.bf16.mxu0 0
  %11866 = vmatpush1.bf16.msra.mxu0 0
  %11867 = vmatprep.subr.bf16.mxu0 0
  %11868 = vmatpush1.bf16.msra.mxu0 0
  %11869 = vmatprep.subr.bf16.mxu0 0
  %11870 = vmatpush1.bf16.msra.mxu0 0
  %11871 = vmatprep.subr.bf16.mxu0 0
  %11872 = vmatpush1.bf16.msra.mxu0 0
  %11873 = vmatprep.subr.bf16.mxu0 0
  %11874 = vmatpush1.bf16.msra.mxu0 0
  %11875 = vmatprep.mubr.bf16.mxu0 0
  %11876 = vmatmul.mubr.bf16.gmra.mrb[0].mxu0 %v11832
  %v11877 = vpop.f32.mrb[0].mxu0
  %v11878 = vadd.f32 0.0, %v11877
  %v11879 = vpop.f32.mrb[0].mxu0
  %v11880 = vpop.f32.mrb[0].mxu0
  %v11881 = vadd.f32 0.0, %v11880
  %v11882 = vpop.f32.mrb[0].mxu0
  %11883 = vmatprep.mubr.bf16.mxu0 0
  %11884 = vmatmul.mubr.bf16.gmra.mrb[0].mxu0 %v11835
  %v11885 = vpop.f32.mrb[0].mxu0
  %v11886 = vadd.f32 0.0, %v11885
  %v11887 = vpop.f32.mrb[0].mxu0
  %v11888 = vpop.f32.mrb[0].mxu0
  %v11889 = vadd.f32 0.0, %v11888
  %v11890 = vpop.f32.mrb[0].mxu0
  %11891 = vmatprep.mubr.bf16.mxu0 0
  %11892 = vmatmul.mubr.bf16.gmra.mrb[0].mxu0 %v11838
  %v11893 = vpop.f32.mrb[0].mxu0
  %v11894 = vadd.f32 0.0, %v11893
  %v11895 = vpop.f32.mrb[0].mxu0
  %v11896 = vpop.f32.mrb[0].mxu0
  %v11897 = vadd.f32 0.0, %v11896
  %v11898 = vpop.f32.mrb[0].mxu0
  %11899 = vmatprep.mubr.bf16.mxu0 0
  %11900 = vmatmul.mubr.bf16.gmra.mrb[0].mxu0 %v11841
  %v11901 = vpop.f32.mrb[0].mxu0
  %v11902 = vadd.f32 0.0, %v11901
  %v11903 = vpop.f32.mrb[0].mxu0
  %v11904 = vpop.f32.mrb[0].mxu0
  %v11905 = vadd.f32 0.0, %v11904
  %v11906 = vpop.f32.mrb[0].mxu0
  %11907 = vdwg.mxu0
  %v11908 = vadd.f32 %v11797, %v11878
  %v11909 = vadd.f32 %v11798, %v11881
  %v11910 = vadd.f32 %v11799, %v11886
  %v11911 = vadd.f32 %v11800, %v11889
  %v11912 = vadd.f32 %v11801, %v11894
  %v11913 = vadd.f32 %v11802, %v11897
  %v11914 = vadd.f32 %v11803, %v11902
  %v11915 = vadd.f32 %v11804, %v11905
  %v11916 = vsel %vm10199, %v11908, 0.0
  %11917 = vadd.xlane.f32.xlu0 %v11916
  %v11918 = vpop.xlane.xlu0 %11917
  %v11919 = vsel %vm10199, %v11909, 0.0
  %11920 = vadd.xlane.f32.xlu0 %v11919
  %v11921 = vpop.xlane.xlu0 %11920
  %v11922 = vsel %vm10199, %v11910, 0.0
  %11923 = vadd.xlane.f32.xlu0 %v11922
  %v11924 = vpop.xlane.xlu0 %11923
  %v11925 = vsel %vm10199, %v11911, 0.0
  %11926 = vadd.xlane.f32.xlu0 %v11925
  %v11927 = vpop.xlane.xlu0 %11926
  %v11928 = vsel %vm10199, %v11912, 0.0
  %11929 = vadd.xlane.f32.xlu0 %v11928
  %v11930 = vpop.xlane.xlu0 %11929
  %v11931 = vsel %vm10199, %v11913, 0.0
  %11932 = vadd.xlane.f32.xlu0 %v11931
  %v11933 = vpop.xlane.xlu0 %11932
  %v11934 = vsel %vm10199, %v11914, 0.0
  %11935 = vadd.xlane.f32.xlu0 %v11934
  %v11936 = vpop.xlane.xlu0 %11935
  %v11937 = vsel %vm10199, %v11915, 0.0
  %11938 = vadd.xlane.f32.xlu0 %v11937
  %v11939 = vpop.xlane.xlu0 %11938
  %v11940 = vrcp.pop 32.0
  %v11941 = vmul.f32 %v11918, %v11940
  %v11942 = vmul.f32 %v11921, %v11940
  %v11943 = vmul.f32 %v11924, %v11940
  %v11944 = vmul.f32 %v11927, %v11940
  %v11945 = vmul.f32 %v11930, %v11940
  %v11946 = vmul.f32 %v11933, %v11940
  %v11947 = vmul.f32 %v11936, %v11940
  %v11948 = vmul.f32 %v11939, %v11940
  %v11949 = vmul.f32 %v11908, %v11908
  %v11950 = vmul.f32 %v11909, %v11909
  %v11951 = vmul.f32 %v11910, %v11910
  %v11952 = vmul.f32 %v11911, %v11911
  %v11953 = vmul.f32 %v11912, %v11912
  %v11954 = vmul.f32 %v11913, %v11913
  %v11955 = vmul.f32 %v11914, %v11914
  %v11956 = vmul.f32 %v11915, %v11915
  %v11957 = vsel %vm10199, %v11949, 0.0
  %11958 = vadd.xlane.f32.xlu0 %v11957
  %v11959 = vpop.xlane.xlu0 %11958
  %v11960 = vsel %vm10199, %v11950, 0.0
  %11961 = vadd.xlane.f32.xlu0 %v11960
  %v11962 = vpop.xlane.xlu0 %11961
  %v11963 = vsel %vm10199, %v11951, 0.0
  %11964 = vadd.xlane.f32.xlu0 %v11963
  %v11965 = vpop.xlane.xlu0 %11964
  %v11966 = vsel %vm10199, %v11952, 0.0
  %11967 = vadd.xlane.f32.xlu0 %v11966
  %v11968 = vpop.xlane.xlu0 %11967
  %v11969 = vsel %vm10199, %v11953, 0.0
  %11970 = vadd.xlane.f32.xlu0 %v11969
  %v11971 = vpop.xlane.xlu0 %11970
  %v11972 = vsel %vm10199, %v11954, 0.0
  %11973 = vadd.xlane.f32.xlu0 %v11972
  %v11974 = vpop.xlane.xlu0 %11973
  %v11975 = vsel %vm10199, %v11955, 0.0
  %11976 = vadd.xlane.f32.xlu0 %v11975
  %v11977 = vpop.xlane.xlu0 %11976
  %v11978 = vsel %vm10199, %v11956, 0.0
  %11979 = vadd.xlane.f32.xlu0 %v11978
  %v11980 = vpop.xlane.xlu0 %11979
  %v11981 = vmul.f32 %v11959, %v11940
  %v11982 = vmul.f32 %v11962, %v11940
  %v11983 = vmul.f32 %v11965, %v11940
  %v11984 = vmul.f32 %v11968, %v11940
  %v11985 = vmul.f32 %v11971, %v11940
  %v11986 = vmul.f32 %v11974, %v11940
  %v11987 = vmul.f32 %v11977, %v11940
  %v11988 = vmul.f32 %v11980, %v11940
  %v11989 = vmul.f32 %v11941, %v11941
  %v11990 = vmul.f32 %v11942, %v11942
  %v11991 = vmul.f32 %v11943, %v11943
  %v11992 = vmul.f32 %v11944, %v11944
  %v11993 = vmul.f32 %v11945, %v11945
  %v11994 = vmul.f32 %v11946, %v11946
  %v11995 = vmul.f32 %v11947, %v11947
  %v11996 = vmul.f32 %v11948, %v11948
  %v11997 = vsub.f32 %v11981, %v11989
  %v11998 = vsub.f32 %v11982, %v11990
  %v11999 = vsub.f32 %v11983, %v11991
  %v12000 = vsub.f32 %v11984, %v11992
  %v12001 = vsub.f32 %v11985, %v11993
  %v12002 = vsub.f32 %v11986, %v11994
  %v12003 = vsub.f32 %v11987, %v11995
  %v12004 = vsub.f32 %v11988, %v11996
  %v12005 = vsub.f32 %v11908, %v11941
  %v12006 = vsub.f32 %v11909, %v11942
  %v12007 = vsub.f32 %v11910, %v11943
  %v12008 = vsub.f32 %v11911, %v11944
  %v12009 = vsub.f32 %v11912, %v11945
  %v12010 = vsub.f32 %v11913, %v11946
  %v12011 = vsub.f32 %v11914, %v11947
  %v12012 = vsub.f32 %v11915, %v11948
  %v12013 = vadd.f32 %v11997, 1e-05
  %v12014 = vadd.f32 %v11998, 1e-05
  %v12015 = vadd.f32 %v11999, 1e-05
  %v12016 = vadd.f32 %v12000, 1e-05
  %v12017 = vadd.f32 %v12001, 1e-05
  %v12018 = vadd.f32 %v12002, 1e-05
  %v12019 = vadd.f32 %v12003, 1e-05
  %v12020 = vadd.f32 %v12004, 1e-05
  %v12021 = vrsqrt.pop %v12013
  %v12022 = vrsqrt.pop %v12014
  %v12023 = vrsqrt.pop %v12015
  %v12024 = vrsqrt.pop %v12016
  %v12025 = vrsqrt.pop %v12017
  %v12026 = vrsqrt.pop %v12018
  %v12027 = vrsqrt.pop %v12019
  %v12028 = vrsqrt.pop %v12020
  %v12029 = vmul.f32 %v10155, %v12021
  %v12030 = vmul.f32 %v10156, %v12022
  %v12031 = vmul.f32 %v10157, %v12023
  %v12032 = vmul.f32 %v10158, %v12024
  %v12033 = vmul.f32 %v10159, %v12025
  %v12034 = vmul.f32 %v10160, %v12026
  %v12035 = vmul.f32 %v10161, %v12027
  %v12036 = vmul.f32 %v10162, %v12028
  %12038 = vset.pattern.permute.xlu0 0
  %12039 = vperm.xlu0 %12038, %v12029
  %v12040 = vpop.permute.xlu0 %12039
  %12043 = vset.pattern.permute.xlu0 0
  %12044 = vperm.xlu0 %12043, %v12030
  %v12045 = vpop.permute.xlu0 %12044
  %12048 = vset.pattern.permute.xlu0 0
  %12049 = vperm.xlu0 %12048, %v12031
  %v12050 = vpop.permute.xlu0 %12049
  %12053 = vset.pattern.permute.xlu0 0
  %12054 = vperm.xlu0 %12053, %v12032
  %v12055 = vpop.permute.xlu0 %12054
  %12058 = vset.pattern.permute.xlu0 0
  %12059 = vperm.xlu0 %12058, %v12033
  %v12060 = vpop.permute.xlu0 %12059
  %12063 = vset.pattern.permute.xlu0 0
  %12064 = vperm.xlu0 %12063, %v12034
  %v12065 = vpop.permute.xlu0 %12064
  %12068 = vset.pattern.permute.xlu0 0
  %12069 = vperm.xlu0 %12068, %v12035
  %v12070 = vpop.permute.xlu0 %12069
  %12073 = vset.pattern.permute.xlu0 0
  %12074 = vperm.xlu0 %12073, %v12036
  %v12075 = vpop.permute.xlu0 %12074
  %v12077 = vmul.f32 %v12005, %v12040
  %v12078 = vmul.f32 %v12006, %v12045
  %v12079 = vmul.f32 %v12007, %v12050
  %v12080 = vmul.f32 %v12008, %v12055
  %v12081 = vmul.f32 %v12009, %v12060
  %v12082 = vmul.f32 %v12010, %v12065
  %v12083 = vmul.f32 %v12011, %v12070
  %v12084 = vmul.f32 %v12012, %v12075
  %12086 = vset.pattern.permute.xlu0 0
  %12087 = vperm.xlu0 %12086, %v10163
  %v12088 = vpop.permute.xlu0 %12087
  %12091 = vset.pattern.permute.xlu0 0
  %12092 = vperm.xlu0 %12091, %v10164
  %v12093 = vpop.permute.xlu0 %12092
  %12096 = vset.pattern.permute.xlu0 0
  %12097 = vperm.xlu0 %12096, %v10165
  %v12098 = vpop.permute.xlu0 %12097
  %12101 = vset.pattern.permute.xlu0 0
  %12102 = vperm.xlu0 %12101, %v10166
  %v12103 = vpop.permute.xlu0 %12102
  %12106 = vset.pattern.permute.xlu0 0
  %12107 = vperm.xlu0 %12106, %v10167
  %v12108 = vpop.permute.xlu0 %12107
  %12111 = vset.pattern.permute.xlu0 0
  %12112 = vperm.xlu0 %12111, %v10168
  %v12113 = vpop.permute.xlu0 %12112
  %12116 = vset.pattern.permute.xlu0 0
  %12117 = vperm.xlu0 %12116, %v10169
  %v12118 = vpop.permute.xlu0 %12117
  %12121 = vset.pattern.permute.xlu0 0
  %12122 = vperm.xlu0 %12121, %v10170
  %v12123 = vpop.permute.xlu0 %12122
  %v12125 = vadd.f32 %v12077, %v12088
  %v12126 = vadd.f32 %v12078, %v12093
  %v12127 = vadd.f32 %v12079, %v12098
  %v12128 = vadd.f32 %v12080, %v12103
  %v12129 = vadd.f32 %v12081, %v12108
  %v12130 = vadd.f32 %v12082, %v12113
  %v12131 = vadd.f32 %v12083, %v12118
  %v12132 = vadd.f32 %v12084, %v12123
  %v12133 = vmul.f32 %v12125, 0.2
  %v12134 = vmul.f32 %v12126, 0.2
  %v12135 = vmul.f32 %v12127, 0.2
  %v12136 = vmul.f32 %v12128, 0.2
  %v12137 = vmul.f32 %v12129, 0.2
  %v12138 = vmul.f32 %v12130, 0.2
  %v12139 = vmul.f32 %v12131, 0.2
  %v12140 = vmul.f32 %v12132, 0.2
  %v12141 = vmax.f32 %v12125, %v12133
  %v12142 = vmax.f32 %v12126, %v12134
  %v12143 = vmax.f32 %v12127, %v12135
  %v12144 = vmax.f32 %v12128, %v12136
  %v12145 = vmax.f32 %v12129, %v12137
  %v12146 = vmax.f32 %v12130, %v12138
  %v12147 = vmax.f32 %v12131, %v12139
  %v12148 = vmax.f32 %v12132, %v12140
  %v12149 = vld [vmem:[%s13] sm:$0xff]
  %v12150 = vld [vmem:[%s13 + $0x8] sm:$0xff]
  %v12151 = vld [vmem:[%s13 + $0x10] sm:$0xff]
  %v12152 = vld [vmem:[%s13 + $0x18] sm:$0xff]
  %v12153 = vld [vmem:[%s13 + $0x20] sm:$0xff]
  %v12154 = vld [vmem:[%s13 + $0x28] sm:$0xff]
  %v12155 = vld [vmem:[%s13 + $0x30] sm:$0xff]
  %v12156 = vld [vmem:[%s13 + $0x38] sm:$0xff]
  %v12157 = vmul.f32 %v12141, %v12149
  %v12158 = vmul.f32 %v12142, %v12150
  %v12159 = vmul.f32 %v12143, %v12151
  %v12160 = vmul.f32 %v12144, %v12152
  %v12161 = vmul.f32 %v12145, %v12153
  %v12162 = vmul.f32 %v12146, %v12154
  %v12163 = vmul.f32 %v12147, %v12155
  %v12164 = vmul.f32 %v12148, %v12156
  %v12165 = vsel %vm10199, %v12157, 0.0
  %v12166 = vsel %vm10199, %v12158, 0.0
  %v12167 = vadd.f32 %v12165, %v12166
  %v12168 = vsel %vm10199, %v12159, 0.0
  %v12169 = vadd.f32 %v12167, %v12168
  %v12170 = vsel %vm10199, %v12160, 0.0
  %v12171 = vadd.f32 %v12169, %v12170
  %v12172 = vsel %vm10199, %v12161, 0.0
  %v12173 = vadd.f32 %v12171, %v12172
  %v12174 = vsel %vm10199, %v12162, 0.0
  %v12175 = vadd.f32 %v12173, %v12174
  %v12176 = vsel %vm10199, %v12163, 0.0
  %v12177 = vadd.f32 %v12175, %v12176
  %v12178 = vsel %vm10199, %v12164, 0.0
  %v12179 = vadd.f32 %v12177, %v12178
  %v12180 = vrot.slane %v12179, 4
  %v12181 = vadd.f32 %v12179, %v12180
  %v12182 = vrot.slane %v12181, 2
  %v12183 = vadd.f32 %v12181, %v12182
  %v12184 = vrot.slane %v12183, 1
  %v12185 = vadd.f32 %v12183, %v12184
  %v12186 = vld [vmem:[%s14] sm:$0xff]
  %v12187 = vld [vmem:[%s14 + $0x8] sm:$0xff]
  %v12188 = vld [vmem:[%s14 + $0x10] sm:$0xff]
  %v12189 = vld [vmem:[%s14 + $0x18] sm:$0xff]
  %v12191 = vsel %vm10199, %v12185, 0
  %12193 = vmatprep.subr.mxu0 0.0
  %12194 = vmatpush1.msra.mxu0 %v12186
  %12195 = vmatprep.subr.mxu0 0.0
  %12196 = vmatpush1.msra.mxu0 %v12187
  %12197 = vmatprep.subr.mxu0 0.0
  %12198 = vmatpush1.msra.mxu0 %v12188
  %12199 = vmatprep.subr.mxu0 0.0
  %12200 = vmatpush1.msra.mxu0 %v12189
  %12201 = vmatprep.subr.mxu0 0.0
  %12202 = vmatpush1.msra.mxu0 0.0
  %12203 = vmatprep.subr.mxu0 0.0
  %12204 = vmatpush1.msra.mxu0 0.0
  %12205 = vmatprep.subr.mxu0 0.0
  %12206 = vmatpush1.msra.mxu0 0.0
  %12207 = vmatprep.subr.mxu0 0.0
  %12208 = vmatpush1.msra.mxu0 0.0
  %12209 = vmatprep.subr.mxu0 0.0
  %12210 = vmatpush1.msra.mxu0 0.0
  %12211 = vmatprep.subr.mxu0 0.0
  %12212 = vmatpush1.msra.mxu0 0.0
  %12213 = vmatprep.subr.mxu0 0.0
  %12214 = vmatpush1.msra.mxu0 0.0
  %12215 = vmatprep.subr.mxu0 0.0
  %12216 = vmatpush1.msra.mxu0 0.0
  %12217 = vmatprep.subr.mxu0 0.0
  %12218 = vmatpush1.msra.mxu0 0.0
  %12219 = vmatprep.subr.mxu0 0.0
  %12220 = vmatpush1.msra.mxu0 0.0
  %12221 = vmatprep.subr.mxu0 0.0
  %12222 = vmatpush1.msra.mxu0 0.0
  %12223 = vmatprep.subr.mxu0 0.0
  %12224 = vmatpush1.msra.mxu0 0.0
  %12225 = vmatprep.subr.mxu0 0.0
  %12226 = vmatpush1.msra.mxu0 0.0
  %12227 = vmatprep.subr.mxu0 0.0
  %12228 = vmatpush1.msra.mxu0 0.0
  %12229 = vmatprep.subr.mxu0 0.0
  %12230 = vmatpush1.msra.mxu0 0.0
  %12231 = vmatprep.subr.mxu0 0.0
  %12232 = vmatpush1.msra.mxu0 0.0
  %12233 = vmatprep.subr.mxu0 0.0
  %12234 = vmatpush1.msra.mxu0 0.0
  %12235 = vmatprep.subr.mxu0 0.0
  %12236 = vmatpush1.msra.mxu0 0.0
  %12237 = vmatprep.subr.mxu0 0.0
  %12238 = vmatpush1.msra.mxu0 0.0
  %12239 = vmatprep.subr.mxu0 0.0
  %12240 = vmatpush1.msra.mxu0 0.0
  %12241 = vmatprep.subr.mxu0 0.0
  %12242 = vmatpush1.msra.mxu0 0.0
  %12243 = vmatprep.subr.mxu0 0.0
  %12244 = vmatpush1.msra.mxu0 0.0
  %12245 = vmatprep.subr.mxu0 0.0
  %12246 = vmatpush1.msra.mxu0 0.0
  %12247 = vmatprep.subr.mxu0 0.0
  %12248 = vmatpush1.msra.mxu0 0.0
  %12249 = vmatprep.subr.mxu0 0.0
  %12250 = vmatpush1.msra.mxu0 0.0
  %12251 = vmatprep.subr.mxu0 0.0
  %12252 = vmatpush1.msra.mxu0 0.0
  %12253 = vmatprep.subr.mxu0 0.0
  %12254 = vmatpush1.msra.mxu0 0.0
  %12255 = vmatprep.subr.mxu0 0.0
  %12256 = vmatpush1.msra.mxu0 0.0
  %12257 = vmatprep.mubr.f32.mxu0 0.0
  %12258 = vmatmul.mubr.f32.gmra.mrb[0].mxu0 %v12191
  %v12259 = vpop.f32.mrb[0].mxu0
  %v12260 = vadd.f32 0.0, %v12259
  %v12261 = vpop.f32.mrb[0].mxu0
  %12262 = vdwg.mxu0
  %v12263 = vsub.f32 0.0, %v12260
  %v12264 = vmul.f32 %v12263, 1.442695
  %v12265 = vpow.pop %v12264
  %v12266 = vadd.f32 %v12265, 1.0
  %v12267 = vrcp.pop %v12266
  %v12268 = vmul.f32 1.0, %v12267
  %v12269 = vlaneseq
  %v12270 = vshrl.u32 %v12269, 7
  %v12271 = vsub.s32 0, %v12270
  %v12272 = vrot.slane %v12268, %v12271
  %12273 = vst [vmem:[%s15] sm:$0xff] %v12272
  // Predicated region
  $region62: #{discriminator_forward.1} parent=0 // pred_check
    _
  $region63: #{discriminator_forward.1} parent=0 // pred_check_branch
    %12275 = sbr.rel (0) target = $region65
  $region64: #{discriminator_forward.1} parent=0 // pred_region
    _
  $region65: #{discriminator_forward.1} parent=0 // pred_fallthru
    _
  // Predicated region
  $region66: #{discriminator_forward.1} parent=0 // pred_check
    _
  $region67: #{discriminator_forward.1} parent=0 // pred_check_branch
    %12277 = sbr.rel (0) target = $region69
  $region68: #{discriminator_forward.1} parent=0 // pred_region
    _
  $region69: #{discriminator_forward.1} parent=0 // pred_fallthru
    _

</llo_original>
